<compile_context>
chip_gen: v6e
topology: v6e:2x2x1
jax: 0.10.0
libtpu: 0.0.40
codegen_flags: <defaults>
</compile_context>

<pallas_src>
import functools

import jax
import jax.numpy as jnp
from jax import lax
from jax.experimental import pallas as pl
from jax.experimental.pallas import tpu as pltpu


# ----------------------------------------------------------------------------
# Small helpers
# ----------------------------------------------------------------------------
def _fold_bn(gamma, beta, mean, var, eps=1e-5):
    scale = gamma / jnp.sqrt(var + eps)
    bias = beta - mean * scale
    return scale, bias


def _round_up(x, m):
    return (x + m - 1) // m * m


def _pad_axis(a, axis, new_size):
    if a.shape[axis] == new_size:
        return a
    pads = [(0, 0)] * a.ndim
    pads[axis] = (0, new_size - a.shape[axis])
    return jnp.pad(a, pads)


def _pick_tn(cout):
    """Output-channel tile width: MXU-width aware, avoids padding if possible."""
    try:
        kind = jax.devices()[0].device_kind.lower()
    except Exception:  # pragma: no cover - perf heuristic only
        kind = ""
    narrow = any(v in kind for v in ("v2", "v3", "v4", "v5"))
    wide = 128 if narrow else 256            # v6e/v7x MXUs are 2x256^2
    if cout <= wide:
        return cout, cout                    # single full-width lane block
    if wide == 256 and cout % 512 == 0:
        return 512, cout
    if cout % wide == 0:
        return wide, cout
    if cout % 128 == 0:
        return 128, cout
    return 128, _round_up(cout, 128)         # rare: pad channels to 128


# ----------------------------------------------------------------------------
# Pallas kernel: in-VMEM k*k tap accumulation + fused BN/residual/ReLU epilogue
# ----------------------------------------------------------------------------
def _make_conv_kernel(k, stride, ho, wo, hph, has_residual, apply_relu):
    m = ho * wo

    def kernel(*refs):
        if has_residual:
            x_ref, w_ref, sc_ref, bi_ref, r_ref, o_ref, acc_ref = refs
        else:
            x_ref, w_ref, sc_ref, bi_ref, o_ref, acc_ref = refs

        # k*k shifted taps, each a bf16 MXU matmul accumulated into f32 VMEM.
        # x_ref holds the stride-phases packed along rows:
        #   row block (pi*stride + pj) * hph contains xp[pi::stride, pj::stride].
        for t in range(k * k):
            ti, tj = t // k, t % k
            pi, pj = ti % stride, tj % stride
            oi, oj = ti // stride, tj // stride
            row0 = (pi * stride + pj) * hph + oi
            xs = x_ref[row0:row0 + ho, oj:oj + wo, :].reshape(m, -1)
            contrib = jnp.dot(xs, w_ref[t], preferred_element_type=jnp.float32)
            if t == 0:
                acc_ref[...] = contrib
            else:
                acc_ref[...] += contrib

        # Fused epilogue: folded BN, optional residual add, ReLU, cast, store.
        acc = acc_ref[...] * sc_ref[...] + bi_ref[...]
        acc = acc.reshape(ho, wo, -1)
        if has_residual:
            acc = acc + r_ref[...].astype(jnp.float32)
        if apply_relu:
            acc = jnp.maximum(acc, 0.0)
        o_ref[...] = acc.astype(o_ref.dtype)

    return kernel


def _conv_bn_pallas(x_nhwc, w_oihw, scale, bias, *, k, stride, pad,
                    residual=None, apply_relu=True, out_dtype=jnp.float32):
    """Conv(k x k, stride, pad, no bias) + folded BN (+ residual) (+ ReLU).

    x_nhwc: (N, H, W, Cin). w_oihw: (Cout, Cin, k, k) (PyTorch layout).
    Returns (N, Ho, Wo, Cout) in out_dtype.
    """
    # A strided 1x1 conv only ever reads the strided sub-grid: subsample up
    # front so the kernel body is a single plain matmul.
    if k == 1 and stride > 1:
        x_nhwc = x_nhwc[:, ::stride, ::stride, :]
        stride = 1

    n, h, w, cin = x_nhwc.shape
    cout = w_oihw.shape[0]
    ho = (h + 2 * pad - k) // stride + 1
    wo = (w + 2 * pad - k) // stride + 1
    hph = (k - 1) // stride + ho          # haloed rows needed per phase
    wph = (k - 1) // stride + wo          # haloed cols needed per phase

    # Activations in bf16 (MXU-native), spatially padded. For stride > 1 the
    # stride*stride even/odd phases are packed along H so each tap becomes a
    # contiguous static slice inside the kernel.
    xb = x_nhwc.astype(jnp.bfloat16)
    if pad > 0:
        xb = jnp.pad(xb, ((0, 0), (pad, pad), (pad, pad), (0, 0)))
    if stride == 1:
        x_packed = xb[:, :hph, :wph, :]
    else:
        phases = []
        for pi in range(stride):
            for pj in range(stride):
                ph = xb[:, pi::stride, pj::stride, :][:, :hph, :wph, :]
                ph = _pad_axis(_pad_axis(ph, 1, hph), 2, wph)
                phases.append(ph)
        x_packed = jnp.concatenate(phases, axis=1)   # (N, s*s*hph, wph, Cin)
    hpk = x_packed.shape[1]

    # Weights: (Cout, Cin, kh, kw) -> (kh*kw, Cin, Cout), bf16.
    wmat = jnp.transpose(w_oihw, (2, 3, 1, 0)).reshape(k * k, cin, cout)
    wmat = wmat.astype(jnp.bfloat16)

    tn, n_pad = _pick_tn(cout)
    wmat = _pad_axis(wmat, 2, n_pad)
    scale2 = _pad_axis(scale.reshape(1, cout).astype(jnp.float32), 1, n_pad)
    bias2 = _pad_axis(bias.reshape(1, cout).astype(jnp.float32), 1, n_pad)

    inputs = [x_packed, wmat, scale2, bias2]
    in_specs = [
        # Whole (phase-packed) image per batch index: fetched once per image.
        pl.BlockSpec((None, hpk, wph, cin), lambda b, j: (b, 0, 0, 0)),
        pl.BlockSpec((k * k, cin, tn), lambda b, j: (0, 0, j)),
        pl.BlockSpec((1, tn), lambda b, j: (0, j)),
        pl.BlockSpec((1, tn), lambda b, j: (0, j)),
    ]
    has_residual = residual is not None
    if has_residual:
        inputs.append(_pad_axis(residual, 3, n_pad))
        in_specs.append(
            pl.BlockSpec((None, ho, wo, tn), lambda b, j: (b, 0, 0, j)))

    out_specs = pl.BlockSpec((None, ho, wo, tn), lambda b, j: (b, 0, 0, j))
    grid = (n, n_pad // tn)

    out = pl.pallas_call(
        _make_conv_kernel(k, stride, ho, wo, hph, has_residual, apply_relu),
        out_shape=jax.ShapeDtypeStruct((n, ho, wo, n_pad), out_dtype),
        grid=grid,
        in_specs=in_specs,
        out_specs=out_specs,
        scratch_shapes=[pltpu.VMEM((ho * wo, tn), jnp.float32)],
        compiler_params=pltpu.CompilerParams(
            dimension_semantics=("parallel", "parallel"),
            vmem_limit_bytes=32 * 1024 * 1024),
    )(*inputs)

    if n_pad != cout:
        out = out[..., :cout]
    return out


# ----------------------------------------------------------------------------
# BasicBlock forward (wrapper)
# ----------------------------------------------------------------------------
def basic_block_forward(x_nchw, params, downsample=False):
    """Matches BasicBlock.forward. x_nchw: (N, C_in, H, W) float32."""
    stride = 2 if downsample else 1
    # NCHW module interface preserved; conv math runs in NHWC (C on lanes).
    x = jnp.transpose(x_nchw, (0, 2, 3, 1))  # NCHW -> NHWC (f32)

    s1, b1 = _fold_bn(*params["bn1"])
    s2, b2 = _fold_bn(*params["bn2"])

    # conv1 -> bn1 -> relu   (bf16 output: feeds conv2 which wants bf16)
    out = _conv_bn_pallas(x, params["w1"], s1, b1,
                          k=3, stride=stride, pad=1,
                          apply_relu=True, out_dtype=jnp.bfloat16)

    # identity path (kept in f32 for the residual add)
    if downsample:
        sd, bd = _fold_bn(*params["bn_d"])
        identity = _conv_bn_pallas(x, params["w_d"], sd, bd,
                                   k=1, stride=2, pad=0,
                                   apply_relu=False, out_dtype=jnp.float32)
    else:
        identity = x

    # conv2 -> bn2 -> (+identity) -> relu   (fused in one kernel, f32 output)
    out = _conv_bn_pallas(out, params["w2"], s2, b2,
                          k=3, stride=1, pad=1,
                          residual=identity, apply_relu=True,
                          out_dtype=jnp.float32)

    return jnp.transpose(out, (0, 3, 1, 2))  # NHWC -> NCHW


# ----------------------------------------------------------------------------
# Pure-JAX reference (lax.conv, f32) for correctness checking
# ----------------------------------------------------------------------------
def _ref_conv_bn(x_nhwc, w_oihw, gamma, beta, mean, var, *, stride, pad,
                 relu=True, residual=None, eps=1e-5):
    w_hwio = jnp.transpose(w_oihw, (2, 3, 1, 0))
    y = lax.conv_general_dilated(
        x_nhwc, w_hwio, window_strides=(stride, stride),
        padding=((pad, pad), (pad, pad)),
        dimension_numbers=("NHWC", "HWIO", "NHWC"))
    y = (y - mean) / jnp.sqrt(var + eps) * gamma + beta
    if residual is not None:
        y = y + residual
    if relu:
        y = jnp.maximum(y, 0.0)
    return y


def _ref_forward(x_nchw, params, downsample=False):
    stride = 2 if downsample else 1
    x = jnp.transpose(x_nchw, (0, 2, 3, 1))
    out = _ref_conv_bn(x, params["w1"], *params["bn1"], stride=stride, pad=1)
    if downsample:
        identity = _ref_conv_bn(x, params["w_d"], *params["bn_d"],
                                stride=2, pad=0, relu=False)
    else:
        identity = x
    out = _ref_conv_bn(out, params["w2"], *params["bn2"], stride=1, pad=1,
                       residual=identity)
    return jnp.transpose(out, (0, 3, 1, 2))


# ----------------------------------------------------------------------------
if __name__ == "__main__":
    key = jax.random.PRNGKey(0)
    keys = jax.random.split(key, 8)

    N, C_in, H, W = 2, 16, 16, 16
    C_out = 16

    x = jax.random.normal(keys[0], (N, C_in, H, W), jnp.float32)

    def bn_params(k):
        ka, kb, kc, kd = jax.random.split(k, 4)
        gamma = 1.0 + 0.1 * jax.random.normal(ka, (C_out,), jnp.float32)
        beta = 0.1 * jax.random.normal(kb, (C_out,), jnp.float32)
        mean = 0.1 * jax.random.normal(kc, (C_out,), jnp.float32)
        var = 1.0 + 0.1 * jnp.abs(jax.random.normal(kd, (C_out,), jnp.float32))
        return (gamma, beta, mean, var)

    params = {
        "w1": 0.1 * jax.random.normal(keys[1], (C_out, C_in, 3, 3), jnp.float32),
        "bn1": bn_params(keys[2]),
        "w2": 0.1 * jax.random.normal(keys[3], (C_out, C_out, 3, 3), jnp.float32),
        "bn2": bn_params(keys[4]),
        "w_d": 0.1 * jax.random.normal(keys[5], (C_out, C_in, 1, 1), jnp.float32),
        "bn_d": bn_params(keys[6]),
    }

    # --- default config: stride 1, identity skip -----------------------------
    fwd = jax.jit(functools.partial(basic_block_forward, downsample=False))
    out = jax.block_until_ready(fwd(x, params))
    ref = _ref_forward(x, params, downsample=False)
    assert out.shape == ref.shape == (N, C_out, H, W)
    # bf16 conv operands with f32 accumulation: loosened tolerance vs f32 ref.
    assert jnp.allclose(out, ref, atol=5e-2, rtol=5e-2), "mismatch (no downsample)"

    # --- downsample config: stride 2, 1x1-conv skip ---------------------------
    fwd_ds = jax.jit(functools.partial(basic_block_forward, downsample=True))
    out_ds = jax.block_until_ready(fwd_ds(x, params))
    ref_ds = _ref_forward(x, params, downsample=True)
    assert out_ds.shape == ref_ds.shape == (N, C_out, H // 2, W // 2)
    assert jnp.allclose(out_ds, ref_ds, atol=5e-2, rtol=5e-2), "mismatch (downsample)"

    print("KERNEL_OK")
</pallas_src>

<mosaic_0001>
module attributes {stable_mosaic.version = 11 : i64} {
  func.func @kernel(%arg0: i32, %arg1: i32, %arg2: memref<1x18x18x16xbf16, #tpu.memory_space<vmem>>, %arg3: memref<9x16x16xbf16, #tpu.memory_space<vmem>>, %arg4: memref<1x16xf32, #tpu.memory_space<vmem>>, %arg5: memref<1x16xf32, #tpu.memory_space<vmem>>, %arg6: memref<1x16x16x16xbf16, #tpu.memory_space<vmem>>, %arg7: memref<256x16xf32, #tpu.memory_space<vmem>>) attributes {dimension_semantics = [#tpu.dimension_semantics<parallel>, #tpu.dimension_semantics<parallel>], iteration_bounds = array<i64: 2, 1>, scalar_prefetch = 0 : i64, scratch_operands = 1 : i64, tpu.core_type = #tpu.core_type<tc>, window_params = [{transform_indices = @transform_0, window_bounds = array<i64: 1, 18, 18, 16>}, {transform_indices = @transform_1, window_bounds = array<i64: 9, 16, 16>}, {transform_indices = @transform_2, window_bounds = array<i64: 1, 16>}, {transform_indices = @transform_3, window_bounds = array<i64: 1, 16>}, {transform_indices = @transform_4, window_bounds = array<i64: 1, 16, 16, 16>}]} {
    %c0 = arith.constant 0 : index
    %c0_0 = arith.constant 0 : index
    %c0_1 = arith.constant 0 : index
    %c0_2 = arith.constant 0 : index
    %0 = vector.load %arg2[%c0, %c0_0, %c0_1, %c0_2] : memref<1x18x18x16xbf16, #tpu.memory_space<vmem>>, vector<1x16x16x16xbf16>
    %1 = vector.shape_cast %0 : vector<1x16x16x16xbf16> to vector<16x16x16xbf16>
    %2 = vector.shape_cast %1 : vector<16x16x16xbf16> to vector<256x16xbf16>
    %c0_3 = arith.constant 0 : index
    %c0_4 = arith.constant 0 : index
    %c0_5 = arith.constant 0 : index
    %3 = vector.load %arg3[%c0_3, %c0_4, %c0_5] : memref<9x16x16xbf16, #tpu.memory_space<vmem>>, vector<1x16x16xbf16>
    %4 = vector.shape_cast %3 : vector<1x16x16xbf16> to vector<16x16xbf16>
    %cst = arith.constant dense<0.000000e+00> : vector<256x16xf32>
    %5 = tpu.matmul %2, %4, %cst {dimension_numbers = #tpu.dot_dimension_numbers<[1], [0], [0], [1], [0, 0, 1, 1], [], []>} : vector<256x16xbf16>, vector<16x16xbf16>, vector<256x16xf32> -> vector<256x16xf32>
    %c0_6 = arith.constant 0 : index
    %c0_7 = arith.constant 0 : index
    %6 = vector.load %arg7[%c0_6, %c0_7] : memref<256x16xf32, #tpu.memory_space<vmem>>, vector<256x16xf32>
    tpu.vector_store %arg7[%c0_6, %c0_7], %5 {strides = array<i32>} : memref<256x16xf32, #tpu.memory_space<vmem>>, vector<256x16xf32>,
    %c0_8 = arith.constant 0 : index
    %c0_9 = arith.constant 0 : index
    %c1 = arith.constant 1 : index
    %c0_10 = arith.constant 0 : index
    %7 = vector.load %arg2[%c0_8, %c0_9, %c1, %c0_10] : memref<1x18x18x16xbf16, #tpu.memory_space<vmem>>, vector<1x16x16x16xbf16>
    %8 = vector.shape_cast %7 : vector<1x16x16x16xbf16> to vector<16x16x16xbf16>
    %9 = vector.shape_cast %8 : vector<16x16x16xbf16> to vector<256x16xbf16>
    %c1_11 = arith.constant 1 : index
    %c0_12 = arith.constant 0 : index
    %c0_13 = arith.constant 0 : index
    %10 = vector.load %arg3[%c1_11, %c0_12, %c0_13] : memref<9x16x16xbf16, #tpu.memory_space<vmem>>, vector<1x16x16xbf16>
    %11 = vector.shape_cast %10 : vector<1x16x16xbf16> to vector<16x16xbf16>
    %cst_14 = arith.constant dense<0.000000e+00> : vector<256x16xf32>
    %12 = tpu.matmul %9, %11, %cst_14 {dimension_numbers = #tpu.dot_dimension_numbers<[1], [0], [0], [1], [0, 0, 1, 1], [], []>} : vector<256x16xbf16>, vector<16x16xbf16>, vector<256x16xf32> -> vector<256x16xf32>
    %c0_15 = arith.constant 0 : index
    %c0_16 = arith.constant 0 : index
    %13 = vector.load %arg7[%c0_15, %c0_16] : memref<256x16xf32, #tpu.memory_space<vmem>>, vector<256x16xf32>
    %14 = arith.addf %13, %12 : vector<256x16xf32>
    %c0_17 = arith.constant 0 : index
    %c0_18 = arith.constant 0 : index
    %15 = vector.load %arg7[%c0_17, %c0_18] : memref<256x16xf32, #tpu.memory_space<vmem>>, vector<256x16xf32>
    tpu.vector_store %arg7[%c0_17, %c0_18], %14 {strides = array<i32>} : memref<256x16xf32, #tpu.memory_space<vmem>>, vector<256x16xf32>,
    %c0_19 = arith.constant 0 : index
    %c0_20 = arith.constant 0 : index
    %c2 = arith.constant 2 : index
    %c0_21 = arith.constant 0 : index
    %16 = vector.load %arg2[%c0_19, %c0_20, %c2, %c0_21] : memref<1x18x18x16xbf16, #tpu.memory_space<vmem>>, vector<1x16x16x16xbf16>
    %17 = vector.shape_cast %16 : vector<1x16x16x16xbf16> to vector<16x16x16xbf16>
    %18 = vector.shape_cast %17 : vector<16x16x16xbf16> to vector<256x16xbf16>
    %c2_22 = arith.constant 2 : index
    %c0_23 = arith.constant 0 : index
    %c0_24 = arith.constant 0 : index
    %19 = vector.load %arg3[%c2_22, %c0_23, %c0_24] : memref<9x16x16xbf16, #tpu.memory_space<vmem>>, vector<1x16x16xbf16>
    %20 = vector.shape_cast %19 : vector<1x16x16xbf16> to vector<16x16xbf16>
    %cst_25 = arith.constant dense<0.000000e+00> : vector<256x16xf32>
    %21 = tpu.matmul %18, %20, %cst_25 {dimension_numbers = #tpu.dot_dimension_numbers<[1], [0], [0], [1], [0, 0, 1, 1], [], []>} : vector<256x16xbf16>, vector<16x16xbf16>, vector<256x16xf32> -> vector<256x16xf32>
    %c0_26 = arith.constant 0 : index
    %c0_27 = arith.constant 0 : index
    %22 = vector.load %arg7[%c0_26, %c0_27] : memref<256x16xf32, #tpu.memory_space<vmem>>, vector<256x16xf32>
    %23 = arith.addf %22, %21 : vector<256x16xf32>
    %c0_28 = arith.constant 0 : index
    %c0_29 = arith.constant 0 : index
    %24 = vector.load %arg7[%c0_28, %c0_29] : memref<256x16xf32, #tpu.memory_space<vmem>>, vector<256x16xf32>
    tpu.vector_store %arg7[%c0_28, %c0_29], %23 {strides = array<i32>} : memref<256x16xf32, #tpu.memory_space<vmem>>, vector<256x16xf32>,
    %c0_30 = arith.constant 0 : index
    %c1_31 = arith.constant 1 : index
    %c0_32 = arith.constant 0 : index
    %c0_33 = arith.constant 0 : index
    %25 = vector.load %arg2[%c0_30, %c1_31, %c0_32, %c0_33] : memref<1x18x18x16xbf16, #tpu.memory_space<vmem>>, vector<1x16x16x16xbf16>
    %26 = vector.shape_cast %25 : vector<1x16x16x16xbf16> to vector<16x16x16xbf16>
    %27 = vector.shape_cast %26 : vector<16x16x16xbf16> to vector<256x16xbf16>
    %c3 = arith.constant 3 : index
    %c0_34 = arith.constant 0 : index
    %c0_35 = arith.constant 0 : index
    %28 = vector.load %arg3[%c3, %c0_34, %c0_35] : memref<9x16x16xbf16, #tpu.memory_space<vmem>>, vector<1x16x16xbf16>
    %29 = vector.shape_cast %28 : vector<1x16x16xbf16> to vector<16x16xbf16>
    %cst_36 = arith.constant dense<0.000000e+00> : vector<256x16xf32>
    %30 = tpu.matmul %27, %29, %cst_36 {dimension_numbers = #tpu.dot_dimension_numbers<[1], [0], [0], [1], [0, 0, 1, 1], [], []>} : vector<256x16xbf16>, vector<16x16xbf16>, vector<256x16xf32> -> vector<256x16xf32>
    %c0_37 = arith.constant 0 : index
    %c0_38 = arith.constant 0 : index
    %31 = vector.load %arg7[%c0_37, %c0_38] : memref<256x16xf32, #tpu.memory_space<vmem>>, vector<256x16xf32>
    %32 = arith.addf %31, %30 : vector<256x16xf32>
    %c0_39 = arith.constant 0 : index
    %c0_40 = arith.constant 0 : index
    %33 = vector.load %arg7[%c0_39, %c0_40] : memref<256x16xf32, #tpu.memory_space<vmem>>, vector<256x16xf32>
    tpu.vector_store %arg7[%c0_39, %c0_40], %32 {strides = array<i32>} : memref<256x16xf32, #tpu.memory_space<vmem>>, vector<256x16xf32>,
    %c0_41 = arith.constant 0 : index
    %c1_42 = arith.constant 1 : index
    %c1_43 = arith.constant 1 : index
    %c0_44 = arith.constant 0 : index
    %34 = vector.load %arg2[%c0_41, %c1_42, %c1_43, %c0_44] : memref<1x18x18x16xbf16, #tpu.memory_space<vmem>>, vector<1x16x16x16xbf16>
    %35 = vector.shape_cast %34 : vector<1x16x16x16xbf16> to vector<16x16x16xbf16>
    %36 = vector.shape_cast %35 : vector<16x16x16xbf16> to vector<256x16xbf16>
    %c4 = arith.constant 4 : index
    %c0_45 = arith.constant 0 : index
    %c0_46 = arith.constant 0 : index
    %37 = vector.load %arg3[%c4, %c0_45, %c0_46] : memref<9x16x16xbf16, #tpu.memory_space<vmem>>, vector<1x16x16xbf16>
    %38 = vector.shape_cast %37 : vector<1x16x16xbf16> to vector<16x16xbf16>
    %cst_47 = arith.constant dense<0.000000e+00> : vector<256x16xf32>
    %39 = tpu.matmul %36, %38, %cst_47 {dimension_numbers = #tpu.dot_dimension_numbers<[1], [0], [0], [1], [0, 0, 1, 1], [], []>} : vector<256x16xbf16>, vector<16x16xbf16>, vector<256x16xf32> -> vector<256x16xf32>
    %c0_48 = arith.constant 0 : index
    %c0_49 = arith.constant 0 : index
    %40 = vector.load %arg7[%c0_48, %c0_49] : memref<256x16xf32, #tpu.memory_space<vmem>>, vector<256x16xf32>
    %41 = arith.addf %40, %39 : vector<256x16xf32>
    %c0_50 = arith.constant 0 : index
    %c0_51 = arith.constant 0 : index
    %42 = vector.load %arg7[%c0_50, %c0_51] : memref<256x16xf32, #tpu.memory_space<vmem>>, vector<256x16xf32>
    tpu.vector_store %arg7[%c0_50, %c0_51], %41 {strides = array<i32>} : memref<256x16xf32, #tpu.memory_space<vmem>>, vector<256x16xf32>,
    %c0_52 = arith.constant 0 : index
    %c1_53 = arith.constant 1 : index
    %c2_54 = arith.constant 2 : index
    %c0_55 = arith.constant 0 : index
    %43 = vector.load %arg2[%c0_52, %c1_53, %c2_54, %c0_55] : memref<1x18x18x16xbf16, #tpu.memory_space<vmem>>, vector<1x16x16x16xbf16>
    %44 = vector.shape_cast %43 : vector<1x16x16x16xbf16> to vector<16x16x16xbf16>
    %45 = vector.shape_cast %44 : vector<16x16x16xbf16> to vector<256x16xbf16>
    %c5 = arith.constant 5 : index
    %c0_56 = arith.constant 0 : index
    %c0_57 = arith.constant 0 : index
    %46 = vector.load %arg3[%c5, %c0_56, %c0_57] : memref<9x16x16xbf16, #tpu.memory_space<vmem>>, vector<1x16x16xbf16>
    %47 = vector.shape_cast %46 : vector<1x16x16xbf16> to vector<16x16xbf16>
    %cst_58 = arith.constant dense<0.000000e+00> : vector<256x16xf32>
    %48 = tpu.matmul %45, %47, %cst_58 {dimension_numbers = #tpu.dot_dimension_numbers<[1], [0], [0], [1], [0, 0, 1, 1], [], []>} : vector<256x16xbf16>, vector<16x16xbf16>, vector<256x16xf32> -> vector<256x16xf32>
    %c0_59 = arith.constant 0 : index
    %c0_60 = arith.constant 0 : index
    %49 = vector.load %arg7[%c0_59, %c0_60] : memref<256x16xf32, #tpu.memory_space<vmem>>, vector<256x16xf32>
    %50 = arith.addf %49, %48 : vector<256x16xf32>
    %c0_61 = arith.constant 0 : index
    %c0_62 = arith.constant 0 : index
    %51 = vector.load %arg7[%c0_61, %c0_62] : memref<256x16xf32, #tpu.memory_space<vmem>>, vector<256x16xf32>
    tpu.vector_store %arg7[%c0_61, %c0_62], %50 {strides = array<i32>} : memref<256x16xf32, #tpu.memory_space<vmem>>, vector<256x16xf32>,
    %c0_63 = arith.constant 0 : index
    %c2_64 = arith.constant 2 : index
    %c0_65 = arith.constant 0 : index
    %c0_66 = arith.constant 0 : index
    %52 = vector.load %arg2[%c0_63, %c2_64, %c0_65, %c0_66] : memref<1x18x18x16xbf16, #tpu.memory_space<vmem>>, vector<1x16x16x16xbf16>
    %53 = vector.shape_cast %52 : vector<1x16x16x16xbf16> to vector<16x16x16xbf16>
    %54 = vector.shape_cast %53 : vector<16x16x16xbf16> to vector<256x16xbf16>
    %c6 = arith.constant 6 : index
    %c0_67 = arith.constant 0 : index
    %c0_68 = arith.constant 0 : index
    %55 = vector.load %arg3[%c6, %c0_67, %c0_68] : memref<9x16x16xbf16, #tpu.memory_space<vmem>>, vector<1x16x16xbf16>
    %56 = vector.shape_cast %55 : vector<1x16x16xbf16> to vector<16x16xbf16>
    %cst_69 = arith.constant dense<0.000000e+00> : vector<256x16xf32>
    %57 = tpu.matmul %54, %56, %cst_69 {dimension_numbers = #tpu.dot_dimension_numbers<[1], [0], [0], [1], [0, 0, 1, 1], [], []>} : vector<256x16xbf16>, vector<16x16xbf16>, vector<256x16xf32> -> vector<256x16xf32>
    %c0_70 = arith.constant 0 : index
    %c0_71 = arith.constant 0 : index
    %58 = vector.load %arg7[%c0_70, %c0_71] : memref<256x16xf32, #tpu.memory_space<vmem>>, vector<256x16xf32>
    %59 = arith.addf %58, %57 : vector<256x16xf32>
    %c0_72 = arith.constant 0 : index
    %c0_73 = arith.constant 0 : index
    %60 = vector.load %arg7[%c0_72, %c0_73] : memref<256x16xf32, #tpu.memory_space<vmem>>, vector<256x16xf32>
    tpu.vector_store %arg7[%c0_72, %c0_73], %59 {strides = array<i32>} : memref<256x16xf32, #tpu.memory_space<vmem>>, vector<256x16xf32>,
    %c0_74 = arith.constant 0 : index
    %c2_75 = arith.constant 2 : index
    %c1_76 = arith.constant 1 : index
    %c0_77 = arith.constant 0 : index
    %61 = vector.load %arg2[%c0_74, %c2_75, %c1_76, %c0_77] : memref<1x18x18x16xbf16, #tpu.memory_space<vmem>>, vector<1x16x16x16xbf16>
    %62 = vector.shape_cast %61 : vector<1x16x16x16xbf16> to vector<16x16x16xbf16>
    %63 = vector.shape_cast %62 : vector<16x16x16xbf16> to vector<256x16xbf16>
    %c7 = arith.constant 7 : index
    %c0_78 = arith.constant 0 : index
    %c0_79 = arith.constant 0 : index
    %64 = vector.load %arg3[%c7, %c0_78, %c0_79] : memref<9x16x16xbf16, #tpu.memory_space<vmem>>, vector<1x16x16xbf16>
    %65 = vector.shape_cast %64 : vector<1x16x16xbf16> to vector<16x16xbf16>
    %cst_80 = arith.constant dense<0.000000e+00> : vector<256x16xf32>
    %66 = tpu.matmul %63, %65, %cst_80 {dimension_numbers = #tpu.dot_dimension_numbers<[1], [0], [0], [1], [0, 0, 1, 1], [], []>} : vector<256x16xbf16>, vector<16x16xbf16>, vector<256x16xf32> -> vector<256x16xf32>
    %c0_81 = arith.constant 0 : index
    %c0_82 = arith.constant 0 : index
    %67 = vector.load %arg7[%c0_81, %c0_82] : memref<256x16xf32, #tpu.memory_space<vmem>>, vector<256x16xf32>
    %68 = arith.addf %67, %66 : vector<256x16xf32>
    %c0_83 = arith.constant 0 : index
    %c0_84 = arith.constant 0 : index
    %69 = vector.load %arg7[%c0_83, %c0_84] : memref<256x16xf32, #tpu.memory_space<vmem>>, vector<256x16xf32>
    tpu.vector_store %arg7[%c0_83, %c0_84], %68 {strides = array<i32>} : memref<256x16xf32, #tpu.memory_space<vmem>>, vector<256x16xf32>,
    %c0_85 = arith.constant 0 : index
    %c2_86 = arith.constant 2 : index
    %c2_87 = arith.constant 2 : index
    %c0_88 = arith.constant 0 : index
    %70 = vector.load %arg2[%c0_85, %c2_86, %c2_87, %c0_88] : memref<1x18x18x16xbf16, #tpu.memory_space<vmem>>, vector<1x16x16x16xbf16>
    %71 = vector.shape_cast %70 : vector<1x16x16x16xbf16> to vector<16x16x16xbf16>
    %72 = vector.shape_cast %71 : vector<16x16x16xbf16> to vector<256x16xbf16>
    %c8 = arith.constant 8 : index
    %c0_89 = arith.constant 0 : index
    %c0_90 = arith.constant 0 : index
    %73 = vector.load %arg3[%c8, %c0_89, %c0_90] : memref<9x16x16xbf16, #tpu.memory_space<vmem>>, vector<1x16x16xbf16>
    %74 = vector.shape_cast %73 : vector<1x16x16xbf16> to vector<16x16xbf16>
    %cst_91 = arith.constant dense<0.000000e+00> : vector<256x16xf32>
    %75 = tpu.matmul %72, %74, %cst_91 {dimension_numbers = #tpu.dot_dimension_numbers<[1], [0], [0], [1], [0, 0, 1, 1], [], []>} : vector<256x16xbf16>, vector<16x16xbf16>, vector<256x16xf32> -> vector<256x16xf32>
    %c0_92 = arith.constant 0 : index
    %c0_93 = arith.constant 0 : index
    %76 = vector.load %arg7[%c0_92, %c0_93] : memref<256x16xf32, #tpu.memory_space<vmem>>, vector<256x16xf32>
    %77 = arith.addf %76, %75 : vector<256x16xf32>
    %c0_94 = arith.constant 0 : index
    %c0_95 = arith.constant 0 : index
    %78 = vector.load %arg7[%c0_94, %c0_95] : memref<256x16xf32, #tpu.memory_space<vmem>>, vector<256x16xf32>
    tpu.vector_store %arg7[%c0_94, %c0_95], %77 {strides = array<i32>} : memref<256x16xf32, #tpu.memory_space<vmem>>, vector<256x16xf32>,
    %c0_96 = arith.constant 0 : index
    %c0_97 = arith.constant 0 : index
    %79 = vector.load %arg7[%c0_96, %c0_97] : memref<256x16xf32, #tpu.memory_space<vmem>>, vector<256x16xf32>
    %c0_98 = arith.constant 0 : index
    %c0_99 = arith.constant 0 : index
    %80 = vector.load %arg4[%c0_98, %c0_99] : memref<1x16xf32, #tpu.memory_space<vmem>>, vector<1x16xf32>
    %81 = vector.broadcast %80 : vector<1x16xf32> to vector<256x16xf32>
    %82 = arith.mulf %79, %81 : vector<256x16xf32>
    %c0_100 = arith.constant 0 : index
    %c0_101 = arith.constant 0 : index
    %83 = vector.load %arg5[%c0_100, %c0_101] : memref<1x16xf32, #tpu.memory_space<vmem>>, vector<1x16xf32>
    %84 = vector.broadcast %83 : vector<1x16xf32> to vector<256x16xf32>
    %85 = arith.addf %82, %84 : vector<256x16xf32>
    %86 = vector.shape_cast %85 : vector<256x16xf32> to vector<16x16x16xf32>
    %cst_102 = arith.constant 0.000000e+00 : f32
    %87 = vector.broadcast %cst_102 : f32 to vector<16x16x16xf32>
    %88 = arith.maximumf %86, %87 : vector<16x16x16xf32>
    %89 = arith.truncf %88 : vector<16x16x16xf32> to vector<16x16x16xbf16>
    %c0_103 = arith.constant 0 : index
    %c0_104 = arith.constant 0 : index
    %c0_105 = arith.constant 0 : index
    %c0_106 = arith.constant 0 : index
    %90 = vector.load %arg6[%c0_103, %c0_104, %c0_105, %c0_106] : memref<1x16x16x16xbf16, #tpu.memory_space<vmem>>, vector<1x16x16x16xbf16>
    %91 = vector.shape_cast %90 : vector<1x16x16x16xbf16> to vector<16x16x16xbf16>
    %92 = vector.shape_cast %89 : vector<16x16x16xbf16> to vector<1x16x16x16xbf16>
    tpu.vector_store %arg6[%c0_103, %c0_104, %c0_105, %c0_106], %92 {strides = array<i32>} : memref<1x16x16x16xbf16, #tpu.memory_space<vmem>>, vector<1x16x16x16xbf16>,
    return
  }
  func.func @transform_0(%arg0: i32, %arg1: i32) -> (i32, i32, i32, i32) {
    %c0_i32 = arith.constant 0 : i32
    %c0_i32_0 = arith.constant 0 : i32
    %c0_i32_1 = arith.constant 0 : i32
    %c0_i32_2 = arith.constant 0 : i32
    return %arg0, %c0_i32, %c0_i32_0, %c0_i32_1 : i32, i32, i32, i32
  }
  func.func @transform_1(%arg0: i32, %arg1: i32) -> (i32, i32, i32) {
    %c0_i32 = arith.constant 0 : i32
    %c0_i32_0 = arith.constant 0 : i32
    %c0_i32_1 = arith.constant 0 : i32
    return %c0_i32, %c0_i32_0, %arg1 : i32, i32, i32
  }
  func.func @transform_2(%arg0: i32, %arg1: i32) -> (i32, i32) {
    %c0_i32 = arith.constant 0 : i32
    %c0_i32_0 = arith.constant 0 : i32
    return %c0_i32, %arg1 : i32, i32
  }
  func.func @transform_3(%arg0: i32, %arg1: i32) -> (i32, i32) {
    %c0_i32 = arith.constant 0 : i32
    %c0_i32_0 = arith.constant 0 : i32
    return %c0_i32, %arg1 : i32, i32
  }
  func.func @transform_4(%arg0: i32, %arg1: i32) -> (i32, i32, i32, i32) {
    %c0_i32 = arith.constant 0 : i32
    %c0_i32_0 = arith.constant 0 : i32
    %c0_i32_1 = arith.constant 0 : i32
    return %arg0, %c0_i32, %c0_i32_0, %arg1 : i32, i32, i32, i32
  }
}

module attributes {stable_mosaic.version = 11 : i64} {
  func.func @kernel(%arg0: i32, %arg1: i32, %arg2: memref<1x18x18x16xbf16, #tpu.memory_space<vmem>>, %arg3: memref<9x16x16xbf16, #tpu.memory_space<vmem>>, %arg4: memref<1x16xf32, #tpu.memory_space<vmem>>, %arg5: memref<1x16xf32, #tpu.memory_space<vmem>>, %arg6: memref<1x16x16x16xf32, #tpu.memory_space<vmem>>, %arg7: memref<1x16x16x16xf32, #tpu.memory_space<vmem>>, %arg8: memref<256x16xf32, #tpu.memory_space<vmem>>) attributes {dimension_semantics = [#tpu.dimension_semantics<parallel>, #tpu.dimension_semantics<parallel>], iteration_bounds = array<i64: 2, 1>, scalar_prefetch = 0 : i64, scratch_operands = 1 : i64, tpu.core_type = #tpu.core_type<tc>, window_params = [{transform_indices = @transform_0, window_bounds = array<i64: 1, 18, 18, 16>}, {transform_indices = @transform_1, window_bounds = array<i64: 9, 16, 16>}, {transform_indices = @transform_2, window_bounds = array<i64: 1, 16>}, {transform_indices = @transform_3, window_bounds = array<i64: 1, 16>}, {transform_indices = @transform_4, window_bounds = array<i64: 1, 16, 16, 16>}, {transform_indices = @transform_5, window_bounds = array<i64: 1, 16, 16, 16>}]} {
    %c0 = arith.constant 0 : index
    %c0_0 = arith.constant 0 : index
    %c0_1 = arith.constant 0 : index
    %c0_2 = arith.constant 0 : index
    %0 = vector.load %arg2[%c0, %c0_0, %c0_1, %c0_2] : memref<1x18x18x16xbf16, #tpu.memory_space<vmem>>, vector<1x16x16x16xbf16>
    %1 = vector.shape_cast %0 : vector<1x16x16x16xbf16> to vector<16x16x16xbf16>
    %2 = vector.shape_cast %1 : vector<16x16x16xbf16> to vector<256x16xbf16>
    %c0_3 = arith.constant 0 : index
    %c0_4 = arith.constant 0 : index
    %c0_5 = arith.constant 0 : index
    %3 = vector.load %arg3[%c0_3, %c0_4, %c0_5] : memref<9x16x16xbf16, #tpu.memory_space<vmem>>, vector<1x16x16xbf16>
    %4 = vector.shape_cast %3 : vector<1x16x16xbf16> to vector<16x16xbf16>
    %cst = arith.constant dense<0.000000e+00> : vector<256x16xf32>
    %5 = tpu.matmul %2, %4, %cst {dimension_numbers = #tpu.dot_dimension_numbers<[1], [0], [0], [1], [0, 0, 1, 1], [], []>} : vector<256x16xbf16>, vector<16x16xbf16>, vector<256x16xf32> -> vector<256x16xf32>
    %c0_6 = arith.constant 0 : index
    %c0_7 = arith.constant 0 : index
    %6 = vector.load %arg8[%c0_6, %c0_7] : memref<256x16xf32, #tpu.memory_space<vmem>>, vector<256x16xf32>
    tpu.vector_store %arg8[%c0_6, %c0_7], %5 {strides = array<i32>} : memref<256x16xf32, #tpu.memory_space<vmem>>, vector<256x16xf32>,
    %c0_8 = arith.constant 0 : index
    %c0_9 = arith.constant 0 : index
    %c1 = arith.constant 1 : index
    %c0_10 = arith.constant 0 : index
    %7 = vector.load %arg2[%c0_8, %c0_9, %c1, %c0_10] : memref<1x18x18x16xbf16, #tpu.memory_space<vmem>>, vector<1x16x16x16xbf16>
    %8 = vector.shape_cast %7 : vector<1x16x16x16xbf16> to vector<16x16x16xbf16>
    %9 = vector.shape_cast %8 : vector<16x16x16xbf16> to vector<256x16xbf16>
    %c1_11 = arith.constant 1 : index
    %c0_12 = arith.constant 0 : index
    %c0_13 = arith.constant 0 : index
    %10 = vector.load %arg3[%c1_11, %c0_12, %c0_13] : memref<9x16x16xbf16, #tpu.memory_space<vmem>>, vector<1x16x16xbf16>
    %11 = vector.shape_cast %10 : vector<1x16x16xbf16> to vector<16x16xbf16>
    %cst_14 = arith.constant dense<0.000000e+00> : vector<256x16xf32>
    %12 = tpu.matmul %9, %11, %cst_14 {dimension_numbers = #tpu.dot_dimension_numbers<[1], [0], [0], [1], [0, 0, 1, 1], [], []>} : vector<256x16xbf16>, vector<16x16xbf16>, vector<256x16xf32> -> vector<256x16xf32>
    %c0_15 = arith.constant 0 : index
    %c0_16 = arith.constant 0 : index
    %13 = vector.load %arg8[%c0_15, %c0_16] : memref<256x16xf32, #tpu.memory_space<vmem>>, vector<256x16xf32>
    %14 = arith.addf %13, %12 : vector<256x16xf32>
    %c0_17 = arith.constant 0 : index
    %c0_18 = arith.constant 0 : index
    %15 = vector.load %arg8[%c0_17, %c0_18] : memref<256x16xf32, #tpu.memory_space<vmem>>, vector<256x16xf32>
    tpu.vector_store %arg8[%c0_17, %c0_18], %14 {strides = array<i32>} : memref<256x16xf32, #tpu.memory_space<vmem>>, vector<256x16xf32>,
    %c0_19 = arith.constant 0 : index
    %c0_20 = arith.constant 0 : index
    %c2 = arith.constant 2 : index
    %c0_21 = arith.constant 0 : index
    %16 = vector.load %arg2[%c0_19, %c0_20, %c2, %c0_21] : memref<1x18x18x16xbf16, #tpu.memory_space<vmem>>, vector<1x16x16x16xbf16>
    %17 = vector.shape_cast %16 : vector<1x16x16x16xbf16> to vector<16x16x16xbf16>
    %18 = vector.shape_cast %17 : vector<16x16x16xbf16> to vector<256x16xbf16>
    %c2_22 = arith.constant 2 : index
    %c0_23 = arith.constant 0 : index
    %c0_24 = arith.constant 0 : index
    %19 = vector.load %arg3[%c2_22, %c0_23, %c0_24] : memref<9x16x16xbf16, #tpu.memory_space<vmem>>, vector<1x16x16xbf16>
    %20 = vector.shape_cast %19 : vector<1x16x16xbf16> to vector<16x16xbf16>
    %cst_25 = arith.constant dense<0.000000e+00> : vector<256x16xf32>
    %21 = tpu.matmul %18, %20, %cst_25 {dimension_numbers = #tpu.dot_dimension_numbers<[1], [0], [0], [1], [0, 0, 1, 1], [], []>} : vector<256x16xbf16>, vector<16x16xbf16>, vector<256x16xf32> -> vector<256x16xf32>
    %c0_26 = arith.constant 0 : index
    %c0_27 = arith.constant 0 : index
    %22 = vector.load %arg8[%c0_26, %c0_27] : memref<256x16xf32, #tpu.memory_space<vmem>>, vector<256x16xf32>
    %23 = arith.addf %22, %21 : vector<256x16xf32>
    %c0_28 = arith.constant 0 : index
    %c0_29 = arith.constant 0 : index
    %24 = vector.load %arg8[%c0_28, %c0_29] : memref<256x16xf32, #tpu.memory_space<vmem>>, vector<256x16xf32>
    tpu.vector_store %arg8[%c0_28, %c0_29], %23 {strides = array<i32>} : memref<256x16xf32, #tpu.memory_space<vmem>>, vector<256x16xf32>,
    %c0_30 = arith.constant 0 : index
    %c1_31 = arith.constant 1 : index
    %c0_32 = arith.constant 0 : index
    %c0_33 = arith.constant 0 : index
    %25 = vector.load %arg2[%c0_30, %c1_31, %c0_32, %c0_33] : memref<1x18x18x16xbf16, #tpu.memory_space<vmem>>, vector<1x16x16x16xbf16>
    %26 = vector.shape_cast %25 : vector<1x16x16x16xbf16> to vector<16x16x16xbf16>
    %27 = vector.shape_cast %26 : vector<16x16x16xbf16> to vector<256x16xbf16>
    %c3 = arith.constant 3 : index
    %c0_34 = arith.constant 0 : index
    %c0_35 = arith.constant 0 : index
    %28 = vector.load %arg3[%c3, %c0_34, %c0_35] : memref<9x16x16xbf16, #tpu.memory_space<vmem>>, vector<1x16x16xbf16>
    %29 = vector.shape_cast %28 : vector<1x16x16xbf16> to vector<16x16xbf16>
    %cst_36 = arith.constant dense<0.000000e+00> : vector<256x16xf32>
    %30 = tpu.matmul %27, %29, %cst_36 {dimension_numbers = #tpu.dot_dimension_numbers<[1], [0], [0], [1], [0, 0, 1, 1], [], []>} : vector<256x16xbf16>, vector<16x16xbf16>, vector<256x16xf32> -> vector<256x16xf32>
    %c0_37 = arith.constant 0 : index
    %c0_38 = arith.constant 0 : index
    %31 = vector.load %arg8[%c0_37, %c0_38] : memref<256x16xf32, #tpu.memory_space<vmem>>, vector<256x16xf32>
    %32 = arith.addf %31, %30 : vector<256x16xf32>
    %c0_39 = arith.constant 0 : index
    %c0_40 = arith.constant 0 : index
    %33 = vector.load %arg8[%c0_39, %c0_40] : memref<256x16xf32, #tpu.memory_space<vmem>>, vector<256x16xf32>
    tpu.vector_store %arg8[%c0_39, %c0_40], %32 {strides = array<i32>} : memref<256x16xf32, #tpu.memory_space<vmem>>, vector<256x16xf32>,
    %c0_41 = arith.constant 0 : index
    %c1_42 = arith.constant 1 : index
    %c1_43 = arith.constant 1 : index
    %c0_44 = arith.constant 0 : index
    %34 = vector.load %arg2[%c0_41, %c1_42, %c1_43, %c0_44] : memref<1x18x18x16xbf16, #tpu.memory_space<vmem>>, vector<1x16x16x16xbf16>
    %35 = vector.shape_cast %34 : vector<1x16x16x16xbf16> to vector<16x16x16xbf16>
    %36 = vector.shape_cast %35 : vector<16x16x16xbf16> to vector<256x16xbf16>
    %c4 = arith.constant 4 : index
    %c0_45 = arith.constant 0 : index
    %c0_46 = arith.constant 0 : index
    %37 = vector.load %arg3[%c4, %c0_45, %c0_46] : memref<9x16x16xbf16, #tpu.memory_space<vmem>>, vector<1x16x16xbf16>
    %38 = vector.shape_cast %37 : vector<1x16x16xbf16> to vector<16x16xbf16>
    %cst_47 = arith.constant dense<0.000000e+00> : vector<256x16xf32>
    %39 = tpu.matmul %36, %38, %cst_47 {dimension_numbers = #tpu.dot_dimension_numbers<[1], [0], [0], [1], [0, 0, 1, 1], [], []>} : vector<256x16xbf16>, vector<16x16xbf16>, vector<256x16xf32> -> vector<256x16xf32>
    %c0_48 = arith.constant 0 : index
    %c0_49 = arith.constant 0 : index
    %40 = vector.load %arg8[%c0_48, %c0_49] : memref<256x16xf32, #tpu.memory_space<vmem>>, vector<256x16xf32>
    %41 = arith.addf %40, %39 : vector<256x16xf32>
    %c0_50 = arith.constant 0 : index
    %c0_51 = arith.constant 0 : index
    %42 = vector.load %arg8[%c0_50, %c0_51] : memref<256x16xf32, #tpu.memory_space<vmem>>, vector<256x16xf32>
    tpu.vector_store %arg8[%c0_50, %c0_51], %41 {strides = array<i32>} : memref<256x16xf32, #tpu.memory_space<vmem>>, vector<256x16xf32>,
    %c0_52 = arith.constant 0 : index
    %c1_53 = arith.constant 1 : index
    %c2_54 = arith.constant 2 : index
    %c0_55 = arith.constant 0 : index
    %43 = vector.load %arg2[%c0_52, %c1_53, %c2_54, %c0_55] : memref<1x18x18x16xbf16, #tpu.memory_space<vmem>>, vector<1x16x16x16xbf16>
    %44 = vector.shape_cast %43 : vector<1x16x16x16xbf16> to vector<16x16x16xbf16>
    %45 = vector.shape_cast %44 : vector<16x16x16xbf16> to vector<256x16xbf16>
    %c5 = arith.constant 5 : index
    %c0_56 = arith.constant 0 : index
    %c0_57 = arith.constant 0 : index
    %46 = vector.load %arg3[%c5, %c0_56, %c0_57] : memref<9x16x16xbf16, #tpu.memory_space<vmem>>, vector<1x16x16xbf16>
    %47 = vector.shape_cast %46 : vector<1x16x16xbf16> to vector<16x16xbf16>
    %cst_58 = arith.constant dense<0.000000e+00> : vector<256x16xf32>
    %48 = tpu.matmul %45, %47, %cst_58 {dimension_numbers = #tpu.dot_dimension_numbers<[1], [0], [0], [1], [0, 0, 1, 1], [], []>} : vector<256x16xbf16>, vector<16x16xbf16>, vector<256x16xf32> -> vector<256x16xf32>
    %c0_59 = arith.constant 0 : index
    %c0_60 = arith.constant 0 : index
    %49 = vector.load %arg8[%c0_59, %c0_60] : memref<256x16xf32, #tpu.memory_space<vmem>>, vector<256x16xf32>
    %50 = arith.addf %49, %48 : vector<256x16xf32>
    %c0_61 = arith.constant 0 : index
    %c0_62 = arith.constant 0 : index
    %51 = vector.load %arg8[%c0_61, %c0_62] : memref<256x16xf32, #tpu.memory_space<vmem>>, vector<256x16xf32>
    tpu.vector_store %arg8[%c0_61, %c0_62], %50 {strides = array<i32>} : memref<256x16xf32, #tpu.memory_space<vmem>>, vector<256x16xf32>,
    %c0_63 = arith.constant 0 : index
    %c2_64 = arith.constant 2 : index
    %c0_65 = arith.constant 0 : index
    %c0_66 = arith.constant 0 : index
    %52 = vector.load %arg2[%c0_63, %c2_64, %c0_65, %c0_66] : memref<1x18x18x16xbf16, #tpu.memory_space<vmem>>, vector<1x16x16x16xbf16>
    %53 = vector.shape_cast %52 : vector<1x16x16x16xbf16> to vector<16x16x16xbf16>
    %54 = vector.shape_cast %53 : vector<16x16x16xbf16> to vector<256x16xbf16>
    %c6 = arith.constant 6 : index
    %c0_67 = arith.constant 0 : index
    %c0_68 = arith.constant 0 : index
    %55 = vector.load %arg3[%c6, %c0_67, %c0_68] : memref<9x16x16xbf16, #tpu.memory_space<vmem>>, vector<1x16x16xbf16>
    %56 = vector.shape_cast %55 : vector<1x16x16xbf16> to vector<16x16xbf16>
    %cst_69 = arith.constant dense<0.000000e+00> : vector<256x16xf32>
    %57 = tpu.matmul %54, %56, %cst_69 {dimension_numbers = #tpu.dot_dimension_numbers<[1], [0], [0], [1], [0, 0, 1, 1], [], []>} : vector<256x16xbf16>, vector<16x16xbf16>, vector<256x16xf32> -> vector<256x16xf32>
    %c0_70 = arith.constant 0 : index
    %c0_71 = arith.constant 0 : index
    %58 = vector.load %arg8[%c0_70, %c0_71] : memref<256x16xf32, #tpu.memory_space<vmem>>, vector<256x16xf32>
    %59 = arith.addf %58, %57 : vector<256x16xf32>
    %c0_72 = arith.constant 0 : index
    %c0_73 = arith.constant 0 : index
    %60 = vector.load %arg8[%c0_72, %c0_73] : memref<256x16xf32, #tpu.memory_space<vmem>>, vector<256x16xf32>
    tpu.vector_store %arg8[%c0_72, %c0_73], %59 {strides = array<i32>} : memref<256x16xf32, #tpu.memory_space<vmem>>, vector<256x16xf32>,
    %c0_74 = arith.constant 0 : index
    %c2_75 = arith.constant 2 : index
    %c1_76 = arith.constant 1 : index
    %c0_77 = arith.constant 0 : index
    %61 = vector.load %arg2[%c0_74, %c2_75, %c1_76, %c0_77] : memref<1x18x18x16xbf16, #tpu.memory_space<vmem>>, vector<1x16x16x16xbf16>
    %62 = vector.shape_cast %61 : vector<1x16x16x16xbf16> to vector<16x16x16xbf16>
    %63 = vector.shape_cast %62 : vector<16x16x16xbf16> to vector<256x16xbf16>
    %c7 = arith.constant 7 : index
    %c0_78 = arith.constant 0 : index
    %c0_79 = arith.constant 0 : index
    %64 = vector.load %arg3[%c7, %c0_78, %c0_79] : memref<9x16x16xbf16, #tpu.memory_space<vmem>>, vector<1x16x16xbf16>
    %65 = vector.shape_cast %64 : vector<1x16x16xbf16> to vector<16x16xbf16>
    %cst_80 = arith.constant dense<0.000000e+00> : vector<256x16xf32>
    %66 = tpu.matmul %63, %65, %cst_80 {dimension_numbers = #tpu.dot_dimension_numbers<[1], [0], [0], [1], [0, 0, 1, 1], [], []>} : vector<256x16xbf16>, vector<16x16xbf16>, vector<256x16xf32> -> vector<256x16xf32>
    %c0_81 = arith.constant 0 : index
    %c0_82 = arith.constant 0 : index
    %67 = vector.load %arg8[%c0_81, %c0_82] : memref<256x16xf32, #tpu.memory_space<vmem>>, vector<256x16xf32>
    %68 = arith.addf %67, %66 : vector<256x16xf32>
    %c0_83 = arith.constant 0 : index
    %c0_84 = arith.constant 0 : index
    %69 = vector.load %arg8[%c0_83, %c0_84] : memref<256x16xf32, #tpu.memory_space<vmem>>, vector<256x16xf32>
    tpu.vector_store %arg8[%c0_83, %c0_84], %68 {strides = array<i32>} : memref<256x16xf32, #tpu.memory_space<vmem>>, vector<256x16xf32>,
    %c0_85 = arith.constant 0 : index
    %c2_86 = arith.constant 2 : index
    %c2_87 = arith.constant 2 : index
    %c0_88 = arith.constant 0 : index
    %70 = vector.load %arg2[%c0_85, %c2_86, %c2_87, %c0_88] : memref<1x18x18x16xbf16, #tpu.memory_space<vmem>>, vector<1x16x16x16xbf16>
    %71 = vector.shape_cast %70 : vector<1x16x16x16xbf16> to vector<16x16x16xbf16>
    %72 = vector.shape_cast %71 : vector<16x16x16xbf16> to vector<256x16xbf16>
    %c8 = arith.constant 8 : index
    %c0_89 = arith.constant 0 : index
    %c0_90 = arith.constant 0 : index
    %73 = vector.load %arg3[%c8, %c0_89, %c0_90] : memref<9x16x16xbf16, #tpu.memory_space<vmem>>, vector<1x16x16xbf16>
    %74 = vector.shape_cast %73 : vector<1x16x16xbf16> to vector<16x16xbf16>
    %cst_91 = arith.constant dense<0.000000e+00> : vector<256x16xf32>
    %75 = tpu.matmul %72, %74, %cst_91 {dimension_numbers = #tpu.dot_dimension_numbers<[1], [0], [0], [1], [0, 0, 1, 1], [], []>} : vector<256x16xbf16>, vector<16x16xbf16>, vector<256x16xf32> -> vector<256x16xf32>
    %c0_92 = arith.constant 0 : index
    %c0_93 = arith.constant 0 : index
    %76 = vector.load %arg8[%c0_92, %c0_93] : memref<256x16xf32, #tpu.memory_space<vmem>>, vector<256x16xf32>
    %77 = arith.addf %76, %75 : vector<256x16xf32>
    %c0_94 = arith.constant 0 : index
    %c0_95 = arith.constant 0 : index
    %78 = vector.load %arg8[%c0_94, %c0_95] : memref<256x16xf32, #tpu.memory_space<vmem>>, vector<256x16xf32>
    tpu.vector_store %arg8[%c0_94, %c0_95], %77 {strides = array<i32>} : memref<256x16xf32, #tpu.memory_space<vmem>>, vector<256x16xf32>,
    %c0_96 = arith.constant 0 : index
    %c0_97 = arith.constant 0 : index
    %79 = vector.load %arg8[%c0_96, %c0_97] : memref<256x16xf32, #tpu.memory_space<vmem>>, vector<256x16xf32>
    %c0_98 = arith.constant 0 : index
    %c0_99 = arith.constant 0 : index
    %80 = vector.load %arg4[%c0_98, %c0_99] : memref<1x16xf32, #tpu.memory_space<vmem>>, vector<1x16xf32>
    %81 = vector.broadcast %80 : vector<1x16xf32> to vector<256x16xf32>
    %82 = arith.mulf %79, %81 : vector<256x16xf32>
    %c0_100 = arith.constant 0 : index
    %c0_101 = arith.constant 0 : index
    %83 = vector.load %arg5[%c0_100, %c0_101] : memref<1x16xf32, #tpu.memory_space<vmem>>, vector<1x16xf32>
    %84 = vector.broadcast %83 : vector<1x16xf32> to vector<256x16xf32>
    %85 = arith.addf %82, %84 : vector<256x16xf32>
    %86 = vector.shape_cast %85 : vector<256x16xf32> to vector<16x16x16xf32>
    %c0_102 = arith.constant 0 : index
    %c0_103 = arith.constant 0 : index
    %c0_104 = arith.constant 0 : index
    %c0_105 = arith.constant 0 : index
    %87 = vector.load %arg6[%c0_102, %c0_103, %c0_104, %c0_105] : memref<1x16x16x16xf32, #tpu.memory_space<vmem>>, vector<1x16x16x16xf32>
    %88 = vector.shape_cast %87 : vector<1x16x16x16xf32> to vector<16x16x16xf32>
    %89 = arith.addf %86, %88 : vector<16x16x16xf32>
    %cst_106 = arith.constant 0.000000e+00 : f32
    %90 = vector.broadcast %cst_106 : f32 to vector<16x16x16xf32>
    %91 = arith.maximumf %89, %90 : vector<16x16x16xf32>
    %c0_107 = arith.constant 0 : index
    %c0_108 = arith.constant 0 : index
    %c0_109 = arith.constant 0 : index
    %c0_110 = arith.constant 0 : index
    %92 = vector.load %arg7[%c0_107, %c0_108, %c0_109, %c0_110] : memref<1x16x16x16xf32, #tpu.memory_space<vmem>>, vector<1x16x16x16xf32>
    %93 = vector.shape_cast %92 : vector<1x16x16x16xf32> to vector<16x16x16xf32>
    %94 = vector.shape_cast %91 : vector<16x16x16xf32> to vector<1x16x16x16xf32>
    tpu.vector_store %arg7[%c0_107, %c0_108, %c0_109, %c0_110], %94 {strides = array<i32>} : memref<1x16x16x16xf32, #tpu.memory_space<vmem>>, vector<1x16x16x16xf32>,
    return
  }
  func.func @transform_0(%arg0: i32, %arg1: i32) -> (i32, i32, i32, i32) {
    %c0_i32 = arith.constant 0 : i32
    %c0_i32_0 = arith.constant 0 : i32
    %c0_i32_1 = arith.constant 0 : i32
    %c0_i32_2 = arith.constant 0 : i32
    return %arg0, %c0_i32, %c0_i32_0, %c0_i32_1 : i32, i32, i32, i32
  }
  func.func @transform_1(%arg0: i32, %arg1: i32) -> (i32, i32, i32) {
    %c0_i32 = arith.constant 0 : i32
    %c0_i32_0 = arith.constant 0 : i32
    %c0_i32_1 = arith.constant 0 : i32
    return %c0_i32, %c0_i32_0, %arg1 : i32, i32, i32
  }
  func.func @transform_2(%arg0: i32, %arg1: i32) -> (i32, i32) {
    %c0_i32 = arith.constant 0 : i32
    %c0_i32_0 = arith.constant 0 : i32
    return %c0_i32, %arg1 : i32, i32
  }
  func.func @transform_3(%arg0: i32, %arg1: i32) -> (i32, i32) {
    %c0_i32 = arith.constant 0 : i32
    %c0_i32_0 = arith.constant 0 : i32
    return %c0_i32, %arg1 : i32, i32
  }
  func.func @transform_4(%arg0: i32, %arg1: i32) -> (i32, i32, i32, i32) {
    %c0_i32 = arith.constant 0 : i32
    %c0_i32_0 = arith.constant 0 : i32
    %c0_i32_1 = arith.constant 0 : i32
    return %arg0, %c0_i32, %c0_i32_0, %arg1 : i32, i32, i32, i32
  }
  func.func @transform_5(%arg0: i32, %arg1: i32) -> (i32, i32, i32, i32) {
    %c0_i32 = arith.constant 0 : i32
    %c0_i32_0 = arith.constant 0 : i32
    %c0_i32_1 = arith.constant 0 : i32
    return %arg0, %c0_i32, %c0_i32_0, %arg1 : i32, i32, i32, i32
  }
}

</mosaic_0001>

<llo_original>
// kernel: basic_block_forward.2
$region0: #{basic_block_forward.2}
  #allocation0 [shape = 'u32[]', space=smem, size = 0x4, offset = 0x4, fixed_abs, tag = 'smem constant byte address 0x4 - core index']
  #allocation1 [shape = 'u32[144,128]{1,0:T(1,128)}', space=vmem, size = 0x12000, scoped, tag = 'internal scratch']
  #allocation2 [shape = 'f32[256,16]{1,0:T(8,128)}', space=vmem, size = 0x20000, scoped, tag = 'scratch operand']
  %s0 = inlined_call_operand.vmem [shape: bf16[2,18,18,16], index: 0, kind: input, shape index: {}]
  %s1 = inlined_call_operand.vmem [shape: bf16[9,16,16], index: 1, kind: input, shape index: {}]
  %s2 = inlined_call_operand.vmem [shape: f32[1,16], index: 2, kind: input, shape index: {}]
  %s3 = inlined_call_operand.vmem [shape: f32[1,16], index: 3, kind: input, shape index: {}]
  %s4 = inlined_call_operand.vmem [shape: bf16[2,16,16,16], index: 4, kind: output, shape index: {}]
  %s5 = sld [smem:[#allocation0]]
  $region49: #{basic_block_forward.2} parent=0
    _
  %s7 = ssub.s32 1, %s5
  %s8 = scalar_select 0, %s7, %s5
  loop: start=0, step=1, limit=4
  $region2: #{basic_block_forward.2} parent=0 // loop_pre_header
    _
  $region3: #{basic_block_forward.2} parent=0 // loop_header
    %s10 = sphi 0, %s14
    %p11 = scmp.ge.s32.totalorder %s10, 4
    %s17 = sphi 0, %s29
    %s18 = sphi 0, %s25
    %s19 = sphi 0, %s17
    %s20 = sphi 0, %s18
    %s21 = sphi 0, %s19
    %s22 = sphi 0, %s20
    %s32 = sphi 0, %s34
    %s35 = sphi 0, %s32
    %s36 = sphi 0, %s35
    %s52 = sphi 0, %s36
    %s58 = sphi 0, %s60
    %s61 = sphi 0, %s58
    %s62 = sphi 0, %s61
    %s78 = sphi 0, %s62
    %s84 = sphi 0, %s86
    %s87 = sphi 0, %s84
    %s88 = sphi 0, %s87
    %s104 = sphi 0, %s88
    %s110 = sphi 0, %s112
    %s113 = sphi 0, %s110
    %s114 = sphi 0, %s113
    %s130 = sphi 0, %s114
    %s138 = sphi 0, %s140
    %s141 = sphi 0, %s138
    %s142 = sphi 0, %s141
    %s158 = sphi 0, %s142
  $region4: #{basic_block_forward.2} parent=0 // loop_header_branch
    %13 = sbr.rel (%p11) target = $region8
  $region5: #{basic_block_forward.2} parent=0 // loop_body
    %s15 = ssub.s32 %s10, 1
    %s16 = ssub.s32 %s10, 2
    %s23 = sadd.s32 1, %s18
    %p24 = scmp.ge.s32.totalorder %s23, 1
    %s25 = scalar_select %p24, 0, %s23
    %s26 = sadd.s32 1, %s17
    %s27 = scalar_select %p24, %s26, %s17
    %p28 = scmp.ge.s32.totalorder %s27, 2
    %s29 = scalar_select %p28, 0, %s27
    %s30 = ssub.s32 %s17, %s29
    %p31 = scmp.eq.s32.totalorder %s30, 0
    %s33 = sadd.s32 %s32, 1
    %s34 = scalar_select %p31, %s32, %s33
    %p37 = pneg %p31
    %p38 = scmp.eq.s32.totalorder %s10, 1
    %p39 = por %p37, %p38
    %p40 = scmp.ne.s32.totalorder %s32, %s35
    %p41 = scmp.eq.s32.totalorder %s10, 0
    %p42 = por %p40, %p41
    %p43 = scmp.ne.s32.totalorder %s32, %s35
    %p44 = scmp.eq.s32.totalorder %s15, 1
    %p45 = por %p43, %p44
    %p46 = scmp.ne.s32.totalorder %s35, %s36
    %p47 = scmp.eq.s32.totalorder %s15, 0
    %p48 = por %p46, %p47
    %p49 = scmp.ne.s32.totalorder %s35, %s36
    %p50 = scmp.eq.s32.totalorder %s16, 1
    %p51 = por %p49, %p50
    %p53 = scmp.ne.s32.totalorder %s36, %s52
    %p54 = scmp.eq.s32.totalorder %s16, 0
    %p55 = por %p53, %p54
    %s56 = ssub.s32 %s18, %s25
    %p57 = scmp.eq.s32.totalorder %s56, 0
    %s59 = sadd.s32 %s58, 1
    %s60 = scalar_select %p57, %s58, %s59
    %p63 = pneg %p57
    %p64 = scmp.eq.s32.totalorder %s10, 1
    %p65 = por %p63, %p64
    %p66 = scmp.ne.s32.totalorder %s58, %s61
    %p67 = scmp.eq.s32.totalorder %s10, 0
    %p68 = por %p66, %p67
    %p69 = scmp.ne.s32.totalorder %s58, %s61
    %p70 = scmp.eq.s32.totalorder %s15, 1
    %p71 = por %p69, %p70
    %p72 = scmp.ne.s32.totalorder %s61, %s62
    %p73 = scmp.eq.s32.totalorder %s15, 0
    %p74 = por %p72, %p73
    %p75 = scmp.ne.s32.totalorder %s61, %s62
    %p76 = scmp.eq.s32.totalorder %s16, 1
    %p77 = por %p75, %p76
    %p79 = scmp.ne.s32.totalorder %s62, %s78
    %p80 = scmp.eq.s32.totalorder %s16, 0
    %p81 = por %p79, %p80
    %s82 = ssub.s32 %s18, %s25
    %p83 = scmp.eq.s32.totalorder %s82, 0
    %s85 = sadd.s32 %s84, 1
    %s86 = scalar_select %p83, %s84, %s85
    %p89 = pneg %p83
    %p90 = scmp.eq.s32.totalorder %s10, 1
    %p91 = por %p89, %p90
    %p92 = scmp.ne.s32.totalorder %s84, %s87
    %p93 = scmp.eq.s32.totalorder %s10, 0
    %p94 = por %p92, %p93
    %p95 = scmp.ne.s32.totalorder %s84, %s87
    %p96 = scmp.eq.s32.totalorder %s15, 1
    %p97 = por %p95, %p96
    %p98 = scmp.ne.s32.totalorder %s87, %s88
    %p99 = scmp.eq.s32.totalorder %s15, 0
    %p100 = por %p98, %p99
    %p101 = scmp.ne.s32.totalorder %s87, %s88
    %p102 = scmp.eq.s32.totalorder %s16, 1
    %p103 = por %p101, %p102
    %p105 = scmp.ne.s32.totalorder %s88, %s104
    %p106 = scmp.eq.s32.totalorder %s16, 0
    %p107 = por %p105, %p106
    %s108 = ssub.s32 %s18, %s25
    %p109 = scmp.eq.s32.totalorder %s108, 0
    %s111 = sadd.s32 %s110, 1
    %s112 = scalar_select %p109, %s110, %s111
    %p115 = pneg %p109
    %p116 = scmp.eq.s32.totalorder %s10, 1
    %p117 = por %p115, %p116
    %p118 = scmp.ne.s32.totalorder %s110, %s113
    %p119 = scmp.eq.s32.totalorder %s10, 0
    %p120 = por %p118, %p119
    %p121 = scmp.ne.s32.totalorder %s110, %s113
    %p122 = scmp.eq.s32.totalorder %s15, 1
    %p123 = por %p121, %p122
    %p124 = scmp.ne.s32.totalorder %s113, %s114
    %p125 = scmp.eq.s32.totalorder %s15, 0
    %p126 = por %p124, %p125
    %p127 = scmp.ne.s32.totalorder %s113, %s114
    %p128 = scmp.eq.s32.totalorder %s16, 1
    %p129 = por %p127, %p128
    %p131 = scmp.ne.s32.totalorder %s114, %s130
    %p132 = scmp.eq.s32.totalorder %s16, 0
    %p133 = por %p131, %p132
    %s134 = ssub.s32 %s17, %s29
    %s135 = ssub.s32 %s18, %s25
    %s136 = sor.u32 %s134, %s135
    %p137 = scmp.eq.s32.totalorder %s136, 0
    %s139 = sadd.s32 %s138, 1
    %s140 = scalar_select %p137, %s138, %s139
    %p143 = pneg %p137
    %p144 = scmp.eq.s32.totalorder %s10, 1
    %p145 = por %p143, %p144
    %p146 = scmp.ne.s32.totalorder %s138, %s141
    %p147 = scmp.eq.s32.totalorder %s10, 0
    %p148 = por %p146, %p147
    %p149 = scmp.ne.s32.totalorder %s138, %s141
    %p150 = scmp.eq.s32.totalorder %s15, 1
    %p151 = por %p149, %p150
    %p152 = scmp.ne.s32.totalorder %s141, %s142
    %p153 = scmp.eq.s32.totalorder %s15, 0
    %p154 = por %p152, %p153
    %p155 = scmp.ne.s32.totalorder %s141, %s142
    %p156 = scmp.eq.s32.totalorder %s16, 1
    %p157 = por %p155, %p156
    %p159 = scmp.ne.s32.totalorder %s142, %s158
    %p160 = scmp.eq.s32.totalorder %s16, 0
    %p161 = por %p159, %p160
    %p162 = scmp.le.s32.totalorder 1, %s10
    %p163 = scmp.lt.s32.totalorder %s10, 3
    %p164 = pnand %p162, %p163
    %p165 = pneg %p164
    // Predicated region
    $region9: #{basic_block_forward.2} parent=5 // pred_check
      _
    $region10: #{basic_block_forward.2} parent=5 // pred_check_branch
      %167 = sbr.rel (%p164) target = $region12
    $region11: #{basic_block_forward.2} parent=5 // pred_region
      %s168 = ssub.s32 %s10, 1
      // Predicated region
      $region13: #{basic_block_forward.2} parent=11 // pred_check
        %p169 = pneg %p74
      $region14: #{basic_block_forward.2} parent=11 // pred_check_branch
        %171 = sbr.rel (%p169) target = $region16
      $region15: #{basic_block_forward.2} parent=11 // pred_region
        %p172 = scmp.lt.s32.totalorder %s20, 0
        %s173 = scalar_select %p172, %s20, 0
        %s174 = smul.addr %s173, 4
        %s175 = scalar_lea.vmem %s1, %s174
      $region16: #{basic_block_forward.2} parent=11 // pred_fallthru
        _
      // Predicated region
      $region17: #{basic_block_forward.2} parent=11 // pred_check
        %p176 = pneg %p100
      $region18: #{basic_block_forward.2} parent=11 // pred_check_branch
        %178 = sbr.rel (%p176) target = $region20
      $region19: #{basic_block_forward.2} parent=11 // pred_region
        %p179 = scmp.lt.s32.totalorder %s20, 0
        %s180 = scalar_select %p179, %s20, 0
        %s181 = scalar_lea.vmem %s2, %s180
      $region20: #{basic_block_forward.2} parent=11 // pred_fallthru
        _
      // Predicated region
      $region21: #{basic_block_forward.2} parent=11 // pred_check
        %p182 = pneg %p126
      $region22: #{basic_block_forward.2} parent=11 // pred_check_branch
        %184 = sbr.rel (%p182) target = $region24
      $region23: #{basic_block_forward.2} parent=11 // pred_region
        %p185 = scmp.lt.s32.totalorder %s20, 0
        %s186 = scalar_select %p185, %s20, 0
        %s187 = scalar_lea.vmem %s3, %s186
      $region24: #{basic_block_forward.2} parent=11 // pred_fallthru
        _
    $region12: #{basic_block_forward.2} parent=5 // pred_fallthru
      _
    %p188 = scmp.lt.s32.totalorder %s10, 2
    // Predicated region
    $region25: #{basic_block_forward.2} parent=5 // pred_check
      %p189 = pneg %p188
    $region26: #{basic_block_forward.2} parent=5 // pred_check_branch
      %191 = sbr.rel (%p189) target = $region28
    $region27: #{basic_block_forward.2} parent=5 // pred_region
      // Predicated region
      $region29: #{basic_block_forward.2} parent=27 // pred_check
        %p192 = pneg %p42
      $region30: #{basic_block_forward.2} parent=27 // pred_check_branch
        %194 = sbr.rel (%p192) target = $region32
      $region31: #{basic_block_forward.2} parent=27 // pred_region
        %p195 = scmp.lt.s32.totalorder %s17, 1
        %s196 = scalar_select %p195, %s17, 1
        %s197 = smul.addr %s196, 54
        %s198 = smul.addr %s197, 4
        %s199 = scalar_lea.vmem %s0, %s198
      $region32: #{basic_block_forward.2} parent=27 // pred_fallthru
        _
    $region28: #{basic_block_forward.2} parent=5 // pred_fallthru
      _
    %p200 = scmp.le.s32.totalorder 1, %s10
    %p201 = scmp.lt.s32.totalorder %s10, 3
    %p202 = pnand %p200, %p201
    %p203 = pneg %p202
    // Predicated region
    $region33: #{basic_block_forward.2} parent=5 // pred_check
      _
    $region34: #{basic_block_forward.2} parent=5 // pred_check_branch
      %205 = sbr.rel (%p202) target = $region36
    $region35: #{basic_block_forward.2} parent=5 // pred_region
      %s206 = ssub.s32 %s10, 1
      %p207 = scmp.lt.s32.totalorder %s19, 1
      %s208 = scalar_select %p207, %s19, 1
      %s209 = smul.addr %s208, 54
      %s210 = smul.addr %s209, 4
      %s211 = scalar_lea.vmem %s0, %s210
      %p212 = pneg %p48
      %p213 = pneg %p45
      %p214 = scmp.lt.s32.totalorder %s20, 0
      %s215 = scalar_select %p214, %s20, 0
      %s216 = smul.addr %s215, 4
      %s217 = scalar_lea.vmem %s1, %s216
      %p218 = pneg %p74
      %p219 = pneg %p71
      %p220 = scmp.lt.s32.totalorder %s20, 0
      %s221 = scalar_select %p220, %s20, 0
      %s222 = scalar_lea.vmem %s2, %s221
      %p223 = pneg %p100
      %p224 = pneg %p97
      %p225 = scmp.lt.s32.totalorder %s20, 0
      %s226 = scalar_select %p225, %s20, 0
      %s227 = scalar_lea.vmem %s3, %s226
      %p228 = pneg %p126
      %p229 = pneg %p123
      %p230 = pneg %p154
      %p231 = pneg %p151
      %p232 = scmp.lt.s32.totalorder %s19, 1
      %s233 = scalar_select %p232, %s19, 1
      %p234 = scmp.lt.s32.totalorder %s20, 0
      %s235 = scalar_select %p234, %s20, 0
      %s236 = smul.addr %s233, 32
      %s237 = sadd.s32 %s235, %s236
      %s238 = smul.addr %s237, 4
      %s239 = scalar_lea.vmem %s4, %s238
      %p240 = scmp.lt.s32.totalorder %s19, 1
      %s241 = scalar_select %p240, %s19, 1
      %s242 = smul.addr %s241, 54
      %s243 = smul.addr %s242, 4
      %s244 = scalar_lea.vmem %s0, %s243
      %p245 = scmp.lt.s32.totalorder %s20, 0
      %s246 = scalar_select %p245, %s20, 0
      %s247 = smul.addr %s246, 4
      %s248 = scalar_lea.vmem %s1, %s247
      %p249 = scmp.lt.s32.totalorder %s20, 0
      %s250 = scalar_select %p249, %s20, 0
      %s251 = scalar_lea.vmem %s2, %s250
      %p252 = scmp.lt.s32.totalorder %s20, 0
      %s253 = scalar_select %p252, %s20, 0
      %s254 = scalar_lea.vmem %s3, %s253
      %p255 = scmp.lt.s32.totalorder %s19, 1
      %s256 = scalar_select %p255, %s19, 1
      %p257 = scmp.lt.s32.totalorder %s20, 0
      %s258 = scalar_select %p257, %s20, 0
      %s259 = smul.addr %s256, 32
      %s260 = sadd.s32 %s258, %s259
      %s261 = smul.addr %s260, 4
      %s262 = scalar_lea.vmem %s4, %s261
      %v264 = vld [vmem:[%s244] sm:$0xf]
      %v265 = vld [vmem:[%s244 + $0x4] sm:$0xf]
      %v266 = vld [vmem:[%s244 + $0xc] sm:$0xf]
      %v267 = vld [vmem:[%s244 + $0x10] sm:$0xf]
      %v268 = vld [vmem:[%s244 + $0x18] sm:$0xf]
      %v269 = vld [vmem:[%s244 + $0x1c] sm:$0xf]
      %v270 = vld [vmem:[%s244 + $0x24] sm:$0xf]
      %v271 = vld [vmem:[%s244 + $0x28] sm:$0xf]
      %v272 = vld [vmem:[%s244 + $0x30] sm:$0xf]
      %v273 = vld [vmem:[%s244 + $0x34] sm:$0xf]
      %v274 = vld [vmem:[%s244 + $0x3c] sm:$0xf]
      %v275 = vld [vmem:[%s244 + $0x40] sm:$0xf]
      %v276 = vld [vmem:[%s244 + $0x48] sm:$0xf]
      %v277 = vld [vmem:[%s244 + $0x4c] sm:$0xf]
      %v278 = vld [vmem:[%s244 + $0x54] sm:$0xf]
      %v279 = vld [vmem:[%s244 + $0x58] sm:$0xf]
      %v280 = vld [vmem:[%s244 + $0x60] sm:$0xf]
      %v281 = vld [vmem:[%s244 + $0x64] sm:$0xf]
      %v282 = vld [vmem:[%s244 + $0x6c] sm:$0xf]
      %v283 = vld [vmem:[%s244 + $0x70] sm:$0xf]
      %v284 = vld [vmem:[%s244 + $0x78] sm:$0xf]
      %v285 = vld [vmem:[%s244 + $0x7c] sm:$0xf]
      %v286 = vld [vmem:[%s244 + $0x84] sm:$0xf]
      %v287 = vld [vmem:[%s244 + $0x88] sm:$0xf]
      %v288 = vld [vmem:[%s244 + $0x90] sm:$0xf]
      %v289 = vld [vmem:[%s244 + $0x94] sm:$0xf]
      %v290 = vld [vmem:[%s244 + $0x9c] sm:$0xf]
      %v291 = vld [vmem:[%s244 + $0xa0] sm:$0xf]
      %v292 = vld [vmem:[%s244 + $0xa8] sm:$0xf]
      %v293 = vld [vmem:[%s244 + $0xac] sm:$0xf]
      %v294 = vld [vmem:[%s244 + $0xb4] sm:$0xf]
      %v295 = vld [vmem:[%s244 + $0xb8] sm:$0xf]
      %v296 = vld [vmem:[%s248] sm:$0xf]
      %v297 = vld [vmem:[%s248 + $0x4] sm:$0xf]
      %v330 = vunpack.c.l.b16 %v264
      %v331 = vunpack.c.l.b16 %v265
      %v332 = vunpack.c.l.b16 %v266
      %v333 = vunpack.c.l.b16 %v267
      %v334 = vunpack.c.l.b16 %v268
      %v335 = vunpack.c.l.b16 %v269
      %v336 = vunpack.c.l.b16 %v270
      %v337 = vunpack.c.l.b16 %v271
      %v338 = vunpack.c.l.b16 %v272
      %v339 = vunpack.c.l.b16 %v273
      %v340 = vunpack.c.l.b16 %v274
      %v341 = vunpack.c.l.b16 %v275
      %v342 = vunpack.c.l.b16 %v276
      %v343 = vunpack.c.l.b16 %v277
      %v344 = vunpack.c.l.b16 %v278
      %v345 = vunpack.c.l.b16 %v279
      %v346 = vunpack.c.l.b16 %v280
      %v347 = vunpack.c.l.b16 %v281
      %v348 = vunpack.c.l.b16 %v282
      %v349 = vunpack.c.l.b16 %v283
      %v350 = vunpack.c.l.b16 %v284
      %v351 = vunpack.c.l.b16 %v285
      %v352 = vunpack.c.l.b16 %v286
      %v353 = vunpack.c.l.b16 %v287
      %v354 = vunpack.c.l.b16 %v288
      %v355 = vunpack.c.l.b16 %v289
      %v356 = vunpack.c.l.b16 %v290
      %v357 = vunpack.c.l.b16 %v291
      %v358 = vunpack.c.l.b16 %v292
      %v359 = vunpack.c.l.b16 %v293
      %v360 = vunpack.c.l.b16 %v294
      %v361 = vunpack.c.l.b16 %v295
      %v362 = vpack.c.b16 %v331, %v330
      %v363 = vpack.c.b16 %v333, %v332
      %v364 = vpack.c.b16 %v335, %v334
      %v365 = vpack.c.b16 %v337, %v336
      %v366 = vpack.c.b16 %v339, %v338
      %v367 = vpack.c.b16 %v341, %v340
      %v368 = vpack.c.b16 %v343, %v342
      %v369 = vpack.c.b16 %v345, %v344
      %v370 = vpack.c.b16 %v347, %v346
      %v371 = vpack.c.b16 %v349, %v348
      %v372 = vpack.c.b16 %v351, %v350
      %v373 = vpack.c.b16 %v353, %v352
      %v374 = vpack.c.b16 %v355, %v354
      %v375 = vpack.c.b16 %v357, %v356
      %v376 = vpack.c.b16 %v359, %v358
      %v377 = vpack.c.b16 %v361, %v360
      %v380 = vunpack.c.l.b16 %v296
      %v381 = vunpack.c.l.b16 %v297
      %v382 = vpack.c.b16 %v381, %v380
      %vm384 = vcmask 130048
      %v386 = vsel %vm384, %v362, 0
      %v389 = vsel %vm384, %v363, 0
      %v392 = vsel %vm384, %v364, 0
      %v395 = vsel %vm384, %v365, 0
      %v398 = vsel %vm384, %v366, 0
      %v401 = vsel %vm384, %v367, 0
      %v404 = vsel %vm384, %v368, 0
      %v407 = vsel %vm384, %v369, 0
      %v410 = vsel %vm384, %v370, 0
      %v413 = vsel %vm384, %v371, 0
      %v416 = vsel %vm384, %v372, 0
      %v419 = vsel %vm384, %v373, 0
      %v422 = vsel %vm384, %v374, 0
      %v425 = vsel %vm384, %v375, 0
      %v428 = vsel %vm384, %v376, 0
      %v431 = vsel %vm384, %v377, 0
      %433 = vmatprep.subr.bf16.mxu0 0
      %434 = vmatpush1.bf16.msra.mxu0 0
      %435 = vmatprep.subr.bf16.mxu0 0
      %436 = vmatpush1.bf16.msra.mxu0 0
      %437 = vmatprep.subr.bf16.mxu0 0
      %438 = vmatpush1.bf16.msra.mxu0 0
      %439 = vmatprep.subr.bf16.mxu0 0
      %440 = vmatpush1.bf16.msra.mxu0 0
      %441 = vmatprep.subr.bf16.mxu0 0
      %442 = vmatpush1.bf16.msra.mxu0 0
      %443 = vmatprep.subr.bf16.mxu0 0
      %444 = vmatpush1.bf16.msra.mxu0 0
      %445 = vmatprep.subr.bf16.mxu0 0
      %446 = vmatpush1.bf16.msra.mxu0 0
      %447 = vmatprep.subr.bf16.mxu0 0
      %448 = vmatpush1.bf16.msra.mxu0 %v382
      %449 = vmatprep.subr.bf16.mxu0 0
      %450 = vmatpush2.bf16.msra.mxu0 0
      %451 = vmatprep.subr.bf16.mxu0 0
      %452 = vmatpush2.bf16.msra.mxu0 0
      %453 = vmatprep.subr.bf16.mxu0 0
      %454 = vmatpush2.bf16.msra.mxu0 0
      %455 = vmatprep.subr.bf16.mxu0 0
      %456 = vmatpush2.bf16.msra.mxu0 0
      %457 = vmatprep.subr.bf16.mxu0 0
      %458 = vmatpush2.bf16.msra.mxu0 0
      %459 = vmatprep.subr.bf16.mxu0 0
      %460 = vmatpush2.bf16.msra.mxu0 0
      %461 = vmatprep.subr.bf16.mxu0 0
      %462 = vmatpush2.bf16.msra.mxu0 0
      %463 = vmatprep.subr.bf16.mxu0 0
      %464 = vmatpush2.bf16.msra.mxu0 0
      %465 = vmatprep.mubr.bf16.mxu0 0
      %466 = vmatmul.mubr.bf16.gmra.mxu0 %v386
      %v467 = vpop.f32.mrf.mxu0
      %v468 = vadd.f32 0.0, %v467
      %v469 = vpop.f32.mrf.mxu0
      %v470 = vpop.f32.mrf.mxu0
      %v471 = vadd.f32 0.0, %v470
      %v472 = vpop.f32.mrf.mxu0
      %473 = vmatprep.mubr.bf16.mxu0 0
      %474 = vmatmul.mubr.bf16.gmra.mxu0 %v389
      %v475 = vpop.f32.mrf.mxu0
      %v476 = vadd.f32 0.0, %v475
      %v477 = vpop.f32.mrf.mxu0
      %v478 = vpop.f32.mrf.mxu0
      %v479 = vadd.f32 0.0, %v478
      %v480 = vpop.f32.mrf.mxu0
      %481 = vmatprep.mubr.bf16.mxu0 0
      %482 = vmatmul.mubr.bf16.gmra.mxu0 %v392
      %v483 = vpop.f32.mrf.mxu0
      %v484 = vadd.f32 0.0, %v483
      %v485 = vpop.f32.mrf.mxu0
      %v486 = vpop.f32.mrf.mxu0
      %v487 = vadd.f32 0.0, %v486
      %v488 = vpop.f32.mrf.mxu0
      %489 = vmatprep.mubr.bf16.mxu0 0
      %490 = vmatmul.mubr.bf16.gmra.mxu0 %v395
      %v491 = vpop.f32.mrf.mxu0
      %v492 = vadd.f32 0.0, %v491
      %v493 = vpop.f32.mrf.mxu0
      %v494 = vpop.f32.mrf.mxu0
      %v495 = vadd.f32 0.0, %v494
      %v496 = vpop.f32.mrf.mxu0
      %497 = vmatprep.mubr.bf16.mxu0 0
      %498 = vmatmul.mubr.bf16.gmra.mxu0 %v398
      %v499 = vpop.f32.mrf.mxu0
      %v500 = vadd.f32 0.0, %v499
      %v501 = vpop.f32.mrf.mxu0
      %v502 = vpop.f32.mrf.mxu0
      %v503 = vadd.f32 0.0, %v502
      %v504 = vpop.f32.mrf.mxu0
      %505 = vmatprep.mubr.bf16.mxu0 0
      %506 = vmatmul.mubr.bf16.gmra.mxu0 %v401
      %v507 = vpop.f32.mrf.mxu0
      %v508 = vadd.f32 0.0, %v507
      %v509 = vpop.f32.mrf.mxu0
      %v510 = vpop.f32.mrf.mxu0
      %v511 = vadd.f32 0.0, %v510
      %v512 = vpop.f32.mrf.mxu0
      %513 = vmatprep.mubr.bf16.mxu0 0
      %514 = vmatmul.mubr.bf16.gmra.mxu0 %v404
      %v515 = vpop.f32.mrf.mxu0
      %v516 = vadd.f32 0.0, %v515
      %v517 = vpop.f32.mrf.mxu0
      %v518 = vpop.f32.mrf.mxu0
      %v519 = vadd.f32 0.0, %v518
      %v520 = vpop.f32.mrf.mxu0
      %521 = vmatprep.mubr.bf16.mxu0 0
      %522 = vmatmul.mubr.bf16.gmra.mxu0 %v407
      %v523 = vpop.f32.mrf.mxu0
      %v524 = vadd.f32 0.0, %v523
      %v525 = vpop.f32.mrf.mxu0
      %v526 = vpop.f32.mrf.mxu0
      %v527 = vadd.f32 0.0, %v526
      %v528 = vpop.f32.mrf.mxu0
      %529 = vmatprep.mubr.bf16.mxu0 0
      %530 = vmatmul.mubr.bf16.gmra.mxu0 %v410
      %v531 = vpop.f32.mrf.mxu0
      %v532 = vadd.f32 0.0, %v531
      %v533 = vpop.f32.mrf.mxu0
      %v534 = vpop.f32.mrf.mxu0
      %v535 = vadd.f32 0.0, %v534
      %v536 = vpop.f32.mrf.mxu0
      %537 = vmatprep.mubr.bf16.mxu0 0
      %538 = vmatmul.mubr.bf16.gmra.mxu0 %v413
      %v539 = vpop.f32.mrf.mxu0
      %v540 = vadd.f32 0.0, %v539
      %v541 = vpop.f32.mrf.mxu0
      %v542 = vpop.f32.mrf.mxu0
      %v543 = vadd.f32 0.0, %v542
      %v544 = vpop.f32.mrf.mxu0
      %545 = vmatprep.mubr.bf16.mxu0 0
      %546 = vmatmul.mubr.bf16.gmra.mxu0 %v416
      %v547 = vpop.f32.mrf.mxu0
      %v548 = vadd.f32 0.0, %v547
      %v549 = vpop.f32.mrf.mxu0
      %v550 = vpop.f32.mrf.mxu0
      %v551 = vadd.f32 0.0, %v550
      %v552 = vpop.f32.mrf.mxu0
      %553 = vmatprep.mubr.bf16.mxu0 0
      %554 = vmatmul.mubr.bf16.gmra.mxu0 %v419
      %v555 = vpop.f32.mrf.mxu0
      %v556 = vadd.f32 0.0, %v555
      %v557 = vpop.f32.mrf.mxu0
      %v558 = vpop.f32.mrf.mxu0
      %v559 = vadd.f32 0.0, %v558
      %v560 = vpop.f32.mrf.mxu0
      %561 = vmatprep.mubr.bf16.mxu0 0
      %562 = vmatmul.mubr.bf16.gmra.mxu0 %v422
      %v563 = vpop.f32.mrf.mxu0
      %v564 = vadd.f32 0.0, %v563
      %v565 = vpop.f32.mrf.mxu0
      %v566 = vpop.f32.mrf.mxu0
      %v567 = vadd.f32 0.0, %v566
      %v568 = vpop.f32.mrf.mxu0
      %569 = vmatprep.mubr.bf16.mxu0 0
      %570 = vmatmul.mubr.bf16.gmra.mxu0 %v425
      %v571 = vpop.f32.mrf.mxu0
      %v572 = vadd.f32 0.0, %v571
      %v573 = vpop.f32.mrf.mxu0
      %v574 = vpop.f32.mrf.mxu0
      %v575 = vadd.f32 0.0, %v574
      %v576 = vpop.f32.mrf.mxu0
      %577 = vmatprep.mubr.bf16.mxu0 0
      %578 = vmatmul.mubr.bf16.gmra.mxu0 %v428
      %v579 = vpop.f32.mrf.mxu0
      %v580 = vadd.f32 0.0, %v579
      %v581 = vpop.f32.mrf.mxu0
      %v582 = vpop.f32.mrf.mxu0
      %v583 = vadd.f32 0.0, %v582
      %v584 = vpop.f32.mrf.mxu0
      %585 = vmatprep.mubr.bf16.mxu0 0
      %586 = vmatmul.mubr.bf16.gmra.mxu0 %v431
      %v587 = vpop.f32.mrf.mxu0
      %v588 = vadd.f32 0.0, %v587
      %v589 = vpop.f32.mrf.mxu0
      %v590 = vpop.f32.mrf.mxu0
      %v591 = vadd.f32 0.0, %v590
      %v592 = vpop.f32.mrf.mxu0
      %593 = vdwg.mxu0
      %594 = vst.msk [vmem:[#allocation2] sm:$0xff] %vm384, %v468
      %595 = vst.msk [vmem:[#allocation2 + $0x8] sm:$0xff] %vm384, %v471
      %596 = vst.msk [vmem:[#allocation2 + $0x10] sm:$0xff] %vm384, %v476
      %597 = vst.msk [vmem:[#allocation2 + $0x18] sm:$0xff] %vm384, %v479
      %598 = vst.msk [vmem:[#allocation2 + $0x20] sm:$0xff] %vm384, %v484
      %599 = vst.msk [vmem:[#allocation2 + $0x28] sm:$0xff] %vm384, %v487
      %600 = vst.msk [vmem:[#allocation2 + $0x30] sm:$0xff] %vm384, %v492
      %601 = vst.msk [vmem:[#allocation2 + $0x38] sm:$0xff] %vm384, %v495
      %602 = vst.msk [vmem:[#allocation2 + $0x40] sm:$0xff] %vm384, %v500
      %603 = vst.msk [vmem:[#allocation2 + $0x48] sm:$0xff] %vm384, %v503
      %604 = vst.msk [vmem:[#allocation2 + $0x50] sm:$0xff] %vm384, %v508
      %605 = vst.msk [vmem:[#allocation2 + $0x58] sm:$0xff] %vm384, %v511
      %606 = vst.msk [vmem:[#allocation2 + $0x60] sm:$0xff] %vm384, %v516
      %607 = vst.msk [vmem:[#allocation2 + $0x68] sm:$0xff] %vm384, %v519
      %608 = vst.msk [vmem:[#allocation2 + $0x70] sm:$0xff] %vm384, %v524
      %609 = vst.msk [vmem:[#allocation2 + $0x78] sm:$0xff] %vm384, %v527
      %610 = vst.msk [vmem:[#allocation2 + $0x80] sm:$0xff] %vm384, %v532
      %611 = vst.msk [vmem:[#allocation2 + $0x88] sm:$0xff] %vm384, %v535
      %612 = vst.msk [vmem:[#allocation2 + $0x90] sm:$0xff] %vm384, %v540
      %613 = vst.msk [vmem:[#allocation2 + $0x98] sm:$0xff] %vm384, %v543
      %614 = vst.msk [vmem:[#allocation2 + $0xa0] sm:$0xff] %vm384, %v548
      %615 = vst.msk [vmem:[#allocation2 + $0xa8] sm:$0xff] %vm384, %v551
      %616 = vst.msk [vmem:[#allocation2 + $0xb0] sm:$0xff] %vm384, %v556
      %617 = vst.msk [vmem:[#allocation2 + $0xb8] sm:$0xff] %vm384, %v559
      %618 = vst.msk [vmem:[#allocation2 + $0xc0] sm:$0xff] %vm384, %v564
      %619 = vst.msk [vmem:[#allocation2 + $0xc8] sm:$0xff] %vm384, %v567
      %620 = vst.msk [vmem:[#allocation2 + $0xd0] sm:$0xff] %vm384, %v572
      %621 = vst.msk [vmem:[#allocation2 + $0xd8] sm:$0xff] %vm384, %v575
      %622 = vst.msk [vmem:[#allocation2 + $0xe0] sm:$0xff] %vm384, %v580
      %623 = vst.msk [vmem:[#allocation2 + $0xe8] sm:$0xff] %vm384, %v583
      %624 = vst.msk [vmem:[#allocation2 + $0xf0] sm:$0xff] %vm384, %v588
      %625 = vst.msk [vmem:[#allocation2 + $0xf8] sm:$0xff] %vm384, %v591
      %v626 = vld [vmem:[%s244] sm:$0xf]
      %v627 = vld [vmem:[%s244 + $0x4] sm:$0xf]
      %v628 = vld [vmem:[%s244 + $0x8] sm:$0x1]
      %v629 = vld [vmem:[%s244 + $0xc] sm:$0xf]
      %v630 = vld [vmem:[%s244 + $0x10] sm:$0xf]
      %v631 = vld [vmem:[%s244 + $0x14] sm:$0x1]
      %v632 = vld [vmem:[%s244 + $0x18] sm:$0xf]
      %v633 = vld [vmem:[%s244 + $0x1c] sm:$0xf]
      %v634 = vld [vmem:[%s244 + $0x20] sm:$0x1]
      %v635 = vld [vmem:[%s244 + $0x24] sm:$0xf]
      %v636 = vld [vmem:[%s244 + $0x28] sm:$0xf]
      %v637 = vld [vmem:[%s244 + $0x2c] sm:$0x1]
      %v638 = vld [vmem:[%s244 + $0x30] sm:$0xf]
      %v639 = vld [vmem:[%s244 + $0x34] sm:$0xf]
      %v640 = vld [vmem:[%s244 + $0x38] sm:$0x1]
      %v641 = vld [vmem:[%s244 + $0x3c] sm:$0xf]
      %v642 = vld [vmem:[%s244 + $0x40] sm:$0xf]
      %v643 = vld [vmem:[%s244 + $0x44] sm:$0x1]
      %v644 = vld [vmem:[%s244 + $0x48] sm:$0xf]
      %v645 = vld [vmem:[%s244 + $0x4c] sm:$0xf]
      %v646 = vld [vmem:[%s244 + $0x50] sm:$0x1]
      %v647 = vld [vmem:[%s244 + $0x54] sm:$0xf]
      %v648 = vld [vmem:[%s244 + $0x58] sm:$0xf]
      %v649 = vld [vmem:[%s244 + $0x5c] sm:$0x1]
      %v650 = vld [vmem:[%s244 + $0x60] sm:$0xf]
      %v651 = vld [vmem:[%s244 + $0x64] sm:$0xf]
      %v652 = vld [vmem:[%s244 + $0x68] sm:$0x1]
      %v653 = vld [vmem:[%s244 + $0x6c] sm:$0xf]
      %v654 = vld [vmem:[%s244 + $0x70] sm:$0xf]
      %v655 = vld [vmem:[%s244 + $0x74] sm:$0x1]
      %v656 = vld [vmem:[%s244 + $0x78] sm:$0xf]
      %v657 = vld [vmem:[%s244 + $0x7c] sm:$0xf]
      %v658 = vld [vmem:[%s244 + $0x80] sm:$0x1]
      %v659 = vld [vmem:[%s244 + $0x84] sm:$0xf]
      %v660 = vld [vmem:[%s244 + $0x88] sm:$0xf]
      %v661 = vld [vmem:[%s244 + $0x8c] sm:$0x1]
      %v662 = vld [vmem:[%s244 + $0x90] sm:$0xf]
      %v663 = vld [vmem:[%s244 + $0x94] sm:$0xf]
      %v664 = vld [vmem:[%s244 + $0x98] sm:$0x1]
      %v665 = vld [vmem:[%s244 + $0x9c] sm:$0xf]
      %v666 = vld [vmem:[%s244 + $0xa0] sm:$0xf]
      %v667 = vld [vmem:[%s244 + $0xa4] sm:$0x1]
      %v668 = vld [vmem:[%s244 + $0xa8] sm:$0xf]
      %v669 = vld [vmem:[%s244 + $0xac] sm:$0xf]
      %v670 = vld [vmem:[%s244 + $0xb0] sm:$0x1]
      %v671 = vld [vmem:[%s244 + $0xb4] sm:$0xf]
      %v672 = vld [vmem:[%s244 + $0xb8] sm:$0xf]
      %v673 = vld [vmem:[%s244 + $0xbc] sm:$0x1]
      %vm674 = vsmask.f32 3328
      %vm675 = vsmask.f32 7440
      %vm676 = vmor %vm674, %vm675
      %v678 = vshrl.u32 %v626, 16
      %v680 = vrot.slane %v678, 4
      %v681 = vshll.u32 %v626, 16
      %v683 = vrot.slane %v681, 5
      %v684 = vor.u32 %v680, %v683
      %v685 = vrot.slane %v684, 4
      %v687 = vshll.u32 %v627, 16
      %v689 = vrot.slane %v687, 5
      %v690 = vsel %vm676, %v685, %v689
      %v691 = vshrl.u32 %v627, 16
      %v693 = vrot.slane %v691, 4
      %v694 = vor.u32 %v693, %v689
      %v695 = vrot.slane %v694, 4
      %v697 = vshll.u32 %v628, 16
      %v699 = vrot.slane %v697, 5
      %v700 = vsel %vm676, %v695, %v699
      %v702 = vshrl.u32 %v629, 16
      %v704 = vrot.slane %v702, 4
      %v705 = vshll.u32 %v629, 16
      %v707 = vrot.slane %v705, 5
      %v708 = vor.u32 %v704, %v707
      %v709 = vrot.slane %v708, 4
      %v711 = vshll.u32 %v630, 16
      %v713 = vrot.slane %v711, 5
      %v714 = vsel %vm676, %v709, %v713
      %v715 = vshrl.u32 %v630, 16
      %v717 = vrot.slane %v715, 4
      %v718 = vor.u32 %v717, %v713
      %v719 = vrot.slane %v718, 4
      %v721 = vshll.u32 %v631, 16
      %v723 = vrot.slane %v721, 5
      %v724 = vsel %vm676, %v719, %v723
      %v726 = vshrl.u32 %v632, 16
      %v728 = vrot.slane %v726, 4
      %v729 = vshll.u32 %v632, 16
      %v731 = vrot.slane %v729, 5
      %v732 = vor.u32 %v728, %v731
      %v733 = vrot.slane %v732, 4
      %v735 = vshll.u32 %v633, 16
      %v737 = vrot.slane %v735, 5
      %v738 = vsel %vm676, %v733, %v737
      %v739 = vshrl.u32 %v633, 16
      %v741 = vrot.slane %v739, 4
      %v742 = vor.u32 %v741, %v737
      %v743 = vrot.slane %v742, 4
      %v745 = vshll.u32 %v634, 16
      %v747 = vrot.slane %v745, 5
      %v748 = vsel %vm676, %v743, %v747
      %v750 = vshrl.u32 %v635, 16
      %v752 = vrot.slane %v750, 4
      %v753 = vshll.u32 %v635, 16
      %v755 = vrot.slane %v753, 5
      %v756 = vor.u32 %v752, %v755
      %v757 = vrot.slane %v756, 4
      %v759 = vshll.u32 %v636, 16
      %v761 = vrot.slane %v759, 5
      %v762 = vsel %vm676, %v757, %v761
      %v763 = vshrl.u32 %v636, 16
      %v765 = vrot.slane %v763, 4
      %v766 = vor.u32 %v765, %v761
      %v767 = vrot.slane %v766, 4
      %v769 = vshll.u32 %v637, 16
      %v771 = vrot.slane %v769, 5
      %v772 = vsel %vm676, %v767, %v771
      %v774 = vshrl.u32 %v638, 16
      %v776 = vrot.slane %v774, 4
      %v777 = vshll.u32 %v638, 16
      %v779 = vrot.slane %v777, 5
      %v780 = vor.u32 %v776, %v779
      %v781 = vrot.slane %v780, 4
      %v783 = vshll.u32 %v639, 16
      %v785 = vrot.slane %v783, 5
      %v786 = vsel %vm676, %v781, %v785
      %v787 = vshrl.u32 %v639, 16
      %v789 = vrot.slane %v787, 4
      %v790 = vor.u32 %v789, %v785
      %v791 = vrot.slane %v790, 4
      %v793 = vshll.u32 %v640, 16
      %v795 = vrot.slane %v793, 5
      %v796 = vsel %vm676, %v791, %v795
      %v798 = vshrl.u32 %v641, 16
      %v800 = vrot.slane %v798, 4
      %v801 = vshll.u32 %v641, 16
      %v803 = vrot.slane %v801, 5
      %v804 = vor.u32 %v800, %v803
      %v805 = vrot.slane %v804, 4
      %v807 = vshll.u32 %v642, 16
      %v809 = vrot.slane %v807, 5
      %v810 = vsel %vm676, %v805, %v809
      %v811 = vshrl.u32 %v642, 16
      %v813 = vrot.slane %v811, 4
      %v814 = vor.u32 %v813, %v809
      %v815 = vrot.slane %v814, 4
      %v817 = vshll.u32 %v643, 16
      %v819 = vrot.slane %v817, 5
      %v820 = vsel %vm676, %v815, %v819
      %v822 = vshrl.u32 %v644, 16
      %v824 = vrot.slane %v822, 4
      %v825 = vshll.u32 %v644, 16
      %v827 = vrot.slane %v825, 5
      %v828 = vor.u32 %v824, %v827
      %v829 = vrot.slane %v828, 4
      %v831 = vshll.u32 %v645, 16
      %v833 = vrot.slane %v831, 5
      %v834 = vsel %vm676, %v829, %v833
      %v835 = vshrl.u32 %v645, 16
      %v837 = vrot.slane %v835, 4
      %v838 = vor.u32 %v837, %v833
      %v839 = vrot.slane %v838, 4
      %v841 = vshll.u32 %v646, 16
      %v843 = vrot.slane %v841, 5
      %v844 = vsel %vm676, %v839, %v843
      %v846 = vshrl.u32 %v647, 16
      %v848 = vrot.slane %v846, 4
      %v849 = vshll.u32 %v647, 16
      %v851 = vrot.slane %v849, 5
      %v852 = vor.u32 %v848, %v851
      %v853 = vrot.slane %v852, 4
      %v855 = vshll.u32 %v648, 16
      %v857 = vrot.slane %v855, 5
      %v858 = vsel %vm676, %v853, %v857
      %v859 = vshrl.u32 %v648, 16
      %v861 = vrot.slane %v859, 4
      %v862 = vor.u32 %v861, %v857
      %v863 = vrot.slane %v862, 4
      %v865 = vshll.u32 %v649, 16
      %v867 = vrot.slane %v865, 5
      %v868 = vsel %vm676, %v863, %v867
      %v870 = vshrl.u32 %v650, 16
      %v872 = vrot.slane %v870, 4
      %v873 = vshll.u32 %v650, 16
      %v875 = vrot.slane %v873, 5
      %v876 = vor.u32 %v872, %v875
      %v877 = vrot.slane %v876, 4
      %v879 = vshll.u32 %v651, 16
      %v881 = vrot.slane %v879, 5
      %v882 = vsel %vm676, %v877, %v881
      %v883 = vshrl.u32 %v651, 16
      %v885 = vrot.slane %v883, 4
      %v886 = vor.u32 %v885, %v881
      %v887 = vrot.slane %v886, 4
      %v889 = vshll.u32 %v652, 16
      %v891 = vrot.slane %v889, 5
      %v892 = vsel %vm676, %v887, %v891
      %v894 = vshrl.u32 %v653, 16
      %v896 = vrot.slane %v894, 4
      %v897 = vshll.u32 %v653, 16
      %v899 = vrot.slane %v897, 5
      %v900 = vor.u32 %v896, %v899
      %v901 = vrot.slane %v900, 4
      %v903 = vshll.u32 %v654, 16
      %v905 = vrot.slane %v903, 5
      %v906 = vsel %vm676, %v901, %v905
      %v907 = vshrl.u32 %v654, 16
      %v909 = vrot.slane %v907, 4
      %v910 = vor.u32 %v909, %v905
      %v911 = vrot.slane %v910, 4
      %v913 = vshll.u32 %v655, 16
      %v915 = vrot.slane %v913, 5
      %v916 = vsel %vm676, %v911, %v915
      %v918 = vshrl.u32 %v656, 16
      %v920 = vrot.slane %v918, 4
      %v921 = vshll.u32 %v656, 16
      %v923 = vrot.slane %v921, 5
      %v924 = vor.u32 %v920, %v923
      %v925 = vrot.slane %v924, 4
      %v927 = vshll.u32 %v657, 16
      %v929 = vrot.slane %v927, 5
      %v930 = vsel %vm676, %v925, %v929
      %v931 = vshrl.u32 %v657, 16
      %v933 = vrot.slane %v931, 4
      %v934 = vor.u32 %v933, %v929
      %v935 = vrot.slane %v934, 4
      %v937 = vshll.u32 %v658, 16
      %v939 = vrot.slane %v937, 5
      %v940 = vsel %vm676, %v935, %v939
      %v942 = vshrl.u32 %v659, 16
      %v944 = vrot.slane %v942, 4
      %v945 = vshll.u32 %v659, 16
      %v947 = vrot.slane %v945, 5
      %v948 = vor.u32 %v944, %v947
      %v949 = vrot.slane %v948, 4
      %v951 = vshll.u32 %v660, 16
      %v953 = vrot.slane %v951, 5
      %v954 = vsel %vm676, %v949, %v953
      %v955 = vshrl.u32 %v660, 16
      %v957 = vrot.slane %v955, 4
      %v958 = vor.u32 %v957, %v953
      %v959 = vrot.slane %v958, 4
      %v961 = vshll.u32 %v661, 16
      %v963 = vrot.slane %v961, 5
      %v964 = vsel %vm676, %v959, %v963
      %v966 = vshrl.u32 %v662, 16
      %v968 = vrot.slane %v966, 4
      %v969 = vshll.u32 %v662, 16
      %v971 = vrot.slane %v969, 5
      %v972 = vor.u32 %v968, %v971
      %v973 = vrot.slane %v972, 4
      %v975 = vshll.u32 %v663, 16
      %v977 = vrot.slane %v975, 5
      %v978 = vsel %vm676, %v973, %v977
      %v979 = vshrl.u32 %v663, 16
      %v981 = vrot.slane %v979, 4
      %v982 = vor.u32 %v981, %v977
      %v983 = vrot.slane %v982, 4
      %v985 = vshll.u32 %v664, 16
      %v987 = vrot.slane %v985, 5
      %v988 = vsel %vm676, %v983, %v987
      %v990 = vshrl.u32 %v665, 16
      %v992 = vrot.slane %v990, 4
      %v993 = vshll.u32 %v665, 16
      %v995 = vrot.slane %v993, 5
      %v996 = vor.u32 %v992, %v995
      %v997 = vrot.slane %v996, 4
      %v999 = vshll.u32 %v666, 16
      %v1001 = vrot.slane %v999, 5
      %v1002 = vsel %vm676, %v997, %v1001
      %v1003 = vshrl.u32 %v666, 16
      %v1005 = vrot.slane %v1003, 4
      %v1006 = vor.u32 %v1005, %v1001
      %v1007 = vrot.slane %v1006, 4
      %v1009 = vshll.u32 %v667, 16
      %v1011 = vrot.slane %v1009, 5
      %v1012 = vsel %vm676, %v1007, %v1011
      %v1014 = vshrl.u32 %v668, 16
      %v1016 = vrot.slane %v1014, 4
      %v1017 = vshll.u32 %v668, 16
      %v1019 = vrot.slane %v1017, 5
      %v1020 = vor.u32 %v1016, %v1019
      %v1021 = vrot.slane %v1020, 4
      %v1023 = vshll.u32 %v669, 16
      %v1025 = vrot.slane %v1023, 5
      %v1026 = vsel %vm676, %v1021, %v1025
      %v1027 = vshrl.u32 %v669, 16
      %v1029 = vrot.slane %v1027, 4
      %v1030 = vor.u32 %v1029, %v1025
      %v1031 = vrot.slane %v1030, 4
      %v1033 = vshll.u32 %v670, 16
      %v1035 = vrot.slane %v1033, 5
      %v1036 = vsel %vm676, %v1031, %v1035
      %v1038 = vshrl.u32 %v671, 16
      %v1040 = vrot.slane %v1038, 4
      %v1041 = vshll.u32 %v671, 16
      %v1043 = vrot.slane %v1041, 5
      %v1044 = vor.u32 %v1040, %v1043
      %v1045 = vrot.slane %v1044, 4
      %v1047 = vshll.u32 %v672, 16
      %v1049 = vrot.slane %v1047, 5
      %v1050 = vsel %vm676, %v1045, %v1049
      %v1051 = vshrl.u32 %v672, 16
      %v1053 = vrot.slane %v1051, 4
      %v1054 = vor.u32 %v1053, %v1049
      %v1055 = vrot.slane %v1054, 4
      %v1057 = vshll.u32 %v673, 16
      %v1059 = vrot.slane %v1057, 5
      %v1060 = vsel %vm676, %v1055, %v1059
      %s1061 = scalar_lea.vmem %s248, 8
      %v1062 = vld [vmem:[%s1061] sm:$0xf]
      %v1063 = vld [vmem:[%s1061 + $0x4] sm:$0xf]
      %v1064 = vunpack.c.l.b16 %v690
      %v1065 = vunpack.c.l.b16 %v700
      %v1066 = vunpack.c.l.b16 %v714
      %v1067 = vunpack.c.l.b16 %v724
      %v1068 = vunpack.c.l.b16 %v738
      %v1069 = vunpack.c.l.b16 %v748
      %v1070 = vunpack.c.l.b16 %v762
      %v1071 = vunpack.c.l.b16 %v772
      %v1072 = vunpack.c.l.b16 %v786
      %v1073 = vunpack.c.l.b16 %v796
      %v1074 = vunpack.c.l.b16 %v810
      %v1075 = vunpack.c.l.b16 %v820
      %v1076 = vunpack.c.l.b16 %v834
      %v1077 = vunpack.c.l.b16 %v844
      %v1078 = vunpack.c.l.b16 %v858
      %v1079 = vunpack.c.l.b16 %v868
      %v1080 = vunpack.c.l.b16 %v882
      %v1081 = vunpack.c.l.b16 %v892
      %v1082 = vunpack.c.l.b16 %v906
      %v1083 = vunpack.c.l.b16 %v916
      %v1084 = vunpack.c.l.b16 %v930
      %v1085 = vunpack.c.l.b16 %v940
      %v1086 = vunpack.c.l.b16 %v954
      %v1087 = vunpack.c.l.b16 %v964
      %v1088 = vunpack.c.l.b16 %v978
      %v1089 = vunpack.c.l.b16 %v988
      %v1090 = vunpack.c.l.b16 %v1002
      %v1091 = vunpack.c.l.b16 %v1012
      %v1092 = vunpack.c.l.b16 %v1026
      %v1093 = vunpack.c.l.b16 %v1036
      %v1094 = vunpack.c.l.b16 %v1050
      %v1095 = vunpack.c.l.b16 %v1060
      %v1096 = vpack.c.b16 %v1065, %v1064
      %v1097 = vpack.c.b16 %v1067, %v1066
      %v1098 = vpack.c.b16 %v1069, %v1068
      %v1099 = vpack.c.b16 %v1071, %v1070
      %v1100 = vpack.c.b16 %v1073, %v1072
      %v1101 = vpack.c.b16 %v1075, %v1074
      %v1102 = vpack.c.b16 %v1077, %v1076
      %v1103 = vpack.c.b16 %v1079, %v1078
      %v1104 = vpack.c.b16 %v1081, %v1080
      %v1105 = vpack.c.b16 %v1083, %v1082
      %v1106 = vpack.c.b16 %v1085, %v1084
      %v1107 = vpack.c.b16 %v1087, %v1086
      %v1108 = vpack.c.b16 %v1089, %v1088
      %v1109 = vpack.c.b16 %v1091, %v1090
      %v1110 = vpack.c.b16 %v1093, %v1092
      %v1111 = vpack.c.b16 %v1095, %v1094
      %v1114 = vunpack.c.l.b16 %v1062
      %v1115 = vunpack.c.l.b16 %v1063
      %v1116 = vpack.c.b16 %v1115, %v1114
      %v1119 = vsel %vm384, %v1096, 0
      %v1122 = vsel %vm384, %v1097, 0
      %v1125 = vsel %vm384, %v1098, 0
      %v1128 = vsel %vm384, %v1099, 0
      %v1131 = vsel %vm384, %v1100, 0
      %v1134 = vsel %vm384, %v1101, 0
      %v1137 = vsel %vm384, %v1102, 0
      %v1140 = vsel %vm384, %v1103, 0
      %v1143 = vsel %vm384, %v1104, 0
      %v1146 = vsel %vm384, %v1105, 0
      %v1149 = vsel %vm384, %v1106, 0
      %v1152 = vsel %vm384, %v1107, 0
      %v1155 = vsel %vm384, %v1108, 0
      %v1158 = vsel %vm384, %v1109, 0
      %v1161 = vsel %vm384, %v1110, 0
      %v1164 = vsel %vm384, %v1111, 0
      %1166 = vmatprep.subr.bf16.mxu0 0
      %1167 = vmatpush1.bf16.msra.mxu0 0
      %1168 = vmatprep.subr.bf16.mxu0 0
      %1169 = vmatpush1.bf16.msra.mxu0 0
      %1170 = vmatprep.subr.bf16.mxu0 0
      %1171 = vmatpush1.bf16.msra.mxu0 0
      %1172 = vmatprep.subr.bf16.mxu0 0
      %1173 = vmatpush1.bf16.msra.mxu0 0
      %1174 = vmatprep.subr.bf16.mxu0 0
      %1175 = vmatpush1.bf16.msra.mxu0 0
      %1176 = vmatprep.subr.bf16.mxu0 0
      %1177 = vmatpush1.bf16.msra.mxu0 0
      %1178 = vmatprep.subr.bf16.mxu0 0
      %1179 = vmatpush1.bf16.msra.mxu0 0
      %1180 = vmatprep.subr.bf16.mxu0 0
      %1181 = vmatpush1.bf16.msra.mxu0 %v1116
      %1182 = vmatprep.subr.bf16.mxu0 0
      %1183 = vmatpush2.bf16.msra.mxu0 0
      %1184 = vmatprep.subr.bf16.mxu0 0
      %1185 = vmatpush2.bf16.msra.mxu0 0
      %1186 = vmatprep.subr.bf16.mxu0 0
      %1187 = vmatpush2.bf16.msra.mxu0 0
      %1188 = vmatprep.subr.bf16.mxu0 0
      %1189 = vmatpush2.bf16.msra.mxu0 0
      %1190 = vmatprep.subr.bf16.mxu0 0
      %1191 = vmatpush2.bf16.msra.mxu0 0
      %1192 = vmatprep.subr.bf16.mxu0 0
      %1193 = vmatpush2.bf16.msra.mxu0 0
      %1194 = vmatprep.subr.bf16.mxu0 0
      %1195 = vmatpush2.bf16.msra.mxu0 0
      %1196 = vmatprep.subr.bf16.mxu0 0
      %1197 = vmatpush2.bf16.msra.mxu0 0
      %1198 = vmatprep.mubr.bf16.mxu0 0
      %1199 = vmatmul.mubr.bf16.gmra.mxu0 %v1119
      %v1200 = vpop.f32.mrf.mxu0
      %v1201 = vadd.f32 0.0, %v1200
      %v1202 = vpop.f32.mrf.mxu0
      %v1203 = vpop.f32.mrf.mxu0
      %v1204 = vadd.f32 0.0, %v1203
      %v1205 = vpop.f32.mrf.mxu0
      %1206 = vmatprep.mubr.bf16.mxu0 0
      %1207 = vmatmul.mubr.bf16.gmra.mxu0 %v1122
      %v1208 = vpop.f32.mrf.mxu0
      %v1209 = vadd.f32 0.0, %v1208
      %v1210 = vpop.f32.mrf.mxu0
      %v1211 = vpop.f32.mrf.mxu0
      %v1212 = vadd.f32 0.0, %v1211
      %v1213 = vpop.f32.mrf.mxu0
      %1214 = vmatprep.mubr.bf16.mxu0 0
      %1215 = vmatmul.mubr.bf16.gmra.mxu0 %v1125
      %v1216 = vpop.f32.mrf.mxu0
      %v1217 = vadd.f32 0.0, %v1216
      %v1218 = vpop.f32.mrf.mxu0
      %v1219 = vpop.f32.mrf.mxu0
      %v1220 = vadd.f32 0.0, %v1219
      %v1221 = vpop.f32.mrf.mxu0
      %1222 = vmatprep.mubr.bf16.mxu0 0
      %1223 = vmatmul.mubr.bf16.gmra.mxu0 %v1128
      %v1224 = vpop.f32.mrf.mxu0
      %v1225 = vadd.f32 0.0, %v1224
      %v1226 = vpop.f32.mrf.mxu0
      %v1227 = vpop.f32.mrf.mxu0
      %v1228 = vadd.f32 0.0, %v1227
      %v1229 = vpop.f32.mrf.mxu0
      %1230 = vmatprep.mubr.bf16.mxu0 0
      %1231 = vmatmul.mubr.bf16.gmra.mxu0 %v1131
      %v1232 = vpop.f32.mrf.mxu0
      %v1233 = vadd.f32 0.0, %v1232
      %v1234 = vpop.f32.mrf.mxu0
      %v1235 = vpop.f32.mrf.mxu0
      %v1236 = vadd.f32 0.0, %v1235
      %v1237 = vpop.f32.mrf.mxu0
      %1238 = vmatprep.mubr.bf16.mxu0 0
      %1239 = vmatmul.mubr.bf16.gmra.mxu0 %v1134
      %v1240 = vpop.f32.mrf.mxu0
      %v1241 = vadd.f32 0.0, %v1240
      %v1242 = vpop.f32.mrf.mxu0
      %v1243 = vpop.f32.mrf.mxu0
      %v1244 = vadd.f32 0.0, %v1243
      %v1245 = vpop.f32.mrf.mxu0
      %1246 = vmatprep.mubr.bf16.mxu0 0
      %1247 = vmatmul.mubr.bf16.gmra.mxu0 %v1137
      %v1248 = vpop.f32.mrf.mxu0
      %v1249 = vadd.f32 0.0, %v1248
      %v1250 = vpop.f32.mrf.mxu0
      %v1251 = vpop.f32.mrf.mxu0
      %v1252 = vadd.f32 0.0, %v1251
      %v1253 = vpop.f32.mrf.mxu0
      %1254 = vmatprep.mubr.bf16.mxu0 0
      %1255 = vmatmul.mubr.bf16.gmra.mxu0 %v1140
      %v1256 = vpop.f32.mrf.mxu0
      %v1257 = vadd.f32 0.0, %v1256
      %v1258 = vpop.f32.mrf.mxu0
      %v1259 = vpop.f32.mrf.mxu0
      %v1260 = vadd.f32 0.0, %v1259
      %v1261 = vpop.f32.mrf.mxu0
      %1262 = vmatprep.mubr.bf16.mxu0 0
      %1263 = vmatmul.mubr.bf16.gmra.mxu0 %v1143
      %v1264 = vpop.f32.mrf.mxu0
      %v1265 = vadd.f32 0.0, %v1264
      %v1266 = vpop.f32.mrf.mxu0
      %v1267 = vpop.f32.mrf.mxu0
      %v1268 = vadd.f32 0.0, %v1267
      %v1269 = vpop.f32.mrf.mxu0
      %1270 = vmatprep.mubr.bf16.mxu0 0
      %1271 = vmatmul.mubr.bf16.gmra.mxu0 %v1146
      %v1272 = vpop.f32.mrf.mxu0
      %v1273 = vadd.f32 0.0, %v1272
      %v1274 = vpop.f32.mrf.mxu0
      %v1275 = vpop.f32.mrf.mxu0
      %v1276 = vadd.f32 0.0, %v1275
      %v1277 = vpop.f32.mrf.mxu0
      %1278 = vmatprep.mubr.bf16.mxu0 0
      %1279 = vmatmul.mubr.bf16.gmra.mxu0 %v1149
      %v1280 = vpop.f32.mrf.mxu0
      %v1281 = vadd.f32 0.0, %v1280
      %v1282 = vpop.f32.mrf.mxu0
      %v1283 = vpop.f32.mrf.mxu0
      %v1284 = vadd.f32 0.0, %v1283
      %v1285 = vpop.f32.mrf.mxu0
      %1286 = vmatprep.mubr.bf16.mxu0 0
      %1287 = vmatmul.mubr.bf16.gmra.mxu0 %v1152
      %v1288 = vpop.f32.mrf.mxu0
      %v1289 = vadd.f32 0.0, %v1288
      %v1290 = vpop.f32.mrf.mxu0
      %v1291 = vpop.f32.mrf.mxu0
      %v1292 = vadd.f32 0.0, %v1291
      %v1293 = vpop.f32.mrf.mxu0
      %1294 = vmatprep.mubr.bf16.mxu0 0
      %1295 = vmatmul.mubr.bf16.gmra.mxu0 %v1155
      %v1296 = vpop.f32.mrf.mxu0
      %v1297 = vadd.f32 0.0, %v1296
      %v1298 = vpop.f32.mrf.mxu0
      %v1299 = vpop.f32.mrf.mxu0
      %v1300 = vadd.f32 0.0, %v1299
      %v1301 = vpop.f32.mrf.mxu0
      %1302 = vmatprep.mubr.bf16.mxu0 0
      %1303 = vmatmul.mubr.bf16.gmra.mxu0 %v1158
      %v1304 = vpop.f32.mrf.mxu0
      %v1305 = vadd.f32 0.0, %v1304
      %v1306 = vpop.f32.mrf.mxu0
      %v1307 = vpop.f32.mrf.mxu0
      %v1308 = vadd.f32 0.0, %v1307
      %v1309 = vpop.f32.mrf.mxu0
      %1310 = vmatprep.mubr.bf16.mxu0 0
      %1311 = vmatmul.mubr.bf16.gmra.mxu0 %v1161
      %v1312 = vpop.f32.mrf.mxu0
      %v1313 = vadd.f32 0.0, %v1312
      %v1314 = vpop.f32.mrf.mxu0
      %v1315 = vpop.f32.mrf.mxu0
      %v1316 = vadd.f32 0.0, %v1315
      %v1317 = vpop.f32.mrf.mxu0
      %1318 = vmatprep.mubr.bf16.mxu0 0
      %1319 = vmatmul.mubr.bf16.gmra.mxu0 %v1164
      %v1320 = vpop.f32.mrf.mxu0
      %v1321 = vadd.f32 0.0, %v1320
      %v1322 = vpop.f32.mrf.mxu0
      %v1323 = vpop.f32.mrf.mxu0
      %v1324 = vadd.f32 0.0, %v1323
      %v1325 = vpop.f32.mrf.mxu0
      %1326 = vdwg.mxu0
      %v1327 = vld [vmem:[#allocation2] sm:$0xff]
      %v1328 = vld [vmem:[#allocation2 + $0x8] sm:$0xff]
      %v1329 = vld [vmem:[#allocation2 + $0x10] sm:$0xff]
      %v1330 = vld [vmem:[#allocation2 + $0x18] sm:$0xff]
      %v1331 = vld [vmem:[#allocation2 + $0x20] sm:$0xff]
      %v1332 = vld [vmem:[#allocation2 + $0x28] sm:$0xff]
      %v1333 = vld [vmem:[#allocation2 + $0x30] sm:$0xff]
      %v1334 = vld [vmem:[#allocation2 + $0x38] sm:$0xff]
      %v1335 = vld [vmem:[#allocation2 + $0x40] sm:$0xff]
      %v1336 = vld [vmem:[#allocation2 + $0x48] sm:$0xff]
      %v1337 = vld [vmem:[#allocation2 + $0x50] sm:$0xff]
      %v1338 = vld [vmem:[#allocation2 + $0x58] sm:$0xff]
      %v1339 = vld [vmem:[#allocation2 + $0x60] sm:$0xff]
      %v1340 = vld [vmem:[#allocation2 + $0x68] sm:$0xff]
      %v1341 = vld [vmem:[#allocation2 + $0x70] sm:$0xff]
      %v1342 = vld [vmem:[#allocation2 + $0x78] sm:$0xff]
      %v1343 = vld [vmem:[#allocation2 + $0x80] sm:$0xff]
      %v1344 = vld [vmem:[#allocation2 + $0x88] sm:$0xff]
      %v1345 = vld [vmem:[#allocation2 + $0x90] sm:$0xff]
      %v1346 = vld [vmem:[#allocation2 + $0x98] sm:$0xff]
      %v1347 = vld [vmem:[#allocation2 + $0xa0] sm:$0xff]
      %v1348 = vld [vmem:[#allocation2 + $0xa8] sm:$0xff]
      %v1349 = vld [vmem:[#allocation2 + $0xb0] sm:$0xff]
      %v1350 = vld [vmem:[#allocation2 + $0xb8] sm:$0xff]
      %v1351 = vld [vmem:[#allocation2 + $0xc0] sm:$0xff]
      %v1352 = vld [vmem:[#allocation2 + $0xc8] sm:$0xff]
      %v1353 = vld [vmem:[#allocation2 + $0xd0] sm:$0xff]
      %v1354 = vld [vmem:[#allocation2 + $0xd8] sm:$0xff]
      %v1355 = vld [vmem:[#allocation2 + $0xe0] sm:$0xff]
      %v1356 = vld [vmem:[#allocation2 + $0xe8] sm:$0xff]
      %v1357 = vld [vmem:[#allocation2 + $0xf0] sm:$0xff]
      %v1358 = vld [vmem:[#allocation2 + $0xf8] sm:$0xff]
      %v1359 = vadd.f32 %v1327, %v1201
      %v1360 = vadd.f32 %v1328, %v1204
      %v1361 = vadd.f32 %v1329, %v1209
      %v1362 = vadd.f32 %v1330, %v1212
      %v1363 = vadd.f32 %v1331, %v1217
      %v1364 = vadd.f32 %v1332, %v1220
      %v1365 = vadd.f32 %v1333, %v1225
      %v1366 = vadd.f32 %v1334, %v1228
      %v1367 = vadd.f32 %v1335, %v1233
      %v1368 = vadd.f32 %v1336, %v1236
      %v1369 = vadd.f32 %v1337, %v1241
      %v1370 = vadd.f32 %v1338, %v1244
      %v1371 = vadd.f32 %v1339, %v1249
      %v1372 = vadd.f32 %v1340, %v1252
      %v1373 = vadd.f32 %v1341, %v1257
      %v1374 = vadd.f32 %v1342, %v1260
      %v1375 = vadd.f32 %v1343, %v1265
      %v1376 = vadd.f32 %v1344, %v1268
      %v1377 = vadd.f32 %v1345, %v1273
      %v1378 = vadd.f32 %v1346, %v1276
      %v1379 = vadd.f32 %v1347, %v1281
      %v1380 = vadd.f32 %v1348, %v1284
      %v1381 = vadd.f32 %v1349, %v1289
      %v1382 = vadd.f32 %v1350, %v1292
      %v1383 = vadd.f32 %v1351, %v1297
      %v1384 = vadd.f32 %v1352, %v1300
      %v1385 = vadd.f32 %v1353, %v1305
      %v1386 = vadd.f32 %v1354, %v1308
      %v1387 = vadd.f32 %v1355, %v1313
      %v1388 = vadd.f32 %v1356, %v1316
      %v1389 = vadd.f32 %v1357, %v1321
      %v1390 = vadd.f32 %v1358, %v1324
      %1391 = vst.msk [vmem:[#allocation2] sm:$0xff] %vm384, %v1359
      %1392 = vst.msk [vmem:[#allocation2 + $0x8] sm:$0xff] %vm384, %v1360
      %1393 = vst.msk [vmem:[#allocation2 + $0x10] sm:$0xff] %vm384, %v1361
      %1394 = vst.msk [vmem:[#allocation2 + $0x18] sm:$0xff] %vm384, %v1362
      %1395 = vst.msk [vmem:[#allocation2 + $0x20] sm:$0xff] %vm384, %v1363
      %1396 = vst.msk [vmem:[#allocation2 + $0x28] sm:$0xff] %vm384, %v1364
      %1397 = vst.msk [vmem:[#allocation2 + $0x30] sm:$0xff] %vm384, %v1365
      %1398 = vst.msk [vmem:[#allocation2 + $0x38] sm:$0xff] %vm384, %v1366
      %1399 = vst.msk [vmem:[#allocation2 + $0x40] sm:$0xff] %vm384, %v1367
      %1400 = vst.msk [vmem:[#allocation2 + $0x48] sm:$0xff] %vm384, %v1368
      %1401 = vst.msk [vmem:[#allocation2 + $0x50] sm:$0xff] %vm384, %v1369
      %1402 = vst.msk [vmem:[#allocation2 + $0x58] sm:$0xff] %vm384, %v1370
      %1403 = vst.msk [vmem:[#allocation2 + $0x60] sm:$0xff] %vm384, %v1371
      %1404 = vst.msk [vmem:[#allocation2 + $0x68] sm:$0xff] %vm384, %v1372
      %1405 = vst.msk [vmem:[#allocation2 + $0x70] sm:$0xff] %vm384, %v1373
      %1406 = vst.msk [vmem:[#allocation2 + $0x78] sm:$0xff] %vm384, %v1374
      %1407 = vst.msk [vmem:[#allocation2 + $0x80] sm:$0xff] %vm384, %v1375
      %1408 = vst.msk [vmem:[#allocation2 + $0x88] sm:$0xff] %vm384, %v1376
      %1409 = vst.msk [vmem:[#allocation2 + $0x90] sm:$0xff] %vm384, %v1377
      %1410 = vst.msk [vmem:[#allocation2 + $0x98] sm:$0xff] %vm384, %v1378
      %1411 = vst.msk [vmem:[#allocation2 + $0xa0] sm:$0xff] %vm384, %v1379
      %1412 = vst.msk [vmem:[#allocation2 + $0xa8] sm:$0xff] %vm384, %v1380
      %1413 = vst.msk [vmem:[#allocation2 + $0xb0] sm:$0xff] %vm384, %v1381
      %1414 = vst.msk [vmem:[#allocation2 + $0xb8] sm:$0xff] %vm384, %v1382
      %1415 = vst.msk [vmem:[#allocation2 + $0xc0] sm:$0xff] %vm384, %v1383
      %1416 = vst.msk [vmem:[#allocation2 + $0xc8] sm:$0xff] %vm384, %v1384
      %1417 = vst.msk [vmem:[#allocation2 + $0xd0] sm:$0xff] %vm384, %v1385
      %1418 = vst.msk [vmem:[#allocation2 + $0xd8] sm:$0xff] %vm384, %v1386
      %1419 = vst.msk [vmem:[#allocation2 + $0xe0] sm:$0xff] %vm384, %v1387
      %1420 = vst.msk [vmem:[#allocation2 + $0xe8] sm:$0xff] %vm384, %v1388
      %1421 = vst.msk [vmem:[#allocation2 + $0xf0] sm:$0xff] %vm384, %v1389
      %1422 = vst.msk [vmem:[#allocation2 + $0xf8] sm:$0xff] %vm384, %v1390
      %v1423 = vld [vmem:[%s244] sm:$0xe]
      %v1424 = vld [vmem:[%s244 + $0x4] sm:$0xf]
      %v1425 = vld [vmem:[%s244 + $0x8] sm:$0x1]
      %v1426 = vld [vmem:[%s244 + $0xc] sm:$0xe]
      %v1427 = vld [vmem:[%s244 + $0x10] sm:$0xf]
      %v1428 = vld [vmem:[%s244 + $0x14] sm:$0x1]
      %v1429 = vld [vmem:[%s244 + $0x18] sm:$0xe]
      %v1430 = vld [vmem:[%s244 + $0x1c] sm:$0xf]
      %v1431 = vld [vmem:[%s244 + $0x20] sm:$0x1]
      %v1432 = vld [vmem:[%s244 + $0x24] sm:$0xe]
      %v1433 = vld [vmem:[%s244 + $0x28] sm:$0xf]
      %v1434 = vld [vmem:[%s244 + $0x2c] sm:$0x1]
      %v1435 = vld [vmem:[%s244 + $0x30] sm:$0xe]
      %v1436 = vld [vmem:[%s244 + $0x34] sm:$0xf]
      %v1437 = vld [vmem:[%s244 + $0x38] sm:$0x1]
      %v1438 = vld [vmem:[%s244 + $0x3c] sm:$0xe]
      %v1439 = vld [vmem:[%s244 + $0x40] sm:$0xf]
      %v1440 = vld [vmem:[%s244 + $0x44] sm:$0x1]
      %v1441 = vld [vmem:[%s244 + $0x48] sm:$0xe]
      %v1442 = vld [vmem:[%s244 + $0x4c] sm:$0xf]
      %v1443 = vld [vmem:[%s244 + $0x50] sm:$0x1]
      %v1444 = vld [vmem:[%s244 + $0x54] sm:$0xe]
      %v1445 = vld [vmem:[%s244 + $0x58] sm:$0xf]
      %v1446 = vld [vmem:[%s244 + $0x5c] sm:$0x1]
      %v1447 = vld [vmem:[%s244 + $0x60] sm:$0xe]
      %v1448 = vld [vmem:[%s244 + $0x64] sm:$0xf]
      %v1449 = vld [vmem:[%s244 + $0x68] sm:$0x1]
      %v1450 = vld [vmem:[%s244 + $0x6c] sm:$0xe]
      %v1451 = vld [vmem:[%s244 + $0x70] sm:$0xf]
      %v1452 = vld [vmem:[%s244 + $0x74] sm:$0x1]
      %v1453 = vld [vmem:[%s244 + $0x78] sm:$0xe]
      %v1454 = vld [vmem:[%s244 + $0x7c] sm:$0xf]
      %v1455 = vld [vmem:[%s244 + $0x80] sm:$0x1]
      %v1456 = vld [vmem:[%s244 + $0x84] sm:$0xe]
      %v1457 = vld [vmem:[%s244 + $0x88] sm:$0xf]
      %v1458 = vld [vmem:[%s244 + $0x8c] sm:$0x1]
      %v1459 = vld [vmem:[%s244 + $0x90] sm:$0xe]
      %v1460 = vld [vmem:[%s244 + $0x94] sm:$0xf]
      %v1461 = vld [vmem:[%s244 + $0x98] sm:$0x1]
      %v1462 = vld [vmem:[%s244 + $0x9c] sm:$0xe]
      %v1463 = vld [vmem:[%s244 + $0xa0] sm:$0xf]
      %v1464 = vld [vmem:[%s244 + $0xa4] sm:$0x1]
      %v1465 = vld [vmem:[%s244 + $0xa8] sm:$0xe]
      %v1466 = vld [vmem:[%s244 + $0xac] sm:$0xf]
      %v1467 = vld [vmem:[%s244 + $0xb0] sm:$0x1]
      %v1468 = vld [vmem:[%s244 + $0xb4] sm:$0xe]
      %v1469 = vld [vmem:[%s244 + $0xb8] sm:$0xf]
      %v1470 = vld [vmem:[%s244 + $0xbc] sm:$0x1]
      %vm1519 = vcmask 1042432
      %vm1520 = vcmask 1046532
      %vm1521 = vmor %vm1519, %vm1520
      %v1522 = vrot.slane %v1423, 5
      %v1523 = vrot.slane %v1522, 4
      %v1524 = vrot.slane %v1424, 5
      %v1525 = vsel %vm1521, %v1523, %v1524
      %v1526 = vrot.slane %v1524, 4
      %v1527 = vrot.slane %v1425, 5
      %v1528 = vsel %vm1521, %v1526, %v1527
      %v1529 = vrot.slane %v1426, 5
      %v1530 = vrot.slane %v1529, 4
      %v1531 = vrot.slane %v1427, 5
      %v1532 = vsel %vm1521, %v1530, %v1531
      %v1533 = vrot.slane %v1531, 4
      %v1534 = vrot.slane %v1428, 5
      %v1535 = vsel %vm1521, %v1533, %v1534
      %v1536 = vrot.slane %v1429, 5
      %v1537 = vrot.slane %v1536, 4
      %v1538 = vrot.slane %v1430, 5
      %v1539 = vsel %vm1521, %v1537, %v1538
      %v1540 = vrot.slane %v1538, 4
      %v1541 = vrot.slane %v1431, 5
      %v1542 = vsel %vm1521, %v1540, %v1541
      %v1543 = vrot.slane %v1432, 5
      %v1544 = vrot.slane %v1543, 4
      %v1545 = vrot.slane %v1433, 5
      %v1546 = vsel %vm1521, %v1544, %v1545
      %v1547 = vrot.slane %v1545, 4
      %v1548 = vrot.slane %v1434, 5
      %v1549 = vsel %vm1521, %v1547, %v1548
      %v1550 = vrot.slane %v1435, 5
      %v1551 = vrot.slane %v1550, 4
      %v1552 = vrot.slane %v1436, 5
      %v1553 = vsel %vm1521, %v1551, %v1552
      %v1554 = vrot.slane %v1552, 4
      %v1555 = vrot.slane %v1437, 5
      %v1556 = vsel %vm1521, %v1554, %v1555
      %v1557 = vrot.slane %v1438, 5
      %v1558 = vrot.slane %v1557, 4
      %v1559 = vrot.slane %v1439, 5
      %v1560 = vsel %vm1521, %v1558, %v1559
      %v1561 = vrot.slane %v1559, 4
      %v1562 = vrot.slane %v1440, 5
      %v1563 = vsel %vm1521, %v1561, %v1562
      %v1564 = vrot.slane %v1441, 5
      %v1565 = vrot.slane %v1564, 4
      %v1566 = vrot.slane %v1442, 5
      %v1567 = vsel %vm1521, %v1565, %v1566
      %v1568 = vrot.slane %v1566, 4
      %v1569 = vrot.slane %v1443, 5
      %v1570 = vsel %vm1521, %v1568, %v1569
      %v1571 = vrot.slane %v1444, 5
      %v1572 = vrot.slane %v1571, 4
      %v1573 = vrot.slane %v1445, 5
      %v1574 = vsel %vm1521, %v1572, %v1573
      %v1575 = vrot.slane %v1573, 4
      %v1576 = vrot.slane %v1446, 5
      %v1577 = vsel %vm1521, %v1575, %v1576
      %v1578 = vrot.slane %v1447, 5
      %v1579 = vrot.slane %v1578, 4
      %v1580 = vrot.slane %v1448, 5
      %v1581 = vsel %vm1521, %v1579, %v1580
      %v1582 = vrot.slane %v1580, 4
      %v1583 = vrot.slane %v1449, 5
      %v1584 = vsel %vm1521, %v1582, %v1583
      %v1585 = vrot.slane %v1450, 5
      %v1586 = vrot.slane %v1585, 4
      %v1587 = vrot.slane %v1451, 5
      %v1588 = vsel %vm1521, %v1586, %v1587
      %v1589 = vrot.slane %v1587, 4
      %v1590 = vrot.slane %v1452, 5
      %v1591 = vsel %vm1521, %v1589, %v1590
      %v1592 = vrot.slane %v1453, 5
      %v1593 = vrot.slane %v1592, 4
      %v1594 = vrot.slane %v1454, 5
      %v1595 = vsel %vm1521, %v1593, %v1594
      %v1596 = vrot.slane %v1594, 4
      %v1597 = vrot.slane %v1455, 5
      %v1598 = vsel %vm1521, %v1596, %v1597
      %v1599 = vrot.slane %v1456, 5
      %v1600 = vrot.slane %v1599, 4
      %v1601 = vrot.slane %v1457, 5
      %v1602 = vsel %vm1521, %v1600, %v1601
      %v1603 = vrot.slane %v1601, 4
      %v1604 = vrot.slane %v1458, 5
      %v1605 = vsel %vm1521, %v1603, %v1604
      %v1606 = vrot.slane %v1459, 5
      %v1607 = vrot.slane %v1606, 4
      %v1608 = vrot.slane %v1460, 5
      %v1609 = vsel %vm1521, %v1607, %v1608
      %v1610 = vrot.slane %v1608, 4
      %v1611 = vrot.slane %v1461, 5
      %v1612 = vsel %vm1521, %v1610, %v1611
      %v1613 = vrot.slane %v1462, 5
      %v1614 = vrot.slane %v1613, 4
      %v1615 = vrot.slane %v1463, 5
      %v1616 = vsel %vm1521, %v1614, %v1615
      %v1617 = vrot.slane %v1615, 4
      %v1618 = vrot.slane %v1464, 5
      %v1619 = vsel %vm1521, %v1617, %v1618
      %v1620 = vrot.slane %v1465, 5
      %v1621 = vrot.slane %v1620, 4
      %v1622 = vrot.slane %v1466, 5
      %v1623 = vsel %vm1521, %v1621, %v1622
      %v1624 = vrot.slane %v1622, 4
      %v1625 = vrot.slane %v1467, 5
      %v1626 = vsel %vm1521, %v1624, %v1625
      %v1627 = vrot.slane %v1468, 5
      %v1628 = vrot.slane %v1627, 4
      %v1629 = vrot.slane %v1469, 5
      %v1630 = vsel %vm1521, %v1628, %v1629
      %v1631 = vrot.slane %v1629, 4
      %v1632 = vrot.slane %v1470, 5
      %v1633 = vsel %vm1521, %v1631, %v1632
      %s1634 = scalar_lea.vmem %s248, 16
      %v1635 = vld [vmem:[%s1634] sm:$0xf]
      %v1636 = vld [vmem:[%s1634 + $0x4] sm:$0xf]
      %v1637 = vunpack.c.l.b16 %v1525
      %v1638 = vunpack.c.l.b16 %v1528
      %v1639 = vunpack.c.l.b16 %v1532
      %v1640 = vunpack.c.l.b16 %v1535
      %v1641 = vunpack.c.l.b16 %v1539
      %v1642 = vunpack.c.l.b16 %v1542
      %v1643 = vunpack.c.l.b16 %v1546
      %v1644 = vunpack.c.l.b16 %v1549
      %v1645 = vunpack.c.l.b16 %v1553
      %v1646 = vunpack.c.l.b16 %v1556
      %v1647 = vunpack.c.l.b16 %v1560
      %v1648 = vunpack.c.l.b16 %v1563
      %v1649 = vunpack.c.l.b16 %v1567
      %v1650 = vunpack.c.l.b16 %v1570
      %v1651 = vunpack.c.l.b16 %v1574
      %v1652 = vunpack.c.l.b16 %v1577
      %v1653 = vunpack.c.l.b16 %v1581
      %v1654 = vunpack.c.l.b16 %v1584
      %v1655 = vunpack.c.l.b16 %v1588
      %v1656 = vunpack.c.l.b16 %v1591
      %v1657 = vunpack.c.l.b16 %v1595
      %v1658 = vunpack.c.l.b16 %v1598
      %v1659 = vunpack.c.l.b16 %v1602
      %v1660 = vunpack.c.l.b16 %v1605
      %v1661 = vunpack.c.l.b16 %v1609
      %v1662 = vunpack.c.l.b16 %v1612
      %v1663 = vunpack.c.l.b16 %v1616
      %v1664 = vunpack.c.l.b16 %v1619
      %v1665 = vunpack.c.l.b16 %v1623
      %v1666 = vunpack.c.l.b16 %v1626
      %v1667 = vunpack.c.l.b16 %v1630
      %v1668 = vunpack.c.l.b16 %v1633
      %v1669 = vpack.c.b16 %v1638, %v1637
      %v1670 = vpack.c.b16 %v1640, %v1639
      %v1671 = vpack.c.b16 %v1642, %v1641
      %v1672 = vpack.c.b16 %v1644, %v1643
      %v1673 = vpack.c.b16 %v1646, %v1645
      %v1674 = vpack.c.b16 %v1648, %v1647
      %v1675 = vpack.c.b16 %v1650, %v1649
      %v1676 = vpack.c.b16 %v1652, %v1651
      %v1677 = vpack.c.b16 %v1654, %v1653
      %v1678 = vpack.c.b16 %v1656, %v1655
      %v1679 = vpack.c.b16 %v1658, %v1657
      %v1680 = vpack.c.b16 %v1660, %v1659
      %v1681 = vpack.c.b16 %v1662, %v1661
      %v1682 = vpack.c.b16 %v1664, %v1663
      %v1683 = vpack.c.b16 %v1666, %v1665
      %v1684 = vpack.c.b16 %v1668, %v1667
      %v1687 = vunpack.c.l.b16 %v1635
      %v1688 = vunpack.c.l.b16 %v1636
      %v1689 = vpack.c.b16 %v1688, %v1687
      %v1692 = vsel %vm384, %v1669, 0
      %v1695 = vsel %vm384, %v1670, 0
      %v1698 = vsel %vm384, %v1671, 0
      %v1701 = vsel %vm384, %v1672, 0
      %v1704 = vsel %vm384, %v1673, 0
      %v1707 = vsel %vm384, %v1674, 0
      %v1710 = vsel %vm384, %v1675, 0
      %v1713 = vsel %vm384, %v1676, 0
      %v1716 = vsel %vm384, %v1677, 0
      %v1719 = vsel %vm384, %v1678, 0
      %v1722 = vsel %vm384, %v1679, 0
      %v1725 = vsel %vm384, %v1680, 0
      %v1728 = vsel %vm384, %v1681, 0
      %v1731 = vsel %vm384, %v1682, 0
      %v1734 = vsel %vm384, %v1683, 0
      %v1737 = vsel %vm384, %v1684, 0
      %1739 = vmatprep.subr.bf16.mxu0 0
      %1740 = vmatpush1.bf16.msra.mxu0 0
      %1741 = vmatprep.subr.bf16.mxu0 0
      %1742 = vmatpush1.bf16.msra.mxu0 0
      %1743 = vmatprep.subr.bf16.mxu0 0
      %1744 = vmatpush1.bf16.msra.mxu0 0
      %1745 = vmatprep.subr.bf16.mxu0 0
      %1746 = vmatpush1.bf16.msra.mxu0 0
      %1747 = vmatprep.subr.bf16.mxu0 0
      %1748 = vmatpush1.bf16.msra.mxu0 0
      %1749 = vmatprep.subr.bf16.mxu0 0
      %1750 = vmatpush1.bf16.msra.mxu0 0
      %1751 = vmatprep.subr.bf16.mxu0 0
      %1752 = vmatpush1.bf16.msra.mxu0 0
      %1753 = vmatprep.subr.bf16.mxu0 0
      %1754 = vmatpush1.bf16.msra.mxu0 %v1689
      %1755 = vmatprep.subr.bf16.mxu0 0
      %1756 = vmatpush2.bf16.msra.mxu0 0
      %1757 = vmatprep.subr.bf16.mxu0 0
      %1758 = vmatpush2.bf16.msra.mxu0 0
      %1759 = vmatprep.subr.bf16.mxu0 0
      %1760 = vmatpush2.bf16.msra.mxu0 0
      %1761 = vmatprep.subr.bf16.mxu0 0
      %1762 = vmatpush2.bf16.msra.mxu0 0
      %1763 = vmatprep.subr.bf16.mxu0 0
      %1764 = vmatpush2.bf16.msra.mxu0 0
      %1765 = vmatprep.subr.bf16.mxu0 0
      %1766 = vmatpush2.bf16.msra.mxu0 0
      %1767 = vmatprep.subr.bf16.mxu0 0
      %1768 = vmatpush2.bf16.msra.mxu0 0
      %1769 = vmatprep.subr.bf16.mxu0 0
      %1770 = vmatpush2.bf16.msra.mxu0 0
      %1771 = vmatprep.mubr.bf16.mxu0 0
      %1772 = vmatmul.mubr.bf16.gmra.mxu0 %v1692
      %v1773 = vpop.f32.mrf.mxu0
      %v1774 = vadd.f32 0.0, %v1773
      %v1775 = vpop.f32.mrf.mxu0
      %v1776 = vpop.f32.mrf.mxu0
      %v1777 = vadd.f32 0.0, %v1776
      %v1778 = vpop.f32.mrf.mxu0
      %1779 = vmatprep.mubr.bf16.mxu0 0
      %1780 = vmatmul.mubr.bf16.gmra.mxu0 %v1695
      %v1781 = vpop.f32.mrf.mxu0
      %v1782 = vadd.f32 0.0, %v1781
      %v1783 = vpop.f32.mrf.mxu0
      %v1784 = vpop.f32.mrf.mxu0
      %v1785 = vadd.f32 0.0, %v1784
      %v1786 = vpop.f32.mrf.mxu0
      %1787 = vmatprep.mubr.bf16.mxu0 0
      %1788 = vmatmul.mubr.bf16.gmra.mxu0 %v1698
      %v1789 = vpop.f32.mrf.mxu0
      %v1790 = vadd.f32 0.0, %v1789
      %v1791 = vpop.f32.mrf.mxu0
      %v1792 = vpop.f32.mrf.mxu0
      %v1793 = vadd.f32 0.0, %v1792
      %v1794 = vpop.f32.mrf.mxu0
      %1795 = vmatprep.mubr.bf16.mxu0 0
      %1796 = vmatmul.mubr.bf16.gmra.mxu0 %v1701
      %v1797 = vpop.f32.mrf.mxu0
      %v1798 = vadd.f32 0.0, %v1797
      %v1799 = vpop.f32.mrf.mxu0
      %v1800 = vpop.f32.mrf.mxu0
      %v1801 = vadd.f32 0.0, %v1800
      %v1802 = vpop.f32.mrf.mxu0
      %1803 = vmatprep.mubr.bf16.mxu0 0
      %1804 = vmatmul.mubr.bf16.gmra.mxu0 %v1704
      %v1805 = vpop.f32.mrf.mxu0
      %v1806 = vadd.f32 0.0, %v1805
      %v1807 = vpop.f32.mrf.mxu0
      %v1808 = vpop.f32.mrf.mxu0
      %v1809 = vadd.f32 0.0, %v1808
      %v1810 = vpop.f32.mrf.mxu0
      %1811 = vmatprep.mubr.bf16.mxu0 0
      %1812 = vmatmul.mubr.bf16.gmra.mxu0 %v1707
      %v1813 = vpop.f32.mrf.mxu0
      %v1814 = vadd.f32 0.0, %v1813
      %v1815 = vpop.f32.mrf.mxu0
      %v1816 = vpop.f32.mrf.mxu0
      %v1817 = vadd.f32 0.0, %v1816
      %v1818 = vpop.f32.mrf.mxu0
      %1819 = vmatprep.mubr.bf16.mxu0 0
      %1820 = vmatmul.mubr.bf16.gmra.mxu0 %v1710
      %v1821 = vpop.f32.mrf.mxu0
      %v1822 = vadd.f32 0.0, %v1821
      %v1823 = vpop.f32.mrf.mxu0
      %v1824 = vpop.f32.mrf.mxu0
      %v1825 = vadd.f32 0.0, %v1824
      %v1826 = vpop.f32.mrf.mxu0
      %1827 = vmatprep.mubr.bf16.mxu0 0
      %1828 = vmatmul.mubr.bf16.gmra.mxu0 %v1713
      %v1829 = vpop.f32.mrf.mxu0
      %v1830 = vadd.f32 0.0, %v1829
      %v1831 = vpop.f32.mrf.mxu0
      %v1832 = vpop.f32.mrf.mxu0
      %v1833 = vadd.f32 0.0, %v1832
      %v1834 = vpop.f32.mrf.mxu0
      %1835 = vmatprep.mubr.bf16.mxu0 0
      %1836 = vmatmul.mubr.bf16.gmra.mxu0 %v1716
      %v1837 = vpop.f32.mrf.mxu0
      %v1838 = vadd.f32 0.0, %v1837
      %v1839 = vpop.f32.mrf.mxu0
      %v1840 = vpop.f32.mrf.mxu0
      %v1841 = vadd.f32 0.0, %v1840
      %v1842 = vpop.f32.mrf.mxu0
      %1843 = vmatprep.mubr.bf16.mxu0 0
      %1844 = vmatmul.mubr.bf16.gmra.mxu0 %v1719
      %v1845 = vpop.f32.mrf.mxu0
      %v1846 = vadd.f32 0.0, %v1845
      %v1847 = vpop.f32.mrf.mxu0
      %v1848 = vpop.f32.mrf.mxu0
      %v1849 = vadd.f32 0.0, %v1848
      %v1850 = vpop.f32.mrf.mxu0
      %1851 = vmatprep.mubr.bf16.mxu0 0
      %1852 = vmatmul.mubr.bf16.gmra.mxu0 %v1722
      %v1853 = vpop.f32.mrf.mxu0
      %v1854 = vadd.f32 0.0, %v1853
      %v1855 = vpop.f32.mrf.mxu0
      %v1856 = vpop.f32.mrf.mxu0
      %v1857 = vadd.f32 0.0, %v1856
      %v1858 = vpop.f32.mrf.mxu0
      %1859 = vmatprep.mubr.bf16.mxu0 0
      %1860 = vmatmul.mubr.bf16.gmra.mxu0 %v1725
      %v1861 = vpop.f32.mrf.mxu0
      %v1862 = vadd.f32 0.0, %v1861
      %v1863 = vpop.f32.mrf.mxu0
      %v1864 = vpop.f32.mrf.mxu0
      %v1865 = vadd.f32 0.0, %v1864
      %v1866 = vpop.f32.mrf.mxu0
      %1867 = vmatprep.mubr.bf16.mxu0 0
      %1868 = vmatmul.mubr.bf16.gmra.mxu0 %v1728
      %v1869 = vpop.f32.mrf.mxu0
      %v1870 = vadd.f32 0.0, %v1869
      %v1871 = vpop.f32.mrf.mxu0
      %v1872 = vpop.f32.mrf.mxu0
      %v1873 = vadd.f32 0.0, %v1872
      %v1874 = vpop.f32.mrf.mxu0
      %1875 = vmatprep.mubr.bf16.mxu0 0
      %1876 = vmatmul.mubr.bf16.gmra.mxu0 %v1731
      %v1877 = vpop.f32.mrf.mxu0
      %v1878 = vadd.f32 0.0, %v1877
      %v1879 = vpop.f32.mrf.mxu0
      %v1880 = vpop.f32.mrf.mxu0
      %v1881 = vadd.f32 0.0, %v1880
      %v1882 = vpop.f32.mrf.mxu0
      %1883 = vmatprep.mubr.bf16.mxu0 0
      %1884 = vmatmul.mubr.bf16.gmra.mxu0 %v1734
      %v1885 = vpop.f32.mrf.mxu0
      %v1886 = vadd.f32 0.0, %v1885
      %v1887 = vpop.f32.mrf.mxu0
      %v1888 = vpop.f32.mrf.mxu0
      %v1889 = vadd.f32 0.0, %v1888
      %v1890 = vpop.f32.mrf.mxu0
      %1891 = vmatprep.mubr.bf16.mxu0 0
      %1892 = vmatmul.mubr.bf16.gmra.mxu0 %v1737
      %v1893 = vpop.f32.mrf.mxu0
      %v1894 = vadd.f32 0.0, %v1893
      %v1895 = vpop.f32.mrf.mxu0
      %v1896 = vpop.f32.mrf.mxu0
      %v1897 = vadd.f32 0.0, %v1896
      %v1898 = vpop.f32.mrf.mxu0
      %1899 = vdwg.mxu0
      %v1900 = vld [vmem:[#allocation2] sm:$0xff]
      %v1901 = vld [vmem:[#allocation2 + $0x8] sm:$0xff]
      %v1902 = vld [vmem:[#allocation2 + $0x10] sm:$0xff]
      %v1903 = vld [vmem:[#allocation2 + $0x18] sm:$0xff]
      %v1904 = vld [vmem:[#allocation2 + $0x20] sm:$0xff]
      %v1905 = vld [vmem:[#allocation2 + $0x28] sm:$0xff]
      %v1906 = vld [vmem:[#allocation2 + $0x30] sm:$0xff]
      %v1907 = vld [vmem:[#allocation2 + $0x38] sm:$0xff]
      %v1908 = vld [vmem:[#allocation2 + $0x40] sm:$0xff]
      %v1909 = vld [vmem:[#allocation2 + $0x48] sm:$0xff]
      %v1910 = vld [vmem:[#allocation2 + $0x50] sm:$0xff]
      %v1911 = vld [vmem:[#allocation2 + $0x58] sm:$0xff]
      %v1912 = vld [vmem:[#allocation2 + $0x60] sm:$0xff]
      %v1913 = vld [vmem:[#allocation2 + $0x68] sm:$0xff]
      %v1914 = vld [vmem:[#allocation2 + $0x70] sm:$0xff]
      %v1915 = vld [vmem:[#allocation2 + $0x78] sm:$0xff]
      %v1916 = vld [vmem:[#allocation2 + $0x80] sm:$0xff]
      %v1917 = vld [vmem:[#allocation2 + $0x88] sm:$0xff]
      %v1918 = vld [vmem:[#allocation2 + $0x90] sm:$0xff]
      %v1919 = vld [vmem:[#allocation2 + $0x98] sm:$0xff]
      %v1920 = vld [vmem:[#allocation2 + $0xa0] sm:$0xff]
      %v1921 = vld [vmem:[#allocation2 + $0xa8] sm:$0xff]
      %v1922 = vld [vmem:[#allocation2 + $0xb0] sm:$0xff]
      %v1923 = vld [vmem:[#allocation2 + $0xb8] sm:$0xff]
      %v1924 = vld [vmem:[#allocation2 + $0xc0] sm:$0xff]
      %v1925 = vld [vmem:[#allocation2 + $0xc8] sm:$0xff]
      %v1926 = vld [vmem:[#allocation2 + $0xd0] sm:$0xff]
      %v1927 = vld [vmem:[#allocation2 + $0xd8] sm:$0xff]
      %v1928 = vld [vmem:[#allocation2 + $0xe0] sm:$0xff]
      %v1929 = vld [vmem:[#allocation2 + $0xe8] sm:$0xff]
      %v1930 = vld [vmem:[#allocation2 + $0xf0] sm:$0xff]
      %v1931 = vld [vmem:[#allocation2 + $0xf8] sm:$0xff]
      %v1932 = vadd.f32 %v1900, %v1774
      %v1933 = vadd.f32 %v1901, %v1777
      %v1934 = vadd.f32 %v1902, %v1782
      %v1935 = vadd.f32 %v1903, %v1785
      %v1936 = vadd.f32 %v1904, %v1790
      %v1937 = vadd.f32 %v1905, %v1793
      %v1938 = vadd.f32 %v1906, %v1798
      %v1939 = vadd.f32 %v1907, %v1801
      %v1940 = vadd.f32 %v1908, %v1806
      %v1941 = vadd.f32 %v1909, %v1809
      %v1942 = vadd.f32 %v1910, %v1814
      %v1943 = vadd.f32 %v1911, %v1817
      %v1944 = vadd.f32 %v1912, %v1822
      %v1945 = vadd.f32 %v1913, %v1825
      %v1946 = vadd.f32 %v1914, %v1830
      %v1947 = vadd.f32 %v1915, %v1833
      %v1948 = vadd.f32 %v1916, %v1838
      %v1949 = vadd.f32 %v1917, %v1841
      %v1950 = vadd.f32 %v1918, %v1846
      %v1951 = vadd.f32 %v1919, %v1849
      %v1952 = vadd.f32 %v1920, %v1854
      %v1953 = vadd.f32 %v1921, %v1857
      %v1954 = vadd.f32 %v1922, %v1862
      %v1955 = vadd.f32 %v1923, %v1865
      %v1956 = vadd.f32 %v1924, %v1870
      %v1957 = vadd.f32 %v1925, %v1873
      %v1958 = vadd.f32 %v1926, %v1878
      %v1959 = vadd.f32 %v1927, %v1881
      %v1960 = vadd.f32 %v1928, %v1886
      %v1961 = vadd.f32 %v1929, %v1889
      %v1962 = vadd.f32 %v1930, %v1894
      %v1963 = vadd.f32 %v1931, %v1897
      %1964 = vst.msk [vmem:[#allocation2] sm:$0xff] %vm384, %v1932
      %1965 = vst.msk [vmem:[#allocation2 + $0x8] sm:$0xff] %vm384, %v1933
      %1966 = vst.msk [vmem:[#allocation2 + $0x10] sm:$0xff] %vm384, %v1934
      %1967 = vst.msk [vmem:[#allocation2 + $0x18] sm:$0xff] %vm384, %v1935
      %1968 = vst.msk [vmem:[#allocation2 + $0x20] sm:$0xff] %vm384, %v1936
      %1969 = vst.msk [vmem:[#allocation2 + $0x28] sm:$0xff] %vm384, %v1937
      %1970 = vst.msk [vmem:[#allocation2 + $0x30] sm:$0xff] %vm384, %v1938
      %1971 = vst.msk [vmem:[#allocation2 + $0x38] sm:$0xff] %vm384, %v1939
      %1972 = vst.msk [vmem:[#allocation2 + $0x40] sm:$0xff] %vm384, %v1940
      %1973 = vst.msk [vmem:[#allocation2 + $0x48] sm:$0xff] %vm384, %v1941
      %1974 = vst.msk [vmem:[#allocation2 + $0x50] sm:$0xff] %vm384, %v1942
      %1975 = vst.msk [vmem:[#allocation2 + $0x58] sm:$0xff] %vm384, %v1943
      %1976 = vst.msk [vmem:[#allocation2 + $0x60] sm:$0xff] %vm384, %v1944
      %1977 = vst.msk [vmem:[#allocation2 + $0x68] sm:$0xff] %vm384, %v1945
      %1978 = vst.msk [vmem:[#allocation2 + $0x70] sm:$0xff] %vm384, %v1946
      %1979 = vst.msk [vmem:[#allocation2 + $0x78] sm:$0xff] %vm384, %v1947
      %1980 = vst.msk [vmem:[#allocation2 + $0x80] sm:$0xff] %vm384, %v1948
      %1981 = vst.msk [vmem:[#allocation2 + $0x88] sm:$0xff] %vm384, %v1949
      %1982 = vst.msk [vmem:[#allocation2 + $0x90] sm:$0xff] %vm384, %v1950
      %1983 = vst.msk [vmem:[#allocation2 + $0x98] sm:$0xff] %vm384, %v1951
      %1984 = vst.msk [vmem:[#allocation2 + $0xa0] sm:$0xff] %vm384, %v1952
      %1985 = vst.msk [vmem:[#allocation2 + $0xa8] sm:$0xff] %vm384, %v1953
      %1986 = vst.msk [vmem:[#allocation2 + $0xb0] sm:$0xff] %vm384, %v1954
      %1987 = vst.msk [vmem:[#allocation2 + $0xb8] sm:$0xff] %vm384, %v1955
      %1988 = vst.msk [vmem:[#allocation2 + $0xc0] sm:$0xff] %vm384, %v1956
      %1989 = vst.msk [vmem:[#allocation2 + $0xc8] sm:$0xff] %vm384, %v1957
      %1990 = vst.msk [vmem:[#allocation2 + $0xd0] sm:$0xff] %vm384, %v1958
      %1991 = vst.msk [vmem:[#allocation2 + $0xd8] sm:$0xff] %vm384, %v1959
      %1992 = vst.msk [vmem:[#allocation2 + $0xe0] sm:$0xff] %vm384, %v1960
      %1993 = vst.msk [vmem:[#allocation2 + $0xe8] sm:$0xff] %vm384, %v1961
      %1994 = vst.msk [vmem:[#allocation2 + $0xf0] sm:$0xff] %vm384, %v1962
      %1995 = vst.msk [vmem:[#allocation2 + $0xf8] sm:$0xff] %vm384, %v1963
      %s1996 = scalar_lea.vmem %s244, 12
      %v1997 = vld [vmem:[%s1996] sm:$0xf]
      %v1998 = vld [vmem:[%s1996 + $0x4] sm:$0xf]
      %v1999 = vld [vmem:[%s1996 + $0xc] sm:$0xf]
      %v2000 = vld [vmem:[%s1996 + $0x10] sm:$0xf]
      %v2001 = vld [vmem:[%s1996 + $0x18] sm:$0xf]
      %v2002 = vld [vmem:[%s1996 + $0x1c] sm:$0xf]
      %v2003 = vld [vmem:[%s1996 + $0x24] sm:$0xf]
      %v2004 = vld [vmem:[%s1996 + $0x28] sm:$0xf]
      %v2005 = vld [vmem:[%s1996 + $0x30] sm:$0xf]
      %v2006 = vld [vmem:[%s1996 + $0x34] sm:$0xf]
      %v2007 = vld [vmem:[%s1996 + $0x3c] sm:$0xf]
      %v2008 = vld [vmem:[%s1996 + $0x40] sm:$0xf]
      %v2009 = vld [vmem:[%s1996 + $0x48] sm:$0xf]
      %v2010 = vld [vmem:[%s1996 + $0x4c] sm:$0xf]
      %v2011 = vld [vmem:[%s1996 + $0x54] sm:$0xf]
      %v2012 = vld [vmem:[%s1996 + $0x58] sm:$0xf]
      %v2013 = vld [vmem:[%s1996 + $0x60] sm:$0xf]
      %v2014 = vld [vmem:[%s1996 + $0x64] sm:$0xf]
      %v2015 = vld [vmem:[%s1996 + $0x6c] sm:$0xf]
      %v2016 = vld [vmem:[%s1996 + $0x70] sm:$0xf]
      %v2017 = vld [vmem:[%s1996 + $0x78] sm:$0xf]
      %v2018 = vld [vmem:[%s1996 + $0x7c] sm:$0xf]
      %v2019 = vld [vmem:[%s1996 + $0x84] sm:$0xf]
      %v2020 = vld [vmem:[%s1996 + $0x88] sm:$0xf]
      %v2021 = vld [vmem:[%s1996 + $0x90] sm:$0xf]
      %v2022 = vld [vmem:[%s1996 + $0x94] sm:$0xf]
      %v2023 = vld [vmem:[%s1996 + $0x9c] sm:$0xf]
      %v2024 = vld [vmem:[%s1996 + $0xa0] sm:$0xf]
      %v2025 = vld [vmem:[%s1996 + $0xa8] sm:$0xf]
      %v2026 = vld [vmem:[%s1996 + $0xac] sm:$0xf]
      %v2027 = vld [vmem:[%s1996 + $0xb4] sm:$0xf]
      %v2028 = vld [vmem:[%s1996 + $0xb8] sm:$0xf]
      %s2029 = scalar_lea.vmem %s248, 24
      %v2030 = vld [vmem:[%s2029] sm:$0xf]
      %v2031 = vld [vmem:[%s2029 + $0x4] sm:$0xf]
      %v2064 = vunpack.c.l.b16 %v1997
      %v2065 = vunpack.c.l.b16 %v1998
      %v2066 = vunpack.c.l.b16 %v1999
      %v2067 = vunpack.c.l.b16 %v2000
      %v2068 = vunpack.c.l.b16 %v2001
      %v2069 = vunpack.c.l.b16 %v2002
      %v2070 = vunpack.c.l.b16 %v2003
      %v2071 = vunpack.c.l.b16 %v2004
      %v2072 = vunpack.c.l.b16 %v2005
      %v2073 = vunpack.c.l.b16 %v2006
      %v2074 = vunpack.c.l.b16 %v2007
      %v2075 = vunpack.c.l.b16 %v2008
      %v2076 = vunpack.c.l.b16 %v2009
      %v2077 = vunpack.c.l.b16 %v2010
      %v2078 = vunpack.c.l.b16 %v2011
      %v2079 = vunpack.c.l.b16 %v2012
      %v2080 = vunpack.c.l.b16 %v2013
      %v2081 = vunpack.c.l.b16 %v2014
      %v2082 = vunpack.c.l.b16 %v2015
      %v2083 = vunpack.c.l.b16 %v2016
      %v2084 = vunpack.c.l.b16 %v2017
      %v2085 = vunpack.c.l.b16 %v2018
      %v2086 = vunpack.c.l.b16 %v2019
      %v2087 = vunpack.c.l.b16 %v2020
      %v2088 = vunpack.c.l.b16 %v2021
      %v2089 = vunpack.c.l.b16 %v2022
      %v2090 = vunpack.c.l.b16 %v2023
      %v2091 = vunpack.c.l.b16 %v2024
      %v2092 = vunpack.c.l.b16 %v2025
      %v2093 = vunpack.c.l.b16 %v2026
      %v2094 = vunpack.c.l.b16 %v2027
      %v2095 = vunpack.c.l.b16 %v2028
      %v2096 = vpack.c.b16 %v2065, %v2064
      %v2097 = vpack.c.b16 %v2067, %v2066
      %v2098 = vpack.c.b16 %v2069, %v2068
      %v2099 = vpack.c.b16 %v2071, %v2070
      %v2100 = vpack.c.b16 %v2073, %v2072
      %v2101 = vpack.c.b16 %v2075, %v2074
      %v2102 = vpack.c.b16 %v2077, %v2076
      %v2103 = vpack.c.b16 %v2079, %v2078
      %v2104 = vpack.c.b16 %v2081, %v2080
      %v2105 = vpack.c.b16 %v2083, %v2082
      %v2106 = vpack.c.b16 %v2085, %v2084
      %v2107 = vpack.c.b16 %v2087, %v2086
      %v2108 = vpack.c.b16 %v2089, %v2088
      %v2109 = vpack.c.b16 %v2091, %v2090
      %v2110 = vpack.c.b16 %v2093, %v2092
      %v2111 = vpack.c.b16 %v2095, %v2094
      %v2114 = vunpack.c.l.b16 %v2030
      %v2115 = vunpack.c.l.b16 %v2031
      %v2116 = vpack.c.b16 %v2115, %v2114
      %v2119 = vsel %vm384, %v2096, 0
      %v2122 = vsel %vm384, %v2097, 0
      %v2125 = vsel %vm384, %v2098, 0
      %v2128 = vsel %vm384, %v2099, 0
      %v2131 = vsel %vm384, %v2100, 0
      %v2134 = vsel %vm384, %v2101, 0
      %v2137 = vsel %vm384, %v2102, 0
      %v2140 = vsel %vm384, %v2103, 0
      %v2143 = vsel %vm384, %v2104, 0
      %v2146 = vsel %vm384, %v2105, 0
      %v2149 = vsel %vm384, %v2106, 0
      %v2152 = vsel %vm384, %v2107, 0
      %v2155 = vsel %vm384, %v2108, 0
      %v2158 = vsel %vm384, %v2109, 0
      %v2161 = vsel %vm384, %v2110, 0
      %v2164 = vsel %vm384, %v2111, 0
      %2166 = vmatprep.subr.bf16.mxu0 0
      %2167 = vmatpush1.bf16.msra.mxu0 0
      %2168 = vmatprep.subr.bf16.mxu0 0
      %2169 = vmatpush1.bf16.msra.mxu0 0
      %2170 = vmatprep.subr.bf16.mxu0 0
      %2171 = vmatpush1.bf16.msra.mxu0 0
      %2172 = vmatprep.subr.bf16.mxu0 0
      %2173 = vmatpush1.bf16.msra.mxu0 0
      %2174 = vmatprep.subr.bf16.mxu0 0
      %2175 = vmatpush1.bf16.msra.mxu0 0
      %2176 = vmatprep.subr.bf16.mxu0 0
      %2177 = vmatpush1.bf16.msra.mxu0 0
      %2178 = vmatprep.subr.bf16.mxu0 0
      %2179 = vmatpush1.bf16.msra.mxu0 0
      %2180 = vmatprep.subr.bf16.mxu0 0
      %2181 = vmatpush1.bf16.msra.mxu0 %v2116
      %2182 = vmatprep.subr.bf16.mxu0 0
      %2183 = vmatpush2.bf16.msra.mxu0 0
      %2184 = vmatprep.subr.bf16.mxu0 0
      %2185 = vmatpush2.bf16.msra.mxu0 0
      %2186 = vmatprep.subr.bf16.mxu0 0
      %2187 = vmatpush2.bf16.msra.mxu0 0
      %2188 = vmatprep.subr.bf16.mxu0 0
      %2189 = vmatpush2.bf16.msra.mxu0 0
      %2190 = vmatprep.subr.bf16.mxu0 0
      %2191 = vmatpush2.bf16.msra.mxu0 0
      %2192 = vmatprep.subr.bf16.mxu0 0
      %2193 = vmatpush2.bf16.msra.mxu0 0
      %2194 = vmatprep.subr.bf16.mxu0 0
      %2195 = vmatpush2.bf16.msra.mxu0 0
      %2196 = vmatprep.subr.bf16.mxu0 0
      %2197 = vmatpush2.bf16.msra.mxu0 0
      %2198 = vmatprep.mubr.bf16.mxu0 0
      %2199 = vmatmul.mubr.bf16.gmra.mxu0 %v2119
      %v2200 = vpop.f32.mrf.mxu0
      %v2201 = vadd.f32 0.0, %v2200
      %v2202 = vpop.f32.mrf.mxu0
      %v2203 = vpop.f32.mrf.mxu0
      %v2204 = vadd.f32 0.0, %v2203
      %v2205 = vpop.f32.mrf.mxu0
      %2206 = vmatprep.mubr.bf16.mxu0 0
      %2207 = vmatmul.mubr.bf16.gmra.mxu0 %v2122
      %v2208 = vpop.f32.mrf.mxu0
      %v2209 = vadd.f32 0.0, %v2208
      %v2210 = vpop.f32.mrf.mxu0
      %v2211 = vpop.f32.mrf.mxu0
      %v2212 = vadd.f32 0.0, %v2211
      %v2213 = vpop.f32.mrf.mxu0
      %2214 = vmatprep.mubr.bf16.mxu0 0
      %2215 = vmatmul.mubr.bf16.gmra.mxu0 %v2125
      %v2216 = vpop.f32.mrf.mxu0
      %v2217 = vadd.f32 0.0, %v2216
      %v2218 = vpop.f32.mrf.mxu0
      %v2219 = vpop.f32.mrf.mxu0
      %v2220 = vadd.f32 0.0, %v2219
      %v2221 = vpop.f32.mrf.mxu0
      %2222 = vmatprep.mubr.bf16.mxu0 0
      %2223 = vmatmul.mubr.bf16.gmra.mxu0 %v2128
      %v2224 = vpop.f32.mrf.mxu0
      %v2225 = vadd.f32 0.0, %v2224
      %v2226 = vpop.f32.mrf.mxu0
      %v2227 = vpop.f32.mrf.mxu0
      %v2228 = vadd.f32 0.0, %v2227
      %v2229 = vpop.f32.mrf.mxu0
      %2230 = vmatprep.mubr.bf16.mxu0 0
      %2231 = vmatmul.mubr.bf16.gmra.mxu0 %v2131
      %v2232 = vpop.f32.mrf.mxu0
      %v2233 = vadd.f32 0.0, %v2232
      %v2234 = vpop.f32.mrf.mxu0
      %v2235 = vpop.f32.mrf.mxu0
      %v2236 = vadd.f32 0.0, %v2235
      %v2237 = vpop.f32.mrf.mxu0
      %2238 = vmatprep.mubr.bf16.mxu0 0
      %2239 = vmatmul.mubr.bf16.gmra.mxu0 %v2134
      %v2240 = vpop.f32.mrf.mxu0
      %v2241 = vadd.f32 0.0, %v2240
      %v2242 = vpop.f32.mrf.mxu0
      %v2243 = vpop.f32.mrf.mxu0
      %v2244 = vadd.f32 0.0, %v2243
      %v2245 = vpop.f32.mrf.mxu0
      %2246 = vmatprep.mubr.bf16.mxu0 0
      %2247 = vmatmul.mubr.bf16.gmra.mxu0 %v2137
      %v2248 = vpop.f32.mrf.mxu0
      %v2249 = vadd.f32 0.0, %v2248
      %v2250 = vpop.f32.mrf.mxu0
      %v2251 = vpop.f32.mrf.mxu0
      %v2252 = vadd.f32 0.0, %v2251
      %v2253 = vpop.f32.mrf.mxu0
      %2254 = vmatprep.mubr.bf16.mxu0 0
      %2255 = vmatmul.mubr.bf16.gmra.mxu0 %v2140
      %v2256 = vpop.f32.mrf.mxu0
      %v2257 = vadd.f32 0.0, %v2256
      %v2258 = vpop.f32.mrf.mxu0
      %v2259 = vpop.f32.mrf.mxu0
      %v2260 = vadd.f32 0.0, %v2259
      %v2261 = vpop.f32.mrf.mxu0
      %2262 = vmatprep.mubr.bf16.mxu0 0
      %2263 = vmatmul.mubr.bf16.gmra.mxu0 %v2143
      %v2264 = vpop.f32.mrf.mxu0
      %v2265 = vadd.f32 0.0, %v2264
      %v2266 = vpop.f32.mrf.mxu0
      %v2267 = vpop.f32.mrf.mxu0
      %v2268 = vadd.f32 0.0, %v2267
      %v2269 = vpop.f32.mrf.mxu0
      %2270 = vmatprep.mubr.bf16.mxu0 0
      %2271 = vmatmul.mubr.bf16.gmra.mxu0 %v2146
      %v2272 = vpop.f32.mrf.mxu0
      %v2273 = vadd.f32 0.0, %v2272
      %v2274 = vpop.f32.mrf.mxu0
      %v2275 = vpop.f32.mrf.mxu0
      %v2276 = vadd.f32 0.0, %v2275
      %v2277 = vpop.f32.mrf.mxu0
      %2278 = vmatprep.mubr.bf16.mxu0 0
      %2279 = vmatmul.mubr.bf16.gmra.mxu0 %v2149
      %v2280 = vpop.f32.mrf.mxu0
      %v2281 = vadd.f32 0.0, %v2280
      %v2282 = vpop.f32.mrf.mxu0
      %v2283 = vpop.f32.mrf.mxu0
      %v2284 = vadd.f32 0.0, %v2283
      %v2285 = vpop.f32.mrf.mxu0
      %2286 = vmatprep.mubr.bf16.mxu0 0
      %2287 = vmatmul.mubr.bf16.gmra.mxu0 %v2152
      %v2288 = vpop.f32.mrf.mxu0
      %v2289 = vadd.f32 0.0, %v2288
      %v2290 = vpop.f32.mrf.mxu0
      %v2291 = vpop.f32.mrf.mxu0
      %v2292 = vadd.f32 0.0, %v2291
      %v2293 = vpop.f32.mrf.mxu0
      %2294 = vmatprep.mubr.bf16.mxu0 0
      %2295 = vmatmul.mubr.bf16.gmra.mxu0 %v2155
      %v2296 = vpop.f32.mrf.mxu0
      %v2297 = vadd.f32 0.0, %v2296
      %v2298 = vpop.f32.mrf.mxu0
      %v2299 = vpop.f32.mrf.mxu0
      %v2300 = vadd.f32 0.0, %v2299
      %v2301 = vpop.f32.mrf.mxu0
      %2302 = vmatprep.mubr.bf16.mxu0 0
      %2303 = vmatmul.mubr.bf16.gmra.mxu0 %v2158
      %v2304 = vpop.f32.mrf.mxu0
      %v2305 = vadd.f32 0.0, %v2304
      %v2306 = vpop.f32.mrf.mxu0
      %v2307 = vpop.f32.mrf.mxu0
      %v2308 = vadd.f32 0.0, %v2307
      %v2309 = vpop.f32.mrf.mxu0
      %2310 = vmatprep.mubr.bf16.mxu0 0
      %2311 = vmatmul.mubr.bf16.gmra.mxu0 %v2161
      %v2312 = vpop.f32.mrf.mxu0
      %v2313 = vadd.f32 0.0, %v2312
      %v2314 = vpop.f32.mrf.mxu0
      %v2315 = vpop.f32.mrf.mxu0
      %v2316 = vadd.f32 0.0, %v2315
      %v2317 = vpop.f32.mrf.mxu0
      %2318 = vmatprep.mubr.bf16.mxu0 0
      %2319 = vmatmul.mubr.bf16.gmra.mxu0 %v2164
      %v2320 = vpop.f32.mrf.mxu0
      %v2321 = vadd.f32 0.0, %v2320
      %v2322 = vpop.f32.mrf.mxu0
      %v2323 = vpop.f32.mrf.mxu0
      %v2324 = vadd.f32 0.0, %v2323
      %v2325 = vpop.f32.mrf.mxu0
      %2326 = vdwg.mxu0
      %v2327 = vld [vmem:[#allocation2] sm:$0xff]
      %v2328 = vld [vmem:[#allocation2 + $0x8] sm:$0xff]
      %v2329 = vld [vmem:[#allocation2 + $0x10] sm:$0xff]
      %v2330 = vld [vmem:[#allocation2 + $0x18] sm:$0xff]
      %v2331 = vld [vmem:[#allocation2 + $0x20] sm:$0xff]
      %v2332 = vld [vmem:[#allocation2 + $0x28] sm:$0xff]
      %v2333 = vld [vmem:[#allocation2 + $0x30] sm:$0xff]
      %v2334 = vld [vmem:[#allocation2 + $0x38] sm:$0xff]
      %v2335 = vld [vmem:[#allocation2 + $0x40] sm:$0xff]
      %v2336 = vld [vmem:[#allocation2 + $0x48] sm:$0xff]
      %v2337 = vld [vmem:[#allocation2 + $0x50] sm:$0xff]
      %v2338 = vld [vmem:[#allocation2 + $0x58] sm:$0xff]
      %v2339 = vld [vmem:[#allocation2 + $0x60] sm:$0xff]
      %v2340 = vld [vmem:[#allocation2 + $0x68] sm:$0xff]
      %v2341 = vld [vmem:[#allocation2 + $0x70] sm:$0xff]
      %v2342 = vld [vmem:[#allocation2 + $0x78] sm:$0xff]
      %v2343 = vld [vmem:[#allocation2 + $0x80] sm:$0xff]
      %v2344 = vld [vmem:[#allocation2 + $0x88] sm:$0xff]
      %v2345 = vld [vmem:[#allocation2 + $0x90] sm:$0xff]
      %v2346 = vld [vmem:[#allocation2 + $0x98] sm:$0xff]
      %v2347 = vld [vmem:[#allocation2 + $0xa0] sm:$0xff]
      %v2348 = vld [vmem:[#allocation2 + $0xa8] sm:$0xff]
      %v2349 = vld [vmem:[#allocation2 + $0xb0] sm:$0xff]
      %v2350 = vld [vmem:[#allocation2 + $0xb8] sm:$0xff]
      %v2351 = vld [vmem:[#allocation2 + $0xc0] sm:$0xff]
      %v2352 = vld [vmem:[#allocation2 + $0xc8] sm:$0xff]
      %v2353 = vld [vmem:[#allocation2 + $0xd0] sm:$0xff]
      %v2354 = vld [vmem:[#allocation2 + $0xd8] sm:$0xff]
      %v2355 = vld [vmem:[#allocation2 + $0xe0] sm:$0xff]
      %v2356 = vld [vmem:[#allocation2 + $0xe8] sm:$0xff]
      %v2357 = vld [vmem:[#allocation2 + $0xf0] sm:$0xff]
      %v2358 = vld [vmem:[#allocation2 + $0xf8] sm:$0xff]
      %v2359 = vadd.f32 %v2327, %v2201
      %v2360 = vadd.f32 %v2328, %v2204
      %v2361 = vadd.f32 %v2329, %v2209
      %v2362 = vadd.f32 %v2330, %v2212
      %v2363 = vadd.f32 %v2331, %v2217
      %v2364 = vadd.f32 %v2332, %v2220
      %v2365 = vadd.f32 %v2333, %v2225
      %v2366 = vadd.f32 %v2334, %v2228
      %v2367 = vadd.f32 %v2335, %v2233
      %v2368 = vadd.f32 %v2336, %v2236
      %v2369 = vadd.f32 %v2337, %v2241
      %v2370 = vadd.f32 %v2338, %v2244
      %v2371 = vadd.f32 %v2339, %v2249
      %v2372 = vadd.f32 %v2340, %v2252
      %v2373 = vadd.f32 %v2341, %v2257
      %v2374 = vadd.f32 %v2342, %v2260
      %v2375 = vadd.f32 %v2343, %v2265
      %v2376 = vadd.f32 %v2344, %v2268
      %v2377 = vadd.f32 %v2345, %v2273
      %v2378 = vadd.f32 %v2346, %v2276
      %v2379 = vadd.f32 %v2347, %v2281
      %v2380 = vadd.f32 %v2348, %v2284
      %v2381 = vadd.f32 %v2349, %v2289
      %v2382 = vadd.f32 %v2350, %v2292
      %v2383 = vadd.f32 %v2351, %v2297
      %v2384 = vadd.f32 %v2352, %v2300
      %v2385 = vadd.f32 %v2353, %v2305
      %v2386 = vadd.f32 %v2354, %v2308
      %v2387 = vadd.f32 %v2355, %v2313
      %v2388 = vadd.f32 %v2356, %v2316
      %v2389 = vadd.f32 %v2357, %v2321
      %v2390 = vadd.f32 %v2358, %v2324
      %2391 = vst.msk [vmem:[#allocation2] sm:$0xff] %vm384, %v2359
      %2392 = vst.msk [vmem:[#allocation2 + $0x8] sm:$0xff] %vm384, %v2360
      %2393 = vst.msk [vmem:[#allocation2 + $0x10] sm:$0xff] %vm384, %v2361
      %2394 = vst.msk [vmem:[#allocation2 + $0x18] sm:$0xff] %vm384, %v2362
      %2395 = vst.msk [vmem:[#allocation2 + $0x20] sm:$0xff] %vm384, %v2363
      %2396 = vst.msk [vmem:[#allocation2 + $0x28] sm:$0xff] %vm384, %v2364
      %2397 = vst.msk [vmem:[#allocation2 + $0x30] sm:$0xff] %vm384, %v2365
      %2398 = vst.msk [vmem:[#allocation2 + $0x38] sm:$0xff] %vm384, %v2366
      %2399 = vst.msk [vmem:[#allocation2 + $0x40] sm:$0xff] %vm384, %v2367
      %2400 = vst.msk [vmem:[#allocation2 + $0x48] sm:$0xff] %vm384, %v2368
      %2401 = vst.msk [vmem:[#allocation2 + $0x50] sm:$0xff] %vm384, %v2369
      %2402 = vst.msk [vmem:[#allocation2 + $0x58] sm:$0xff] %vm384, %v2370
      %2403 = vst.msk [vmem:[#allocation2 + $0x60] sm:$0xff] %vm384, %v2371
      %2404 = vst.msk [vmem:[#allocation2 + $0x68] sm:$0xff] %vm384, %v2372
      %2405 = vst.msk [vmem:[#allocation2 + $0x70] sm:$0xff] %vm384, %v2373
      %2406 = vst.msk [vmem:[#allocation2 + $0x78] sm:$0xff] %vm384, %v2374
      %2407 = vst.msk [vmem:[#allocation2 + $0x80] sm:$0xff] %vm384, %v2375
      %2408 = vst.msk [vmem:[#allocation2 + $0x88] sm:$0xff] %vm384, %v2376
      %2409 = vst.msk [vmem:[#allocation2 + $0x90] sm:$0xff] %vm384, %v2377
      %2410 = vst.msk [vmem:[#allocation2 + $0x98] sm:$0xff] %vm384, %v2378
      %2411 = vst.msk [vmem:[#allocation2 + $0xa0] sm:$0xff] %vm384, %v2379
      %2412 = vst.msk [vmem:[#allocation2 + $0xa8] sm:$0xff] %vm384, %v2380
      %2413 = vst.msk [vmem:[#allocation2 + $0xb0] sm:$0xff] %vm384, %v2381
      %2414 = vst.msk [vmem:[#allocation2 + $0xb8] sm:$0xff] %vm384, %v2382
      %2415 = vst.msk [vmem:[#allocation2 + $0xc0] sm:$0xff] %vm384, %v2383
      %2416 = vst.msk [vmem:[#allocation2 + $0xc8] sm:$0xff] %vm384, %v2384
      %2417 = vst.msk [vmem:[#allocation2 + $0xd0] sm:$0xff] %vm384, %v2385
      %2418 = vst.msk [vmem:[#allocation2 + $0xd8] sm:$0xff] %vm384, %v2386
      %2419 = vst.msk [vmem:[#allocation2 + $0xe0] sm:$0xff] %vm384, %v2387
      %2420 = vst.msk [vmem:[#allocation2 + $0xe8] sm:$0xff] %vm384, %v2388
      %2421 = vst.msk [vmem:[#allocation2 + $0xf0] sm:$0xff] %vm384, %v2389
      %2422 = vst.msk [vmem:[#allocation2 + $0xf8] sm:$0xff] %vm384, %v2390
      %v2423 = vld [vmem:[%s1996] sm:$0xf]
      %v2424 = vld [vmem:[%s1996 + $0x4] sm:$0xf]
      %v2425 = vld [vmem:[%s1996 + $0x8] sm:$0x1]
      %v2426 = vld [vmem:[%s1996 + $0xc] sm:$0xf]
      %v2427 = vld [vmem:[%s1996 + $0x10] sm:$0xf]
      %v2428 = vld [vmem:[%s1996 + $0x14] sm:$0x1]
      %v2429 = vld [vmem:[%s1996 + $0x18] sm:$0xf]
      %v2430 = vld [vmem:[%s1996 + $0x1c] sm:$0xf]
      %v2431 = vld [vmem:[%s1996 + $0x20] sm:$0x1]
      %v2432 = vld [vmem:[%s1996 + $0x24] sm:$0xf]
      %v2433 = vld [vmem:[%s1996 + $0x28] sm:$0xf]
      %v2434 = vld [vmem:[%s1996 + $0x2c] sm:$0x1]
      %v2435 = vld [vmem:[%s1996 + $0x30] sm:$0xf]
      %v2436 = vld [vmem:[%s1996 + $0x34] sm:$0xf]
      %v2437 = vld [vmem:[%s1996 + $0x38] sm:$0x1]
      %v2438 = vld [vmem:[%s1996 + $0x3c] sm:$0xf]
      %v2439 = vld [vmem:[%s1996 + $0x40] sm:$0xf]
      %v2440 = vld [vmem:[%s1996 + $0x44] sm:$0x1]
      %v2441 = vld [vmem:[%s1996 + $0x48] sm:$0xf]
      %v2442 = vld [vmem:[%s1996 + $0x4c] sm:$0xf]
      %v2443 = vld [vmem:[%s1996 + $0x50] sm:$0x1]
      %v2444 = vld [vmem:[%s1996 + $0x54] sm:$0xf]
      %v2445 = vld [vmem:[%s1996 + $0x58] sm:$0xf]
      %v2446 = vld [vmem:[%s1996 + $0x5c] sm:$0x1]
      %v2447 = vld [vmem:[%s1996 + $0x60] sm:$0xf]
      %v2448 = vld [vmem:[%s1996 + $0x64] sm:$0xf]
      %v2449 = vld [vmem:[%s1996 + $0x68] sm:$0x1]
      %v2450 = vld [vmem:[%s1996 + $0x6c] sm:$0xf]
      %v2451 = vld [vmem:[%s1996 + $0x70] sm:$0xf]
      %v2452 = vld [vmem:[%s1996 + $0x74] sm:$0x1]
      %v2453 = vld [vmem:[%s1996 + $0x78] sm:$0xf]
      %v2454 = vld [vmem:[%s1996 + $0x7c] sm:$0xf]
      %v2455 = vld [vmem:[%s1996 + $0x80] sm:$0x1]
      %v2456 = vld [vmem:[%s1996 + $0x84] sm:$0xf]
      %v2457 = vld [vmem:[%s1996 + $0x88] sm:$0xf]
      %v2458 = vld [vmem:[%s1996 + $0x8c] sm:$0x1]
      %v2459 = vld [vmem:[%s1996 + $0x90] sm:$0xf]
      %v2460 = vld [vmem:[%s1996 + $0x94] sm:$0xf]
      %v2461 = vld [vmem:[%s1996 + $0x98] sm:$0x1]
      %v2462 = vld [vmem:[%s1996 + $0x9c] sm:$0xf]
      %v2463 = vld [vmem:[%s1996 + $0xa0] sm:$0xf]
      %v2464 = vld [vmem:[%s1996 + $0xa4] sm:$0x1]
      %v2465 = vld [vmem:[%s1996 + $0xa8] sm:$0xf]
      %v2466 = vld [vmem:[%s1996 + $0xac] sm:$0xf]
      %v2467 = vld [vmem:[%s1996 + $0xb0] sm:$0x1]
      %v2468 = vld [vmem:[%s1996 + $0xb4] sm:$0xf]
      %v2469 = vld [vmem:[%s1996 + $0xb8] sm:$0xf]
      %v2470 = vld [vmem:[%s1996 + $0xbc] sm:$0x1]
      %v2472 = vshrl.u32 %v2423, 16
      %v2474 = vrot.slane %v2472, 4
      %v2475 = vshll.u32 %v2423, 16
      %v2477 = vrot.slane %v2475, 5
      %v2478 = vor.u32 %v2474, %v2477
      %v2479 = vrot.slane %v2478, 4
      %v2481 = vshll.u32 %v2424, 16
      %v2483 = vrot.slane %v2481, 5
      %v2484 = vsel %vm676, %v2479, %v2483
      %v2485 = vshrl.u32 %v2424, 16
      %v2487 = vrot.slane %v2485, 4
      %v2488 = vor.u32 %v2487, %v2483
      %v2489 = vrot.slane %v2488, 4
      %v2491 = vshll.u32 %v2425, 16
      %v2493 = vrot.slane %v2491, 5
      %v2494 = vsel %vm676, %v2489, %v2493
      %v2496 = vshrl.u32 %v2426, 16
      %v2498 = vrot.slane %v2496, 4
      %v2499 = vshll.u32 %v2426, 16
      %v2501 = vrot.slane %v2499, 5
      %v2502 = vor.u32 %v2498, %v2501
      %v2503 = vrot.slane %v2502, 4
      %v2505 = vshll.u32 %v2427, 16
      %v2507 = vrot.slane %v2505, 5
      %v2508 = vsel %vm676, %v2503, %v2507
      %v2509 = vshrl.u32 %v2427, 16
      %v2511 = vrot.slane %v2509, 4
      %v2512 = vor.u32 %v2511, %v2507
      %v2513 = vrot.slane %v2512, 4
      %v2515 = vshll.u32 %v2428, 16
      %v2517 = vrot.slane %v2515, 5
      %v2518 = vsel %vm676, %v2513, %v2517
      %v2520 = vshrl.u32 %v2429, 16
      %v2522 = vrot.slane %v2520, 4
      %v2523 = vshll.u32 %v2429, 16
      %v2525 = vrot.slane %v2523, 5
      %v2526 = vor.u32 %v2522, %v2525
      %v2527 = vrot.slane %v2526, 4
      %v2529 = vshll.u32 %v2430, 16
      %v2531 = vrot.slane %v2529, 5
      %v2532 = vsel %vm676, %v2527, %v2531
      %v2533 = vshrl.u32 %v2430, 16
      %v2535 = vrot.slane %v2533, 4
      %v2536 = vor.u32 %v2535, %v2531
      %v2537 = vrot.slane %v2536, 4
      %v2539 = vshll.u32 %v2431, 16
      %v2541 = vrot.slane %v2539, 5
      %v2542 = vsel %vm676, %v2537, %v2541
      %v2544 = vshrl.u32 %v2432, 16
      %v2546 = vrot.slane %v2544, 4
      %v2547 = vshll.u32 %v2432, 16
      %v2549 = vrot.slane %v2547, 5
      %v2550 = vor.u32 %v2546, %v2549
      %v2551 = vrot.slane %v2550, 4
      %v2553 = vshll.u32 %v2433, 16
      %v2555 = vrot.slane %v2553, 5
      %v2556 = vsel %vm676, %v2551, %v2555
      %v2557 = vshrl.u32 %v2433, 16
      %v2559 = vrot.slane %v2557, 4
      %v2560 = vor.u32 %v2559, %v2555
      %v2561 = vrot.slane %v2560, 4
      %v2563 = vshll.u32 %v2434, 16
      %v2565 = vrot.slane %v2563, 5
      %v2566 = vsel %vm676, %v2561, %v2565
      %v2568 = vshrl.u32 %v2435, 16
      %v2570 = vrot.slane %v2568, 4
      %v2571 = vshll.u32 %v2435, 16
      %v2573 = vrot.slane %v2571, 5
      %v2574 = vor.u32 %v2570, %v2573
      %v2575 = vrot.slane %v2574, 4
      %v2577 = vshll.u32 %v2436, 16
      %v2579 = vrot.slane %v2577, 5
      %v2580 = vsel %vm676, %v2575, %v2579
      %v2581 = vshrl.u32 %v2436, 16
      %v2583 = vrot.slane %v2581, 4
      %v2584 = vor.u32 %v2583, %v2579
      %v2585 = vrot.slane %v2584, 4
      %v2587 = vshll.u32 %v2437, 16
      %v2589 = vrot.slane %v2587, 5
      %v2590 = vsel %vm676, %v2585, %v2589
      %v2592 = vshrl.u32 %v2438, 16
      %v2594 = vrot.slane %v2592, 4
      %v2595 = vshll.u32 %v2438, 16
      %v2597 = vrot.slane %v2595, 5
      %v2598 = vor.u32 %v2594, %v2597
      %v2599 = vrot.slane %v2598, 4
      %v2601 = vshll.u32 %v2439, 16
      %v2603 = vrot.slane %v2601, 5
      %v2604 = vsel %vm676, %v2599, %v2603
      %v2605 = vshrl.u32 %v2439, 16
      %v2607 = vrot.slane %v2605, 4
      %v2608 = vor.u32 %v2607, %v2603
      %v2609 = vrot.slane %v2608, 4
      %v2611 = vshll.u32 %v2440, 16
      %v2613 = vrot.slane %v2611, 5
      %v2614 = vsel %vm676, %v2609, %v2613
      %v2616 = vshrl.u32 %v2441, 16
      %v2618 = vrot.slane %v2616, 4
      %v2619 = vshll.u32 %v2441, 16
      %v2621 = vrot.slane %v2619, 5
      %v2622 = vor.u32 %v2618, %v2621
      %v2623 = vrot.slane %v2622, 4
      %v2625 = vshll.u32 %v2442, 16
      %v2627 = vrot.slane %v2625, 5
      %v2628 = vsel %vm676, %v2623, %v2627
      %v2629 = vshrl.u32 %v2442, 16
      %v2631 = vrot.slane %v2629, 4
      %v2632 = vor.u32 %v2631, %v2627
      %v2633 = vrot.slane %v2632, 4
      %v2635 = vshll.u32 %v2443, 16
      %v2637 = vrot.slane %v2635, 5
      %v2638 = vsel %vm676, %v2633, %v2637
      %v2640 = vshrl.u32 %v2444, 16
      %v2642 = vrot.slane %v2640, 4
      %v2643 = vshll.u32 %v2444, 16
      %v2645 = vrot.slane %v2643, 5
      %v2646 = vor.u32 %v2642, %v2645
      %v2647 = vrot.slane %v2646, 4
      %v2649 = vshll.u32 %v2445, 16
      %v2651 = vrot.slane %v2649, 5
      %v2652 = vsel %vm676, %v2647, %v2651
      %v2653 = vshrl.u32 %v2445, 16
      %v2655 = vrot.slane %v2653, 4
      %v2656 = vor.u32 %v2655, %v2651
      %v2657 = vrot.slane %v2656, 4
      %v2659 = vshll.u32 %v2446, 16
      %v2661 = vrot.slane %v2659, 5
      %v2662 = vsel %vm676, %v2657, %v2661
      %v2664 = vshrl.u32 %v2447, 16
      %v2666 = vrot.slane %v2664, 4
      %v2667 = vshll.u32 %v2447, 16
      %v2669 = vrot.slane %v2667, 5
      %v2670 = vor.u32 %v2666, %v2669
      %v2671 = vrot.slane %v2670, 4
      %v2673 = vshll.u32 %v2448, 16
      %v2675 = vrot.slane %v2673, 5
      %v2676 = vsel %vm676, %v2671, %v2675
      %v2677 = vshrl.u32 %v2448, 16
      %v2679 = vrot.slane %v2677, 4
      %v2680 = vor.u32 %v2679, %v2675
      %v2681 = vrot.slane %v2680, 4
      %v2683 = vshll.u32 %v2449, 16
      %v2685 = vrot.slane %v2683, 5
      %v2686 = vsel %vm676, %v2681, %v2685
      %v2688 = vshrl.u32 %v2450, 16
      %v2690 = vrot.slane %v2688, 4
      %v2691 = vshll.u32 %v2450, 16
      %v2693 = vrot.slane %v2691, 5
      %v2694 = vor.u32 %v2690, %v2693
      %v2695 = vrot.slane %v2694, 4
      %v2697 = vshll.u32 %v2451, 16
      %v2699 = vrot.slane %v2697, 5
      %v2700 = vsel %vm676, %v2695, %v2699
      %v2701 = vshrl.u32 %v2451, 16
      %v2703 = vrot.slane %v2701, 4
      %v2704 = vor.u32 %v2703, %v2699
      %v2705 = vrot.slane %v2704, 4
      %v2707 = vshll.u32 %v2452, 16
      %v2709 = vrot.slane %v2707, 5
      %v2710 = vsel %vm676, %v2705, %v2709
      %v2712 = vshrl.u32 %v2453, 16
      %v2714 = vrot.slane %v2712, 4
      %v2715 = vshll.u32 %v2453, 16
      %v2717 = vrot.slane %v2715, 5
      %v2718 = vor.u32 %v2714, %v2717
      %v2719 = vrot.slane %v2718, 4
      %v2721 = vshll.u32 %v2454, 16
      %v2723 = vrot.slane %v2721, 5
      %v2724 = vsel %vm676, %v2719, %v2723
      %v2725 = vshrl.u32 %v2454, 16
      %v2727 = vrot.slane %v2725, 4
      %v2728 = vor.u32 %v2727, %v2723
      %v2729 = vrot.slane %v2728, 4
      %v2731 = vshll.u32 %v2455, 16
      %v2733 = vrot.slane %v2731, 5
      %v2734 = vsel %vm676, %v2729, %v2733
      %v2736 = vshrl.u32 %v2456, 16
      %v2738 = vrot.slane %v2736, 4
      %v2739 = vshll.u32 %v2456, 16
      %v2741 = vrot.slane %v2739, 5
      %v2742 = vor.u32 %v2738, %v2741
      %v2743 = vrot.slane %v2742, 4
      %v2745 = vshll.u32 %v2457, 16
      %v2747 = vrot.slane %v2745, 5
      %v2748 = vsel %vm676, %v2743, %v2747
      %v2749 = vshrl.u32 %v2457, 16
      %v2751 = vrot.slane %v2749, 4
      %v2752 = vor.u32 %v2751, %v2747
      %v2753 = vrot.slane %v2752, 4
      %v2755 = vshll.u32 %v2458, 16
      %v2757 = vrot.slane %v2755, 5
      %v2758 = vsel %vm676, %v2753, %v2757
      %v2760 = vshrl.u32 %v2459, 16
      %v2762 = vrot.slane %v2760, 4
      %v2763 = vshll.u32 %v2459, 16
      %v2765 = vrot.slane %v2763, 5
      %v2766 = vor.u32 %v2762, %v2765
      %v2767 = vrot.slane %v2766, 4
      %v2769 = vshll.u32 %v2460, 16
      %v2771 = vrot.slane %v2769, 5
      %v2772 = vsel %vm676, %v2767, %v2771
      %v2773 = vshrl.u32 %v2460, 16
      %v2775 = vrot.slane %v2773, 4
      %v2776 = vor.u32 %v2775, %v2771
      %v2777 = vrot.slane %v2776, 4
      %v2779 = vshll.u32 %v2461, 16
      %v2781 = vrot.slane %v2779, 5
      %v2782 = vsel %vm676, %v2777, %v2781
      %v2784 = vshrl.u32 %v2462, 16
      %v2786 = vrot.slane %v2784, 4
      %v2787 = vshll.u32 %v2462, 16
      %v2789 = vrot.slane %v2787, 5
      %v2790 = vor.u32 %v2786, %v2789
      %v2791 = vrot.slane %v2790, 4
      %v2793 = vshll.u32 %v2463, 16
      %v2795 = vrot.slane %v2793, 5
      %v2796 = vsel %vm676, %v2791, %v2795
      %v2797 = vshrl.u32 %v2463, 16
      %v2799 = vrot.slane %v2797, 4
      %v2800 = vor.u32 %v2799, %v2795
      %v2801 = vrot.slane %v2800, 4
      %v2803 = vshll.u32 %v2464, 16
      %v2805 = vrot.slane %v2803, 5
      %v2806 = vsel %vm676, %v2801, %v2805
      %v2808 = vshrl.u32 %v2465, 16
      %v2810 = vrot.slane %v2808, 4
      %v2811 = vshll.u32 %v2465, 16
      %v2813 = vrot.slane %v2811, 5
      %v2814 = vor.u32 %v2810, %v2813
      %v2815 = vrot.slane %v2814, 4
      %v2817 = vshll.u32 %v2466, 16
      %v2819 = vrot.slane %v2817, 5
      %v2820 = vsel %vm676, %v2815, %v2819
      %v2821 = vshrl.u32 %v2466, 16
      %v2823 = vrot.slane %v2821, 4
      %v2824 = vor.u32 %v2823, %v2819
      %v2825 = vrot.slane %v2824, 4
      %v2827 = vshll.u32 %v2467, 16
      %v2829 = vrot.slane %v2827, 5
      %v2830 = vsel %vm676, %v2825, %v2829
      %v2832 = vshrl.u32 %v2468, 16
      %v2834 = vrot.slane %v2832, 4
      %v2835 = vshll.u32 %v2468, 16
      %v2837 = vrot.slane %v2835, 5
      %v2838 = vor.u32 %v2834, %v2837
      %v2839 = vrot.slane %v2838, 4
      %v2841 = vshll.u32 %v2469, 16
      %v2843 = vrot.slane %v2841, 5
      %v2844 = vsel %vm676, %v2839, %v2843
      %v2845 = vshrl.u32 %v2469, 16
      %v2847 = vrot.slane %v2845, 4
      %v2848 = vor.u32 %v2847, %v2843
      %v2849 = vrot.slane %v2848, 4
      %v2851 = vshll.u32 %v2470, 16
      %v2853 = vrot.slane %v2851, 5
      %v2854 = vsel %vm676, %v2849, %v2853
      %s2855 = scalar_lea.vmem %s248, 32
      %v2856 = vld [vmem:[%s2855] sm:$0xf]
      %v2857 = vld [vmem:[%s2855 + $0x4] sm:$0xf]
      %v2858 = vunpack.c.l.b16 %v2484
      %v2859 = vunpack.c.l.b16 %v2494
      %v2860 = vunpack.c.l.b16 %v2508
      %v2861 = vunpack.c.l.b16 %v2518
      %v2862 = vunpack.c.l.b16 %v2532
      %v2863 = vunpack.c.l.b16 %v2542
      %v2864 = vunpack.c.l.b16 %v2556
      %v2865 = vunpack.c.l.b16 %v2566
      %v2866 = vunpack.c.l.b16 %v2580
      %v2867 = vunpack.c.l.b16 %v2590
      %v2868 = vunpack.c.l.b16 %v2604
      %v2869 = vunpack.c.l.b16 %v2614
      %v2870 = vunpack.c.l.b16 %v2628
      %v2871 = vunpack.c.l.b16 %v2638
      %v2872 = vunpack.c.l.b16 %v2652
      %v2873 = vunpack.c.l.b16 %v2662
      %v2874 = vunpack.c.l.b16 %v2676
      %v2875 = vunpack.c.l.b16 %v2686
      %v2876 = vunpack.c.l.b16 %v2700
      %v2877 = vunpack.c.l.b16 %v2710
      %v2878 = vunpack.c.l.b16 %v2724
      %v2879 = vunpack.c.l.b16 %v2734
      %v2880 = vunpack.c.l.b16 %v2748
      %v2881 = vunpack.c.l.b16 %v2758
      %v2882 = vunpack.c.l.b16 %v2772
      %v2883 = vunpack.c.l.b16 %v2782
      %v2884 = vunpack.c.l.b16 %v2796
      %v2885 = vunpack.c.l.b16 %v2806
      %v2886 = vunpack.c.l.b16 %v2820
      %v2887 = vunpack.c.l.b16 %v2830
      %v2888 = vunpack.c.l.b16 %v2844
      %v2889 = vunpack.c.l.b16 %v2854
      %v2890 = vpack.c.b16 %v2859, %v2858
      %v2891 = vpack.c.b16 %v2861, %v2860
      %v2892 = vpack.c.b16 %v2863, %v2862
      %v2893 = vpack.c.b16 %v2865, %v2864
      %v2894 = vpack.c.b16 %v2867, %v2866
      %v2895 = vpack.c.b16 %v2869, %v2868
      %v2896 = vpack.c.b16 %v2871, %v2870
      %v2897 = vpack.c.b16 %v2873, %v2872
      %v2898 = vpack.c.b16 %v2875, %v2874
      %v2899 = vpack.c.b16 %v2877, %v2876
      %v2900 = vpack.c.b16 %v2879, %v2878
      %v2901 = vpack.c.b16 %v2881, %v2880
      %v2902 = vpack.c.b16 %v2883, %v2882
      %v2903 = vpack.c.b16 %v2885, %v2884
      %v2904 = vpack.c.b16 %v2887, %v2886
      %v2905 = vpack.c.b16 %v2889, %v2888
      %v2908 = vunpack.c.l.b16 %v2856
      %v2909 = vunpack.c.l.b16 %v2857
      %v2910 = vpack.c.b16 %v2909, %v2908
      %v2913 = vsel %vm384, %v2890, 0
      %v2916 = vsel %vm384, %v2891, 0
      %v2919 = vsel %vm384, %v2892, 0
      %v2922 = vsel %vm384, %v2893, 0
      %v2925 = vsel %vm384, %v2894, 0
      %v2928 = vsel %vm384, %v2895, 0
      %v2931 = vsel %vm384, %v2896, 0
      %v2934 = vsel %vm384, %v2897, 0
      %v2937 = vsel %vm384, %v2898, 0
      %v2940 = vsel %vm384, %v2899, 0
      %v2943 = vsel %vm384, %v2900, 0
      %v2946 = vsel %vm384, %v2901, 0
      %v2949 = vsel %vm384, %v2902, 0
      %v2952 = vsel %vm384, %v2903, 0
      %v2955 = vsel %vm384, %v2904, 0
      %v2958 = vsel %vm384, %v2905, 0
      %2960 = vmatprep.subr.bf16.mxu0 0
      %2961 = vmatpush1.bf16.msra.mxu0 0
      %2962 = vmatprep.subr.bf16.mxu0 0
      %2963 = vmatpush1.bf16.msra.mxu0 0
      %2964 = vmatprep.subr.bf16.mxu0 0
      %2965 = vmatpush1.bf16.msra.mxu0 0
      %2966 = vmatprep.subr.bf16.mxu0 0
      %2967 = vmatpush1.bf16.msra.mxu0 0
      %2968 = vmatprep.subr.bf16.mxu0 0
      %2969 = vmatpush1.bf16.msra.mxu0 0
      %2970 = vmatprep.subr.bf16.mxu0 0
      %2971 = vmatpush1.bf16.msra.mxu0 0
      %2972 = vmatprep.subr.bf16.mxu0 0
      %2973 = vmatpush1.bf16.msra.mxu0 0
      %2974 = vmatprep.subr.bf16.mxu0 0
      %2975 = vmatpush1.bf16.msra.mxu0 %v2910
      %2976 = vmatprep.subr.bf16.mxu0 0
      %2977 = vmatpush2.bf16.msra.mxu0 0
      %2978 = vmatprep.subr.bf16.mxu0 0
      %2979 = vmatpush2.bf16.msra.mxu0 0
      %2980 = vmatprep.subr.bf16.mxu0 0
      %2981 = vmatpush2.bf16.msra.mxu0 0
      %2982 = vmatprep.subr.bf16.mxu0 0
      %2983 = vmatpush2.bf16.msra.mxu0 0
      %2984 = vmatprep.subr.bf16.mxu0 0
      %2985 = vmatpush2.bf16.msra.mxu0 0
      %2986 = vmatprep.subr.bf16.mxu0 0
      %2987 = vmatpush2.bf16.msra.mxu0 0
      %2988 = vmatprep.subr.bf16.mxu0 0
      %2989 = vmatpush2.bf16.msra.mxu0 0
      %2990 = vmatprep.subr.bf16.mxu0 0
      %2991 = vmatpush2.bf16.msra.mxu0 0
      %2992 = vmatprep.mubr.bf16.mxu0 0
      %2993 = vmatmul.mubr.bf16.gmra.mxu0 %v2913
      %v2994 = vpop.f32.mrf.mxu0
      %v2995 = vadd.f32 0.0, %v2994
      %v2996 = vpop.f32.mrf.mxu0
      %v2997 = vpop.f32.mrf.mxu0
      %v2998 = vadd.f32 0.0, %v2997
      %v2999 = vpop.f32.mrf.mxu0
      %3000 = vmatprep.mubr.bf16.mxu0 0
      %3001 = vmatmul.mubr.bf16.gmra.mxu0 %v2916
      %v3002 = vpop.f32.mrf.mxu0
      %v3003 = vadd.f32 0.0, %v3002
      %v3004 = vpop.f32.mrf.mxu0
      %v3005 = vpop.f32.mrf.mxu0
      %v3006 = vadd.f32 0.0, %v3005
      %v3007 = vpop.f32.mrf.mxu0
      %3008 = vmatprep.mubr.bf16.mxu0 0
      %3009 = vmatmul.mubr.bf16.gmra.mxu0 %v2919
      %v3010 = vpop.f32.mrf.mxu0
      %v3011 = vadd.f32 0.0, %v3010
      %v3012 = vpop.f32.mrf.mxu0
      %v3013 = vpop.f32.mrf.mxu0
      %v3014 = vadd.f32 0.0, %v3013
      %v3015 = vpop.f32.mrf.mxu0
      %3016 = vmatprep.mubr.bf16.mxu0 0
      %3017 = vmatmul.mubr.bf16.gmra.mxu0 %v2922
      %v3018 = vpop.f32.mrf.mxu0
      %v3019 = vadd.f32 0.0, %v3018
      %v3020 = vpop.f32.mrf.mxu0
      %v3021 = vpop.f32.mrf.mxu0
      %v3022 = vadd.f32 0.0, %v3021
      %v3023 = vpop.f32.mrf.mxu0
      %3024 = vmatprep.mubr.bf16.mxu0 0
      %3025 = vmatmul.mubr.bf16.gmra.mxu0 %v2925
      %v3026 = vpop.f32.mrf.mxu0
      %v3027 = vadd.f32 0.0, %v3026
      %v3028 = vpop.f32.mrf.mxu0
      %v3029 = vpop.f32.mrf.mxu0
      %v3030 = vadd.f32 0.0, %v3029
      %v3031 = vpop.f32.mrf.mxu0
      %3032 = vmatprep.mubr.bf16.mxu0 0
      %3033 = vmatmul.mubr.bf16.gmra.mxu0 %v2928
      %v3034 = vpop.f32.mrf.mxu0
      %v3035 = vadd.f32 0.0, %v3034
      %v3036 = vpop.f32.mrf.mxu0
      %v3037 = vpop.f32.mrf.mxu0
      %v3038 = vadd.f32 0.0, %v3037
      %v3039 = vpop.f32.mrf.mxu0
      %3040 = vmatprep.mubr.bf16.mxu0 0
      %3041 = vmatmul.mubr.bf16.gmra.mxu0 %v2931
      %v3042 = vpop.f32.mrf.mxu0
      %v3043 = vadd.f32 0.0, %v3042
      %v3044 = vpop.f32.mrf.mxu0
      %v3045 = vpop.f32.mrf.mxu0
      %v3046 = vadd.f32 0.0, %v3045
      %v3047 = vpop.f32.mrf.mxu0
      %3048 = vmatprep.mubr.bf16.mxu0 0
      %3049 = vmatmul.mubr.bf16.gmra.mxu0 %v2934
      %v3050 = vpop.f32.mrf.mxu0
      %v3051 = vadd.f32 0.0, %v3050
      %v3052 = vpop.f32.mrf.mxu0
      %v3053 = vpop.f32.mrf.mxu0
      %v3054 = vadd.f32 0.0, %v3053
      %v3055 = vpop.f32.mrf.mxu0
      %3056 = vmatprep.mubr.bf16.mxu0 0
      %3057 = vmatmul.mubr.bf16.gmra.mxu0 %v2937
      %v3058 = vpop.f32.mrf.mxu0
      %v3059 = vadd.f32 0.0, %v3058
      %v3060 = vpop.f32.mrf.mxu0
      %v3061 = vpop.f32.mrf.mxu0
      %v3062 = vadd.f32 0.0, %v3061
      %v3063 = vpop.f32.mrf.mxu0
      %3064 = vmatprep.mubr.bf16.mxu0 0
      %3065 = vmatmul.mubr.bf16.gmra.mxu0 %v2940
      %v3066 = vpop.f32.mrf.mxu0
      %v3067 = vadd.f32 0.0, %v3066
      %v3068 = vpop.f32.mrf.mxu0
      %v3069 = vpop.f32.mrf.mxu0
      %v3070 = vadd.f32 0.0, %v3069
      %v3071 = vpop.f32.mrf.mxu0
      %3072 = vmatprep.mubr.bf16.mxu0 0
      %3073 = vmatmul.mubr.bf16.gmra.mxu0 %v2943
      %v3074 = vpop.f32.mrf.mxu0
      %v3075 = vadd.f32 0.0, %v3074
      %v3076 = vpop.f32.mrf.mxu0
      %v3077 = vpop.f32.mrf.mxu0
      %v3078 = vadd.f32 0.0, %v3077
      %v3079 = vpop.f32.mrf.mxu0
      %3080 = vmatprep.mubr.bf16.mxu0 0
      %3081 = vmatmul.mubr.bf16.gmra.mxu0 %v2946
      %v3082 = vpop.f32.mrf.mxu0
      %v3083 = vadd.f32 0.0, %v3082
      %v3084 = vpop.f32.mrf.mxu0
      %v3085 = vpop.f32.mrf.mxu0
      %v3086 = vadd.f32 0.0, %v3085
      %v3087 = vpop.f32.mrf.mxu0
      %3088 = vmatprep.mubr.bf16.mxu0 0
      %3089 = vmatmul.mubr.bf16.gmra.mxu0 %v2949
      %v3090 = vpop.f32.mrf.mxu0
      %v3091 = vadd.f32 0.0, %v3090
      %v3092 = vpop.f32.mrf.mxu0
      %v3093 = vpop.f32.mrf.mxu0
      %v3094 = vadd.f32 0.0, %v3093
      %v3095 = vpop.f32.mrf.mxu0
      %3096 = vmatprep.mubr.bf16.mxu0 0
      %3097 = vmatmul.mubr.bf16.gmra.mxu0 %v2952
      %v3098 = vpop.f32.mrf.mxu0
      %v3099 = vadd.f32 0.0, %v3098
      %v3100 = vpop.f32.mrf.mxu0
      %v3101 = vpop.f32.mrf.mxu0
      %v3102 = vadd.f32 0.0, %v3101
      %v3103 = vpop.f32.mrf.mxu0
      %3104 = vmatprep.mubr.bf16.mxu0 0
      %3105 = vmatmul.mubr.bf16.gmra.mxu0 %v2955
      %v3106 = vpop.f32.mrf.mxu0
      %v3107 = vadd.f32 0.0, %v3106
      %v3108 = vpop.f32.mrf.mxu0
      %v3109 = vpop.f32.mrf.mxu0
      %v3110 = vadd.f32 0.0, %v3109
      %v3111 = vpop.f32.mrf.mxu0
      %3112 = vmatprep.mubr.bf16.mxu0 0
      %3113 = vmatmul.mubr.bf16.gmra.mxu0 %v2958
      %v3114 = vpop.f32.mrf.mxu0
      %v3115 = vadd.f32 0.0, %v3114
      %v3116 = vpop.f32.mrf.mxu0
      %v3117 = vpop.f32.mrf.mxu0
      %v3118 = vadd.f32 0.0, %v3117
      %v3119 = vpop.f32.mrf.mxu0
      %3120 = vdwg.mxu0
      %v3121 = vld [vmem:[#allocation2] sm:$0xff]
      %v3122 = vld [vmem:[#allocation2 + $0x8] sm:$0xff]
      %v3123 = vld [vmem:[#allocation2 + $0x10] sm:$0xff]
      %v3124 = vld [vmem:[#allocation2 + $0x18] sm:$0xff]
      %v3125 = vld [vmem:[#allocation2 + $0x20] sm:$0xff]
      %v3126 = vld [vmem:[#allocation2 + $0x28] sm:$0xff]
      %v3127 = vld [vmem:[#allocation2 + $0x30] sm:$0xff]
      %v3128 = vld [vmem:[#allocation2 + $0x38] sm:$0xff]
      %v3129 = vld [vmem:[#allocation2 + $0x40] sm:$0xff]
      %v3130 = vld [vmem:[#allocation2 + $0x48] sm:$0xff]
      %v3131 = vld [vmem:[#allocation2 + $0x50] sm:$0xff]
      %v3132 = vld [vmem:[#allocation2 + $0x58] sm:$0xff]
      %v3133 = vld [vmem:[#allocation2 + $0x60] sm:$0xff]
      %v3134 = vld [vmem:[#allocation2 + $0x68] sm:$0xff]
      %v3135 = vld [vmem:[#allocation2 + $0x70] sm:$0xff]
      %v3136 = vld [vmem:[#allocation2 + $0x78] sm:$0xff]
      %v3137 = vld [vmem:[#allocation2 + $0x80] sm:$0xff]
      %v3138 = vld [vmem:[#allocation2 + $0x88] sm:$0xff]
      %v3139 = vld [vmem:[#allocation2 + $0x90] sm:$0xff]
      %v3140 = vld [vmem:[#allocation2 + $0x98] sm:$0xff]
      %v3141 = vld [vmem:[#allocation2 + $0xa0] sm:$0xff]
      %v3142 = vld [vmem:[#allocation2 + $0xa8] sm:$0xff]
      %v3143 = vld [vmem:[#allocation2 + $0xb0] sm:$0xff]
      %v3144 = vld [vmem:[#allocation2 + $0xb8] sm:$0xff]
      %v3145 = vld [vmem:[#allocation2 + $0xc0] sm:$0xff]
      %v3146 = vld [vmem:[#allocation2 + $0xc8] sm:$0xff]
      %v3147 = vld [vmem:[#allocation2 + $0xd0] sm:$0xff]
      %v3148 = vld [vmem:[#allocation2 + $0xd8] sm:$0xff]
      %v3149 = vld [vmem:[#allocation2 + $0xe0] sm:$0xff]
      %v3150 = vld [vmem:[#allocation2 + $0xe8] sm:$0xff]
      %v3151 = vld [vmem:[#allocation2 + $0xf0] sm:$0xff]
      %v3152 = vld [vmem:[#allocation2 + $0xf8] sm:$0xff]
      %v3153 = vadd.f32 %v3121, %v2995
      %v3154 = vadd.f32 %v3122, %v2998
      %v3155 = vadd.f32 %v3123, %v3003
      %v3156 = vadd.f32 %v3124, %v3006
      %v3157 = vadd.f32 %v3125, %v3011
      %v3158 = vadd.f32 %v3126, %v3014
      %v3159 = vadd.f32 %v3127, %v3019
      %v3160 = vadd.f32 %v3128, %v3022
      %v3161 = vadd.f32 %v3129, %v3027
      %v3162 = vadd.f32 %v3130, %v3030
      %v3163 = vadd.f32 %v3131, %v3035
      %v3164 = vadd.f32 %v3132, %v3038
      %v3165 = vadd.f32 %v3133, %v3043
      %v3166 = vadd.f32 %v3134, %v3046
      %v3167 = vadd.f32 %v3135, %v3051
      %v3168 = vadd.f32 %v3136, %v3054
      %v3169 = vadd.f32 %v3137, %v3059
      %v3170 = vadd.f32 %v3138, %v3062
      %v3171 = vadd.f32 %v3139, %v3067
      %v3172 = vadd.f32 %v3140, %v3070
      %v3173 = vadd.f32 %v3141, %v3075
      %v3174 = vadd.f32 %v3142, %v3078
      %v3175 = vadd.f32 %v3143, %v3083
      %v3176 = vadd.f32 %v3144, %v3086
      %v3177 = vadd.f32 %v3145, %v3091
      %v3178 = vadd.f32 %v3146, %v3094
      %v3179 = vadd.f32 %v3147, %v3099
      %v3180 = vadd.f32 %v3148, %v3102
      %v3181 = vadd.f32 %v3149, %v3107
      %v3182 = vadd.f32 %v3150, %v3110
      %v3183 = vadd.f32 %v3151, %v3115
      %v3184 = vadd.f32 %v3152, %v3118
      %3185 = vst.msk [vmem:[#allocation2] sm:$0xff] %vm384, %v3153
      %3186 = vst.msk [vmem:[#allocation2 + $0x8] sm:$0xff] %vm384, %v3154
      %3187 = vst.msk [vmem:[#allocation2 + $0x10] sm:$0xff] %vm384, %v3155
      %3188 = vst.msk [vmem:[#allocation2 + $0x18] sm:$0xff] %vm384, %v3156
      %3189 = vst.msk [vmem:[#allocation2 + $0x20] sm:$0xff] %vm384, %v3157
      %3190 = vst.msk [vmem:[#allocation2 + $0x28] sm:$0xff] %vm384, %v3158
      %3191 = vst.msk [vmem:[#allocation2 + $0x30] sm:$0xff] %vm384, %v3159
      %3192 = vst.msk [vmem:[#allocation2 + $0x38] sm:$0xff] %vm384, %v3160
      %3193 = vst.msk [vmem:[#allocation2 + $0x40] sm:$0xff] %vm384, %v3161
      %3194 = vst.msk [vmem:[#allocation2 + $0x48] sm:$0xff] %vm384, %v3162
      %3195 = vst.msk [vmem:[#allocation2 + $0x50] sm:$0xff] %vm384, %v3163
      %3196 = vst.msk [vmem:[#allocation2 + $0x58] sm:$0xff] %vm384, %v3164
      %3197 = vst.msk [vmem:[#allocation2 + $0x60] sm:$0xff] %vm384, %v3165
      %3198 = vst.msk [vmem:[#allocation2 + $0x68] sm:$0xff] %vm384, %v3166
      %3199 = vst.msk [vmem:[#allocation2 + $0x70] sm:$0xff] %vm384, %v3167
      %3200 = vst.msk [vmem:[#allocation2 + $0x78] sm:$0xff] %vm384, %v3168
      %3201 = vst.msk [vmem:[#allocation2 + $0x80] sm:$0xff] %vm384, %v3169
      %3202 = vst.msk [vmem:[#allocation2 + $0x88] sm:$0xff] %vm384, %v3170
      %3203 = vst.msk [vmem:[#allocation2 + $0x90] sm:$0xff] %vm384, %v3171
      %3204 = vst.msk [vmem:[#allocation2 + $0x98] sm:$0xff] %vm384, %v3172
      %3205 = vst.msk [vmem:[#allocation2 + $0xa0] sm:$0xff] %vm384, %v3173
      %3206 = vst.msk [vmem:[#allocation2 + $0xa8] sm:$0xff] %vm384, %v3174
      %3207 = vst.msk [vmem:[#allocation2 + $0xb0] sm:$0xff] %vm384, %v3175
      %3208 = vst.msk [vmem:[#allocation2 + $0xb8] sm:$0xff] %vm384, %v3176
      %3209 = vst.msk [vmem:[#allocation2 + $0xc0] sm:$0xff] %vm384, %v3177
      %3210 = vst.msk [vmem:[#allocation2 + $0xc8] sm:$0xff] %vm384, %v3178
      %3211 = vst.msk [vmem:[#allocation2 + $0xd0] sm:$0xff] %vm384, %v3179
      %3212 = vst.msk [vmem:[#allocation2 + $0xd8] sm:$0xff] %vm384, %v3180
      %3213 = vst.msk [vmem:[#allocation2 + $0xe0] sm:$0xff] %vm384, %v3181
      %3214 = vst.msk [vmem:[#allocation2 + $0xe8] sm:$0xff] %vm384, %v3182
      %3215 = vst.msk [vmem:[#allocation2 + $0xf0] sm:$0xff] %vm384, %v3183
      %3216 = vst.msk [vmem:[#allocation2 + $0xf8] sm:$0xff] %vm384, %v3184
      %v3217 = vld [vmem:[%s1996] sm:$0xe]
      %v3218 = vld [vmem:[%s1996 + $0x4] sm:$0xf]
      %v3219 = vld [vmem:[%s1996 + $0x8] sm:$0x1]
      %v3220 = vld [vmem:[%s1996 + $0xc] sm:$0xe]
      %v3221 = vld [vmem:[%s1996 + $0x10] sm:$0xf]
      %v3222 = vld [vmem:[%s1996 + $0x14] sm:$0x1]
      %v3223 = vld [vmem:[%s1996 + $0x18] sm:$0xe]
      %v3224 = vld [vmem:[%s1996 + $0x1c] sm:$0xf]
      %v3225 = vld [vmem:[%s1996 + $0x20] sm:$0x1]
      %v3226 = vld [vmem:[%s1996 + $0x24] sm:$0xe]
      %v3227 = vld [vmem:[%s1996 + $0x28] sm:$0xf]
      %v3228 = vld [vmem:[%s1996 + $0x2c] sm:$0x1]
      %v3229 = vld [vmem:[%s1996 + $0x30] sm:$0xe]
      %v3230 = vld [vmem:[%s1996 + $0x34] sm:$0xf]
      %v3231 = vld [vmem:[%s1996 + $0x38] sm:$0x1]
      %v3232 = vld [vmem:[%s1996 + $0x3c] sm:$0xe]
      %v3233 = vld [vmem:[%s1996 + $0x40] sm:$0xf]
      %v3234 = vld [vmem:[%s1996 + $0x44] sm:$0x1]
      %v3235 = vld [vmem:[%s1996 + $0x48] sm:$0xe]
      %v3236 = vld [vmem:[%s1996 + $0x4c] sm:$0xf]
      %v3237 = vld [vmem:[%s1996 + $0x50] sm:$0x1]
      %v3238 = vld [vmem:[%s1996 + $0x54] sm:$0xe]
      %v3239 = vld [vmem:[%s1996 + $0x58] sm:$0xf]
      %v3240 = vld [vmem:[%s1996 + $0x5c] sm:$0x1]
      %v3241 = vld [vmem:[%s1996 + $0x60] sm:$0xe]
      %v3242 = vld [vmem:[%s1996 + $0x64] sm:$0xf]
      %v3243 = vld [vmem:[%s1996 + $0x68] sm:$0x1]
      %v3244 = vld [vmem:[%s1996 + $0x6c] sm:$0xe]
      %v3245 = vld [vmem:[%s1996 + $0x70] sm:$0xf]
      %v3246 = vld [vmem:[%s1996 + $0x74] sm:$0x1]
      %v3247 = vld [vmem:[%s1996 + $0x78] sm:$0xe]
      %v3248 = vld [vmem:[%s1996 + $0x7c] sm:$0xf]
      %v3249 = vld [vmem:[%s1996 + $0x80] sm:$0x1]
      %v3250 = vld [vmem:[%s1996 + $0x84] sm:$0xe]
      %v3251 = vld [vmem:[%s1996 + $0x88] sm:$0xf]
      %v3252 = vld [vmem:[%s1996 + $0x8c] sm:$0x1]
      %v3253 = vld [vmem:[%s1996 + $0x90] sm:$0xe]
      %v3254 = vld [vmem:[%s1996 + $0x94] sm:$0xf]
      %v3255 = vld [vmem:[%s1996 + $0x98] sm:$0x1]
      %v3256 = vld [vmem:[%s1996 + $0x9c] sm:$0xe]
      %v3257 = vld [vmem:[%s1996 + $0xa0] sm:$0xf]
      %v3258 = vld [vmem:[%s1996 + $0xa4] sm:$0x1]
      %v3259 = vld [vmem:[%s1996 + $0xa8] sm:$0xe]
      %v3260 = vld [vmem:[%s1996 + $0xac] sm:$0xf]
      %v3261 = vld [vmem:[%s1996 + $0xb0] sm:$0x1]
      %v3262 = vld [vmem:[%s1996 + $0xb4] sm:$0xe]
      %v3263 = vld [vmem:[%s1996 + $0xb8] sm:$0xf]
      %v3264 = vld [vmem:[%s1996 + $0xbc] sm:$0x1]
      %v3313 = vrot.slane %v3217, 5
      %v3314 = vrot.slane %v3313, 4
      %v3315 = vrot.slane %v3218, 5
      %v3316 = vsel %vm1521, %v3314, %v3315
      %v3317 = vrot.slane %v3315, 4
      %v3318 = vrot.slane %v3219, 5
      %v3319 = vsel %vm1521, %v3317, %v3318
      %v3320 = vrot.slane %v3220, 5
      %v3321 = vrot.slane %v3320, 4
      %v3322 = vrot.slane %v3221, 5
      %v3323 = vsel %vm1521, %v3321, %v3322
      %v3324 = vrot.slane %v3322, 4
      %v3325 = vrot.slane %v3222, 5
      %v3326 = vsel %vm1521, %v3324, %v3325
      %v3327 = vrot.slane %v3223, 5
      %v3328 = vrot.slane %v3327, 4
      %v3329 = vrot.slane %v3224, 5
      %v3330 = vsel %vm1521, %v3328, %v3329
      %v3331 = vrot.slane %v3329, 4
      %v3332 = vrot.slane %v3225, 5
      %v3333 = vsel %vm1521, %v3331, %v3332
      %v3334 = vrot.slane %v3226, 5
      %v3335 = vrot.slane %v3334, 4
      %v3336 = vrot.slane %v3227, 5
      %v3337 = vsel %vm1521, %v3335, %v3336
      %v3338 = vrot.slane %v3336, 4
      %v3339 = vrot.slane %v3228, 5
      %v3340 = vsel %vm1521, %v3338, %v3339
      %v3341 = vrot.slane %v3229, 5
      %v3342 = vrot.slane %v3341, 4
      %v3343 = vrot.slane %v3230, 5
      %v3344 = vsel %vm1521, %v3342, %v3343
      %v3345 = vrot.slane %v3343, 4
      %v3346 = vrot.slane %v3231, 5
      %v3347 = vsel %vm1521, %v3345, %v3346
      %v3348 = vrot.slane %v3232, 5
      %v3349 = vrot.slane %v3348, 4
      %v3350 = vrot.slane %v3233, 5
      %v3351 = vsel %vm1521, %v3349, %v3350
      %v3352 = vrot.slane %v3350, 4
      %v3353 = vrot.slane %v3234, 5
      %v3354 = vsel %vm1521, %v3352, %v3353
      %v3355 = vrot.slane %v3235, 5
      %v3356 = vrot.slane %v3355, 4
      %v3357 = vrot.slane %v3236, 5
      %v3358 = vsel %vm1521, %v3356, %v3357
      %v3359 = vrot.slane %v3357, 4
      %v3360 = vrot.slane %v3237, 5
      %v3361 = vsel %vm1521, %v3359, %v3360
      %v3362 = vrot.slane %v3238, 5
      %v3363 = vrot.slane %v3362, 4
      %v3364 = vrot.slane %v3239, 5
      %v3365 = vsel %vm1521, %v3363, %v3364
      %v3366 = vrot.slane %v3364, 4
      %v3367 = vrot.slane %v3240, 5
      %v3368 = vsel %vm1521, %v3366, %v3367
      %v3369 = vrot.slane %v3241, 5
      %v3370 = vrot.slane %v3369, 4
      %v3371 = vrot.slane %v3242, 5
      %v3372 = vsel %vm1521, %v3370, %v3371
      %v3373 = vrot.slane %v3371, 4
      %v3374 = vrot.slane %v3243, 5
      %v3375 = vsel %vm1521, %v3373, %v3374
      %v3376 = vrot.slane %v3244, 5
      %v3377 = vrot.slane %v3376, 4
      %v3378 = vrot.slane %v3245, 5
      %v3379 = vsel %vm1521, %v3377, %v3378
      %v3380 = vrot.slane %v3378, 4
      %v3381 = vrot.slane %v3246, 5
      %v3382 = vsel %vm1521, %v3380, %v3381
      %v3383 = vrot.slane %v3247, 5
      %v3384 = vrot.slane %v3383, 4
      %v3385 = vrot.slane %v3248, 5
      %v3386 = vsel %vm1521, %v3384, %v3385
      %v3387 = vrot.slane %v3385, 4
      %v3388 = vrot.slane %v3249, 5
      %v3389 = vsel %vm1521, %v3387, %v3388
      %v3390 = vrot.slane %v3250, 5
      %v3391 = vrot.slane %v3390, 4
      %v3392 = vrot.slane %v3251, 5
      %v3393 = vsel %vm1521, %v3391, %v3392
      %v3394 = vrot.slane %v3392, 4
      %v3395 = vrot.slane %v3252, 5
      %v3396 = vsel %vm1521, %v3394, %v3395
      %v3397 = vrot.slane %v3253, 5
      %v3398 = vrot.slane %v3397, 4
      %v3399 = vrot.slane %v3254, 5
      %v3400 = vsel %vm1521, %v3398, %v3399
      %v3401 = vrot.slane %v3399, 4
      %v3402 = vrot.slane %v3255, 5
      %v3403 = vsel %vm1521, %v3401, %v3402
      %v3404 = vrot.slane %v3256, 5
      %v3405 = vrot.slane %v3404, 4
      %v3406 = vrot.slane %v3257, 5
      %v3407 = vsel %vm1521, %v3405, %v3406
      %v3408 = vrot.slane %v3406, 4
      %v3409 = vrot.slane %v3258, 5
      %v3410 = vsel %vm1521, %v3408, %v3409
      %v3411 = vrot.slane %v3259, 5
      %v3412 = vrot.slane %v3411, 4
      %v3413 = vrot.slane %v3260, 5
      %v3414 = vsel %vm1521, %v3412, %v3413
      %v3415 = vrot.slane %v3413, 4
      %v3416 = vrot.slane %v3261, 5
      %v3417 = vsel %vm1521, %v3415, %v3416
      %v3418 = vrot.slane %v3262, 5
      %v3419 = vrot.slane %v3418, 4
      %v3420 = vrot.slane %v3263, 5
      %v3421 = vsel %vm1521, %v3419, %v3420
      %v3422 = vrot.slane %v3420, 4
      %v3423 = vrot.slane %v3264, 5
      %v3424 = vsel %vm1521, %v3422, %v3423
      %s3425 = scalar_lea.vmem %s248, 40
      %v3426 = vld [vmem:[%s3425] sm:$0xf]
      %v3427 = vld [vmem:[%s3425 + $0x4] sm:$0xf]
      %v3428 = vunpack.c.l.b16 %v3316
      %v3429 = vunpack.c.l.b16 %v3319
      %v3430 = vunpack.c.l.b16 %v3323
      %v3431 = vunpack.c.l.b16 %v3326
      %v3432 = vunpack.c.l.b16 %v3330
      %v3433 = vunpack.c.l.b16 %v3333
      %v3434 = vunpack.c.l.b16 %v3337
      %v3435 = vunpack.c.l.b16 %v3340
      %v3436 = vunpack.c.l.b16 %v3344
      %v3437 = vunpack.c.l.b16 %v3347
      %v3438 = vunpack.c.l.b16 %v3351
      %v3439 = vunpack.c.l.b16 %v3354
      %v3440 = vunpack.c.l.b16 %v3358
      %v3441 = vunpack.c.l.b16 %v3361
      %v3442 = vunpack.c.l.b16 %v3365
      %v3443 = vunpack.c.l.b16 %v3368
      %v3444 = vunpack.c.l.b16 %v3372
      %v3445 = vunpack.c.l.b16 %v3375
      %v3446 = vunpack.c.l.b16 %v3379
      %v3447 = vunpack.c.l.b16 %v3382
      %v3448 = vunpack.c.l.b16 %v3386
      %v3449 = vunpack.c.l.b16 %v3389
      %v3450 = vunpack.c.l.b16 %v3393
      %v3451 = vunpack.c.l.b16 %v3396
      %v3452 = vunpack.c.l.b16 %v3400
      %v3453 = vunpack.c.l.b16 %v3403
      %v3454 = vunpack.c.l.b16 %v3407
      %v3455 = vunpack.c.l.b16 %v3410
      %v3456 = vunpack.c.l.b16 %v3414
      %v3457 = vunpack.c.l.b16 %v3417
      %v3458 = vunpack.c.l.b16 %v3421
      %v3459 = vunpack.c.l.b16 %v3424
      %v3460 = vpack.c.b16 %v3429, %v3428
      %v3461 = vpack.c.b16 %v3431, %v3430
      %v3462 = vpack.c.b16 %v3433, %v3432
      %v3463 = vpack.c.b16 %v3435, %v3434
      %v3464 = vpack.c.b16 %v3437, %v3436
      %v3465 = vpack.c.b16 %v3439, %v3438
      %v3466 = vpack.c.b16 %v3441, %v3440
      %v3467 = vpack.c.b16 %v3443, %v3442
      %v3468 = vpack.c.b16 %v3445, %v3444
      %v3469 = vpack.c.b16 %v3447, %v3446
      %v3470 = vpack.c.b16 %v3449, %v3448
      %v3471 = vpack.c.b16 %v3451, %v3450
      %v3472 = vpack.c.b16 %v3453, %v3452
      %v3473 = vpack.c.b16 %v3455, %v3454
      %v3474 = vpack.c.b16 %v3457, %v3456
      %v3475 = vpack.c.b16 %v3459, %v3458
      %v3478 = vunpack.c.l.b16 %v3426
      %v3479 = vunpack.c.l.b16 %v3427
      %v3480 = vpack.c.b16 %v3479, %v3478
      %v3483 = vsel %vm384, %v3460, 0
      %v3486 = vsel %vm384, %v3461, 0
      %v3489 = vsel %vm384, %v3462, 0
      %v3492 = vsel %vm384, %v3463, 0
      %v3495 = vsel %vm384, %v3464, 0
      %v3498 = vsel %vm384, %v3465, 0
      %v3501 = vsel %vm384, %v3466, 0
      %v3504 = vsel %vm384, %v3467, 0
      %v3507 = vsel %vm384, %v3468, 0
      %v3510 = vsel %vm384, %v3469, 0
      %v3513 = vsel %vm384, %v3470, 0
      %v3516 = vsel %vm384, %v3471, 0
      %v3519 = vsel %vm384, %v3472, 0
      %v3522 = vsel %vm384, %v3473, 0
      %v3525 = vsel %vm384, %v3474, 0
      %v3528 = vsel %vm384, %v3475, 0
      %3530 = vmatprep.subr.bf16.mxu0 0
      %3531 = vmatpush1.bf16.msra.mxu0 0
      %3532 = vmatprep.subr.bf16.mxu0 0
      %3533 = vmatpush1.bf16.msra.mxu0 0
      %3534 = vmatprep.subr.bf16.mxu0 0
      %3535 = vmatpush1.bf16.msra.mxu0 0
      %3536 = vmatprep.subr.bf16.mxu0 0
      %3537 = vmatpush1.bf16.msra.mxu0 0
      %3538 = vmatprep.subr.bf16.mxu0 0
      %3539 = vmatpush1.bf16.msra.mxu0 0
      %3540 = vmatprep.subr.bf16.mxu0 0
      %3541 = vmatpush1.bf16.msra.mxu0 0
      %3542 = vmatprep.subr.bf16.mxu0 0
      %3543 = vmatpush1.bf16.msra.mxu0 0
      %3544 = vmatprep.subr.bf16.mxu0 0
      %3545 = vmatpush1.bf16.msra.mxu0 %v3480
      %3546 = vmatprep.subr.bf16.mxu0 0
      %3547 = vmatpush2.bf16.msra.mxu0 0
      %3548 = vmatprep.subr.bf16.mxu0 0
      %3549 = vmatpush2.bf16.msra.mxu0 0
      %3550 = vmatprep.subr.bf16.mxu0 0
      %3551 = vmatpush2.bf16.msra.mxu0 0
      %3552 = vmatprep.subr.bf16.mxu0 0
      %3553 = vmatpush2.bf16.msra.mxu0 0
      %3554 = vmatprep.subr.bf16.mxu0 0
      %3555 = vmatpush2.bf16.msra.mxu0 0
      %3556 = vmatprep.subr.bf16.mxu0 0
      %3557 = vmatpush2.bf16.msra.mxu0 0
      %3558 = vmatprep.subr.bf16.mxu0 0
      %3559 = vmatpush2.bf16.msra.mxu0 0
      %3560 = vmatprep.subr.bf16.mxu0 0
      %3561 = vmatpush2.bf16.msra.mxu0 0
      %3562 = vmatprep.mubr.bf16.mxu0 0
      %3563 = vmatmul.mubr.bf16.gmra.mxu0 %v3483
      %v3564 = vpop.f32.mrf.mxu0
      %v3565 = vadd.f32 0.0, %v3564
      %v3566 = vpop.f32.mrf.mxu0
      %v3567 = vpop.f32.mrf.mxu0
      %v3568 = vadd.f32 0.0, %v3567
      %v3569 = vpop.f32.mrf.mxu0
      %3570 = vmatprep.mubr.bf16.mxu0 0
      %3571 = vmatmul.mubr.bf16.gmra.mxu0 %v3486
      %v3572 = vpop.f32.mrf.mxu0
      %v3573 = vadd.f32 0.0, %v3572
      %v3574 = vpop.f32.mrf.mxu0
      %v3575 = vpop.f32.mrf.mxu0
      %v3576 = vadd.f32 0.0, %v3575
      %v3577 = vpop.f32.mrf.mxu0
      %3578 = vmatprep.mubr.bf16.mxu0 0
      %3579 = vmatmul.mubr.bf16.gmra.mxu0 %v3489
      %v3580 = vpop.f32.mrf.mxu0
      %v3581 = vadd.f32 0.0, %v3580
      %v3582 = vpop.f32.mrf.mxu0
      %v3583 = vpop.f32.mrf.mxu0
      %v3584 = vadd.f32 0.0, %v3583
      %v3585 = vpop.f32.mrf.mxu0
      %3586 = vmatprep.mubr.bf16.mxu0 0
      %3587 = vmatmul.mubr.bf16.gmra.mxu0 %v3492
      %v3588 = vpop.f32.mrf.mxu0
      %v3589 = vadd.f32 0.0, %v3588
      %v3590 = vpop.f32.mrf.mxu0
      %v3591 = vpop.f32.mrf.mxu0
      %v3592 = vadd.f32 0.0, %v3591
      %v3593 = vpop.f32.mrf.mxu0
      %3594 = vmatprep.mubr.bf16.mxu0 0
      %3595 = vmatmul.mubr.bf16.gmra.mxu0 %v3495
      %v3596 = vpop.f32.mrf.mxu0
      %v3597 = vadd.f32 0.0, %v3596
      %v3598 = vpop.f32.mrf.mxu0
      %v3599 = vpop.f32.mrf.mxu0
      %v3600 = vadd.f32 0.0, %v3599
      %v3601 = vpop.f32.mrf.mxu0
      %3602 = vmatprep.mubr.bf16.mxu0 0
      %3603 = vmatmul.mubr.bf16.gmra.mxu0 %v3498
      %v3604 = vpop.f32.mrf.mxu0
      %v3605 = vadd.f32 0.0, %v3604
      %v3606 = vpop.f32.mrf.mxu0
      %v3607 = vpop.f32.mrf.mxu0
      %v3608 = vadd.f32 0.0, %v3607
      %v3609 = vpop.f32.mrf.mxu0
      %3610 = vmatprep.mubr.bf16.mxu0 0
      %3611 = vmatmul.mubr.bf16.gmra.mxu0 %v3501
      %v3612 = vpop.f32.mrf.mxu0
      %v3613 = vadd.f32 0.0, %v3612
      %v3614 = vpop.f32.mrf.mxu0
      %v3615 = vpop.f32.mrf.mxu0
      %v3616 = vadd.f32 0.0, %v3615
      %v3617 = vpop.f32.mrf.mxu0
      %3618 = vmatprep.mubr.bf16.mxu0 0
      %3619 = vmatmul.mubr.bf16.gmra.mxu0 %v3504
      %v3620 = vpop.f32.mrf.mxu0
      %v3621 = vadd.f32 0.0, %v3620
      %v3622 = vpop.f32.mrf.mxu0
      %v3623 = vpop.f32.mrf.mxu0
      %v3624 = vadd.f32 0.0, %v3623
      %v3625 = vpop.f32.mrf.mxu0
      %3626 = vmatprep.mubr.bf16.mxu0 0
      %3627 = vmatmul.mubr.bf16.gmra.mxu0 %v3507
      %v3628 = vpop.f32.mrf.mxu0
      %v3629 = vadd.f32 0.0, %v3628
      %v3630 = vpop.f32.mrf.mxu0
      %v3631 = vpop.f32.mrf.mxu0
      %v3632 = vadd.f32 0.0, %v3631
      %v3633 = vpop.f32.mrf.mxu0
      %3634 = vmatprep.mubr.bf16.mxu0 0
      %3635 = vmatmul.mubr.bf16.gmra.mxu0 %v3510
      %v3636 = vpop.f32.mrf.mxu0
      %v3637 = vadd.f32 0.0, %v3636
      %v3638 = vpop.f32.mrf.mxu0
      %v3639 = vpop.f32.mrf.mxu0
      %v3640 = vadd.f32 0.0, %v3639
      %v3641 = vpop.f32.mrf.mxu0
      %3642 = vmatprep.mubr.bf16.mxu0 0
      %3643 = vmatmul.mubr.bf16.gmra.mxu0 %v3513
      %v3644 = vpop.f32.mrf.mxu0
      %v3645 = vadd.f32 0.0, %v3644
      %v3646 = vpop.f32.mrf.mxu0
      %v3647 = vpop.f32.mrf.mxu0
      %v3648 = vadd.f32 0.0, %v3647
      %v3649 = vpop.f32.mrf.mxu0
      %3650 = vmatprep.mubr.bf16.mxu0 0
      %3651 = vmatmul.mubr.bf16.gmra.mxu0 %v3516
      %v3652 = vpop.f32.mrf.mxu0
      %v3653 = vadd.f32 0.0, %v3652
      %v3654 = vpop.f32.mrf.mxu0
      %v3655 = vpop.f32.mrf.mxu0
      %v3656 = vadd.f32 0.0, %v3655
      %v3657 = vpop.f32.mrf.mxu0
      %3658 = vmatprep.mubr.bf16.mxu0 0
      %3659 = vmatmul.mubr.bf16.gmra.mxu0 %v3519
      %v3660 = vpop.f32.mrf.mxu0
      %v3661 = vadd.f32 0.0, %v3660
      %v3662 = vpop.f32.mrf.mxu0
      %v3663 = vpop.f32.mrf.mxu0
      %v3664 = vadd.f32 0.0, %v3663
      %v3665 = vpop.f32.mrf.mxu0
      %3666 = vmatprep.mubr.bf16.mxu0 0
      %3667 = vmatmul.mubr.bf16.gmra.mxu0 %v3522
      %v3668 = vpop.f32.mrf.mxu0
      %v3669 = vadd.f32 0.0, %v3668
      %v3670 = vpop.f32.mrf.mxu0
      %v3671 = vpop.f32.mrf.mxu0
      %v3672 = vadd.f32 0.0, %v3671
      %v3673 = vpop.f32.mrf.mxu0
      %3674 = vmatprep.mubr.bf16.mxu0 0
      %3675 = vmatmul.mubr.bf16.gmra.mxu0 %v3525
      %v3676 = vpop.f32.mrf.mxu0
      %v3677 = vadd.f32 0.0, %v3676
      %v3678 = vpop.f32.mrf.mxu0
      %v3679 = vpop.f32.mrf.mxu0
      %v3680 = vadd.f32 0.0, %v3679
      %v3681 = vpop.f32.mrf.mxu0
      %3682 = vmatprep.mubr.bf16.mxu0 0
      %3683 = vmatmul.mubr.bf16.gmra.mxu0 %v3528
      %v3684 = vpop.f32.mrf.mxu0
      %v3685 = vadd.f32 0.0, %v3684
      %v3686 = vpop.f32.mrf.mxu0
      %v3687 = vpop.f32.mrf.mxu0
      %v3688 = vadd.f32 0.0, %v3687
      %v3689 = vpop.f32.mrf.mxu0
      %3690 = vdwg.mxu0
      %v3691 = vld [vmem:[#allocation2] sm:$0xff]
      %v3692 = vld [vmem:[#allocation2 + $0x8] sm:$0xff]
      %v3693 = vld [vmem:[#allocation2 + $0x10] sm:$0xff]
      %v3694 = vld [vmem:[#allocation2 + $0x18] sm:$0xff]
      %v3695 = vld [vmem:[#allocation2 + $0x20] sm:$0xff]
      %v3696 = vld [vmem:[#allocation2 + $0x28] sm:$0xff]
      %v3697 = vld [vmem:[#allocation2 + $0x30] sm:$0xff]
      %v3698 = vld [vmem:[#allocation2 + $0x38] sm:$0xff]
      %v3699 = vld [vmem:[#allocation2 + $0x40] sm:$0xff]
      %v3700 = vld [vmem:[#allocation2 + $0x48] sm:$0xff]
      %v3701 = vld [vmem:[#allocation2 + $0x50] sm:$0xff]
      %v3702 = vld [vmem:[#allocation2 + $0x58] sm:$0xff]
      %v3703 = vld [vmem:[#allocation2 + $0x60] sm:$0xff]
      %v3704 = vld [vmem:[#allocation2 + $0x68] sm:$0xff]
      %v3705 = vld [vmem:[#allocation2 + $0x70] sm:$0xff]
      %v3706 = vld [vmem:[#allocation2 + $0x78] sm:$0xff]
      %v3707 = vld [vmem:[#allocation2 + $0x80] sm:$0xff]
      %v3708 = vld [vmem:[#allocation2 + $0x88] sm:$0xff]
      %v3709 = vld [vmem:[#allocation2 + $0x90] sm:$0xff]
      %v3710 = vld [vmem:[#allocation2 + $0x98] sm:$0xff]
      %v3711 = vld [vmem:[#allocation2 + $0xa0] sm:$0xff]
      %v3712 = vld [vmem:[#allocation2 + $0xa8] sm:$0xff]
      %v3713 = vld [vmem:[#allocation2 + $0xb0] sm:$0xff]
      %v3714 = vld [vmem:[#allocation2 + $0xb8] sm:$0xff]
      %v3715 = vld [vmem:[#allocation2 + $0xc0] sm:$0xff]
      %v3716 = vld [vmem:[#allocation2 + $0xc8] sm:$0xff]
      %v3717 = vld [vmem:[#allocation2 + $0xd0] sm:$0xff]
      %v3718 = vld [vmem:[#allocation2 + $0xd8] sm:$0xff]
      %v3719 = vld [vmem:[#allocation2 + $0xe0] sm:$0xff]
      %v3720 = vld [vmem:[#allocation2 + $0xe8] sm:$0xff]
      %v3721 = vld [vmem:[#allocation2 + $0xf0] sm:$0xff]
      %v3722 = vld [vmem:[#allocation2 + $0xf8] sm:$0xff]
      %v3723 = vadd.f32 %v3691, %v3565
      %v3724 = vadd.f32 %v3692, %v3568
      %v3725 = vadd.f32 %v3693, %v3573
      %v3726 = vadd.f32 %v3694, %v3576
      %v3727 = vadd.f32 %v3695, %v3581
      %v3728 = vadd.f32 %v3696, %v3584
      %v3729 = vadd.f32 %v3697, %v3589
      %v3730 = vadd.f32 %v3698, %v3592
      %v3731 = vadd.f32 %v3699, %v3597
      %v3732 = vadd.f32 %v3700, %v3600
      %v3733 = vadd.f32 %v3701, %v3605
      %v3734 = vadd.f32 %v3702, %v3608
      %v3735 = vadd.f32 %v3703, %v3613
      %v3736 = vadd.f32 %v3704, %v3616
      %v3737 = vadd.f32 %v3705, %v3621
      %v3738 = vadd.f32 %v3706, %v3624
      %v3739 = vadd.f32 %v3707, %v3629
      %v3740 = vadd.f32 %v3708, %v3632
      %v3741 = vadd.f32 %v3709, %v3637
      %v3742 = vadd.f32 %v3710, %v3640
      %v3743 = vadd.f32 %v3711, %v3645
      %v3744 = vadd.f32 %v3712, %v3648
      %v3745 = vadd.f32 %v3713, %v3653
      %v3746 = vadd.f32 %v3714, %v3656
      %v3747 = vadd.f32 %v3715, %v3661
      %v3748 = vadd.f32 %v3716, %v3664
      %v3749 = vadd.f32 %v3717, %v3669
      %v3750 = vadd.f32 %v3718, %v3672
      %v3751 = vadd.f32 %v3719, %v3677
      %v3752 = vadd.f32 %v3720, %v3680
      %v3753 = vadd.f32 %v3721, %v3685
      %v3754 = vadd.f32 %v3722, %v3688
      %3755 = vst.msk [vmem:[#allocation2] sm:$0xff] %vm384, %v3723
      %3756 = vst.msk [vmem:[#allocation2 + $0x8] sm:$0xff] %vm384, %v3724
      %3757 = vst.msk [vmem:[#allocation2 + $0x10] sm:$0xff] %vm384, %v3725
      %3758 = vst.msk [vmem:[#allocation2 + $0x18] sm:$0xff] %vm384, %v3726
      %3759 = vst.msk [vmem:[#allocation2 + $0x20] sm:$0xff] %vm384, %v3727
      %3760 = vst.msk [vmem:[#allocation2 + $0x28] sm:$0xff] %vm384, %v3728
      %3761 = vst.msk [vmem:[#allocation2 + $0x30] sm:$0xff] %vm384, %v3729
      %3762 = vst.msk [vmem:[#allocation2 + $0x38] sm:$0xff] %vm384, %v3730
      %3763 = vst.msk [vmem:[#allocation2 + $0x40] sm:$0xff] %vm384, %v3731
      %3764 = vst.msk [vmem:[#allocation2 + $0x48] sm:$0xff] %vm384, %v3732
      %3765 = vst.msk [vmem:[#allocation2 + $0x50] sm:$0xff] %vm384, %v3733
      %3766 = vst.msk [vmem:[#allocation2 + $0x58] sm:$0xff] %vm384, %v3734
      %3767 = vst.msk [vmem:[#allocation2 + $0x60] sm:$0xff] %vm384, %v3735
      %3768 = vst.msk [vmem:[#allocation2 + $0x68] sm:$0xff] %vm384, %v3736
      %3769 = vst.msk [vmem:[#allocation2 + $0x70] sm:$0xff] %vm384, %v3737
      %3770 = vst.msk [vmem:[#allocation2 + $0x78] sm:$0xff] %vm384, %v3738
      %3771 = vst.msk [vmem:[#allocation2 + $0x80] sm:$0xff] %vm384, %v3739
      %3772 = vst.msk [vmem:[#allocation2 + $0x88] sm:$0xff] %vm384, %v3740
      %3773 = vst.msk [vmem:[#allocation2 + $0x90] sm:$0xff] %vm384, %v3741
      %3774 = vst.msk [vmem:[#allocation2 + $0x98] sm:$0xff] %vm384, %v3742
      %3775 = vst.msk [vmem:[#allocation2 + $0xa0] sm:$0xff] %vm384, %v3743
      %3776 = vst.msk [vmem:[#allocation2 + $0xa8] sm:$0xff] %vm384, %v3744
      %3777 = vst.msk [vmem:[#allocation2 + $0xb0] sm:$0xff] %vm384, %v3745
      %3778 = vst.msk [vmem:[#allocation2 + $0xb8] sm:$0xff] %vm384, %v3746
      %3779 = vst.msk [vmem:[#allocation2 + $0xc0] sm:$0xff] %vm384, %v3747
      %3780 = vst.msk [vmem:[#allocation2 + $0xc8] sm:$0xff] %vm384, %v3748
      %3781 = vst.msk [vmem:[#allocation2 + $0xd0] sm:$0xff] %vm384, %v3749
      %3782 = vst.msk [vmem:[#allocation2 + $0xd8] sm:$0xff] %vm384, %v3750
      %3783 = vst.msk [vmem:[#allocation2 + $0xe0] sm:$0xff] %vm384, %v3751
      %3784 = vst.msk [vmem:[#allocation2 + $0xe8] sm:$0xff] %vm384, %v3752
      %3785 = vst.msk [vmem:[#allocation2 + $0xf0] sm:$0xff] %vm384, %v3753
      %3786 = vst.msk [vmem:[#allocation2 + $0xf8] sm:$0xff] %vm384, %v3754
      %s3787 = scalar_lea.vmem %s244, 24
      %v3788 = vld [vmem:[%s3787] sm:$0xf]
      %v3789 = vld [vmem:[%s3787 + $0x4] sm:$0xf]
      %v3790 = vld [vmem:[%s3787 + $0xc] sm:$0xf]
      %v3791 = vld [vmem:[%s3787 + $0x10] sm:$0xf]
      %v3792 = vld [vmem:[%s3787 + $0x18] sm:$0xf]
      %v3793 = vld [vmem:[%s3787 + $0x1c] sm:$0xf]
      %v3794 = vld [vmem:[%s3787 + $0x24] sm:$0xf]
      %v3795 = vld [vmem:[%s3787 + $0x28] sm:$0xf]
      %v3796 = vld [vmem:[%s3787 + $0x30] sm:$0xf]
      %v3797 = vld [vmem:[%s3787 + $0x34] sm:$0xf]
      %v3798 = vld [vmem:[%s3787 + $0x3c] sm:$0xf]
      %v3799 = vld [vmem:[%s3787 + $0x40] sm:$0xf]
      %v3800 = vld [vmem:[%s3787 + $0x48] sm:$0xf]
      %v3801 = vld [vmem:[%s3787 + $0x4c] sm:$0xf]
      %v3802 = vld [vmem:[%s3787 + $0x54] sm:$0xf]
      %v3803 = vld [vmem:[%s3787 + $0x58] sm:$0xf]
      %v3804 = vld [vmem:[%s3787 + $0x60] sm:$0xf]
      %v3805 = vld [vmem:[%s3787 + $0x64] sm:$0xf]
      %v3806 = vld [vmem:[%s3787 + $0x6c] sm:$0xf]
      %v3807 = vld [vmem:[%s3787 + $0x70] sm:$0xf]
      %v3808 = vld [vmem:[%s3787 + $0x78] sm:$0xf]
      %v3809 = vld [vmem:[%s3787 + $0x7c] sm:$0xf]
      %v3810 = vld [vmem:[%s3787 + $0x84] sm:$0xf]
      %v3811 = vld [vmem:[%s3787 + $0x88] sm:$0xf]
      %v3812 = vld [vmem:[%s3787 + $0x90] sm:$0xf]
      %v3813 = vld [vmem:[%s3787 + $0x94] sm:$0xf]
      %v3814 = vld [vmem:[%s3787 + $0x9c] sm:$0xf]
      %v3815 = vld [vmem:[%s3787 + $0xa0] sm:$0xf]
      %v3816 = vld [vmem:[%s3787 + $0xa8] sm:$0xf]
      %v3817 = vld [vmem:[%s3787 + $0xac] sm:$0xf]
      %v3818 = vld [vmem:[%s3787 + $0xb4] sm:$0xf]
      %v3819 = vld [vmem:[%s3787 + $0xb8] sm:$0xf]
      %s3820 = scalar_lea.vmem %s248, 48
      %v3821 = vld [vmem:[%s3820] sm:$0xf]
      %v3822 = vld [vmem:[%s3820 + $0x4] sm:$0xf]
      %v3855 = vunpack.c.l.b16 %v3788
      %v3856 = vunpack.c.l.b16 %v3789
      %v3857 = vunpack.c.l.b16 %v3790
      %v3858 = vunpack.c.l.b16 %v3791
      %v3859 = vunpack.c.l.b16 %v3792
      %v3860 = vunpack.c.l.b16 %v3793
      %v3861 = vunpack.c.l.b16 %v3794
      %v3862 = vunpack.c.l.b16 %v3795
      %v3863 = vunpack.c.l.b16 %v3796
      %v3864 = vunpack.c.l.b16 %v3797
      %v3865 = vunpack.c.l.b16 %v3798
      %v3866 = vunpack.c.l.b16 %v3799
      %v3867 = vunpack.c.l.b16 %v3800
      %v3868 = vunpack.c.l.b16 %v3801
      %v3869 = vunpack.c.l.b16 %v3802
      %v3870 = vunpack.c.l.b16 %v3803
      %v3871 = vunpack.c.l.b16 %v3804
      %v3872 = vunpack.c.l.b16 %v3805
      %v3873 = vunpack.c.l.b16 %v3806
      %v3874 = vunpack.c.l.b16 %v3807
      %v3875 = vunpack.c.l.b16 %v3808
      %v3876 = vunpack.c.l.b16 %v3809
      %v3877 = vunpack.c.l.b16 %v3810
      %v3878 = vunpack.c.l.b16 %v3811
      %v3879 = vunpack.c.l.b16 %v3812
      %v3880 = vunpack.c.l.b16 %v3813
      %v3881 = vunpack.c.l.b16 %v3814
      %v3882 = vunpack.c.l.b16 %v3815
      %v3883 = vunpack.c.l.b16 %v3816
      %v3884 = vunpack.c.l.b16 %v3817
      %v3885 = vunpack.c.l.b16 %v3818
      %v3886 = vunpack.c.l.b16 %v3819
      %v3887 = vpack.c.b16 %v3856, %v3855
      %v3888 = vpack.c.b16 %v3858, %v3857
      %v3889 = vpack.c.b16 %v3860, %v3859
      %v3890 = vpack.c.b16 %v3862, %v3861
      %v3891 = vpack.c.b16 %v3864, %v3863
      %v3892 = vpack.c.b16 %v3866, %v3865
      %v3893 = vpack.c.b16 %v3868, %v3867
      %v3894 = vpack.c.b16 %v3870, %v3869
      %v3895 = vpack.c.b16 %v3872, %v3871
      %v3896 = vpack.c.b16 %v3874, %v3873
      %v3897 = vpack.c.b16 %v3876, %v3875
      %v3898 = vpack.c.b16 %v3878, %v3877
      %v3899 = vpack.c.b16 %v3880, %v3879
      %v3900 = vpack.c.b16 %v3882, %v3881
      %v3901 = vpack.c.b16 %v3884, %v3883
      %v3902 = vpack.c.b16 %v3886, %v3885
      %v3905 = vunpack.c.l.b16 %v3821
      %v3906 = vunpack.c.l.b16 %v3822
      %v3907 = vpack.c.b16 %v3906, %v3905
      %v3910 = vsel %vm384, %v3887, 0
      %v3913 = vsel %vm384, %v3888, 0
      %v3916 = vsel %vm384, %v3889, 0
      %v3919 = vsel %vm384, %v3890, 0
      %v3922 = vsel %vm384, %v3891, 0
      %v3925 = vsel %vm384, %v3892, 0
      %v3928 = vsel %vm384, %v3893, 0
      %v3931 = vsel %vm384, %v3894, 0
      %v3934 = vsel %vm384, %v3895, 0
      %v3937 = vsel %vm384, %v3896, 0
      %v3940 = vsel %vm384, %v3897, 0
      %v3943 = vsel %vm384, %v3898, 0
      %v3946 = vsel %vm384, %v3899, 0
      %v3949 = vsel %vm384, %v3900, 0
      %v3952 = vsel %vm384, %v3901, 0
      %v3955 = vsel %vm384, %v3902, 0
      %3957 = vmatprep.subr.bf16.mxu0 0
      %3958 = vmatpush1.bf16.msra.mxu0 0
      %3959 = vmatprep.subr.bf16.mxu0 0
      %3960 = vmatpush1.bf16.msra.mxu0 0
      %3961 = vmatprep.subr.bf16.mxu0 0
      %3962 = vmatpush1.bf16.msra.mxu0 0
      %3963 = vmatprep.subr.bf16.mxu0 0
      %3964 = vmatpush1.bf16.msra.mxu0 0
      %3965 = vmatprep.subr.bf16.mxu0 0
      %3966 = vmatpush1.bf16.msra.mxu0 0
      %3967 = vmatprep.subr.bf16.mxu0 0
      %3968 = vmatpush1.bf16.msra.mxu0 0
      %3969 = vmatprep.subr.bf16.mxu0 0
      %3970 = vmatpush1.bf16.msra.mxu0 0
      %3971 = vmatprep.subr.bf16.mxu0 0
      %3972 = vmatpush1.bf16.msra.mxu0 %v3907
      %3973 = vmatprep.subr.bf16.mxu0 0
      %3974 = vmatpush2.bf16.msra.mxu0 0
      %3975 = vmatprep.subr.bf16.mxu0 0
      %3976 = vmatpush2.bf16.msra.mxu0 0
      %3977 = vmatprep.subr.bf16.mxu0 0
      %3978 = vmatpush2.bf16.msra.mxu0 0
      %3979 = vmatprep.subr.bf16.mxu0 0
      %3980 = vmatpush2.bf16.msra.mxu0 0
      %3981 = vmatprep.subr.bf16.mxu0 0
      %3982 = vmatpush2.bf16.msra.mxu0 0
      %3983 = vmatprep.subr.bf16.mxu0 0
      %3984 = vmatpush2.bf16.msra.mxu0 0
      %3985 = vmatprep.subr.bf16.mxu0 0
      %3986 = vmatpush2.bf16.msra.mxu0 0
      %3987 = vmatprep.subr.bf16.mxu0 0
      %3988 = vmatpush2.bf16.msra.mxu0 0
      %3989 = vmatprep.mubr.bf16.mxu0 0
      %3990 = vmatmul.mubr.bf16.gmra.mxu0 %v3910
      %v3991 = vpop.f32.mrf.mxu0
      %v3992 = vadd.f32 0.0, %v3991
      %v3993 = vpop.f32.mrf.mxu0
      %v3994 = vpop.f32.mrf.mxu0
      %v3995 = vadd.f32 0.0, %v3994
      %v3996 = vpop.f32.mrf.mxu0
      %3997 = vmatprep.mubr.bf16.mxu0 0
      %3998 = vmatmul.mubr.bf16.gmra.mxu0 %v3913
      %v3999 = vpop.f32.mrf.mxu0
      %v4000 = vadd.f32 0.0, %v3999
      %v4001 = vpop.f32.mrf.mxu0
      %v4002 = vpop.f32.mrf.mxu0
      %v4003 = vadd.f32 0.0, %v4002
      %v4004 = vpop.f32.mrf.mxu0
      %4005 = vmatprep.mubr.bf16.mxu0 0
      %4006 = vmatmul.mubr.bf16.gmra.mxu0 %v3916
      %v4007 = vpop.f32.mrf.mxu0
      %v4008 = vadd.f32 0.0, %v4007
      %v4009 = vpop.f32.mrf.mxu0
      %v4010 = vpop.f32.mrf.mxu0
      %v4011 = vadd.f32 0.0, %v4010
      %v4012 = vpop.f32.mrf.mxu0
      %4013 = vmatprep.mubr.bf16.mxu0 0
      %4014 = vmatmul.mubr.bf16.gmra.mxu0 %v3919
      %v4015 = vpop.f32.mrf.mxu0
      %v4016 = vadd.f32 0.0, %v4015
      %v4017 = vpop.f32.mrf.mxu0
      %v4018 = vpop.f32.mrf.mxu0
      %v4019 = vadd.f32 0.0, %v4018
      %v4020 = vpop.f32.mrf.mxu0
      %4021 = vmatprep.mubr.bf16.mxu0 0
      %4022 = vmatmul.mubr.bf16.gmra.mxu0 %v3922
      %v4023 = vpop.f32.mrf.mxu0
      %v4024 = vadd.f32 0.0, %v4023
      %v4025 = vpop.f32.mrf.mxu0
      %v4026 = vpop.f32.mrf.mxu0
      %v4027 = vadd.f32 0.0, %v4026
      %v4028 = vpop.f32.mrf.mxu0
      %4029 = vmatprep.mubr.bf16.mxu0 0
      %4030 = vmatmul.mubr.bf16.gmra.mxu0 %v3925
      %v4031 = vpop.f32.mrf.mxu0
      %v4032 = vadd.f32 0.0, %v4031
      %v4033 = vpop.f32.mrf.mxu0
      %v4034 = vpop.f32.mrf.mxu0
      %v4035 = vadd.f32 0.0, %v4034
      %v4036 = vpop.f32.mrf.mxu0
      %4037 = vmatprep.mubr.bf16.mxu0 0
      %4038 = vmatmul.mubr.bf16.gmra.mxu0 %v3928
      %v4039 = vpop.f32.mrf.mxu0
      %v4040 = vadd.f32 0.0, %v4039
      %v4041 = vpop.f32.mrf.mxu0
      %v4042 = vpop.f32.mrf.mxu0
      %v4043 = vadd.f32 0.0, %v4042
      %v4044 = vpop.f32.mrf.mxu0
      %4045 = vmatprep.mubr.bf16.mxu0 0
      %4046 = vmatmul.mubr.bf16.gmra.mxu0 %v3931
      %v4047 = vpop.f32.mrf.mxu0
      %v4048 = vadd.f32 0.0, %v4047
      %v4049 = vpop.f32.mrf.mxu0
      %v4050 = vpop.f32.mrf.mxu0
      %v4051 = vadd.f32 0.0, %v4050
      %v4052 = vpop.f32.mrf.mxu0
      %4053 = vmatprep.mubr.bf16.mxu0 0
      %4054 = vmatmul.mubr.bf16.gmra.mxu0 %v3934
      %v4055 = vpop.f32.mrf.mxu0
      %v4056 = vadd.f32 0.0, %v4055
      %v4057 = vpop.f32.mrf.mxu0
      %v4058 = vpop.f32.mrf.mxu0
      %v4059 = vadd.f32 0.0, %v4058
      %v4060 = vpop.f32.mrf.mxu0
      %4061 = vmatprep.mubr.bf16.mxu0 0
      %4062 = vmatmul.mubr.bf16.gmra.mxu0 %v3937
      %v4063 = vpop.f32.mrf.mxu0
      %v4064 = vadd.f32 0.0, %v4063
      %v4065 = vpop.f32.mrf.mxu0
      %v4066 = vpop.f32.mrf.mxu0
      %v4067 = vadd.f32 0.0, %v4066
      %v4068 = vpop.f32.mrf.mxu0
      %4069 = vmatprep.mubr.bf16.mxu0 0
      %4070 = vmatmul.mubr.bf16.gmra.mxu0 %v3940
      %v4071 = vpop.f32.mrf.mxu0
      %v4072 = vadd.f32 0.0, %v4071
      %v4073 = vpop.f32.mrf.mxu0
      %v4074 = vpop.f32.mrf.mxu0
      %v4075 = vadd.f32 0.0, %v4074
      %v4076 = vpop.f32.mrf.mxu0
      %4077 = vmatprep.mubr.bf16.mxu0 0
      %4078 = vmatmul.mubr.bf16.gmra.mxu0 %v3943
      %v4079 = vpop.f32.mrf.mxu0
      %v4080 = vadd.f32 0.0, %v4079
      %v4081 = vpop.f32.mrf.mxu0
      %v4082 = vpop.f32.mrf.mxu0
      %v4083 = vadd.f32 0.0, %v4082
      %v4084 = vpop.f32.mrf.mxu0
      %4085 = vmatprep.mubr.bf16.mxu0 0
      %4086 = vmatmul.mubr.bf16.gmra.mxu0 %v3946
      %v4087 = vpop.f32.mrf.mxu0
      %v4088 = vadd.f32 0.0, %v4087
      %v4089 = vpop.f32.mrf.mxu0
      %v4090 = vpop.f32.mrf.mxu0
      %v4091 = vadd.f32 0.0, %v4090
      %v4092 = vpop.f32.mrf.mxu0
      %4093 = vmatprep.mubr.bf16.mxu0 0
      %4094 = vmatmul.mubr.bf16.gmra.mxu0 %v3949
      %v4095 = vpop.f32.mrf.mxu0
      %v4096 = vadd.f32 0.0, %v4095
      %v4097 = vpop.f32.mrf.mxu0
      %v4098 = vpop.f32.mrf.mxu0
      %v4099 = vadd.f32 0.0, %v4098
      %v4100 = vpop.f32.mrf.mxu0
      %4101 = vmatprep.mubr.bf16.mxu0 0
      %4102 = vmatmul.mubr.bf16.gmra.mxu0 %v3952
      %v4103 = vpop.f32.mrf.mxu0
      %v4104 = vadd.f32 0.0, %v4103
      %v4105 = vpop.f32.mrf.mxu0
      %v4106 = vpop.f32.mrf.mxu0
      %v4107 = vadd.f32 0.0, %v4106
      %v4108 = vpop.f32.mrf.mxu0
      %4109 = vmatprep.mubr.bf16.mxu0 0
      %4110 = vmatmul.mubr.bf16.gmra.mxu0 %v3955
      %v4111 = vpop.f32.mrf.mxu0
      %v4112 = vadd.f32 0.0, %v4111
      %v4113 = vpop.f32.mrf.mxu0
      %v4114 = vpop.f32.mrf.mxu0
      %v4115 = vadd.f32 0.0, %v4114
      %v4116 = vpop.f32.mrf.mxu0
      %4117 = vdwg.mxu0
      %v4118 = vld [vmem:[#allocation2] sm:$0xff]
      %v4119 = vld [vmem:[#allocation2 + $0x8] sm:$0xff]
      %v4120 = vld [vmem:[#allocation2 + $0x10] sm:$0xff]
      %v4121 = vld [vmem:[#allocation2 + $0x18] sm:$0xff]
      %v4122 = vld [vmem:[#allocation2 + $0x20] sm:$0xff]
      %v4123 = vld [vmem:[#allocation2 + $0x28] sm:$0xff]
      %v4124 = vld [vmem:[#allocation2 + $0x30] sm:$0xff]
      %v4125 = vld [vmem:[#allocation2 + $0x38] sm:$0xff]
      %v4126 = vld [vmem:[#allocation2 + $0x40] sm:$0xff]
      %v4127 = vld [vmem:[#allocation2 + $0x48] sm:$0xff]
      %v4128 = vld [vmem:[#allocation2 + $0x50] sm:$0xff]
      %v4129 = vld [vmem:[#allocation2 + $0x58] sm:$0xff]
      %v4130 = vld [vmem:[#allocation2 + $0x60] sm:$0xff]
      %v4131 = vld [vmem:[#allocation2 + $0x68] sm:$0xff]
      %v4132 = vld [vmem:[#allocation2 + $0x70] sm:$0xff]
      %v4133 = vld [vmem:[#allocation2 + $0x78] sm:$0xff]
      %v4134 = vld [vmem:[#allocation2 + $0x80] sm:$0xff]
      %v4135 = vld [vmem:[#allocation2 + $0x88] sm:$0xff]
      %v4136 = vld [vmem:[#allocation2 + $0x90] sm:$0xff]
      %v4137 = vld [vmem:[#allocation2 + $0x98] sm:$0xff]
      %v4138 = vld [vmem:[#allocation2 + $0xa0] sm:$0xff]
      %v4139 = vld [vmem:[#allocation2 + $0xa8] sm:$0xff]
      %v4140 = vld [vmem:[#allocation2 + $0xb0] sm:$0xff]
      %v4141 = vld [vmem:[#allocation2 + $0xb8] sm:$0xff]
      %v4142 = vld [vmem:[#allocation2 + $0xc0] sm:$0xff]
      %v4143 = vld [vmem:[#allocation2 + $0xc8] sm:$0xff]
      %v4144 = vld [vmem:[#allocation2 + $0xd0] sm:$0xff]
      %v4145 = vld [vmem:[#allocation2 + $0xd8] sm:$0xff]
      %v4146 = vld [vmem:[#allocation2 + $0xe0] sm:$0xff]
      %v4147 = vld [vmem:[#allocation2 + $0xe8] sm:$0xff]
      %v4148 = vld [vmem:[#allocation2 + $0xf0] sm:$0xff]
      %v4149 = vld [vmem:[#allocation2 + $0xf8] sm:$0xff]
      %v4150 = vadd.f32 %v4118, %v3992
      %v4151 = vadd.f32 %v4119, %v3995
      %v4152 = vadd.f32 %v4120, %v4000
      %v4153 = vadd.f32 %v4121, %v4003
      %v4154 = vadd.f32 %v4122, %v4008
      %v4155 = vadd.f32 %v4123, %v4011
      %v4156 = vadd.f32 %v4124, %v4016
      %v4157 = vadd.f32 %v4125, %v4019
      %v4158 = vadd.f32 %v4126, %v4024
      %v4159 = vadd.f32 %v4127, %v4027
      %v4160 = vadd.f32 %v4128, %v4032
      %v4161 = vadd.f32 %v4129, %v4035
      %v4162 = vadd.f32 %v4130, %v4040
      %v4163 = vadd.f32 %v4131, %v4043
      %v4164 = vadd.f32 %v4132, %v4048
      %v4165 = vadd.f32 %v4133, %v4051
      %v4166 = vadd.f32 %v4134, %v4056
      %v4167 = vadd.f32 %v4135, %v4059
      %v4168 = vadd.f32 %v4136, %v4064
      %v4169 = vadd.f32 %v4137, %v4067
      %v4170 = vadd.f32 %v4138, %v4072
      %v4171 = vadd.f32 %v4139, %v4075
      %v4172 = vadd.f32 %v4140, %v4080
      %v4173 = vadd.f32 %v4141, %v4083
      %v4174 = vadd.f32 %v4142, %v4088
      %v4175 = vadd.f32 %v4143, %v4091
      %v4176 = vadd.f32 %v4144, %v4096
      %v4177 = vadd.f32 %v4145, %v4099
      %v4178 = vadd.f32 %v4146, %v4104
      %v4179 = vadd.f32 %v4147, %v4107
      %v4180 = vadd.f32 %v4148, %v4112
      %v4181 = vadd.f32 %v4149, %v4115
      %4182 = vst.msk [vmem:[#allocation2] sm:$0xff] %vm384, %v4150
      %4183 = vst.msk [vmem:[#allocation2 + $0x8] sm:$0xff] %vm384, %v4151
      %4184 = vst.msk [vmem:[#allocation2 + $0x10] sm:$0xff] %vm384, %v4152
      %4185 = vst.msk [vmem:[#allocation2 + $0x18] sm:$0xff] %vm384, %v4153
      %4186 = vst.msk [vmem:[#allocation2 + $0x20] sm:$0xff] %vm384, %v4154
      %4187 = vst.msk [vmem:[#allocation2 + $0x28] sm:$0xff] %vm384, %v4155
      %4188 = vst.msk [vmem:[#allocation2 + $0x30] sm:$0xff] %vm384, %v4156
      %4189 = vst.msk [vmem:[#allocation2 + $0x38] sm:$0xff] %vm384, %v4157
      %4190 = vst.msk [vmem:[#allocation2 + $0x40] sm:$0xff] %vm384, %v4158
      %4191 = vst.msk [vmem:[#allocation2 + $0x48] sm:$0xff] %vm384, %v4159
      %4192 = vst.msk [vmem:[#allocation2 + $0x50] sm:$0xff] %vm384, %v4160
      %4193 = vst.msk [vmem:[#allocation2 + $0x58] sm:$0xff] %vm384, %v4161
      %4194 = vst.msk [vmem:[#allocation2 + $0x60] sm:$0xff] %vm384, %v4162
      %4195 = vst.msk [vmem:[#allocation2 + $0x68] sm:$0xff] %vm384, %v4163
      %4196 = vst.msk [vmem:[#allocation2 + $0x70] sm:$0xff] %vm384, %v4164
      %4197 = vst.msk [vmem:[#allocation2 + $0x78] sm:$0xff] %vm384, %v4165
      %4198 = vst.msk [vmem:[#allocation2 + $0x80] sm:$0xff] %vm384, %v4166
      %4199 = vst.msk [vmem:[#allocation2 + $0x88] sm:$0xff] %vm384, %v4167
      %4200 = vst.msk [vmem:[#allocation2 + $0x90] sm:$0xff] %vm384, %v4168
      %4201 = vst.msk [vmem:[#allocation2 + $0x98] sm:$0xff] %vm384, %v4169
      %4202 = vst.msk [vmem:[#allocation2 + $0xa0] sm:$0xff] %vm384, %v4170
      %4203 = vst.msk [vmem:[#allocation2 + $0xa8] sm:$0xff] %vm384, %v4171
      %4204 = vst.msk [vmem:[#allocation2 + $0xb0] sm:$0xff] %vm384, %v4172
      %4205 = vst.msk [vmem:[#allocation2 + $0xb8] sm:$0xff] %vm384, %v4173
      %4206 = vst.msk [vmem:[#allocation2 + $0xc0] sm:$0xff] %vm384, %v4174
      %4207 = vst.msk [vmem:[#allocation2 + $0xc8] sm:$0xff] %vm384, %v4175
      %4208 = vst.msk [vmem:[#allocation2 + $0xd0] sm:$0xff] %vm384, %v4176
      %4209 = vst.msk [vmem:[#allocation2 + $0xd8] sm:$0xff] %vm384, %v4177
      %4210 = vst.msk [vmem:[#allocation2 + $0xe0] sm:$0xff] %vm384, %v4178
      %4211 = vst.msk [vmem:[#allocation2 + $0xe8] sm:$0xff] %vm384, %v4179
      %4212 = vst.msk [vmem:[#allocation2 + $0xf0] sm:$0xff] %vm384, %v4180
      %4213 = vst.msk [vmem:[#allocation2 + $0xf8] sm:$0xff] %vm384, %v4181
      %v4214 = vld [vmem:[%s3787] sm:$0xf]
      %v4215 = vld [vmem:[%s3787 + $0x4] sm:$0xf]
      %v4216 = vld [vmem:[%s3787 + $0x8] sm:$0x1]
      %v4217 = vld [vmem:[%s3787 + $0xc] sm:$0xf]
      %v4218 = vld [vmem:[%s3787 + $0x10] sm:$0xf]
      %v4219 = vld [vmem:[%s3787 + $0x14] sm:$0x1]
      %v4220 = vld [vmem:[%s3787 + $0x18] sm:$0xf]
      %v4221 = vld [vmem:[%s3787 + $0x1c] sm:$0xf]
      %v4222 = vld [vmem:[%s3787 + $0x20] sm:$0x1]
      %v4223 = vld [vmem:[%s3787 + $0x24] sm:$0xf]
      %v4224 = vld [vmem:[%s3787 + $0x28] sm:$0xf]
      %v4225 = vld [vmem:[%s3787 + $0x2c] sm:$0x1]
      %v4226 = vld [vmem:[%s3787 + $0x30] sm:$0xf]
      %v4227 = vld [vmem:[%s3787 + $0x34] sm:$0xf]
      %v4228 = vld [vmem:[%s3787 + $0x38] sm:$0x1]
      %v4229 = vld [vmem:[%s3787 + $0x3c] sm:$0xf]
      %v4230 = vld [vmem:[%s3787 + $0x40] sm:$0xf]
      %v4231 = vld [vmem:[%s3787 + $0x44] sm:$0x1]
      %v4232 = vld [vmem:[%s3787 + $0x48] sm:$0xf]
      %v4233 = vld [vmem:[%s3787 + $0x4c] sm:$0xf]
      %v4234 = vld [vmem:[%s3787 + $0x50] sm:$0x1]
      %v4235 = vld [vmem:[%s3787 + $0x54] sm:$0xf]
      %v4236 = vld [vmem:[%s3787 + $0x58] sm:$0xf]
      %v4237 = vld [vmem:[%s3787 + $0x5c] sm:$0x1]
      %v4238 = vld [vmem:[%s3787 + $0x60] sm:$0xf]
      %v4239 = vld [vmem:[%s3787 + $0x64] sm:$0xf]
      %v4240 = vld [vmem:[%s3787 + $0x68] sm:$0x1]
      %v4241 = vld [vmem:[%s3787 + $0x6c] sm:$0xf]
      %v4242 = vld [vmem:[%s3787 + $0x70] sm:$0xf]
      %v4243 = vld [vmem:[%s3787 + $0x74] sm:$0x1]
      %v4244 = vld [vmem:[%s3787 + $0x78] sm:$0xf]
      %v4245 = vld [vmem:[%s3787 + $0x7c] sm:$0xf]
      %v4246 = vld [vmem:[%s3787 + $0x80] sm:$0x1]
      %v4247 = vld [vmem:[%s3787 + $0x84] sm:$0xf]
      %v4248 = vld [vmem:[%s3787 + $0x88] sm:$0xf]
      %v4249 = vld [vmem:[%s3787 + $0x8c] sm:$0x1]
      %v4250 = vld [vmem:[%s3787 + $0x90] sm:$0xf]
      %v4251 = vld [vmem:[%s3787 + $0x94] sm:$0xf]
      %v4252 = vld [vmem:[%s3787 + $0x98] sm:$0x1]
      %v4253 = vld [vmem:[%s3787 + $0x9c] sm:$0xf]
      %v4254 = vld [vmem:[%s3787 + $0xa0] sm:$0xf]
      %v4255 = vld [vmem:[%s3787 + $0xa4] sm:$0x1]
      %v4256 = vld [vmem:[%s3787 + $0xa8] sm:$0xf]
      %v4257 = vld [vmem:[%s3787 + $0xac] sm:$0xf]
      %v4258 = vld [vmem:[%s3787 + $0xb0] sm:$0x1]
      %v4259 = vld [vmem:[%s3787 + $0xb4] sm:$0xf]
      %v4260 = vld [vmem:[%s3787 + $0xb8] sm:$0xf]
      %v4261 = vld [vmem:[%s3787 + $0xbc] sm:$0x1]
      %v4263 = vshrl.u32 %v4214, 16
      %v4265 = vrot.slane %v4263, 4
      %v4266 = vshll.u32 %v4214, 16
      %v4268 = vrot.slane %v4266, 5
      %v4269 = vor.u32 %v4265, %v4268
      %v4270 = vrot.slane %v4269, 4
      %v4272 = vshll.u32 %v4215, 16
      %v4274 = vrot.slane %v4272, 5
      %v4275 = vsel %vm676, %v4270, %v4274
      %v4276 = vshrl.u32 %v4215, 16
      %v4278 = vrot.slane %v4276, 4
      %v4279 = vor.u32 %v4278, %v4274
      %v4280 = vrot.slane %v4279, 4
      %v4282 = vshll.u32 %v4216, 16
      %v4284 = vrot.slane %v4282, 5
      %v4285 = vsel %vm676, %v4280, %v4284
      %v4287 = vshrl.u32 %v4217, 16
      %v4289 = vrot.slane %v4287, 4
      %v4290 = vshll.u32 %v4217, 16
      %v4292 = vrot.slane %v4290, 5
      %v4293 = vor.u32 %v4289, %v4292
      %v4294 = vrot.slane %v4293, 4
      %v4296 = vshll.u32 %v4218, 16
      %v4298 = vrot.slane %v4296, 5
      %v4299 = vsel %vm676, %v4294, %v4298
      %v4300 = vshrl.u32 %v4218, 16
      %v4302 = vrot.slane %v4300, 4
      %v4303 = vor.u32 %v4302, %v4298
      %v4304 = vrot.slane %v4303, 4
      %v4306 = vshll.u32 %v4219, 16
      %v4308 = vrot.slane %v4306, 5
      %v4309 = vsel %vm676, %v4304, %v4308
      %v4311 = vshrl.u32 %v4220, 16
      %v4313 = vrot.slane %v4311, 4
      %v4314 = vshll.u32 %v4220, 16
      %v4316 = vrot.slane %v4314, 5
      %v4317 = vor.u32 %v4313, %v4316
      %v4318 = vrot.slane %v4317, 4
      %v4320 = vshll.u32 %v4221, 16
      %v4322 = vrot.slane %v4320, 5
      %v4323 = vsel %vm676, %v4318, %v4322
      %v4324 = vshrl.u32 %v4221, 16
      %v4326 = vrot.slane %v4324, 4
      %v4327 = vor.u32 %v4326, %v4322
      %v4328 = vrot.slane %v4327, 4
      %v4330 = vshll.u32 %v4222, 16
      %v4332 = vrot.slane %v4330, 5
      %v4333 = vsel %vm676, %v4328, %v4332
      %v4335 = vshrl.u32 %v4223, 16
      %v4337 = vrot.slane %v4335, 4
      %v4338 = vshll.u32 %v4223, 16
      %v4340 = vrot.slane %v4338, 5
      %v4341 = vor.u32 %v4337, %v4340
      %v4342 = vrot.slane %v4341, 4
      %v4344 = vshll.u32 %v4224, 16
      %v4346 = vrot.slane %v4344, 5
      %v4347 = vsel %vm676, %v4342, %v4346
      %v4348 = vshrl.u32 %v4224, 16
      %v4350 = vrot.slane %v4348, 4
      %v4351 = vor.u32 %v4350, %v4346
      %v4352 = vrot.slane %v4351, 4
      %v4354 = vshll.u32 %v4225, 16
      %v4356 = vrot.slane %v4354, 5
      %v4357 = vsel %vm676, %v4352, %v4356
      %v4359 = vshrl.u32 %v4226, 16
      %v4361 = vrot.slane %v4359, 4
      %v4362 = vshll.u32 %v4226, 16
      %v4364 = vrot.slane %v4362, 5
      %v4365 = vor.u32 %v4361, %v4364
      %v4366 = vrot.slane %v4365, 4
      %v4368 = vshll.u32 %v4227, 16
      %v4370 = vrot.slane %v4368, 5
      %v4371 = vsel %vm676, %v4366, %v4370
      %v4372 = vshrl.u32 %v4227, 16
      %v4374 = vrot.slane %v4372, 4
      %v4375 = vor.u32 %v4374, %v4370
      %v4376 = vrot.slane %v4375, 4
      %v4378 = vshll.u32 %v4228, 16
      %v4380 = vrot.slane %v4378, 5
      %v4381 = vsel %vm676, %v4376, %v4380
      %v4383 = vshrl.u32 %v4229, 16
      %v4385 = vrot.slane %v4383, 4
      %v4386 = vshll.u32 %v4229, 16
      %v4388 = vrot.slane %v4386, 5
      %v4389 = vor.u32 %v4385, %v4388
      %v4390 = vrot.slane %v4389, 4
      %v4392 = vshll.u32 %v4230, 16
      %v4394 = vrot.slane %v4392, 5
      %v4395 = vsel %vm676, %v4390, %v4394
      %v4396 = vshrl.u32 %v4230, 16
      %v4398 = vrot.slane %v4396, 4
      %v4399 = vor.u32 %v4398, %v4394
      %v4400 = vrot.slane %v4399, 4
      %v4402 = vshll.u32 %v4231, 16
      %v4404 = vrot.slane %v4402, 5
      %v4405 = vsel %vm676, %v4400, %v4404
      %v4407 = vshrl.u32 %v4232, 16
      %v4409 = vrot.slane %v4407, 4
      %v4410 = vshll.u32 %v4232, 16
      %v4412 = vrot.slane %v4410, 5
      %v4413 = vor.u32 %v4409, %v4412
      %v4414 = vrot.slane %v4413, 4
      %v4416 = vshll.u32 %v4233, 16
      %v4418 = vrot.slane %v4416, 5
      %v4419 = vsel %vm676, %v4414, %v4418
      %v4420 = vshrl.u32 %v4233, 16
      %v4422 = vrot.slane %v4420, 4
      %v4423 = vor.u32 %v4422, %v4418
      %v4424 = vrot.slane %v4423, 4
      %v4426 = vshll.u32 %v4234, 16
      %v4428 = vrot.slane %v4426, 5
      %v4429 = vsel %vm676, %v4424, %v4428
      %v4431 = vshrl.u32 %v4235, 16
      %v4433 = vrot.slane %v4431, 4
      %v4434 = vshll.u32 %v4235, 16
      %v4436 = vrot.slane %v4434, 5
      %v4437 = vor.u32 %v4433, %v4436
      %v4438 = vrot.slane %v4437, 4
      %v4440 = vshll.u32 %v4236, 16
      %v4442 = vrot.slane %v4440, 5
      %v4443 = vsel %vm676, %v4438, %v4442
      %v4444 = vshrl.u32 %v4236, 16
      %v4446 = vrot.slane %v4444, 4
      %v4447 = vor.u32 %v4446, %v4442
      %v4448 = vrot.slane %v4447, 4
      %v4450 = vshll.u32 %v4237, 16
      %v4452 = vrot.slane %v4450, 5
      %v4453 = vsel %vm676, %v4448, %v4452
      %v4455 = vshrl.u32 %v4238, 16
      %v4457 = vrot.slane %v4455, 4
      %v4458 = vshll.u32 %v4238, 16
      %v4460 = vrot.slane %v4458, 5
      %v4461 = vor.u32 %v4457, %v4460
      %v4462 = vrot.slane %v4461, 4
      %v4464 = vshll.u32 %v4239, 16
      %v4466 = vrot.slane %v4464, 5
      %v4467 = vsel %vm676, %v4462, %v4466
      %v4468 = vshrl.u32 %v4239, 16
      %v4470 = vrot.slane %v4468, 4
      %v4471 = vor.u32 %v4470, %v4466
      %v4472 = vrot.slane %v4471, 4
      %v4474 = vshll.u32 %v4240, 16
      %v4476 = vrot.slane %v4474, 5
      %v4477 = vsel %vm676, %v4472, %v4476
      %v4479 = vshrl.u32 %v4241, 16
      %v4481 = vrot.slane %v4479, 4
      %v4482 = vshll.u32 %v4241, 16
      %v4484 = vrot.slane %v4482, 5
      %v4485 = vor.u32 %v4481, %v4484
      %v4486 = vrot.slane %v4485, 4
      %v4488 = vshll.u32 %v4242, 16
      %v4490 = vrot.slane %v4488, 5
      %v4491 = vsel %vm676, %v4486, %v4490
      %v4492 = vshrl.u32 %v4242, 16
      %v4494 = vrot.slane %v4492, 4
      %v4495 = vor.u32 %v4494, %v4490
      %v4496 = vrot.slane %v4495, 4
      %v4498 = vshll.u32 %v4243, 16
      %v4500 = vrot.slane %v4498, 5
      %v4501 = vsel %vm676, %v4496, %v4500
      %v4503 = vshrl.u32 %v4244, 16
      %v4505 = vrot.slane %v4503, 4
      %v4506 = vshll.u32 %v4244, 16
      %v4508 = vrot.slane %v4506, 5
      %v4509 = vor.u32 %v4505, %v4508
      %v4510 = vrot.slane %v4509, 4
      %v4512 = vshll.u32 %v4245, 16
      %v4514 = vrot.slane %v4512, 5
      %v4515 = vsel %vm676, %v4510, %v4514
      %v4516 = vshrl.u32 %v4245, 16
      %v4518 = vrot.slane %v4516, 4
      %v4519 = vor.u32 %v4518, %v4514
      %v4520 = vrot.slane %v4519, 4
      %v4522 = vshll.u32 %v4246, 16
      %v4524 = vrot.slane %v4522, 5
      %v4525 = vsel %vm676, %v4520, %v4524
      %v4527 = vshrl.u32 %v4247, 16
      %v4529 = vrot.slane %v4527, 4
      %v4530 = vshll.u32 %v4247, 16
      %v4532 = vrot.slane %v4530, 5
      %v4533 = vor.u32 %v4529, %v4532
      %v4534 = vrot.slane %v4533, 4
      %v4536 = vshll.u32 %v4248, 16
      %v4538 = vrot.slane %v4536, 5
      %v4539 = vsel %vm676, %v4534, %v4538
      %v4540 = vshrl.u32 %v4248, 16
      %v4542 = vrot.slane %v4540, 4
      %v4543 = vor.u32 %v4542, %v4538
      %v4544 = vrot.slane %v4543, 4
      %v4546 = vshll.u32 %v4249, 16
      %v4548 = vrot.slane %v4546, 5
      %v4549 = vsel %vm676, %v4544, %v4548
      %v4551 = vshrl.u32 %v4250, 16
      %v4553 = vrot.slane %v4551, 4
      %v4554 = vshll.u32 %v4250, 16
      %v4556 = vrot.slane %v4554, 5
      %v4557 = vor.u32 %v4553, %v4556
      %v4558 = vrot.slane %v4557, 4
      %v4560 = vshll.u32 %v4251, 16
      %v4562 = vrot.slane %v4560, 5
      %v4563 = vsel %vm676, %v4558, %v4562
      %v4564 = vshrl.u32 %v4251, 16
      %v4566 = vrot.slane %v4564, 4
      %v4567 = vor.u32 %v4566, %v4562
      %v4568 = vrot.slane %v4567, 4
      %v4570 = vshll.u32 %v4252, 16
      %v4572 = vrot.slane %v4570, 5
      %v4573 = vsel %vm676, %v4568, %v4572
      %v4575 = vshrl.u32 %v4253, 16
      %v4577 = vrot.slane %v4575, 4
      %v4578 = vshll.u32 %v4253, 16
      %v4580 = vrot.slane %v4578, 5
      %v4581 = vor.u32 %v4577, %v4580
      %v4582 = vrot.slane %v4581, 4
      %v4584 = vshll.u32 %v4254, 16
      %v4586 = vrot.slane %v4584, 5
      %v4587 = vsel %vm676, %v4582, %v4586
      %v4588 = vshrl.u32 %v4254, 16
      %v4590 = vrot.slane %v4588, 4
      %v4591 = vor.u32 %v4590, %v4586
      %v4592 = vrot.slane %v4591, 4
      %v4594 = vshll.u32 %v4255, 16
      %v4596 = vrot.slane %v4594, 5
      %v4597 = vsel %vm676, %v4592, %v4596
      %v4599 = vshrl.u32 %v4256, 16
      %v4601 = vrot.slane %v4599, 4
      %v4602 = vshll.u32 %v4256, 16
      %v4604 = vrot.slane %v4602, 5
      %v4605 = vor.u32 %v4601, %v4604
      %v4606 = vrot.slane %v4605, 4
      %v4608 = vshll.u32 %v4257, 16
      %v4610 = vrot.slane %v4608, 5
      %v4611 = vsel %vm676, %v4606, %v4610
      %v4612 = vshrl.u32 %v4257, 16
      %v4614 = vrot.slane %v4612, 4
      %v4615 = vor.u32 %v4614, %v4610
      %v4616 = vrot.slane %v4615, 4
      %v4618 = vshll.u32 %v4258, 16
      %v4620 = vrot.slane %v4618, 5
      %v4621 = vsel %vm676, %v4616, %v4620
      %v4623 = vshrl.u32 %v4259, 16
      %v4625 = vrot.slane %v4623, 4
      %v4626 = vshll.u32 %v4259, 16
      %v4628 = vrot.slane %v4626, 5
      %v4629 = vor.u32 %v4625, %v4628
      %v4630 = vrot.slane %v4629, 4
      %v4632 = vshll.u32 %v4260, 16
      %v4634 = vrot.slane %v4632, 5
      %v4635 = vsel %vm676, %v4630, %v4634
      %v4636 = vshrl.u32 %v4260, 16
      %v4638 = vrot.slane %v4636, 4
      %v4639 = vor.u32 %v4638, %v4634
      %v4640 = vrot.slane %v4639, 4
      %v4642 = vshll.u32 %v4261, 16
      %v4644 = vrot.slane %v4642, 5
      %v4645 = vsel %vm676, %v4640, %v4644
      %s4646 = scalar_lea.vmem %s248, 56
      %v4647 = vld [vmem:[%s4646] sm:$0xf]
      %v4648 = vld [vmem:[%s4646 + $0x4] sm:$0xf]
      %v4649 = vunpack.c.l.b16 %v4275
      %v4650 = vunpack.c.l.b16 %v4285
      %v4651 = vunpack.c.l.b16 %v4299
      %v4652 = vunpack.c.l.b16 %v4309
      %v4653 = vunpack.c.l.b16 %v4323
      %v4654 = vunpack.c.l.b16 %v4333
      %v4655 = vunpack.c.l.b16 %v4347
      %v4656 = vunpack.c.l.b16 %v4357
      %v4657 = vunpack.c.l.b16 %v4371
      %v4658 = vunpack.c.l.b16 %v4381
      %v4659 = vunpack.c.l.b16 %v4395
      %v4660 = vunpack.c.l.b16 %v4405
      %v4661 = vunpack.c.l.b16 %v4419
      %v4662 = vunpack.c.l.b16 %v4429
      %v4663 = vunpack.c.l.b16 %v4443
      %v4664 = vunpack.c.l.b16 %v4453
      %v4665 = vunpack.c.l.b16 %v4467
      %v4666 = vunpack.c.l.b16 %v4477
      %v4667 = vunpack.c.l.b16 %v4491
      %v4668 = vunpack.c.l.b16 %v4501
      %v4669 = vunpack.c.l.b16 %v4515
      %v4670 = vunpack.c.l.b16 %v4525
      %v4671 = vunpack.c.l.b16 %v4539
      %v4672 = vunpack.c.l.b16 %v4549
      %v4673 = vunpack.c.l.b16 %v4563
      %v4674 = vunpack.c.l.b16 %v4573
      %v4675 = vunpack.c.l.b16 %v4587
      %v4676 = vunpack.c.l.b16 %v4597
      %v4677 = vunpack.c.l.b16 %v4611
      %v4678 = vunpack.c.l.b16 %v4621
      %v4679 = vunpack.c.l.b16 %v4635
      %v4680 = vunpack.c.l.b16 %v4645
      %v4681 = vpack.c.b16 %v4650, %v4649
      %v4682 = vpack.c.b16 %v4652, %v4651
      %v4683 = vpack.c.b16 %v4654, %v4653
      %v4684 = vpack.c.b16 %v4656, %v4655
      %v4685 = vpack.c.b16 %v4658, %v4657
      %v4686 = vpack.c.b16 %v4660, %v4659
      %v4687 = vpack.c.b16 %v4662, %v4661
      %v4688 = vpack.c.b16 %v4664, %v4663
      %v4689 = vpack.c.b16 %v4666, %v4665
      %v4690 = vpack.c.b16 %v4668, %v4667
      %v4691 = vpack.c.b16 %v4670, %v4669
      %v4692 = vpack.c.b16 %v4672, %v4671
      %v4693 = vpack.c.b16 %v4674, %v4673
      %v4694 = vpack.c.b16 %v4676, %v4675
      %v4695 = vpack.c.b16 %v4678, %v4677
      %v4696 = vpack.c.b16 %v4680, %v4679
      %v4699 = vunpack.c.l.b16 %v4647
      %v4700 = vunpack.c.l.b16 %v4648
      %v4701 = vpack.c.b16 %v4700, %v4699
      %v4704 = vsel %vm384, %v4681, 0
      %v4707 = vsel %vm384, %v4682, 0
      %v4710 = vsel %vm384, %v4683, 0
      %v4713 = vsel %vm384, %v4684, 0
      %v4716 = vsel %vm384, %v4685, 0
      %v4719 = vsel %vm384, %v4686, 0
      %v4722 = vsel %vm384, %v4687, 0
      %v4725 = vsel %vm384, %v4688, 0
      %v4728 = vsel %vm384, %v4689, 0
      %v4731 = vsel %vm384, %v4690, 0
      %v4734 = vsel %vm384, %v4691, 0
      %v4737 = vsel %vm384, %v4692, 0
      %v4740 = vsel %vm384, %v4693, 0
      %v4743 = vsel %vm384, %v4694, 0
      %v4746 = vsel %vm384, %v4695, 0
      %v4749 = vsel %vm384, %v4696, 0
      %4751 = vmatprep.subr.bf16.mxu0 0
      %4752 = vmatpush1.bf16.msra.mxu0 0
      %4753 = vmatprep.subr.bf16.mxu0 0
      %4754 = vmatpush1.bf16.msra.mxu0 0
      %4755 = vmatprep.subr.bf16.mxu0 0
      %4756 = vmatpush1.bf16.msra.mxu0 0
      %4757 = vmatprep.subr.bf16.mxu0 0
      %4758 = vmatpush1.bf16.msra.mxu0 0
      %4759 = vmatprep.subr.bf16.mxu0 0
      %4760 = vmatpush1.bf16.msra.mxu0 0
      %4761 = vmatprep.subr.bf16.mxu0 0
      %4762 = vmatpush1.bf16.msra.mxu0 0
      %4763 = vmatprep.subr.bf16.mxu0 0
      %4764 = vmatpush1.bf16.msra.mxu0 0
      %4765 = vmatprep.subr.bf16.mxu0 0
      %4766 = vmatpush1.bf16.msra.mxu0 %v4701
      %4767 = vmatprep.subr.bf16.mxu0 0
      %4768 = vmatpush2.bf16.msra.mxu0 0
      %4769 = vmatprep.subr.bf16.mxu0 0
      %4770 = vmatpush2.bf16.msra.mxu0 0
      %4771 = vmatprep.subr.bf16.mxu0 0
      %4772 = vmatpush2.bf16.msra.mxu0 0
      %4773 = vmatprep.subr.bf16.mxu0 0
      %4774 = vmatpush2.bf16.msra.mxu0 0
      %4775 = vmatprep.subr.bf16.mxu0 0
      %4776 = vmatpush2.bf16.msra.mxu0 0
      %4777 = vmatprep.subr.bf16.mxu0 0
      %4778 = vmatpush2.bf16.msra.mxu0 0
      %4779 = vmatprep.subr.bf16.mxu0 0
      %4780 = vmatpush2.bf16.msra.mxu0 0
      %4781 = vmatprep.subr.bf16.mxu0 0
      %4782 = vmatpush2.bf16.msra.mxu0 0
      %4783 = vmatprep.mubr.bf16.mxu0 0
      %4784 = vmatmul.mubr.bf16.gmra.mxu0 %v4704
      %v4785 = vpop.f32.mrf.mxu0
      %v4786 = vadd.f32 0.0, %v4785
      %v4787 = vpop.f32.mrf.mxu0
      %v4788 = vpop.f32.mrf.mxu0
      %v4789 = vadd.f32 0.0, %v4788
      %v4790 = vpop.f32.mrf.mxu0
      %4791 = vmatprep.mubr.bf16.mxu0 0
      %4792 = vmatmul.mubr.bf16.gmra.mxu0 %v4707
      %v4793 = vpop.f32.mrf.mxu0
      %v4794 = vadd.f32 0.0, %v4793
      %v4795 = vpop.f32.mrf.mxu0
      %v4796 = vpop.f32.mrf.mxu0
      %v4797 = vadd.f32 0.0, %v4796
      %v4798 = vpop.f32.mrf.mxu0
      %4799 = vmatprep.mubr.bf16.mxu0 0
      %4800 = vmatmul.mubr.bf16.gmra.mxu0 %v4710
      %v4801 = vpop.f32.mrf.mxu0
      %v4802 = vadd.f32 0.0, %v4801
      %v4803 = vpop.f32.mrf.mxu0
      %v4804 = vpop.f32.mrf.mxu0
      %v4805 = vadd.f32 0.0, %v4804
      %v4806 = vpop.f32.mrf.mxu0
      %4807 = vmatprep.mubr.bf16.mxu0 0
      %4808 = vmatmul.mubr.bf16.gmra.mxu0 %v4713
      %v4809 = vpop.f32.mrf.mxu0
      %v4810 = vadd.f32 0.0, %v4809
      %v4811 = vpop.f32.mrf.mxu0
      %v4812 = vpop.f32.mrf.mxu0
      %v4813 = vadd.f32 0.0, %v4812
      %v4814 = vpop.f32.mrf.mxu0
      %4815 = vmatprep.mubr.bf16.mxu0 0
      %4816 = vmatmul.mubr.bf16.gmra.mxu0 %v4716
      %v4817 = vpop.f32.mrf.mxu0
      %v4818 = vadd.f32 0.0, %v4817
      %v4819 = vpop.f32.mrf.mxu0
      %v4820 = vpop.f32.mrf.mxu0
      %v4821 = vadd.f32 0.0, %v4820
      %v4822 = vpop.f32.mrf.mxu0
      %4823 = vmatprep.mubr.bf16.mxu0 0
      %4824 = vmatmul.mubr.bf16.gmra.mxu0 %v4719
      %v4825 = vpop.f32.mrf.mxu0
      %v4826 = vadd.f32 0.0, %v4825
      %v4827 = vpop.f32.mrf.mxu0
      %v4828 = vpop.f32.mrf.mxu0
      %v4829 = vadd.f32 0.0, %v4828
      %v4830 = vpop.f32.mrf.mxu0
      %4831 = vmatprep.mubr.bf16.mxu0 0
      %4832 = vmatmul.mubr.bf16.gmra.mxu0 %v4722
      %v4833 = vpop.f32.mrf.mxu0
      %v4834 = vadd.f32 0.0, %v4833
      %v4835 = vpop.f32.mrf.mxu0
      %v4836 = vpop.f32.mrf.mxu0
      %v4837 = vadd.f32 0.0, %v4836
      %v4838 = vpop.f32.mrf.mxu0
      %4839 = vmatprep.mubr.bf16.mxu0 0
      %4840 = vmatmul.mubr.bf16.gmra.mxu0 %v4725
      %v4841 = vpop.f32.mrf.mxu0
      %v4842 = vadd.f32 0.0, %v4841
      %v4843 = vpop.f32.mrf.mxu0
      %v4844 = vpop.f32.mrf.mxu0
      %v4845 = vadd.f32 0.0, %v4844
      %v4846 = vpop.f32.mrf.mxu0
      %4847 = vmatprep.mubr.bf16.mxu0 0
      %4848 = vmatmul.mubr.bf16.gmra.mxu0 %v4728
      %v4849 = vpop.f32.mrf.mxu0
      %v4850 = vadd.f32 0.0, %v4849
      %v4851 = vpop.f32.mrf.mxu0
      %v4852 = vpop.f32.mrf.mxu0
      %v4853 = vadd.f32 0.0, %v4852
      %v4854 = vpop.f32.mrf.mxu0
      %4855 = vmatprep.mubr.bf16.mxu0 0
      %4856 = vmatmul.mubr.bf16.gmra.mxu0 %v4731
      %v4857 = vpop.f32.mrf.mxu0
      %v4858 = vadd.f32 0.0, %v4857
      %v4859 = vpop.f32.mrf.mxu0
      %v4860 = vpop.f32.mrf.mxu0
      %v4861 = vadd.f32 0.0, %v4860
      %v4862 = vpop.f32.mrf.mxu0
      %4863 = vmatprep.mubr.bf16.mxu0 0
      %4864 = vmatmul.mubr.bf16.gmra.mxu0 %v4734
      %v4865 = vpop.f32.mrf.mxu0
      %v4866 = vadd.f32 0.0, %v4865
      %v4867 = vpop.f32.mrf.mxu0
      %v4868 = vpop.f32.mrf.mxu0
      %v4869 = vadd.f32 0.0, %v4868
      %v4870 = vpop.f32.mrf.mxu0
      %4871 = vmatprep.mubr.bf16.mxu0 0
      %4872 = vmatmul.mubr.bf16.gmra.mxu0 %v4737
      %v4873 = vpop.f32.mrf.mxu0
      %v4874 = vadd.f32 0.0, %v4873
      %v4875 = vpop.f32.mrf.mxu0
      %v4876 = vpop.f32.mrf.mxu0
      %v4877 = vadd.f32 0.0, %v4876
      %v4878 = vpop.f32.mrf.mxu0
      %4879 = vmatprep.mubr.bf16.mxu0 0
      %4880 = vmatmul.mubr.bf16.gmra.mxu0 %v4740
      %v4881 = vpop.f32.mrf.mxu0
      %v4882 = vadd.f32 0.0, %v4881
      %v4883 = vpop.f32.mrf.mxu0
      %v4884 = vpop.f32.mrf.mxu0
      %v4885 = vadd.f32 0.0, %v4884
      %v4886 = vpop.f32.mrf.mxu0
      %4887 = vmatprep.mubr.bf16.mxu0 0
      %4888 = vmatmul.mubr.bf16.gmra.mxu0 %v4743
      %v4889 = vpop.f32.mrf.mxu0
      %v4890 = vadd.f32 0.0, %v4889
      %v4891 = vpop.f32.mrf.mxu0
      %v4892 = vpop.f32.mrf.mxu0
      %v4893 = vadd.f32 0.0, %v4892
      %v4894 = vpop.f32.mrf.mxu0
      %4895 = vmatprep.mubr.bf16.mxu0 0
      %4896 = vmatmul.mubr.bf16.gmra.mxu0 %v4746
      %v4897 = vpop.f32.mrf.mxu0
      %v4898 = vadd.f32 0.0, %v4897
      %v4899 = vpop.f32.mrf.mxu0
      %v4900 = vpop.f32.mrf.mxu0
      %v4901 = vadd.f32 0.0, %v4900
      %v4902 = vpop.f32.mrf.mxu0
      %4903 = vmatprep.mubr.bf16.mxu0 0
      %4904 = vmatmul.mubr.bf16.gmra.mxu0 %v4749
      %v4905 = vpop.f32.mrf.mxu0
      %v4906 = vadd.f32 0.0, %v4905
      %v4907 = vpop.f32.mrf.mxu0
      %v4908 = vpop.f32.mrf.mxu0
      %v4909 = vadd.f32 0.0, %v4908
      %v4910 = vpop.f32.mrf.mxu0
      %4911 = vdwg.mxu0
      %v4912 = vld [vmem:[#allocation2] sm:$0xff]
      %v4913 = vld [vmem:[#allocation2 + $0x8] sm:$0xff]
      %v4914 = vld [vmem:[#allocation2 + $0x10] sm:$0xff]
      %v4915 = vld [vmem:[#allocation2 + $0x18] sm:$0xff]
      %v4916 = vld [vmem:[#allocation2 + $0x20] sm:$0xff]
      %v4917 = vld [vmem:[#allocation2 + $0x28] sm:$0xff]
      %v4918 = vld [vmem:[#allocation2 + $0x30] sm:$0xff]
      %v4919 = vld [vmem:[#allocation2 + $0x38] sm:$0xff]
      %v4920 = vld [vmem:[#allocation2 + $0x40] sm:$0xff]
      %v4921 = vld [vmem:[#allocation2 + $0x48] sm:$0xff]
      %v4922 = vld [vmem:[#allocation2 + $0x50] sm:$0xff]
      %v4923 = vld [vmem:[#allocation2 + $0x58] sm:$0xff]
      %v4924 = vld [vmem:[#allocation2 + $0x60] sm:$0xff]
      %v4925 = vld [vmem:[#allocation2 + $0x68] sm:$0xff]
      %v4926 = vld [vmem:[#allocation2 + $0x70] sm:$0xff]
      %v4927 = vld [vmem:[#allocation2 + $0x78] sm:$0xff]
      %v4928 = vld [vmem:[#allocation2 + $0x80] sm:$0xff]
      %v4929 = vld [vmem:[#allocation2 + $0x88] sm:$0xff]
      %v4930 = vld [vmem:[#allocation2 + $0x90] sm:$0xff]
      %v4931 = vld [vmem:[#allocation2 + $0x98] sm:$0xff]
      %v4932 = vld [vmem:[#allocation2 + $0xa0] sm:$0xff]
      %v4933 = vld [vmem:[#allocation2 + $0xa8] sm:$0xff]
      %v4934 = vld [vmem:[#allocation2 + $0xb0] sm:$0xff]
      %v4935 = vld [vmem:[#allocation2 + $0xb8] sm:$0xff]
      %v4936 = vld [vmem:[#allocation2 + $0xc0] sm:$0xff]
      %v4937 = vld [vmem:[#allocation2 + $0xc8] sm:$0xff]
      %v4938 = vld [vmem:[#allocation2 + $0xd0] sm:$0xff]
      %v4939 = vld [vmem:[#allocation2 + $0xd8] sm:$0xff]
      %v4940 = vld [vmem:[#allocation2 + $0xe0] sm:$0xff]
      %v4941 = vld [vmem:[#allocation2 + $0xe8] sm:$0xff]
      %v4942 = vld [vmem:[#allocation2 + $0xf0] sm:$0xff]
      %v4943 = vld [vmem:[#allocation2 + $0xf8] sm:$0xff]
      %v4944 = vadd.f32 %v4912, %v4786
      %v4945 = vadd.f32 %v4913, %v4789
      %v4946 = vadd.f32 %v4914, %v4794
      %v4947 = vadd.f32 %v4915, %v4797
      %v4948 = vadd.f32 %v4916, %v4802
      %v4949 = vadd.f32 %v4917, %v4805
      %v4950 = vadd.f32 %v4918, %v4810
      %v4951 = vadd.f32 %v4919, %v4813
      %v4952 = vadd.f32 %v4920, %v4818
      %v4953 = vadd.f32 %v4921, %v4821
      %v4954 = vadd.f32 %v4922, %v4826
      %v4955 = vadd.f32 %v4923, %v4829
      %v4956 = vadd.f32 %v4924, %v4834
      %v4957 = vadd.f32 %v4925, %v4837
      %v4958 = vadd.f32 %v4926, %v4842
      %v4959 = vadd.f32 %v4927, %v4845
      %v4960 = vadd.f32 %v4928, %v4850
      %v4961 = vadd.f32 %v4929, %v4853
      %v4962 = vadd.f32 %v4930, %v4858
      %v4963 = vadd.f32 %v4931, %v4861
      %v4964 = vadd.f32 %v4932, %v4866
      %v4965 = vadd.f32 %v4933, %v4869
      %v4966 = vadd.f32 %v4934, %v4874
      %v4967 = vadd.f32 %v4935, %v4877
      %v4968 = vadd.f32 %v4936, %v4882
      %v4969 = vadd.f32 %v4937, %v4885
      %v4970 = vadd.f32 %v4938, %v4890
      %v4971 = vadd.f32 %v4939, %v4893
      %v4972 = vadd.f32 %v4940, %v4898
      %v4973 = vadd.f32 %v4941, %v4901
      %v4974 = vadd.f32 %v4942, %v4906
      %v4975 = vadd.f32 %v4943, %v4909
      %4976 = vst.msk [vmem:[#allocation2] sm:$0xff] %vm384, %v4944
      %4977 = vst.msk [vmem:[#allocation2 + $0x8] sm:$0xff] %vm384, %v4945
      %4978 = vst.msk [vmem:[#allocation2 + $0x10] sm:$0xff] %vm384, %v4946
      %4979 = vst.msk [vmem:[#allocation2 + $0x18] sm:$0xff] %vm384, %v4947
      %4980 = vst.msk [vmem:[#allocation2 + $0x20] sm:$0xff] %vm384, %v4948
      %4981 = vst.msk [vmem:[#allocation2 + $0x28] sm:$0xff] %vm384, %v4949
      %4982 = vst.msk [vmem:[#allocation2 + $0x30] sm:$0xff] %vm384, %v4950
      %4983 = vst.msk [vmem:[#allocation2 + $0x38] sm:$0xff] %vm384, %v4951
      %4984 = vst.msk [vmem:[#allocation2 + $0x40] sm:$0xff] %vm384, %v4952
      %4985 = vst.msk [vmem:[#allocation2 + $0x48] sm:$0xff] %vm384, %v4953
      %4986 = vst.msk [vmem:[#allocation2 + $0x50] sm:$0xff] %vm384, %v4954
      %4987 = vst.msk [vmem:[#allocation2 + $0x58] sm:$0xff] %vm384, %v4955
      %4988 = vst.msk [vmem:[#allocation2 + $0x60] sm:$0xff] %vm384, %v4956
      %4989 = vst.msk [vmem:[#allocation2 + $0x68] sm:$0xff] %vm384, %v4957
      %4990 = vst.msk [vmem:[#allocation2 + $0x70] sm:$0xff] %vm384, %v4958
      %4991 = vst.msk [vmem:[#allocation2 + $0x78] sm:$0xff] %vm384, %v4959
      %4992 = vst.msk [vmem:[#allocation2 + $0x80] sm:$0xff] %vm384, %v4960
      %4993 = vst.msk [vmem:[#allocation2 + $0x88] sm:$0xff] %vm384, %v4961
      %4994 = vst.msk [vmem:[#allocation2 + $0x90] sm:$0xff] %vm384, %v4962
      %4995 = vst.msk [vmem:[#allocation2 + $0x98] sm:$0xff] %vm384, %v4963
      %4996 = vst.msk [vmem:[#allocation2 + $0xa0] sm:$0xff] %vm384, %v4964
      %4997 = vst.msk [vmem:[#allocation2 + $0xa8] sm:$0xff] %vm384, %v4965
      %4998 = vst.msk [vmem:[#allocation2 + $0xb0] sm:$0xff] %vm384, %v4966
      %4999 = vst.msk [vmem:[#allocation2 + $0xb8] sm:$0xff] %vm384, %v4967
      %5000 = vst.msk [vmem:[#allocation2 + $0xc0] sm:$0xff] %vm384, %v4968
      %5001 = vst.msk [vmem:[#allocation2 + $0xc8] sm:$0xff] %vm384, %v4969
      %5002 = vst.msk [vmem:[#allocation2 + $0xd0] sm:$0xff] %vm384, %v4970
      %5003 = vst.msk [vmem:[#allocation2 + $0xd8] sm:$0xff] %vm384, %v4971
      %5004 = vst.msk [vmem:[#allocation2 + $0xe0] sm:$0xff] %vm384, %v4972
      %5005 = vst.msk [vmem:[#allocation2 + $0xe8] sm:$0xff] %vm384, %v4973
      %5006 = vst.msk [vmem:[#allocation2 + $0xf0] sm:$0xff] %vm384, %v4974
      %5007 = vst.msk [vmem:[#allocation2 + $0xf8] sm:$0xff] %vm384, %v4975
      %v5008 = vld [vmem:[%s3787] sm:$0xe]
      %v5009 = vld [vmem:[%s3787 + $0x4] sm:$0xf]
      %v5010 = vld [vmem:[%s3787 + $0x8] sm:$0x1]
      %v5011 = vld [vmem:[%s3787 + $0xc] sm:$0xe]
      %v5012 = vld [vmem:[%s3787 + $0x10] sm:$0xf]
      %v5013 = vld [vmem:[%s3787 + $0x14] sm:$0x1]
      %v5014 = vld [vmem:[%s3787 + $0x18] sm:$0xe]
      %v5015 = vld [vmem:[%s3787 + $0x1c] sm:$0xf]
      %v5016 = vld [vmem:[%s3787 + $0x20] sm:$0x1]
      %v5017 = vld [vmem:[%s3787 + $0x24] sm:$0xe]
      %v5018 = vld [vmem:[%s3787 + $0x28] sm:$0xf]
      %v5019 = vld [vmem:[%s3787 + $0x2c] sm:$0x1]
      %v5020 = vld [vmem:[%s3787 + $0x30] sm:$0xe]
      %v5021 = vld [vmem:[%s3787 + $0x34] sm:$0xf]
      %v5022 = vld [vmem:[%s3787 + $0x38] sm:$0x1]
      %v5023 = vld [vmem:[%s3787 + $0x3c] sm:$0xe]
      %v5024 = vld [vmem:[%s3787 + $0x40] sm:$0xf]
      %v5025 = vld [vmem:[%s3787 + $0x44] sm:$0x1]
      %v5026 = vld [vmem:[%s3787 + $0x48] sm:$0xe]
      %v5027 = vld [vmem:[%s3787 + $0x4c] sm:$0xf]
      %v5028 = vld [vmem:[%s3787 + $0x50] sm:$0x1]
      %v5029 = vld [vmem:[%s3787 + $0x54] sm:$0xe]
      %v5030 = vld [vmem:[%s3787 + $0x58] sm:$0xf]
      %v5031 = vld [vmem:[%s3787 + $0x5c] sm:$0x1]
      %v5032 = vld [vmem:[%s3787 + $0x60] sm:$0xe]
      %v5033 = vld [vmem:[%s3787 + $0x64] sm:$0xf]
      %v5034 = vld [vmem:[%s3787 + $0x68] sm:$0x1]
      %v5035 = vld [vmem:[%s3787 + $0x6c] sm:$0xe]
      %v5036 = vld [vmem:[%s3787 + $0x70] sm:$0xf]
      %v5037 = vld [vmem:[%s3787 + $0x74] sm:$0x1]
      %v5038 = vld [vmem:[%s3787 + $0x78] sm:$0xe]
      %v5039 = vld [vmem:[%s3787 + $0x7c] sm:$0xf]
      %v5040 = vld [vmem:[%s3787 + $0x80] sm:$0x1]
      %v5041 = vld [vmem:[%s3787 + $0x84] sm:$0xe]
      %v5042 = vld [vmem:[%s3787 + $0x88] sm:$0xf]
      %v5043 = vld [vmem:[%s3787 + $0x8c] sm:$0x1]
      %v5044 = vld [vmem:[%s3787 + $0x90] sm:$0xe]
      %v5045 = vld [vmem:[%s3787 + $0x94] sm:$0xf]
      %v5046 = vld [vmem:[%s3787 + $0x98] sm:$0x1]
      %v5047 = vld [vmem:[%s3787 + $0x9c] sm:$0xe]
      %v5048 = vld [vmem:[%s3787 + $0xa0] sm:$0xf]
      %v5049 = vld [vmem:[%s3787 + $0xa4] sm:$0x1]
      %v5050 = vld [vmem:[%s3787 + $0xa8] sm:$0xe]
      %v5051 = vld [vmem:[%s3787 + $0xac] sm:$0xf]
      %v5052 = vld [vmem:[%s3787 + $0xb0] sm:$0x1]
      %v5053 = vld [vmem:[%s3787 + $0xb4] sm:$0xe]
      %v5054 = vld [vmem:[%s3787 + $0xb8] sm:$0xf]
      %v5055 = vld [vmem:[%s3787 + $0xbc] sm:$0x1]
      %v5104 = vrot.slane %v5008, 5
      %v5105 = vrot.slane %v5104, 4
      %v5106 = vrot.slane %v5009, 5
      %v5107 = vsel %vm1521, %v5105, %v5106
      %v5108 = vrot.slane %v5106, 4
      %v5109 = vrot.slane %v5010, 5
      %v5110 = vsel %vm1521, %v5108, %v5109
      %v5111 = vrot.slane %v5011, 5
      %v5112 = vrot.slane %v5111, 4
      %v5113 = vrot.slane %v5012, 5
      %v5114 = vsel %vm1521, %v5112, %v5113
      %v5115 = vrot.slane %v5113, 4
      %v5116 = vrot.slane %v5013, 5
      %v5117 = vsel %vm1521, %v5115, %v5116
      %v5118 = vrot.slane %v5014, 5
      %v5119 = vrot.slane %v5118, 4
      %v5120 = vrot.slane %v5015, 5
      %v5121 = vsel %vm1521, %v5119, %v5120
      %v5122 = vrot.slane %v5120, 4
      %v5123 = vrot.slane %v5016, 5
      %v5124 = vsel %vm1521, %v5122, %v5123
      %v5125 = vrot.slane %v5017, 5
      %v5126 = vrot.slane %v5125, 4
      %v5127 = vrot.slane %v5018, 5
      %v5128 = vsel %vm1521, %v5126, %v5127
      %v5129 = vrot.slane %v5127, 4
      %v5130 = vrot.slane %v5019, 5
      %v5131 = vsel %vm1521, %v5129, %v5130
      %v5132 = vrot.slane %v5020, 5
      %v5133 = vrot.slane %v5132, 4
      %v5134 = vrot.slane %v5021, 5
      %v5135 = vsel %vm1521, %v5133, %v5134
      %v5136 = vrot.slane %v5134, 4
      %v5137 = vrot.slane %v5022, 5
      %v5138 = vsel %vm1521, %v5136, %v5137
      %v5139 = vrot.slane %v5023, 5
      %v5140 = vrot.slane %v5139, 4
      %v5141 = vrot.slane %v5024, 5
      %v5142 = vsel %vm1521, %v5140, %v5141
      %v5143 = vrot.slane %v5141, 4
      %v5144 = vrot.slane %v5025, 5
      %v5145 = vsel %vm1521, %v5143, %v5144
      %v5146 = vrot.slane %v5026, 5
      %v5147 = vrot.slane %v5146, 4
      %v5148 = vrot.slane %v5027, 5
      %v5149 = vsel %vm1521, %v5147, %v5148
      %v5150 = vrot.slane %v5148, 4
      %v5151 = vrot.slane %v5028, 5
      %v5152 = vsel %vm1521, %v5150, %v5151
      %v5153 = vrot.slane %v5029, 5
      %v5154 = vrot.slane %v5153, 4
      %v5155 = vrot.slane %v5030, 5
      %v5156 = vsel %vm1521, %v5154, %v5155
      %v5157 = vrot.slane %v5155, 4
      %v5158 = vrot.slane %v5031, 5
      %v5159 = vsel %vm1521, %v5157, %v5158
      %v5160 = vrot.slane %v5032, 5
      %v5161 = vrot.slane %v5160, 4
      %v5162 = vrot.slane %v5033, 5
      %v5163 = vsel %vm1521, %v5161, %v5162
      %v5164 = vrot.slane %v5162, 4
      %v5165 = vrot.slane %v5034, 5
      %v5166 = vsel %vm1521, %v5164, %v5165
      %v5167 = vrot.slane %v5035, 5
      %v5168 = vrot.slane %v5167, 4
      %v5169 = vrot.slane %v5036, 5
      %v5170 = vsel %vm1521, %v5168, %v5169
      %v5171 = vrot.slane %v5169, 4
      %v5172 = vrot.slane %v5037, 5
      %v5173 = vsel %vm1521, %v5171, %v5172
      %v5174 = vrot.slane %v5038, 5
      %v5175 = vrot.slane %v5174, 4
      %v5176 = vrot.slane %v5039, 5
      %v5177 = vsel %vm1521, %v5175, %v5176
      %v5178 = vrot.slane %v5176, 4
      %v5179 = vrot.slane %v5040, 5
      %v5180 = vsel %vm1521, %v5178, %v5179
      %v5181 = vrot.slane %v5041, 5
      %v5182 = vrot.slane %v5181, 4
      %v5183 = vrot.slane %v5042, 5
      %v5184 = vsel %vm1521, %v5182, %v5183
      %v5185 = vrot.slane %v5183, 4
      %v5186 = vrot.slane %v5043, 5
      %v5187 = vsel %vm1521, %v5185, %v5186
      %v5188 = vrot.slane %v5044, 5
      %v5189 = vrot.slane %v5188, 4
      %v5190 = vrot.slane %v5045, 5
      %v5191 = vsel %vm1521, %v5189, %v5190
      %v5192 = vrot.slane %v5190, 4
      %v5193 = vrot.slane %v5046, 5
      %v5194 = vsel %vm1521, %v5192, %v5193
      %v5195 = vrot.slane %v5047, 5
      %v5196 = vrot.slane %v5195, 4
      %v5197 = vrot.slane %v5048, 5
      %v5198 = vsel %vm1521, %v5196, %v5197
      %v5199 = vrot.slane %v5197, 4
      %v5200 = vrot.slane %v5049, 5
      %v5201 = vsel %vm1521, %v5199, %v5200
      %v5202 = vrot.slane %v5050, 5
      %v5203 = vrot.slane %v5202, 4
      %v5204 = vrot.slane %v5051, 5
      %v5205 = vsel %vm1521, %v5203, %v5204
      %v5206 = vrot.slane %v5204, 4
      %v5207 = vrot.slane %v5052, 5
      %v5208 = vsel %vm1521, %v5206, %v5207
      %v5209 = vrot.slane %v5053, 5
      %v5210 = vrot.slane %v5209, 4
      %v5211 = vrot.slane %v5054, 5
      %v5212 = vsel %vm1521, %v5210, %v5211
      %v5213 = vrot.slane %v5211, 4
      %v5214 = vrot.slane %v5055, 5
      %v5215 = vsel %vm1521, %v5213, %v5214
      %s5216 = scalar_lea.vmem %s248, 64
      %v5217 = vld [vmem:[%s5216] sm:$0xf]
      %v5218 = vld [vmem:[%s5216 + $0x4] sm:$0xf]
      %v5219 = vunpack.c.l.b16 %v5107
      %v5220 = vunpack.c.l.b16 %v5110
      %v5221 = vunpack.c.l.b16 %v5114
      %v5222 = vunpack.c.l.b16 %v5117
      %v5223 = vunpack.c.l.b16 %v5121
      %v5224 = vunpack.c.l.b16 %v5124
      %v5225 = vunpack.c.l.b16 %v5128
      %v5226 = vunpack.c.l.b16 %v5131
      %v5227 = vunpack.c.l.b16 %v5135
      %v5228 = vunpack.c.l.b16 %v5138
      %v5229 = vunpack.c.l.b16 %v5142
      %v5230 = vunpack.c.l.b16 %v5145
      %v5231 = vunpack.c.l.b16 %v5149
      %v5232 = vunpack.c.l.b16 %v5152
      %v5233 = vunpack.c.l.b16 %v5156
      %v5234 = vunpack.c.l.b16 %v5159
      %v5235 = vunpack.c.l.b16 %v5163
      %v5236 = vunpack.c.l.b16 %v5166
      %v5237 = vunpack.c.l.b16 %v5170
      %v5238 = vunpack.c.l.b16 %v5173
      %v5239 = vunpack.c.l.b16 %v5177
      %v5240 = vunpack.c.l.b16 %v5180
      %v5241 = vunpack.c.l.b16 %v5184
      %v5242 = vunpack.c.l.b16 %v5187
      %v5243 = vunpack.c.l.b16 %v5191
      %v5244 = vunpack.c.l.b16 %v5194
      %v5245 = vunpack.c.l.b16 %v5198
      %v5246 = vunpack.c.l.b16 %v5201
      %v5247 = vunpack.c.l.b16 %v5205
      %v5248 = vunpack.c.l.b16 %v5208
      %v5249 = vunpack.c.l.b16 %v5212
      %v5250 = vunpack.c.l.b16 %v5215
      %v5251 = vpack.c.b16 %v5220, %v5219
      %v5252 = vpack.c.b16 %v5222, %v5221
      %v5253 = vpack.c.b16 %v5224, %v5223
      %v5254 = vpack.c.b16 %v5226, %v5225
      %v5255 = vpack.c.b16 %v5228, %v5227
      %v5256 = vpack.c.b16 %v5230, %v5229
      %v5257 = vpack.c.b16 %v5232, %v5231
      %v5258 = vpack.c.b16 %v5234, %v5233
      %v5259 = vpack.c.b16 %v5236, %v5235
      %v5260 = vpack.c.b16 %v5238, %v5237
      %v5261 = vpack.c.b16 %v5240, %v5239
      %v5262 = vpack.c.b16 %v5242, %v5241
      %v5263 = vpack.c.b16 %v5244, %v5243
      %v5264 = vpack.c.b16 %v5246, %v5245
      %v5265 = vpack.c.b16 %v5248, %v5247
      %v5266 = vpack.c.b16 %v5250, %v5249
      %v5269 = vunpack.c.l.b16 %v5217
      %v5270 = vunpack.c.l.b16 %v5218
      %v5271 = vpack.c.b16 %v5270, %v5269
      %v5274 = vsel %vm384, %v5251, 0
      %v5277 = vsel %vm384, %v5252, 0
      %v5280 = vsel %vm384, %v5253, 0
      %v5283 = vsel %vm384, %v5254, 0
      %v5286 = vsel %vm384, %v5255, 0
      %v5289 = vsel %vm384, %v5256, 0
      %v5292 = vsel %vm384, %v5257, 0
      %v5295 = vsel %vm384, %v5258, 0
      %v5298 = vsel %vm384, %v5259, 0
      %v5301 = vsel %vm384, %v5260, 0
      %v5304 = vsel %vm384, %v5261, 0
      %v5307 = vsel %vm384, %v5262, 0
      %v5310 = vsel %vm384, %v5263, 0
      %v5313 = vsel %vm384, %v5264, 0
      %v5316 = vsel %vm384, %v5265, 0
      %v5319 = vsel %vm384, %v5266, 0
      %5321 = vmatprep.subr.bf16.mxu0 0
      %5322 = vmatpush1.bf16.msra.mxu0 0
      %5323 = vmatprep.subr.bf16.mxu0 0
      %5324 = vmatpush1.bf16.msra.mxu0 0
      %5325 = vmatprep.subr.bf16.mxu0 0
      %5326 = vmatpush1.bf16.msra.mxu0 0
      %5327 = vmatprep.subr.bf16.mxu0 0
      %5328 = vmatpush1.bf16.msra.mxu0 0
      %5329 = vmatprep.subr.bf16.mxu0 0
      %5330 = vmatpush1.bf16.msra.mxu0 0
      %5331 = vmatprep.subr.bf16.mxu0 0
      %5332 = vmatpush1.bf16.msra.mxu0 0
      %5333 = vmatprep.subr.bf16.mxu0 0
      %5334 = vmatpush1.bf16.msra.mxu0 0
      %5335 = vmatprep.subr.bf16.mxu0 0
      %5336 = vmatpush1.bf16.msra.mxu0 %v5271
      %5337 = vmatprep.subr.bf16.mxu0 0
      %5338 = vmatpush2.bf16.msra.mxu0 0
      %5339 = vmatprep.subr.bf16.mxu0 0
      %5340 = vmatpush2.bf16.msra.mxu0 0
      %5341 = vmatprep.subr.bf16.mxu0 0
      %5342 = vmatpush2.bf16.msra.mxu0 0
      %5343 = vmatprep.subr.bf16.mxu0 0
      %5344 = vmatpush2.bf16.msra.mxu0 0
      %5345 = vmatprep.subr.bf16.mxu0 0
      %5346 = vmatpush2.bf16.msra.mxu0 0
      %5347 = vmatprep.subr.bf16.mxu0 0
      %5348 = vmatpush2.bf16.msra.mxu0 0
      %5349 = vmatprep.subr.bf16.mxu0 0
      %5350 = vmatpush2.bf16.msra.mxu0 0
      %5351 = vmatprep.subr.bf16.mxu0 0
      %5352 = vmatpush2.bf16.msra.mxu0 0
      %5353 = vmatprep.mubr.bf16.mxu0 0
      %5354 = vmatmul.mubr.bf16.gmra.mxu0 %v5274
      %v5355 = vpop.f32.mrf.mxu0
      %v5356 = vadd.f32 0.0, %v5355
      %v5357 = vpop.f32.mrf.mxu0
      %v5358 = vpop.f32.mrf.mxu0
      %v5359 = vadd.f32 0.0, %v5358
      %v5360 = vpop.f32.mrf.mxu0
      %5361 = vmatprep.mubr.bf16.mxu0 0
      %5362 = vmatmul.mubr.bf16.gmra.mxu0 %v5277
      %v5363 = vpop.f32.mrf.mxu0
      %v5364 = vadd.f32 0.0, %v5363
      %v5365 = vpop.f32.mrf.mxu0
      %v5366 = vpop.f32.mrf.mxu0
      %v5367 = vadd.f32 0.0, %v5366
      %v5368 = vpop.f32.mrf.mxu0
      %5369 = vmatprep.mubr.bf16.mxu0 0
      %5370 = vmatmul.mubr.bf16.gmra.mxu0 %v5280
      %v5371 = vpop.f32.mrf.mxu0
      %v5372 = vadd.f32 0.0, %v5371
      %v5373 = vpop.f32.mrf.mxu0
      %v5374 = vpop.f32.mrf.mxu0
      %v5375 = vadd.f32 0.0, %v5374
      %v5376 = vpop.f32.mrf.mxu0
      %5377 = vmatprep.mubr.bf16.mxu0 0
      %5378 = vmatmul.mubr.bf16.gmra.mxu0 %v5283
      %v5379 = vpop.f32.mrf.mxu0
      %v5380 = vadd.f32 0.0, %v5379
      %v5381 = vpop.f32.mrf.mxu0
      %v5382 = vpop.f32.mrf.mxu0
      %v5383 = vadd.f32 0.0, %v5382
      %v5384 = vpop.f32.mrf.mxu0
      %5385 = vmatprep.mubr.bf16.mxu0 0
      %5386 = vmatmul.mubr.bf16.gmra.mxu0 %v5286
      %v5387 = vpop.f32.mrf.mxu0
      %v5388 = vadd.f32 0.0, %v5387
      %v5389 = vpop.f32.mrf.mxu0
      %v5390 = vpop.f32.mrf.mxu0
      %v5391 = vadd.f32 0.0, %v5390
      %v5392 = vpop.f32.mrf.mxu0
      %5393 = vmatprep.mubr.bf16.mxu0 0
      %5394 = vmatmul.mubr.bf16.gmra.mxu0 %v5289
      %v5395 = vpop.f32.mrf.mxu0
      %v5396 = vadd.f32 0.0, %v5395
      %v5397 = vpop.f32.mrf.mxu0
      %v5398 = vpop.f32.mrf.mxu0
      %v5399 = vadd.f32 0.0, %v5398
      %v5400 = vpop.f32.mrf.mxu0
      %5401 = vmatprep.mubr.bf16.mxu0 0
      %5402 = vmatmul.mubr.bf16.gmra.mxu0 %v5292
      %v5403 = vpop.f32.mrf.mxu0
      %v5404 = vadd.f32 0.0, %v5403
      %v5405 = vpop.f32.mrf.mxu0
      %v5406 = vpop.f32.mrf.mxu0
      %v5407 = vadd.f32 0.0, %v5406
      %v5408 = vpop.f32.mrf.mxu0
      %5409 = vmatprep.mubr.bf16.mxu0 0
      %5410 = vmatmul.mubr.bf16.gmra.mxu0 %v5295
      %v5411 = vpop.f32.mrf.mxu0
      %v5412 = vadd.f32 0.0, %v5411
      %v5413 = vpop.f32.mrf.mxu0
      %v5414 = vpop.f32.mrf.mxu0
      %v5415 = vadd.f32 0.0, %v5414
      %v5416 = vpop.f32.mrf.mxu0
      %5417 = vmatprep.mubr.bf16.mxu0 0
      %5418 = vmatmul.mubr.bf16.gmra.mxu0 %v5298
      %v5419 = vpop.f32.mrf.mxu0
      %v5420 = vadd.f32 0.0, %v5419
      %v5421 = vpop.f32.mrf.mxu0
      %v5422 = vpop.f32.mrf.mxu0
      %v5423 = vadd.f32 0.0, %v5422
      %v5424 = vpop.f32.mrf.mxu0
      %5425 = vmatprep.mubr.bf16.mxu0 0
      %5426 = vmatmul.mubr.bf16.gmra.mxu0 %v5301
      %v5427 = vpop.f32.mrf.mxu0
      %v5428 = vadd.f32 0.0, %v5427
      %v5429 = vpop.f32.mrf.mxu0
      %v5430 = vpop.f32.mrf.mxu0
      %v5431 = vadd.f32 0.0, %v5430
      %v5432 = vpop.f32.mrf.mxu0
      %5433 = vmatprep.mubr.bf16.mxu0 0
      %5434 = vmatmul.mubr.bf16.gmra.mxu0 %v5304
      %v5435 = vpop.f32.mrf.mxu0
      %v5436 = vadd.f32 0.0, %v5435
      %v5437 = vpop.f32.mrf.mxu0
      %v5438 = vpop.f32.mrf.mxu0
      %v5439 = vadd.f32 0.0, %v5438
      %v5440 = vpop.f32.mrf.mxu0
      %5441 = vmatprep.mubr.bf16.mxu0 0
      %5442 = vmatmul.mubr.bf16.gmra.mxu0 %v5307
      %v5443 = vpop.f32.mrf.mxu0
      %v5444 = vadd.f32 0.0, %v5443
      %v5445 = vpop.f32.mrf.mxu0
      %v5446 = vpop.f32.mrf.mxu0
      %v5447 = vadd.f32 0.0, %v5446
      %v5448 = vpop.f32.mrf.mxu0
      %5449 = vmatprep.mubr.bf16.mxu0 0
      %5450 = vmatmul.mubr.bf16.gmra.mxu0 %v5310
      %v5451 = vpop.f32.mrf.mxu0
      %v5452 = vadd.f32 0.0, %v5451
      %v5453 = vpop.f32.mrf.mxu0
      %v5454 = vpop.f32.mrf.mxu0
      %v5455 = vadd.f32 0.0, %v5454
      %v5456 = vpop.f32.mrf.mxu0
      %5457 = vmatprep.mubr.bf16.mxu0 0
      %5458 = vmatmul.mubr.bf16.gmra.mxu0 %v5313
      %v5459 = vpop.f32.mrf.mxu0
      %v5460 = vadd.f32 0.0, %v5459
      %v5461 = vpop.f32.mrf.mxu0
      %v5462 = vpop.f32.mrf.mxu0
      %v5463 = vadd.f32 0.0, %v5462
      %v5464 = vpop.f32.mrf.mxu0
      %5465 = vmatprep.mubr.bf16.mxu0 0
      %5466 = vmatmul.mubr.bf16.gmra.mxu0 %v5316
      %v5467 = vpop.f32.mrf.mxu0
      %v5468 = vadd.f32 0.0, %v5467
      %v5469 = vpop.f32.mrf.mxu0
      %v5470 = vpop.f32.mrf.mxu0
      %v5471 = vadd.f32 0.0, %v5470
      %v5472 = vpop.f32.mrf.mxu0
      %5473 = vmatprep.mubr.bf16.mxu0 0
      %5474 = vmatmul.mubr.bf16.gmra.mxu0 %v5319
      %v5475 = vpop.f32.mrf.mxu0
      %v5476 = vadd.f32 0.0, %v5475
      %v5477 = vpop.f32.mrf.mxu0
      %v5478 = vpop.f32.mrf.mxu0
      %v5479 = vadd.f32 0.0, %v5478
      %v5480 = vpop.f32.mrf.mxu0
      %5481 = vdwg.mxu0
      %v5482 = vld [vmem:[#allocation2] sm:$0xff]
      %v5483 = vld [vmem:[#allocation2 + $0x8] sm:$0xff]
      %v5484 = vld [vmem:[#allocation2 + $0x10] sm:$0xff]
      %v5485 = vld [vmem:[#allocation2 + $0x18] sm:$0xff]
      %v5486 = vld [vmem:[#allocation2 + $0x20] sm:$0xff]
      %v5487 = vld [vmem:[#allocation2 + $0x28] sm:$0xff]
      %v5488 = vld [vmem:[#allocation2 + $0x30] sm:$0xff]
      %v5489 = vld [vmem:[#allocation2 + $0x38] sm:$0xff]
      %v5490 = vld [vmem:[#allocation2 + $0x40] sm:$0xff]
      %v5491 = vld [vmem:[#allocation2 + $0x48] sm:$0xff]
      %v5492 = vld [vmem:[#allocation2 + $0x50] sm:$0xff]
      %v5493 = vld [vmem:[#allocation2 + $0x58] sm:$0xff]
      %v5494 = vld [vmem:[#allocation2 + $0x60] sm:$0xff]
      %v5495 = vld [vmem:[#allocation2 + $0x68] sm:$0xff]
      %v5496 = vld [vmem:[#allocation2 + $0x70] sm:$0xff]
      %v5497 = vld [vmem:[#allocation2 + $0x78] sm:$0xff]
      %v5498 = vld [vmem:[#allocation2 + $0x80] sm:$0xff]
      %v5499 = vld [vmem:[#allocation2 + $0x88] sm:$0xff]
      %v5500 = vld [vmem:[#allocation2 + $0x90] sm:$0xff]
      %v5501 = vld [vmem:[#allocation2 + $0x98] sm:$0xff]
      %v5502 = vld [vmem:[#allocation2 + $0xa0] sm:$0xff]
      %v5503 = vld [vmem:[#allocation2 + $0xa8] sm:$0xff]
      %v5504 = vld [vmem:[#allocation2 + $0xb0] sm:$0xff]
      %v5505 = vld [vmem:[#allocation2 + $0xb8] sm:$0xff]
      %v5506 = vld [vmem:[#allocation2 + $0xc0] sm:$0xff]
      %v5507 = vld [vmem:[#allocation2 + $0xc8] sm:$0xff]
      %v5508 = vld [vmem:[#allocation2 + $0xd0] sm:$0xff]
      %v5509 = vld [vmem:[#allocation2 + $0xd8] sm:$0xff]
      %v5510 = vld [vmem:[#allocation2 + $0xe0] sm:$0xff]
      %v5511 = vld [vmem:[#allocation2 + $0xe8] sm:$0xff]
      %v5512 = vld [vmem:[#allocation2 + $0xf0] sm:$0xff]
      %v5513 = vld [vmem:[#allocation2 + $0xf8] sm:$0xff]
      %v5514 = vadd.f32 %v5482, %v5356
      %v5515 = vadd.f32 %v5483, %v5359
      %v5516 = vadd.f32 %v5484, %v5364
      %v5517 = vadd.f32 %v5485, %v5367
      %v5518 = vadd.f32 %v5486, %v5372
      %v5519 = vadd.f32 %v5487, %v5375
      %v5520 = vadd.f32 %v5488, %v5380
      %v5521 = vadd.f32 %v5489, %v5383
      %v5522 = vadd.f32 %v5490, %v5388
      %v5523 = vadd.f32 %v5491, %v5391
      %v5524 = vadd.f32 %v5492, %v5396
      %v5525 = vadd.f32 %v5493, %v5399
      %v5526 = vadd.f32 %v5494, %v5404
      %v5527 = vadd.f32 %v5495, %v5407
      %v5528 = vadd.f32 %v5496, %v5412
      %v5529 = vadd.f32 %v5497, %v5415
      %v5530 = vadd.f32 %v5498, %v5420
      %v5531 = vadd.f32 %v5499, %v5423
      %v5532 = vadd.f32 %v5500, %v5428
      %v5533 = vadd.f32 %v5501, %v5431
      %v5534 = vadd.f32 %v5502, %v5436
      %v5535 = vadd.f32 %v5503, %v5439
      %v5536 = vadd.f32 %v5504, %v5444
      %v5537 = vadd.f32 %v5505, %v5447
      %v5538 = vadd.f32 %v5506, %v5452
      %v5539 = vadd.f32 %v5507, %v5455
      %v5540 = vadd.f32 %v5508, %v5460
      %v5541 = vadd.f32 %v5509, %v5463
      %v5542 = vadd.f32 %v5510, %v5468
      %v5543 = vadd.f32 %v5511, %v5471
      %v5544 = vadd.f32 %v5512, %v5476
      %v5545 = vadd.f32 %v5513, %v5479
      %5546 = vst.msk [vmem:[#allocation2] sm:$0xff] %vm384, %v5514
      %5547 = vst.msk [vmem:[#allocation2 + $0x8] sm:$0xff] %vm384, %v5515
      %5548 = vst.msk [vmem:[#allocation2 + $0x10] sm:$0xff] %vm384, %v5516
      %5549 = vst.msk [vmem:[#allocation2 + $0x18] sm:$0xff] %vm384, %v5517
      %5550 = vst.msk [vmem:[#allocation2 + $0x20] sm:$0xff] %vm384, %v5518
      %5551 = vst.msk [vmem:[#allocation2 + $0x28] sm:$0xff] %vm384, %v5519
      %5552 = vst.msk [vmem:[#allocation2 + $0x30] sm:$0xff] %vm384, %v5520
      %5553 = vst.msk [vmem:[#allocation2 + $0x38] sm:$0xff] %vm384, %v5521
      %5554 = vst.msk [vmem:[#allocation2 + $0x40] sm:$0xff] %vm384, %v5522
      %5555 = vst.msk [vmem:[#allocation2 + $0x48] sm:$0xff] %vm384, %v5523
      %5556 = vst.msk [vmem:[#allocation2 + $0x50] sm:$0xff] %vm384, %v5524
      %5557 = vst.msk [vmem:[#allocation2 + $0x58] sm:$0xff] %vm384, %v5525
      %5558 = vst.msk [vmem:[#allocation2 + $0x60] sm:$0xff] %vm384, %v5526
      %5559 = vst.msk [vmem:[#allocation2 + $0x68] sm:$0xff] %vm384, %v5527
      %5560 = vst.msk [vmem:[#allocation2 + $0x70] sm:$0xff] %vm384, %v5528
      %5561 = vst.msk [vmem:[#allocation2 + $0x78] sm:$0xff] %vm384, %v5529
      %5562 = vst.msk [vmem:[#allocation2 + $0x80] sm:$0xff] %vm384, %v5530
      %5563 = vst.msk [vmem:[#allocation2 + $0x88] sm:$0xff] %vm384, %v5531
      %5564 = vst.msk [vmem:[#allocation2 + $0x90] sm:$0xff] %vm384, %v5532
      %5565 = vst.msk [vmem:[#allocation2 + $0x98] sm:$0xff] %vm384, %v5533
      %5566 = vst.msk [vmem:[#allocation2 + $0xa0] sm:$0xff] %vm384, %v5534
      %5567 = vst.msk [vmem:[#allocation2 + $0xa8] sm:$0xff] %vm384, %v5535
      %5568 = vst.msk [vmem:[#allocation2 + $0xb0] sm:$0xff] %vm384, %v5536
      %5569 = vst.msk [vmem:[#allocation2 + $0xb8] sm:$0xff] %vm384, %v5537
      %5570 = vst.msk [vmem:[#allocation2 + $0xc0] sm:$0xff] %vm384, %v5538
      %5571 = vst.msk [vmem:[#allocation2 + $0xc8] sm:$0xff] %vm384, %v5539
      %5572 = vst.msk [vmem:[#allocation2 + $0xd0] sm:$0xff] %vm384, %v5540
      %5573 = vst.msk [vmem:[#allocation2 + $0xd8] sm:$0xff] %vm384, %v5541
      %5574 = vst.msk [vmem:[#allocation2 + $0xe0] sm:$0xff] %vm384, %v5542
      %5575 = vst.msk [vmem:[#allocation2 + $0xe8] sm:$0xff] %vm384, %v5543
      %5576 = vst.msk [vmem:[#allocation2 + $0xf0] sm:$0xff] %vm384, %v5544
      %5577 = vst.msk [vmem:[#allocation2 + $0xf8] sm:$0xff] %vm384, %v5545
      %v5578 = vld [vmem:[#allocation2] sm:$0xff]
      %v5579 = vld [vmem:[#allocation2 + $0x8] sm:$0xff]
      %v5580 = vld [vmem:[#allocation2 + $0x10] sm:$0xff]
      %v5581 = vld [vmem:[#allocation2 + $0x18] sm:$0xff]
      %v5582 = vld [vmem:[#allocation2 + $0x20] sm:$0xff]
      %v5583 = vld [vmem:[#allocation2 + $0x28] sm:$0xff]
      %v5584 = vld [vmem:[#allocation2 + $0x30] sm:$0xff]
      %v5585 = vld [vmem:[#allocation2 + $0x38] sm:$0xff]
      %v5586 = vld [vmem:[#allocation2 + $0x40] sm:$0xff]
      %v5587 = vld [vmem:[#allocation2 + $0x48] sm:$0xff]
      %v5588 = vld [vmem:[#allocation2 + $0x50] sm:$0xff]
      %v5589 = vld [vmem:[#allocation2 + $0x58] sm:$0xff]
      %v5590 = vld [vmem:[#allocation2 + $0x60] sm:$0xff]
      %v5591 = vld [vmem:[#allocation2 + $0x68] sm:$0xff]
      %v5592 = vld [vmem:[#allocation2 + $0x70] sm:$0xff]
      %v5593 = vld [vmem:[#allocation2 + $0x78] sm:$0xff]
      %v5594 = vld [vmem:[#allocation2 + $0x80] sm:$0xff]
      %v5595 = vld [vmem:[#allocation2 + $0x88] sm:$0xff]
      %v5596 = vld [vmem:[#allocation2 + $0x90] sm:$0xff]
      %v5597 = vld [vmem:[#allocation2 + $0x98] sm:$0xff]
      %v5598 = vld [vmem:[#allocation2 + $0xa0] sm:$0xff]
      %v5599 = vld [vmem:[#allocation2 + $0xa8] sm:$0xff]
      %v5600 = vld [vmem:[#allocation2 + $0xb0] sm:$0xff]
      %v5601 = vld [vmem:[#allocation2 + $0xb8] sm:$0xff]
      %v5602 = vld [vmem:[#allocation2 + $0xc0] sm:$0xff]
      %v5603 = vld [vmem:[#allocation2 + $0xc8] sm:$0xff]
      %v5604 = vld [vmem:[#allocation2 + $0xd0] sm:$0xff]
      %v5605 = vld [vmem:[#allocation2 + $0xd8] sm:$0xff]
      %v5606 = vld [vmem:[#allocation2 + $0xe0] sm:$0xff]
      %v5607 = vld [vmem:[#allocation2 + $0xe8] sm:$0xff]
      %v5608 = vld [vmem:[#allocation2 + $0xf0] sm:$0xff]
      %v5609 = vld [vmem:[#allocation2 + $0xf8] sm:$0xff]
      %v5610 = vld [vmem:[%s251] sm:$0x1]
      %v5612 = vlaneseq
      %v5613 = vshrl.u32 %v5612, 7
      %v5614 = vsub.s32 0, %v5613
      %v5615 = vrot.slane %v5610, %v5614
      %v5617 = vmul.f32 %v5578, %v5615
      %v5618 = vmul.f32 %v5579, %v5615
      %v5619 = vmul.f32 %v5580, %v5615
      %v5620 = vmul.f32 %v5581, %v5615
      %v5621 = vmul.f32 %v5582, %v5615
      %v5622 = vmul.f32 %v5583, %v5615
      %v5623 = vmul.f32 %v5584, %v5615
      %v5624 = vmul.f32 %v5585, %v5615
      %v5625 = vmul.f32 %v5586, %v5615
      %v5626 = vmul.f32 %v5587, %v5615
      %v5627 = vmul.f32 %v5588, %v5615
      %v5628 = vmul.f32 %v5589, %v5615
      %v5629 = vmul.f32 %v5590, %v5615
      %v5630 = vmul.f32 %v5591, %v5615
      %v5631 = vmul.f32 %v5592, %v5615
      %v5632 = vmul.f32 %v5593, %v5615
      %v5633 = vmul.f32 %v5594, %v5615
      %v5634 = vmul.f32 %v5595, %v5615
      %v5635 = vmul.f32 %v5596, %v5615
      %v5636 = vmul.f32 %v5597, %v5615
      %v5637 = vmul.f32 %v5598, %v5615
      %v5638 = vmul.f32 %v5599, %v5615
      %v5639 = vmul.f32 %v5600, %v5615
      %v5640 = vmul.f32 %v5601, %v5615
      %v5641 = vmul.f32 %v5602, %v5615
      %v5642 = vmul.f32 %v5603, %v5615
      %v5643 = vmul.f32 %v5604, %v5615
      %v5644 = vmul.f32 %v5605, %v5615
      %v5645 = vmul.f32 %v5606, %v5615
      %v5646 = vmul.f32 %v5607, %v5615
      %v5647 = vmul.f32 %v5608, %v5615
      %v5648 = vmul.f32 %v5609, %v5615
      %v5649 = vld [vmem:[%s254] sm:$0x1]
      %v5651 = vlaneseq
      %v5652 = vshrl.u32 %v5651, 7
      %v5653 = vsub.s32 0, %v5652
      %v5654 = vrot.slane %v5649, %v5653
      %v5656 = vadd.f32 %v5617, %v5654
      %v5657 = vadd.f32 %v5618, %v5654
      %v5658 = vadd.f32 %v5619, %v5654
      %v5659 = vadd.f32 %v5620, %v5654
      %v5660 = vadd.f32 %v5621, %v5654
      %v5661 = vadd.f32 %v5622, %v5654
      %v5662 = vadd.f32 %v5623, %v5654
      %v5663 = vadd.f32 %v5624, %v5654
      %v5664 = vadd.f32 %v5625, %v5654
      %v5665 = vadd.f32 %v5626, %v5654
      %v5666 = vadd.f32 %v5627, %v5654
      %v5667 = vadd.f32 %v5628, %v5654
      %v5668 = vadd.f32 %v5629, %v5654
      %v5669 = vadd.f32 %v5630, %v5654
      %v5670 = vadd.f32 %v5631, %v5654
      %v5671 = vadd.f32 %v5632, %v5654
      %v5672 = vadd.f32 %v5633, %v5654
      %v5673 = vadd.f32 %v5634, %v5654
      %v5674 = vadd.f32 %v5635, %v5654
      %v5675 = vadd.f32 %v5636, %v5654
      %v5676 = vadd.f32 %v5637, %v5654
      %v5677 = vadd.f32 %v5638, %v5654
      %v5678 = vadd.f32 %v5639, %v5654
      %v5679 = vadd.f32 %v5640, %v5654
      %v5680 = vadd.f32 %v5641, %v5654
      %v5681 = vadd.f32 %v5642, %v5654
      %v5682 = vadd.f32 %v5643, %v5654
      %v5683 = vadd.f32 %v5644, %v5654
      %v5684 = vadd.f32 %v5645, %v5654
      %v5685 = vadd.f32 %v5646, %v5654
      %v5686 = vadd.f32 %v5647, %v5654
      %v5687 = vadd.f32 %v5648, %v5654
      %v5688 = vmax.f32 %v5656, 0.0
      %v5689 = vmax.f32 %v5657, 0.0
      %v5690 = vmax.f32 %v5658, 0.0
      %v5691 = vmax.f32 %v5659, 0.0
      %v5692 = vmax.f32 %v5660, 0.0
      %v5693 = vmax.f32 %v5661, 0.0
      %v5694 = vmax.f32 %v5662, 0.0
      %v5695 = vmax.f32 %v5663, 0.0
      %v5696 = vmax.f32 %v5664, 0.0
      %v5697 = vmax.f32 %v5665, 0.0
      %v5698 = vmax.f32 %v5666, 0.0
      %v5699 = vmax.f32 %v5667, 0.0
      %v5700 = vmax.f32 %v5668, 0.0
      %v5701 = vmax.f32 %v5669, 0.0
      %v5702 = vmax.f32 %v5670, 0.0
      %v5703 = vmax.f32 %v5671, 0.0
      %v5704 = vmax.f32 %v5672, 0.0
      %v5705 = vmax.f32 %v5673, 0.0
      %v5706 = vmax.f32 %v5674, 0.0
      %v5707 = vmax.f32 %v5675, 0.0
      %v5708 = vmax.f32 %v5676, 0.0
      %v5709 = vmax.f32 %v5677, 0.0
      %v5710 = vmax.f32 %v5678, 0.0
      %v5711 = vmax.f32 %v5679, 0.0
      %v5712 = vmax.f32 %v5680, 0.0
      %v5713 = vmax.f32 %v5681, 0.0
      %v5714 = vmax.f32 %v5682, 0.0
      %v5715 = vmax.f32 %v5683, 0.0
      %v5716 = vmax.f32 %v5684, 0.0
      %v5717 = vmax.f32 %v5685, 0.0
      %v5718 = vmax.f32 %v5686, 0.0
      %v5719 = vmax.f32 %v5687, 0.0
      %v5720 = vpack.c.bf16 %v5689, %v5688
      %v5721 = vpack.c.bf16 %v5691, %v5690
      %v5722 = vpack.c.bf16 %v5693, %v5692
      %v5723 = vpack.c.bf16 %v5695, %v5694
      %v5724 = vpack.c.bf16 %v5697, %v5696
      %v5725 = vpack.c.bf16 %v5699, %v5698
      %v5726 = vpack.c.bf16 %v5701, %v5700
      %v5727 = vpack.c.bf16 %v5703, %v5702
      %v5728 = vpack.c.bf16 %v5705, %v5704
      %v5729 = vpack.c.bf16 %v5707, %v5706
      %v5730 = vpack.c.bf16 %v5709, %v5708
      %v5731 = vpack.c.bf16 %v5711, %v5710
      %v5732 = vpack.c.bf16 %v5713, %v5712
      %v5733 = vpack.c.bf16 %v5715, %v5714
      %v5734 = vpack.c.bf16 %v5717, %v5716
      %v5735 = vpack.c.bf16 %v5719, %v5718
      %v5752 = vunpack.c.l.b16 %v5720
      %v5753 = vunpack.c.h.b16 %v5720
      %v5754 = vunpack.c.l.b16 %v5721
      %v5755 = vunpack.c.h.b16 %v5721
      %v5756 = vunpack.c.l.b16 %v5722
      %v5757 = vunpack.c.h.b16 %v5722
      %v5758 = vunpack.c.l.b16 %v5723
      %v5759 = vunpack.c.h.b16 %v5723
      %v5760 = vunpack.c.l.b16 %v5724
      %v5761 = vunpack.c.h.b16 %v5724
      %v5762 = vunpack.c.l.b16 %v5725
      %v5763 = vunpack.c.h.b16 %v5725
      %v5764 = vunpack.c.l.b16 %v5726
      %v5765 = vunpack.c.h.b16 %v5726
      %v5766 = vunpack.c.l.b16 %v5727
      %v5767 = vunpack.c.h.b16 %v5727
      %v5768 = vunpack.c.l.b16 %v5728
      %v5769 = vunpack.c.h.b16 %v5728
      %v5770 = vunpack.c.l.b16 %v5729
      %v5771 = vunpack.c.h.b16 %v5729
      %v5772 = vunpack.c.l.b16 %v5730
      %v5773 = vunpack.c.h.b16 %v5730
      %v5774 = vunpack.c.l.b16 %v5731
      %v5775 = vunpack.c.h.b16 %v5731
      %v5776 = vunpack.c.l.b16 %v5732
      %v5777 = vunpack.c.h.b16 %v5732
      %v5778 = vunpack.c.l.b16 %v5733
      %v5779 = vunpack.c.h.b16 %v5733
      %v5780 = vunpack.c.l.b16 %v5734
      %v5781 = vunpack.c.h.b16 %v5734
      %v5782 = vunpack.c.l.b16 %v5735
      %v5783 = vunpack.c.h.b16 %v5735
      %v5784 = vpack.c.b16 %v5752, %v5752
      %v5785 = vpack.c.b16 %v5753, %v5753
      %v5786 = vpack.c.b16 %v5754, %v5754
      %v5787 = vpack.c.b16 %v5755, %v5755
      %v5788 = vpack.c.b16 %v5756, %v5756
      %v5789 = vpack.c.b16 %v5757, %v5757
      %v5790 = vpack.c.b16 %v5758, %v5758
      %v5791 = vpack.c.b16 %v5759, %v5759
      %v5792 = vpack.c.b16 %v5760, %v5760
      %v5793 = vpack.c.b16 %v5761, %v5761
      %v5794 = vpack.c.b16 %v5762, %v5762
      %v5795 = vpack.c.b16 %v5763, %v5763
      %v5796 = vpack.c.b16 %v5764, %v5764
      %v5797 = vpack.c.b16 %v5765, %v5765
      %v5798 = vpack.c.b16 %v5766, %v5766
      %v5799 = vpack.c.b16 %v5767, %v5767
      %v5800 = vpack.c.b16 %v5768, %v5768
      %v5801 = vpack.c.b16 %v5769, %v5769
      %v5802 = vpack.c.b16 %v5770, %v5770
      %v5803 = vpack.c.b16 %v5771, %v5771
      %v5804 = vpack.c.b16 %v5772, %v5772
      %v5805 = vpack.c.b16 %v5773, %v5773
      %v5806 = vpack.c.b16 %v5774, %v5774
      %v5807 = vpack.c.b16 %v5775, %v5775
      %v5808 = vpack.c.b16 %v5776, %v5776
      %v5809 = vpack.c.b16 %v5777, %v5777
      %v5810 = vpack.c.b16 %v5778, %v5778
      %v5811 = vpack.c.b16 %v5779, %v5779
      %v5812 = vpack.c.b16 %v5780, %v5780
      %v5813 = vpack.c.b16 %v5781, %v5781
      %v5814 = vpack.c.b16 %v5782, %v5782
      %v5815 = vpack.c.b16 %v5783, %v5783
      %vm5848 = vcmask 125952
      %5849 = vst.msk [vmem:[%s262] sm:$0xf] %vm5848, %v5784
      %5850 = vst.msk [vmem:[%s262 + $0x4] sm:$0xf] %vm5848, %v5785
      %5851 = vst.msk [vmem:[%s262 + $0x8] sm:$0xf] %vm5848, %v5786
      %5852 = vst.msk [vmem:[%s262 + $0xc] sm:$0xf] %vm5848, %v5787
      %5853 = vst.msk [vmem:[%s262 + $0x10] sm:$0xf] %vm5848, %v5788
      %5854 = vst.msk [vmem:[%s262 + $0x14] sm:$0xf] %vm5848, %v5789
      %5855 = vst.msk [vmem:[%s262 + $0x18] sm:$0xf] %vm5848, %v5790
      %5856 = vst.msk [vmem:[%s262 + $0x1c] sm:$0xf] %vm5848, %v5791
      %5857 = vst.msk [vmem:[%s262 + $0x20] sm:$0xf] %vm5848, %v5792
      %5858 = vst.msk [vmem:[%s262 + $0x24] sm:$0xf] %vm5848, %v5793
      %5859 = vst.msk [vmem:[%s262 + $0x28] sm:$0xf] %vm5848, %v5794
      %5860 = vst.msk [vmem:[%s262 + $0x2c] sm:$0xf] %vm5848, %v5795
      %5861 = vst.msk [vmem:[%s262 + $0x30] sm:$0xf] %vm5848, %v5796
      %5862 = vst.msk [vmem:[%s262 + $0x34] sm:$0xf] %vm5848, %v5797
      %5863 = vst.msk [vmem:[%s262 + $0x38] sm:$0xf] %vm5848, %v5798
      %5864 = vst.msk [vmem:[%s262 + $0x3c] sm:$0xf] %vm5848, %v5799
      %5865 = vst.msk [vmem:[%s262 + $0x40] sm:$0xf] %vm5848, %v5800
      %5866 = vst.msk [vmem:[%s262 + $0x44] sm:$0xf] %vm5848, %v5801
      %5867 = vst.msk [vmem:[%s262 + $0x48] sm:$0xf] %vm5848, %v5802
      %5868 = vst.msk [vmem:[%s262 + $0x4c] sm:$0xf] %vm5848, %v5803
      %5869 = vst.msk [vmem:[%s262 + $0x50] sm:$0xf] %vm5848, %v5804
      %5870 = vst.msk [vmem:[%s262 + $0x54] sm:$0xf] %vm5848, %v5805
      %5871 = vst.msk [vmem:[%s262 + $0x58] sm:$0xf] %vm5848, %v5806
      %5872 = vst.msk [vmem:[%s262 + $0x5c] sm:$0xf] %vm5848, %v5807
      %5873 = vst.msk [vmem:[%s262 + $0x60] sm:$0xf] %vm5848, %v5808
      %5874 = vst.msk [vmem:[%s262 + $0x64] sm:$0xf] %vm5848, %v5809
      %5875 = vst.msk [vmem:[%s262 + $0x68] sm:$0xf] %vm5848, %v5810
      %5876 = vst.msk [vmem:[%s262 + $0x6c] sm:$0xf] %vm5848, %v5811
      %5877 = vst.msk [vmem:[%s262 + $0x70] sm:$0xf] %vm5848, %v5812
      %5878 = vst.msk [vmem:[%s262 + $0x74] sm:$0xf] %vm5848, %v5813
      %5879 = vst.msk [vmem:[%s262 + $0x78] sm:$0xf] %vm5848, %v5814
      %5880 = vst.msk [vmem:[%s262 + $0x7c] sm:$0xf] %vm5848, %v5815
      %p5881 = scmp.lt.s32.totalorder %s19, 1
      %s5882 = scalar_select %p5881, %s19, 1
      %p5883 = scmp.lt.s32.totalorder %s20, 0
      %s5884 = scalar_select %p5883, %s20, 0
      %s5885 = smul.addr %s5882, 32
      %s5886 = sadd.s32 %s5884, %s5885
      %s5887 = smul.addr %s5886, 4
      %s5888 = scalar_lea.vmem %s4, %s5887
      // Predicated region
      $region37: #{basic_block_forward.2} parent=35 // pred_check
        %p5889 = pneg %p151
      $region38: #{basic_block_forward.2} parent=35 // pred_check_branch
        %5891 = sbr.rel (%p5889) target = $region40
      $region39: #{basic_block_forward.2} parent=35 // pred_region
        _
      $region40: #{basic_block_forward.2} parent=35 // pred_fallthru
        _
    $region36: #{basic_block_forward.2} parent=5 // pred_fallthru
      _
    %p5892 = scmp.le.s32.totalorder 2, %s10
    // Predicated region
    $region41: #{basic_block_forward.2} parent=5 // pred_check
      %p5893 = pneg %p5892
    $region42: #{basic_block_forward.2} parent=5 // pred_check_branch
      %5895 = sbr.rel (%p5893) target = $region44
    $region43: #{basic_block_forward.2} parent=5 // pred_region
      %s5896 = ssub.s32 %s10, 2
      // Predicated region
      $region45: #{basic_block_forward.2} parent=43 // pred_check
        %p5897 = pneg %p157
      $region46: #{basic_block_forward.2} parent=43 // pred_check_branch
        %5899 = sbr.rel (%p5897) target = $region48
      $region47: #{basic_block_forward.2} parent=43 // pred_region
        %p5900 = scmp.lt.s32.totalorder %s21, 1
        %s5901 = scalar_select %p5900, %s21, 1
        %p5902 = scmp.lt.s32.totalorder %s22, 0
        %s5903 = scalar_select %p5902, %s22, 0
        %s5904 = smul.addr %s5901, 32
        %s5905 = sadd.s32 %s5903, %s5904
        %s5906 = smul.addr %s5905, 4
        %s5907 = scalar_lea.vmem %s4, %s5906
      $region48: #{basic_block_forward.2} parent=43 // pred_fallthru
        _
    $region44: #{basic_block_forward.2} parent=5 // pred_fallthru
      _
  $region6: #{basic_block_forward.2} parent=0 // loop_footer
    %s14 = sadd.s32 1, %s10
  $region7: #{basic_block_forward.2} parent=0 // loop_footer_branch
    %9 = sbr.rel target = $region3
  $region8: #{basic_block_forward.2} parent=0 // loop_exit
    _

// kernel: basic_block_forward.3
$region0: #{basic_block_forward.3}
  #allocation0 [shape = 'u32[]', space=smem, size = 0x4, offset = 0x4, fixed_abs, tag = 'smem constant byte address 0x4 - core index']
  #allocation1 [shape = 'u32[144,128]{1,0:T(1,128)}', space=vmem, size = 0x12000, scoped, tag = 'internal scratch']
  #allocation2 [shape = 'f32[256,16]{1,0:T(8,128)}', space=vmem, size = 0x20000, scoped, tag = 'scratch operand']
  %s0 = inlined_call_operand.vmem [shape: bf16[2,18,18,16], index: 0, kind: input, shape index: {}]
  %s1 = inlined_call_operand.vmem [shape: bf16[9,16,16], index: 1, kind: input, shape index: {}]
  %s2 = inlined_call_operand.vmem [shape: f32[1,16], index: 2, kind: input, shape index: {}]
  %s3 = inlined_call_operand.vmem [shape: f32[1,16], index: 3, kind: input, shape index: {}]
  %s4 = inlined_call_operand.vmem [shape: f32[2,16,16,16], index: 4, kind: input, shape index: {}]
  %s5 = inlined_call_operand.vmem [shape: f32[2,16,16,16], index: 5, kind: output, shape index: {}]
  %s6 = sld [smem:[#allocation0]]
  $region53: #{basic_block_forward.3} parent=0
    _
  %s8 = ssub.s32 1, %s6
  %s9 = scalar_select 0, %s8, %s6
  loop: start=0, step=1, limit=4
  $region2: #{basic_block_forward.3} parent=0 // loop_pre_header
    _
  $region3: #{basic_block_forward.3} parent=0 // loop_header
    %s11 = sphi 0, %s15
    %p12 = scmp.ge.s32.totalorder %s11, 4
    %s18 = sphi 0, %s30
    %s19 = sphi 0, %s26
    %s20 = sphi 0, %s18
    %s21 = sphi 0, %s19
    %s22 = sphi 0, %s20
    %s23 = sphi 0, %s21
    %s33 = sphi 0, %s35
    %s36 = sphi 0, %s33
    %s37 = sphi 0, %s36
    %s53 = sphi 0, %s37
    %s59 = sphi 0, %s61
    %s62 = sphi 0, %s59
    %s63 = sphi 0, %s62
    %s79 = sphi 0, %s63
    %s85 = sphi 0, %s87
    %s88 = sphi 0, %s85
    %s89 = sphi 0, %s88
    %s105 = sphi 0, %s89
    %s111 = sphi 0, %s113
    %s114 = sphi 0, %s111
    %s115 = sphi 0, %s114
    %s131 = sphi 0, %s115
    %s139 = sphi 0, %s141
    %s142 = sphi 0, %s139
    %s143 = sphi 0, %s142
    %s159 = sphi 0, %s143
    %s167 = sphi 0, %s169
    %s170 = sphi 0, %s167
    %s171 = sphi 0, %s170
    %s187 = sphi 0, %s171
  $region4: #{basic_block_forward.3} parent=0 // loop_header_branch
    %14 = sbr.rel (%p12) target = $region8
  $region5: #{basic_block_forward.3} parent=0 // loop_body
    %s16 = ssub.s32 %s11, 1
    %s17 = ssub.s32 %s11, 2
    %s24 = sadd.s32 1, %s19
    %p25 = scmp.ge.s32.totalorder %s24, 1
    %s26 = scalar_select %p25, 0, %s24
    %s27 = sadd.s32 1, %s18
    %s28 = scalar_select %p25, %s27, %s18
    %p29 = scmp.ge.s32.totalorder %s28, 2
    %s30 = scalar_select %p29, 0, %s28
    %s31 = ssub.s32 %s18, %s30
    %p32 = scmp.eq.s32.totalorder %s31, 0
    %s34 = sadd.s32 %s33, 1
    %s35 = scalar_select %p32, %s33, %s34
    %p38 = pneg %p32
    %p39 = scmp.eq.s32.totalorder %s11, 1
    %p40 = por %p38, %p39
    %p41 = scmp.ne.s32.totalorder %s33, %s36
    %p42 = scmp.eq.s32.totalorder %s11, 0
    %p43 = por %p41, %p42
    %p44 = scmp.ne.s32.totalorder %s33, %s36
    %p45 = scmp.eq.s32.totalorder %s16, 1
    %p46 = por %p44, %p45
    %p47 = scmp.ne.s32.totalorder %s36, %s37
    %p48 = scmp.eq.s32.totalorder %s16, 0
    %p49 = por %p47, %p48
    %p50 = scmp.ne.s32.totalorder %s36, %s37
    %p51 = scmp.eq.s32.totalorder %s17, 1
    %p52 = por %p50, %p51
    %p54 = scmp.ne.s32.totalorder %s37, %s53
    %p55 = scmp.eq.s32.totalorder %s17, 0
    %p56 = por %p54, %p55
    %s57 = ssub.s32 %s19, %s26
    %p58 = scmp.eq.s32.totalorder %s57, 0
    %s60 = sadd.s32 %s59, 1
    %s61 = scalar_select %p58, %s59, %s60
    %p64 = pneg %p58
    %p65 = scmp.eq.s32.totalorder %s11, 1
    %p66 = por %p64, %p65
    %p67 = scmp.ne.s32.totalorder %s59, %s62
    %p68 = scmp.eq.s32.totalorder %s11, 0
    %p69 = por %p67, %p68
    %p70 = scmp.ne.s32.totalorder %s59, %s62
    %p71 = scmp.eq.s32.totalorder %s16, 1
    %p72 = por %p70, %p71
    %p73 = scmp.ne.s32.totalorder %s62, %s63
    %p74 = scmp.eq.s32.totalorder %s16, 0
    %p75 = por %p73, %p74
    %p76 = scmp.ne.s32.totalorder %s62, %s63
    %p77 = scmp.eq.s32.totalorder %s17, 1
    %p78 = por %p76, %p77
    %p80 = scmp.ne.s32.totalorder %s63, %s79
    %p81 = scmp.eq.s32.totalorder %s17, 0
    %p82 = por %p80, %p81
    %s83 = ssub.s32 %s19, %s26
    %p84 = scmp.eq.s32.totalorder %s83, 0
    %s86 = sadd.s32 %s85, 1
    %s87 = scalar_select %p84, %s85, %s86
    %p90 = pneg %p84
    %p91 = scmp.eq.s32.totalorder %s11, 1
    %p92 = por %p90, %p91
    %p93 = scmp.ne.s32.totalorder %s85, %s88
    %p94 = scmp.eq.s32.totalorder %s11, 0
    %p95 = por %p93, %p94
    %p96 = scmp.ne.s32.totalorder %s85, %s88
    %p97 = scmp.eq.s32.totalorder %s16, 1
    %p98 = por %p96, %p97
    %p99 = scmp.ne.s32.totalorder %s88, %s89
    %p100 = scmp.eq.s32.totalorder %s16, 0
    %p101 = por %p99, %p100
    %p102 = scmp.ne.s32.totalorder %s88, %s89
    %p103 = scmp.eq.s32.totalorder %s17, 1
    %p104 = por %p102, %p103
    %p106 = scmp.ne.s32.totalorder %s89, %s105
    %p107 = scmp.eq.s32.totalorder %s17, 0
    %p108 = por %p106, %p107
    %s109 = ssub.s32 %s19, %s26
    %p110 = scmp.eq.s32.totalorder %s109, 0
    %s112 = sadd.s32 %s111, 1
    %s113 = scalar_select %p110, %s111, %s112
    %p116 = pneg %p110
    %p117 = scmp.eq.s32.totalorder %s11, 1
    %p118 = por %p116, %p117
    %p119 = scmp.ne.s32.totalorder %s111, %s114
    %p120 = scmp.eq.s32.totalorder %s11, 0
    %p121 = por %p119, %p120
    %p122 = scmp.ne.s32.totalorder %s111, %s114
    %p123 = scmp.eq.s32.totalorder %s16, 1
    %p124 = por %p122, %p123
    %p125 = scmp.ne.s32.totalorder %s114, %s115
    %p126 = scmp.eq.s32.totalorder %s16, 0
    %p127 = por %p125, %p126
    %p128 = scmp.ne.s32.totalorder %s114, %s115
    %p129 = scmp.eq.s32.totalorder %s17, 1
    %p130 = por %p128, %p129
    %p132 = scmp.ne.s32.totalorder %s115, %s131
    %p133 = scmp.eq.s32.totalorder %s17, 0
    %p134 = por %p132, %p133
    %s135 = ssub.s32 %s18, %s30
    %s136 = ssub.s32 %s19, %s26
    %s137 = sor.u32 %s135, %s136
    %p138 = scmp.eq.s32.totalorder %s137, 0
    %s140 = sadd.s32 %s139, 1
    %s141 = scalar_select %p138, %s139, %s140
    %p144 = pneg %p138
    %p145 = scmp.eq.s32.totalorder %s11, 1
    %p146 = por %p144, %p145
    %p147 = scmp.ne.s32.totalorder %s139, %s142
    %p148 = scmp.eq.s32.totalorder %s11, 0
    %p149 = por %p147, %p148
    %p150 = scmp.ne.s32.totalorder %s139, %s142
    %p151 = scmp.eq.s32.totalorder %s16, 1
    %p152 = por %p150, %p151
    %p153 = scmp.ne.s32.totalorder %s142, %s143
    %p154 = scmp.eq.s32.totalorder %s16, 0
    %p155 = por %p153, %p154
    %p156 = scmp.ne.s32.totalorder %s142, %s143
    %p157 = scmp.eq.s32.totalorder %s17, 1
    %p158 = por %p156, %p157
    %p160 = scmp.ne.s32.totalorder %s143, %s159
    %p161 = scmp.eq.s32.totalorder %s17, 0
    %p162 = por %p160, %p161
    %s163 = ssub.s32 %s18, %s30
    %s164 = ssub.s32 %s19, %s26
    %s165 = sor.u32 %s163, %s164
    %p166 = scmp.eq.s32.totalorder %s165, 0
    %s168 = sadd.s32 %s167, 1
    %s169 = scalar_select %p166, %s167, %s168
    %p172 = pneg %p166
    %p173 = scmp.eq.s32.totalorder %s11, 1
    %p174 = por %p172, %p173
    %p175 = scmp.ne.s32.totalorder %s167, %s170
    %p176 = scmp.eq.s32.totalorder %s11, 0
    %p177 = por %p175, %p176
    %p178 = scmp.ne.s32.totalorder %s167, %s170
    %p179 = scmp.eq.s32.totalorder %s16, 1
    %p180 = por %p178, %p179
    %p181 = scmp.ne.s32.totalorder %s170, %s171
    %p182 = scmp.eq.s32.totalorder %s16, 0
    %p183 = por %p181, %p182
    %p184 = scmp.ne.s32.totalorder %s170, %s171
    %p185 = scmp.eq.s32.totalorder %s17, 1
    %p186 = por %p184, %p185
    %p188 = scmp.ne.s32.totalorder %s171, %s187
    %p189 = scmp.eq.s32.totalorder %s17, 0
    %p190 = por %p188, %p189
    %p191 = scmp.le.s32.totalorder 1, %s11
    %p192 = scmp.lt.s32.totalorder %s11, 3
    %p193 = pnand %p191, %p192
    %p194 = pneg %p193
    // Predicated region
    $region9: #{basic_block_forward.3} parent=5 // pred_check
      _
    $region10: #{basic_block_forward.3} parent=5 // pred_check_branch
      %196 = sbr.rel (%p193) target = $region12
    $region11: #{basic_block_forward.3} parent=5 // pred_region
      %s197 = ssub.s32 %s11, 1
      // Predicated region
      $region13: #{basic_block_forward.3} parent=11 // pred_check
        %p198 = pneg %p75
      $region14: #{basic_block_forward.3} parent=11 // pred_check_branch
        %200 = sbr.rel (%p198) target = $region16
      $region15: #{basic_block_forward.3} parent=11 // pred_region
        %p201 = scmp.lt.s32.totalorder %s21, 0
        %s202 = scalar_select %p201, %s21, 0
        %s203 = smul.addr %s202, 4
        %s204 = scalar_lea.vmem %s1, %s203
      $region16: #{basic_block_forward.3} parent=11 // pred_fallthru
        _
      // Predicated region
      $region17: #{basic_block_forward.3} parent=11 // pred_check
        %p205 = pneg %p101
      $region18: #{basic_block_forward.3} parent=11 // pred_check_branch
        %207 = sbr.rel (%p205) target = $region20
      $region19: #{basic_block_forward.3} parent=11 // pred_region
        %p208 = scmp.lt.s32.totalorder %s21, 0
        %s209 = scalar_select %p208, %s21, 0
        %s210 = scalar_lea.vmem %s2, %s209
      $region20: #{basic_block_forward.3} parent=11 // pred_fallthru
        _
      // Predicated region
      $region21: #{basic_block_forward.3} parent=11 // pred_check
        %p211 = pneg %p127
      $region22: #{basic_block_forward.3} parent=11 // pred_check_branch
        %213 = sbr.rel (%p211) target = $region24
      $region23: #{basic_block_forward.3} parent=11 // pred_region
        %p214 = scmp.lt.s32.totalorder %s21, 0
        %s215 = scalar_select %p214, %s21, 0
        %s216 = scalar_lea.vmem %s3, %s215
      $region24: #{basic_block_forward.3} parent=11 // pred_fallthru
        _
    $region12: #{basic_block_forward.3} parent=5 // pred_fallthru
      _
    %p217 = scmp.lt.s32.totalorder %s11, 2
    // Predicated region
    $region25: #{basic_block_forward.3} parent=5 // pred_check
      %p218 = pneg %p217
    $region26: #{basic_block_forward.3} parent=5 // pred_check_branch
      %220 = sbr.rel (%p218) target = $region28
    $region27: #{basic_block_forward.3} parent=5 // pred_region
      // Predicated region
      $region29: #{basic_block_forward.3} parent=27 // pred_check
        %p221 = pneg %p43
      $region30: #{basic_block_forward.3} parent=27 // pred_check_branch
        %223 = sbr.rel (%p221) target = $region32
      $region31: #{basic_block_forward.3} parent=27 // pred_region
        %p224 = scmp.lt.s32.totalorder %s18, 1
        %s225 = scalar_select %p224, %s18, 1
        %s226 = smul.addr %s225, 54
        %s227 = smul.addr %s226, 4
        %s228 = scalar_lea.vmem %s0, %s227
      $region32: #{basic_block_forward.3} parent=27 // pred_fallthru
        _
      // Predicated region
      $region33: #{basic_block_forward.3} parent=27 // pred_check
        %p229 = pneg %p149
      $region34: #{basic_block_forward.3} parent=27 // pred_check_branch
        %231 = sbr.rel (%p229) target = $region36
      $region35: #{basic_block_forward.3} parent=27 // pred_region
        %p232 = scmp.lt.s32.totalorder %s18, 1
        %s233 = scalar_select %p232, %s18, 1
        %p234 = scmp.lt.s32.totalorder %s19, 0
        %s235 = scalar_select %p234, %s19, 0
        %s236 = smul.addr %s233, 32
        %s237 = sadd.s32 %s235, %s236
        %s238 = smul.addr %s237, 8
        %s239 = scalar_lea.vmem %s4, %s238
      $region36: #{basic_block_forward.3} parent=27 // pred_fallthru
        _
    $region28: #{basic_block_forward.3} parent=5 // pred_fallthru
      _
    %p240 = scmp.le.s32.totalorder 1, %s11
    %p241 = scmp.lt.s32.totalorder %s11, 3
    %p242 = pnand %p240, %p241
    %p243 = pneg %p242
    // Predicated region
    $region37: #{basic_block_forward.3} parent=5 // pred_check
      _
    $region38: #{basic_block_forward.3} parent=5 // pred_check_branch
      %245 = sbr.rel (%p242) target = $region40
    $region39: #{basic_block_forward.3} parent=5 // pred_region
      %s246 = ssub.s32 %s11, 1
      %p247 = scmp.lt.s32.totalorder %s20, 1
      %s248 = scalar_select %p247, %s20, 1
      %s249 = smul.addr %s248, 54
      %s250 = smul.addr %s249, 4
      %s251 = scalar_lea.vmem %s0, %s250
      %p252 = pneg %p49
      %p253 = pneg %p46
      %p254 = scmp.lt.s32.totalorder %s21, 0
      %s255 = scalar_select %p254, %s21, 0
      %s256 = smul.addr %s255, 4
      %s257 = scalar_lea.vmem %s1, %s256
      %p258 = pneg %p75
      %p259 = pneg %p72
      %p260 = scmp.lt.s32.totalorder %s21, 0
      %s261 = scalar_select %p260, %s21, 0
      %s262 = scalar_lea.vmem %s2, %s261
      %p263 = pneg %p101
      %p264 = pneg %p98
      %p265 = scmp.lt.s32.totalorder %s21, 0
      %s266 = scalar_select %p265, %s21, 0
      %s267 = scalar_lea.vmem %s3, %s266
      %p268 = pneg %p127
      %p269 = pneg %p124
      %p270 = scmp.lt.s32.totalorder %s20, 1
      %s271 = scalar_select %p270, %s20, 1
      %p272 = scmp.lt.s32.totalorder %s21, 0
      %s273 = scalar_select %p272, %s21, 0
      %s274 = smul.addr %s271, 32
      %s275 = sadd.s32 %s273, %s274
      %s276 = smul.addr %s275, 8
      %s277 = scalar_lea.vmem %s4, %s276
      %p278 = pneg %p155
      %p279 = pneg %p152
      %p280 = pneg %p183
      %p281 = pneg %p180
      %p282 = scmp.lt.s32.totalorder %s20, 1
      %s283 = scalar_select %p282, %s20, 1
      %p284 = scmp.lt.s32.totalorder %s21, 0
      %s285 = scalar_select %p284, %s21, 0
      %s286 = smul.addr %s283, 32
      %s287 = sadd.s32 %s285, %s286
      %s288 = smul.addr %s287, 8
      %s289 = scalar_lea.vmem %s5, %s288
      %p290 = scmp.lt.s32.totalorder %s20, 1
      %s291 = scalar_select %p290, %s20, 1
      %s292 = smul.addr %s291, 54
      %s293 = smul.addr %s292, 4
      %s294 = scalar_lea.vmem %s0, %s293
      %p295 = scmp.lt.s32.totalorder %s21, 0
      %s296 = scalar_select %p295, %s21, 0
      %s297 = smul.addr %s296, 4
      %s298 = scalar_lea.vmem %s1, %s297
      %p299 = scmp.lt.s32.totalorder %s21, 0
      %s300 = scalar_select %p299, %s21, 0
      %s301 = scalar_lea.vmem %s2, %s300
      %p302 = scmp.lt.s32.totalorder %s21, 0
      %s303 = scalar_select %p302, %s21, 0
      %s304 = scalar_lea.vmem %s3, %s303
      %p305 = scmp.lt.s32.totalorder %s20, 1
      %s306 = scalar_select %p305, %s20, 1
      %p307 = scmp.lt.s32.totalorder %s21, 0
      %s308 = scalar_select %p307, %s21, 0
      %s309 = smul.addr %s306, 32
      %s310 = sadd.s32 %s308, %s309
      %s311 = smul.addr %s310, 8
      %s312 = scalar_lea.vmem %s4, %s311
      %p313 = scmp.lt.s32.totalorder %s20, 1
      %s314 = scalar_select %p313, %s20, 1
      %p315 = scmp.lt.s32.totalorder %s21, 0
      %s316 = scalar_select %p315, %s21, 0
      %s317 = smul.addr %s314, 32
      %s318 = sadd.s32 %s316, %s317
      %s319 = smul.addr %s318, 8
      %s320 = scalar_lea.vmem %s5, %s319
      %v322 = vld [vmem:[%s294] sm:$0xf]
      %v323 = vld [vmem:[%s294 + $0x4] sm:$0xf]
      %v324 = vld [vmem:[%s294 + $0xc] sm:$0xf]
      %v325 = vld [vmem:[%s294 + $0x10] sm:$0xf]
      %v326 = vld [vmem:[%s294 + $0x18] sm:$0xf]
      %v327 = vld [vmem:[%s294 + $0x1c] sm:$0xf]
      %v328 = vld [vmem:[%s294 + $0x24] sm:$0xf]
      %v329 = vld [vmem:[%s294 + $0x28] sm:$0xf]
      %v330 = vld [vmem:[%s294 + $0x30] sm:$0xf]
      %v331 = vld [vmem:[%s294 + $0x34] sm:$0xf]
      %v332 = vld [vmem:[%s294 + $0x3c] sm:$0xf]
      %v333 = vld [vmem:[%s294 + $0x40] sm:$0xf]
      %v334 = vld [vmem:[%s294 + $0x48] sm:$0xf]
      %v335 = vld [vmem:[%s294 + $0x4c] sm:$0xf]
      %v336 = vld [vmem:[%s294 + $0x54] sm:$0xf]
      %v337 = vld [vmem:[%s294 + $0x58] sm:$0xf]
      %v338 = vld [vmem:[%s294 + $0x60] sm:$0xf]
      %v339 = vld [vmem:[%s294 + $0x64] sm:$0xf]
      %v340 = vld [vmem:[%s294 + $0x6c] sm:$0xf]
      %v341 = vld [vmem:[%s294 + $0x70] sm:$0xf]
      %v342 = vld [vmem:[%s294 + $0x78] sm:$0xf]
      %v343 = vld [vmem:[%s294 + $0x7c] sm:$0xf]
      %v344 = vld [vmem:[%s294 + $0x84] sm:$0xf]
      %v345 = vld [vmem:[%s294 + $0x88] sm:$0xf]
      %v346 = vld [vmem:[%s294 + $0x90] sm:$0xf]
      %v347 = vld [vmem:[%s294 + $0x94] sm:$0xf]
      %v348 = vld [vmem:[%s294 + $0x9c] sm:$0xf]
      %v349 = vld [vmem:[%s294 + $0xa0] sm:$0xf]
      %v350 = vld [vmem:[%s294 + $0xa8] sm:$0xf]
      %v351 = vld [vmem:[%s294 + $0xac] sm:$0xf]
      %v352 = vld [vmem:[%s294 + $0xb4] sm:$0xf]
      %v353 = vld [vmem:[%s294 + $0xb8] sm:$0xf]
      %v354 = vld [vmem:[%s298] sm:$0xf]
      %v355 = vld [vmem:[%s298 + $0x4] sm:$0xf]
      %v388 = vunpack.c.l.b16 %v322
      %v389 = vunpack.c.l.b16 %v323
      %v390 = vunpack.c.l.b16 %v324
      %v391 = vunpack.c.l.b16 %v325
      %v392 = vunpack.c.l.b16 %v326
      %v393 = vunpack.c.l.b16 %v327
      %v394 = vunpack.c.l.b16 %v328
      %v395 = vunpack.c.l.b16 %v329
      %v396 = vunpack.c.l.b16 %v330
      %v397 = vunpack.c.l.b16 %v331
      %v398 = vunpack.c.l.b16 %v332
      %v399 = vunpack.c.l.b16 %v333
      %v400 = vunpack.c.l.b16 %v334
      %v401 = vunpack.c.l.b16 %v335
      %v402 = vunpack.c.l.b16 %v336
      %v403 = vunpack.c.l.b16 %v337
      %v404 = vunpack.c.l.b16 %v338
      %v405 = vunpack.c.l.b16 %v339
      %v406 = vunpack.c.l.b16 %v340
      %v407 = vunpack.c.l.b16 %v341
      %v408 = vunpack.c.l.b16 %v342
      %v409 = vunpack.c.l.b16 %v343
      %v410 = vunpack.c.l.b16 %v344
      %v411 = vunpack.c.l.b16 %v345
      %v412 = vunpack.c.l.b16 %v346
      %v413 = vunpack.c.l.b16 %v347
      %v414 = vunpack.c.l.b16 %v348
      %v415 = vunpack.c.l.b16 %v349
      %v416 = vunpack.c.l.b16 %v350
      %v417 = vunpack.c.l.b16 %v351
      %v418 = vunpack.c.l.b16 %v352
      %v419 = vunpack.c.l.b16 %v353
      %v420 = vpack.c.b16 %v389, %v388
      %v421 = vpack.c.b16 %v391, %v390
      %v422 = vpack.c.b16 %v393, %v392
      %v423 = vpack.c.b16 %v395, %v394
      %v424 = vpack.c.b16 %v397, %v396
      %v425 = vpack.c.b16 %v399, %v398
      %v426 = vpack.c.b16 %v401, %v400
      %v427 = vpack.c.b16 %v403, %v402
      %v428 = vpack.c.b16 %v405, %v404
      %v429 = vpack.c.b16 %v407, %v406
      %v430 = vpack.c.b16 %v409, %v408
      %v431 = vpack.c.b16 %v411, %v410
      %v432 = vpack.c.b16 %v413, %v412
      %v433 = vpack.c.b16 %v415, %v414
      %v434 = vpack.c.b16 %v417, %v416
      %v435 = vpack.c.b16 %v419, %v418
      %v438 = vunpack.c.l.b16 %v354
      %v439 = vunpack.c.l.b16 %v355
      %v440 = vpack.c.b16 %v439, %v438
      %vm442 = vcmask 130048
      %v444 = vsel %vm442, %v420, 0
      %v447 = vsel %vm442, %v421, 0
      %v450 = vsel %vm442, %v422, 0
      %v453 = vsel %vm442, %v423, 0
      %v456 = vsel %vm442, %v424, 0
      %v459 = vsel %vm442, %v425, 0
      %v462 = vsel %vm442, %v426, 0
      %v465 = vsel %vm442, %v427, 0
      %v468 = vsel %vm442, %v428, 0
      %v471 = vsel %vm442, %v429, 0
      %v474 = vsel %vm442, %v430, 0
      %v477 = vsel %vm442, %v431, 0
      %v480 = vsel %vm442, %v432, 0
      %v483 = vsel %vm442, %v433, 0
      %v486 = vsel %vm442, %v434, 0
      %v489 = vsel %vm442, %v435, 0
      %491 = vmatprep.subr.bf16.mxu0 0
      %492 = vmatpush1.bf16.msra.mxu0 0
      %493 = vmatprep.subr.bf16.mxu0 0
      %494 = vmatpush1.bf16.msra.mxu0 0
      %495 = vmatprep.subr.bf16.mxu0 0
      %496 = vmatpush1.bf16.msra.mxu0 0
      %497 = vmatprep.subr.bf16.mxu0 0
      %498 = vmatpush1.bf16.msra.mxu0 0
      %499 = vmatprep.subr.bf16.mxu0 0
      %500 = vmatpush1.bf16.msra.mxu0 0
      %501 = vmatprep.subr.bf16.mxu0 0
      %502 = vmatpush1.bf16.msra.mxu0 0
      %503 = vmatprep.subr.bf16.mxu0 0
      %504 = vmatpush1.bf16.msra.mxu0 0
      %505 = vmatprep.subr.bf16.mxu0 0
      %506 = vmatpush1.bf16.msra.mxu0 %v440
      %507 = vmatprep.subr.bf16.mxu0 0
      %508 = vmatpush2.bf16.msra.mxu0 0
      %509 = vmatprep.subr.bf16.mxu0 0
      %510 = vmatpush2.bf16.msra.mxu0 0
      %511 = vmatprep.subr.bf16.mxu0 0
      %512 = vmatpush2.bf16.msra.mxu0 0
      %513 = vmatprep.subr.bf16.mxu0 0
      %514 = vmatpush2.bf16.msra.mxu0 0
      %515 = vmatprep.subr.bf16.mxu0 0
      %516 = vmatpush2.bf16.msra.mxu0 0
      %517 = vmatprep.subr.bf16.mxu0 0
      %518 = vmatpush2.bf16.msra.mxu0 0
      %519 = vmatprep.subr.bf16.mxu0 0
      %520 = vmatpush2.bf16.msra.mxu0 0
      %521 = vmatprep.subr.bf16.mxu0 0
      %522 = vmatpush2.bf16.msra.mxu0 0
      %523 = vmatprep.mubr.bf16.mxu0 0
      %524 = vmatmul.mubr.bf16.gmra.mxu0 %v444
      %v525 = vpop.f32.mrf.mxu0
      %v526 = vadd.f32 0.0, %v525
      %v527 = vpop.f32.mrf.mxu0
      %v528 = vpop.f32.mrf.mxu0
      %v529 = vadd.f32 0.0, %v528
      %v530 = vpop.f32.mrf.mxu0
      %531 = vmatprep.mubr.bf16.mxu0 0
      %532 = vmatmul.mubr.bf16.gmra.mxu0 %v447
      %v533 = vpop.f32.mrf.mxu0
      %v534 = vadd.f32 0.0, %v533
      %v535 = vpop.f32.mrf.mxu0
      %v536 = vpop.f32.mrf.mxu0
      %v537 = vadd.f32 0.0, %v536
      %v538 = vpop.f32.mrf.mxu0
      %539 = vmatprep.mubr.bf16.mxu0 0
      %540 = vmatmul.mubr.bf16.gmra.mxu0 %v450
      %v541 = vpop.f32.mrf.mxu0
      %v542 = vadd.f32 0.0, %v541
      %v543 = vpop.f32.mrf.mxu0
      %v544 = vpop.f32.mrf.mxu0
      %v545 = vadd.f32 0.0, %v544
      %v546 = vpop.f32.mrf.mxu0
      %547 = vmatprep.mubr.bf16.mxu0 0
      %548 = vmatmul.mubr.bf16.gmra.mxu0 %v453
      %v549 = vpop.f32.mrf.mxu0
      %v550 = vadd.f32 0.0, %v549
      %v551 = vpop.f32.mrf.mxu0
      %v552 = vpop.f32.mrf.mxu0
      %v553 = vadd.f32 0.0, %v552
      %v554 = vpop.f32.mrf.mxu0
      %555 = vmatprep.mubr.bf16.mxu0 0
      %556 = vmatmul.mubr.bf16.gmra.mxu0 %v456
      %v557 = vpop.f32.mrf.mxu0
      %v558 = vadd.f32 0.0, %v557
      %v559 = vpop.f32.mrf.mxu0
      %v560 = vpop.f32.mrf.mxu0
      %v561 = vadd.f32 0.0, %v560
      %v562 = vpop.f32.mrf.mxu0
      %563 = vmatprep.mubr.bf16.mxu0 0
      %564 = vmatmul.mubr.bf16.gmra.mxu0 %v459
      %v565 = vpop.f32.mrf.mxu0
      %v566 = vadd.f32 0.0, %v565
      %v567 = vpop.f32.mrf.mxu0
      %v568 = vpop.f32.mrf.mxu0
      %v569 = vadd.f32 0.0, %v568
      %v570 = vpop.f32.mrf.mxu0
      %571 = vmatprep.mubr.bf16.mxu0 0
      %572 = vmatmul.mubr.bf16.gmra.mxu0 %v462
      %v573 = vpop.f32.mrf.mxu0
      %v574 = vadd.f32 0.0, %v573
      %v575 = vpop.f32.mrf.mxu0
      %v576 = vpop.f32.mrf.mxu0
      %v577 = vadd.f32 0.0, %v576
      %v578 = vpop.f32.mrf.mxu0
      %579 = vmatprep.mubr.bf16.mxu0 0
      %580 = vmatmul.mubr.bf16.gmra.mxu0 %v465
      %v581 = vpop.f32.mrf.mxu0
      %v582 = vadd.f32 0.0, %v581
      %v583 = vpop.f32.mrf.mxu0
      %v584 = vpop.f32.mrf.mxu0
      %v585 = vadd.f32 0.0, %v584
      %v586 = vpop.f32.mrf.mxu0
      %587 = vmatprep.mubr.bf16.mxu0 0
      %588 = vmatmul.mubr.bf16.gmra.mxu0 %v468
      %v589 = vpop.f32.mrf.mxu0
      %v590 = vadd.f32 0.0, %v589
      %v591 = vpop.f32.mrf.mxu0
      %v592 = vpop.f32.mrf.mxu0
      %v593 = vadd.f32 0.0, %v592
      %v594 = vpop.f32.mrf.mxu0
      %595 = vmatprep.mubr.bf16.mxu0 0
      %596 = vmatmul.mubr.bf16.gmra.mxu0 %v471
      %v597 = vpop.f32.mrf.mxu0
      %v598 = vadd.f32 0.0, %v597
      %v599 = vpop.f32.mrf.mxu0
      %v600 = vpop.f32.mrf.mxu0
      %v601 = vadd.f32 0.0, %v600
      %v602 = vpop.f32.mrf.mxu0
      %603 = vmatprep.mubr.bf16.mxu0 0
      %604 = vmatmul.mubr.bf16.gmra.mxu0 %v474
      %v605 = vpop.f32.mrf.mxu0
      %v606 = vadd.f32 0.0, %v605
      %v607 = vpop.f32.mrf.mxu0
      %v608 = vpop.f32.mrf.mxu0
      %v609 = vadd.f32 0.0, %v608
      %v610 = vpop.f32.mrf.mxu0
      %611 = vmatprep.mubr.bf16.mxu0 0
      %612 = vmatmul.mubr.bf16.gmra.mxu0 %v477
      %v613 = vpop.f32.mrf.mxu0
      %v614 = vadd.f32 0.0, %v613
      %v615 = vpop.f32.mrf.mxu0
      %v616 = vpop.f32.mrf.mxu0
      %v617 = vadd.f32 0.0, %v616
      %v618 = vpop.f32.mrf.mxu0
      %619 = vmatprep.mubr.bf16.mxu0 0
      %620 = vmatmul.mubr.bf16.gmra.mxu0 %v480
      %v621 = vpop.f32.mrf.mxu0
      %v622 = vadd.f32 0.0, %v621
      %v623 = vpop.f32.mrf.mxu0
      %v624 = vpop.f32.mrf.mxu0
      %v625 = vadd.f32 0.0, %v624
      %v626 = vpop.f32.mrf.mxu0
      %627 = vmatprep.mubr.bf16.mxu0 0
      %628 = vmatmul.mubr.bf16.gmra.mxu0 %v483
      %v629 = vpop.f32.mrf.mxu0
      %v630 = vadd.f32 0.0, %v629
      %v631 = vpop.f32.mrf.mxu0
      %v632 = vpop.f32.mrf.mxu0
      %v633 = vadd.f32 0.0, %v632
      %v634 = vpop.f32.mrf.mxu0
      %635 = vmatprep.mubr.bf16.mxu0 0
      %636 = vmatmul.mubr.bf16.gmra.mxu0 %v486
      %v637 = vpop.f32.mrf.mxu0
      %v638 = vadd.f32 0.0, %v637
      %v639 = vpop.f32.mrf.mxu0
      %v640 = vpop.f32.mrf.mxu0
      %v641 = vadd.f32 0.0, %v640
      %v642 = vpop.f32.mrf.mxu0
      %643 = vmatprep.mubr.bf16.mxu0 0
      %644 = vmatmul.mubr.bf16.gmra.mxu0 %v489
      %v645 = vpop.f32.mrf.mxu0
      %v646 = vadd.f32 0.0, %v645
      %v647 = vpop.f32.mrf.mxu0
      %v648 = vpop.f32.mrf.mxu0
      %v649 = vadd.f32 0.0, %v648
      %v650 = vpop.f32.mrf.mxu0
      %651 = vdwg.mxu0
      %652 = vst.msk [vmem:[#allocation2] sm:$0xff] %vm442, %v526
      %653 = vst.msk [vmem:[#allocation2 + $0x8] sm:$0xff] %vm442, %v529
      %654 = vst.msk [vmem:[#allocation2 + $0x10] sm:$0xff] %vm442, %v534
      %655 = vst.msk [vmem:[#allocation2 + $0x18] sm:$0xff] %vm442, %v537
      %656 = vst.msk [vmem:[#allocation2 + $0x20] sm:$0xff] %vm442, %v542
      %657 = vst.msk [vmem:[#allocation2 + $0x28] sm:$0xff] %vm442, %v545
      %658 = vst.msk [vmem:[#allocation2 + $0x30] sm:$0xff] %vm442, %v550
      %659 = vst.msk [vmem:[#allocation2 + $0x38] sm:$0xff] %vm442, %v553
      %660 = vst.msk [vmem:[#allocation2 + $0x40] sm:$0xff] %vm442, %v558
      %661 = vst.msk [vmem:[#allocation2 + $0x48] sm:$0xff] %vm442, %v561
      %662 = vst.msk [vmem:[#allocation2 + $0x50] sm:$0xff] %vm442, %v566
      %663 = vst.msk [vmem:[#allocation2 + $0x58] sm:$0xff] %vm442, %v569
      %664 = vst.msk [vmem:[#allocation2 + $0x60] sm:$0xff] %vm442, %v574
      %665 = vst.msk [vmem:[#allocation2 + $0x68] sm:$0xff] %vm442, %v577
      %666 = vst.msk [vmem:[#allocation2 + $0x70] sm:$0xff] %vm442, %v582
      %667 = vst.msk [vmem:[#allocation2 + $0x78] sm:$0xff] %vm442, %v585
      %668 = vst.msk [vmem:[#allocation2 + $0x80] sm:$0xff] %vm442, %v590
      %669 = vst.msk [vmem:[#allocation2 + $0x88] sm:$0xff] %vm442, %v593
      %670 = vst.msk [vmem:[#allocation2 + $0x90] sm:$0xff] %vm442, %v598
      %671 = vst.msk [vmem:[#allocation2 + $0x98] sm:$0xff] %vm442, %v601
      %672 = vst.msk [vmem:[#allocation2 + $0xa0] sm:$0xff] %vm442, %v606
      %673 = vst.msk [vmem:[#allocation2 + $0xa8] sm:$0xff] %vm442, %v609
      %674 = vst.msk [vmem:[#allocation2 + $0xb0] sm:$0xff] %vm442, %v614
      %675 = vst.msk [vmem:[#allocation2 + $0xb8] sm:$0xff] %vm442, %v617
      %676 = vst.msk [vmem:[#allocation2 + $0xc0] sm:$0xff] %vm442, %v622
      %677 = vst.msk [vmem:[#allocation2 + $0xc8] sm:$0xff] %vm442, %v625
      %678 = vst.msk [vmem:[#allocation2 + $0xd0] sm:$0xff] %vm442, %v630
      %679 = vst.msk [vmem:[#allocation2 + $0xd8] sm:$0xff] %vm442, %v633
      %680 = vst.msk [vmem:[#allocation2 + $0xe0] sm:$0xff] %vm442, %v638
      %681 = vst.msk [vmem:[#allocation2 + $0xe8] sm:$0xff] %vm442, %v641
      %682 = vst.msk [vmem:[#allocation2 + $0xf0] sm:$0xff] %vm442, %v646
      %683 = vst.msk [vmem:[#allocation2 + $0xf8] sm:$0xff] %vm442, %v649
      %v684 = vld [vmem:[%s294] sm:$0xf]
      %v685 = vld [vmem:[%s294 + $0x4] sm:$0xf]
      %v686 = vld [vmem:[%s294 + $0x8] sm:$0x1]
      %v687 = vld [vmem:[%s294 + $0xc] sm:$0xf]
      %v688 = vld [vmem:[%s294 + $0x10] sm:$0xf]
      %v689 = vld [vmem:[%s294 + $0x14] sm:$0x1]
      %v690 = vld [vmem:[%s294 + $0x18] sm:$0xf]
      %v691 = vld [vmem:[%s294 + $0x1c] sm:$0xf]
      %v692 = vld [vmem:[%s294 + $0x20] sm:$0x1]
      %v693 = vld [vmem:[%s294 + $0x24] sm:$0xf]
      %v694 = vld [vmem:[%s294 + $0x28] sm:$0xf]
      %v695 = vld [vmem:[%s294 + $0x2c] sm:$0x1]
      %v696 = vld [vmem:[%s294 + $0x30] sm:$0xf]
      %v697 = vld [vmem:[%s294 + $0x34] sm:$0xf]
      %v698 = vld [vmem:[%s294 + $0x38] sm:$0x1]
      %v699 = vld [vmem:[%s294 + $0x3c] sm:$0xf]
      %v700 = vld [vmem:[%s294 + $0x40] sm:$0xf]
      %v701 = vld [vmem:[%s294 + $0x44] sm:$0x1]
      %v702 = vld [vmem:[%s294 + $0x48] sm:$0xf]
      %v703 = vld [vmem:[%s294 + $0x4c] sm:$0xf]
      %v704 = vld [vmem:[%s294 + $0x50] sm:$0x1]
      %v705 = vld [vmem:[%s294 + $0x54] sm:$0xf]
      %v706 = vld [vmem:[%s294 + $0x58] sm:$0xf]
      %v707 = vld [vmem:[%s294 + $0x5c] sm:$0x1]
      %v708 = vld [vmem:[%s294 + $0x60] sm:$0xf]
      %v709 = vld [vmem:[%s294 + $0x64] sm:$0xf]
      %v710 = vld [vmem:[%s294 + $0x68] sm:$0x1]
      %v711 = vld [vmem:[%s294 + $0x6c] sm:$0xf]
      %v712 = vld [vmem:[%s294 + $0x70] sm:$0xf]
      %v713 = vld [vmem:[%s294 + $0x74] sm:$0x1]
      %v714 = vld [vmem:[%s294 + $0x78] sm:$0xf]
      %v715 = vld [vmem:[%s294 + $0x7c] sm:$0xf]
      %v716 = vld [vmem:[%s294 + $0x80] sm:$0x1]
      %v717 = vld [vmem:[%s294 + $0x84] sm:$0xf]
      %v718 = vld [vmem:[%s294 + $0x88] sm:$0xf]
      %v719 = vld [vmem:[%s294 + $0x8c] sm:$0x1]
      %v720 = vld [vmem:[%s294 + $0x90] sm:$0xf]
      %v721 = vld [vmem:[%s294 + $0x94] sm:$0xf]
      %v722 = vld [vmem:[%s294 + $0x98] sm:$0x1]
      %v723 = vld [vmem:[%s294 + $0x9c] sm:$0xf]
      %v724 = vld [vmem:[%s294 + $0xa0] sm:$0xf]
      %v725 = vld [vmem:[%s294 + $0xa4] sm:$0x1]
      %v726 = vld [vmem:[%s294 + $0xa8] sm:$0xf]
      %v727 = vld [vmem:[%s294 + $0xac] sm:$0xf]
      %v728 = vld [vmem:[%s294 + $0xb0] sm:$0x1]
      %v729 = vld [vmem:[%s294 + $0xb4] sm:$0xf]
      %v730 = vld [vmem:[%s294 + $0xb8] sm:$0xf]
      %v731 = vld [vmem:[%s294 + $0xbc] sm:$0x1]
      %vm732 = vsmask.f32 3328
      %vm733 = vsmask.f32 7440
      %vm734 = vmor %vm732, %vm733
      %v736 = vshrl.u32 %v684, 16
      %v738 = vrot.slane %v736, 4
      %v739 = vshll.u32 %v684, 16
      %v741 = vrot.slane %v739, 5
      %v742 = vor.u32 %v738, %v741
      %v743 = vrot.slane %v742, 4
      %v745 = vshll.u32 %v685, 16
      %v747 = vrot.slane %v745, 5
      %v748 = vsel %vm734, %v743, %v747
      %v749 = vshrl.u32 %v685, 16
      %v751 = vrot.slane %v749, 4
      %v752 = vor.u32 %v751, %v747
      %v753 = vrot.slane %v752, 4
      %v755 = vshll.u32 %v686, 16
      %v757 = vrot.slane %v755, 5
      %v758 = vsel %vm734, %v753, %v757
      %v760 = vshrl.u32 %v687, 16
      %v762 = vrot.slane %v760, 4
      %v763 = vshll.u32 %v687, 16
      %v765 = vrot.slane %v763, 5
      %v766 = vor.u32 %v762, %v765
      %v767 = vrot.slane %v766, 4
      %v769 = vshll.u32 %v688, 16
      %v771 = vrot.slane %v769, 5
      %v772 = vsel %vm734, %v767, %v771
      %v773 = vshrl.u32 %v688, 16
      %v775 = vrot.slane %v773, 4
      %v776 = vor.u32 %v775, %v771
      %v777 = vrot.slane %v776, 4
      %v779 = vshll.u32 %v689, 16
      %v781 = vrot.slane %v779, 5
      %v782 = vsel %vm734, %v777, %v781
      %v784 = vshrl.u32 %v690, 16
      %v786 = vrot.slane %v784, 4
      %v787 = vshll.u32 %v690, 16
      %v789 = vrot.slane %v787, 5
      %v790 = vor.u32 %v786, %v789
      %v791 = vrot.slane %v790, 4
      %v793 = vshll.u32 %v691, 16
      %v795 = vrot.slane %v793, 5
      %v796 = vsel %vm734, %v791, %v795
      %v797 = vshrl.u32 %v691, 16
      %v799 = vrot.slane %v797, 4
      %v800 = vor.u32 %v799, %v795
      %v801 = vrot.slane %v800, 4
      %v803 = vshll.u32 %v692, 16
      %v805 = vrot.slane %v803, 5
      %v806 = vsel %vm734, %v801, %v805
      %v808 = vshrl.u32 %v693, 16
      %v810 = vrot.slane %v808, 4
      %v811 = vshll.u32 %v693, 16
      %v813 = vrot.slane %v811, 5
      %v814 = vor.u32 %v810, %v813
      %v815 = vrot.slane %v814, 4
      %v817 = vshll.u32 %v694, 16
      %v819 = vrot.slane %v817, 5
      %v820 = vsel %vm734, %v815, %v819
      %v821 = vshrl.u32 %v694, 16
      %v823 = vrot.slane %v821, 4
      %v824 = vor.u32 %v823, %v819
      %v825 = vrot.slane %v824, 4
      %v827 = vshll.u32 %v695, 16
      %v829 = vrot.slane %v827, 5
      %v830 = vsel %vm734, %v825, %v829
      %v832 = vshrl.u32 %v696, 16
      %v834 = vrot.slane %v832, 4
      %v835 = vshll.u32 %v696, 16
      %v837 = vrot.slane %v835, 5
      %v838 = vor.u32 %v834, %v837
      %v839 = vrot.slane %v838, 4
      %v841 = vshll.u32 %v697, 16
      %v843 = vrot.slane %v841, 5
      %v844 = vsel %vm734, %v839, %v843
      %v845 = vshrl.u32 %v697, 16
      %v847 = vrot.slane %v845, 4
      %v848 = vor.u32 %v847, %v843
      %v849 = vrot.slane %v848, 4
      %v851 = vshll.u32 %v698, 16
      %v853 = vrot.slane %v851, 5
      %v854 = vsel %vm734, %v849, %v853
      %v856 = vshrl.u32 %v699, 16
      %v858 = vrot.slane %v856, 4
      %v859 = vshll.u32 %v699, 16
      %v861 = vrot.slane %v859, 5
      %v862 = vor.u32 %v858, %v861
      %v863 = vrot.slane %v862, 4
      %v865 = vshll.u32 %v700, 16
      %v867 = vrot.slane %v865, 5
      %v868 = vsel %vm734, %v863, %v867
      %v869 = vshrl.u32 %v700, 16
      %v871 = vrot.slane %v869, 4
      %v872 = vor.u32 %v871, %v867
      %v873 = vrot.slane %v872, 4
      %v875 = vshll.u32 %v701, 16
      %v877 = vrot.slane %v875, 5
      %v878 = vsel %vm734, %v873, %v877
      %v880 = vshrl.u32 %v702, 16
      %v882 = vrot.slane %v880, 4
      %v883 = vshll.u32 %v702, 16
      %v885 = vrot.slane %v883, 5
      %v886 = vor.u32 %v882, %v885
      %v887 = vrot.slane %v886, 4
      %v889 = vshll.u32 %v703, 16
      %v891 = vrot.slane %v889, 5
      %v892 = vsel %vm734, %v887, %v891
      %v893 = vshrl.u32 %v703, 16
      %v895 = vrot.slane %v893, 4
      %v896 = vor.u32 %v895, %v891
      %v897 = vrot.slane %v896, 4
      %v899 = vshll.u32 %v704, 16
      %v901 = vrot.slane %v899, 5
      %v902 = vsel %vm734, %v897, %v901
      %v904 = vshrl.u32 %v705, 16
      %v906 = vrot.slane %v904, 4
      %v907 = vshll.u32 %v705, 16
      %v909 = vrot.slane %v907, 5
      %v910 = vor.u32 %v906, %v909
      %v911 = vrot.slane %v910, 4
      %v913 = vshll.u32 %v706, 16
      %v915 = vrot.slane %v913, 5
      %v916 = vsel %vm734, %v911, %v915
      %v917 = vshrl.u32 %v706, 16
      %v919 = vrot.slane %v917, 4
      %v920 = vor.u32 %v919, %v915
      %v921 = vrot.slane %v920, 4
      %v923 = vshll.u32 %v707, 16
      %v925 = vrot.slane %v923, 5
      %v926 = vsel %vm734, %v921, %v925
      %v928 = vshrl.u32 %v708, 16
      %v930 = vrot.slane %v928, 4
      %v931 = vshll.u32 %v708, 16
      %v933 = vrot.slane %v931, 5
      %v934 = vor.u32 %v930, %v933
      %v935 = vrot.slane %v934, 4
      %v937 = vshll.u32 %v709, 16
      %v939 = vrot.slane %v937, 5
      %v940 = vsel %vm734, %v935, %v939
      %v941 = vshrl.u32 %v709, 16
      %v943 = vrot.slane %v941, 4
      %v944 = vor.u32 %v943, %v939
      %v945 = vrot.slane %v944, 4
      %v947 = vshll.u32 %v710, 16
      %v949 = vrot.slane %v947, 5
      %v950 = vsel %vm734, %v945, %v949
      %v952 = vshrl.u32 %v711, 16
      %v954 = vrot.slane %v952, 4
      %v955 = vshll.u32 %v711, 16
      %v957 = vrot.slane %v955, 5
      %v958 = vor.u32 %v954, %v957
      %v959 = vrot.slane %v958, 4
      %v961 = vshll.u32 %v712, 16
      %v963 = vrot.slane %v961, 5
      %v964 = vsel %vm734, %v959, %v963
      %v965 = vshrl.u32 %v712, 16
      %v967 = vrot.slane %v965, 4
      %v968 = vor.u32 %v967, %v963
      %v969 = vrot.slane %v968, 4
      %v971 = vshll.u32 %v713, 16
      %v973 = vrot.slane %v971, 5
      %v974 = vsel %vm734, %v969, %v973
      %v976 = vshrl.u32 %v714, 16
      %v978 = vrot.slane %v976, 4
      %v979 = vshll.u32 %v714, 16
      %v981 = vrot.slane %v979, 5
      %v982 = vor.u32 %v978, %v981
      %v983 = vrot.slane %v982, 4
      %v985 = vshll.u32 %v715, 16
      %v987 = vrot.slane %v985, 5
      %v988 = vsel %vm734, %v983, %v987
      %v989 = vshrl.u32 %v715, 16
      %v991 = vrot.slane %v989, 4
      %v992 = vor.u32 %v991, %v987
      %v993 = vrot.slane %v992, 4
      %v995 = vshll.u32 %v716, 16
      %v997 = vrot.slane %v995, 5
      %v998 = vsel %vm734, %v993, %v997
      %v1000 = vshrl.u32 %v717, 16
      %v1002 = vrot.slane %v1000, 4
      %v1003 = vshll.u32 %v717, 16
      %v1005 = vrot.slane %v1003, 5
      %v1006 = vor.u32 %v1002, %v1005
      %v1007 = vrot.slane %v1006, 4
      %v1009 = vshll.u32 %v718, 16
      %v1011 = vrot.slane %v1009, 5
      %v1012 = vsel %vm734, %v1007, %v1011
      %v1013 = vshrl.u32 %v718, 16
      %v1015 = vrot.slane %v1013, 4
      %v1016 = vor.u32 %v1015, %v1011
      %v1017 = vrot.slane %v1016, 4
      %v1019 = vshll.u32 %v719, 16
      %v1021 = vrot.slane %v1019, 5
      %v1022 = vsel %vm734, %v1017, %v1021
      %v1024 = vshrl.u32 %v720, 16
      %v1026 = vrot.slane %v1024, 4
      %v1027 = vshll.u32 %v720, 16
      %v1029 = vrot.slane %v1027, 5
      %v1030 = vor.u32 %v1026, %v1029
      %v1031 = vrot.slane %v1030, 4
      %v1033 = vshll.u32 %v721, 16
      %v1035 = vrot.slane %v1033, 5
      %v1036 = vsel %vm734, %v1031, %v1035
      %v1037 = vshrl.u32 %v721, 16
      %v1039 = vrot.slane %v1037, 4
      %v1040 = vor.u32 %v1039, %v1035
      %v1041 = vrot.slane %v1040, 4
      %v1043 = vshll.u32 %v722, 16
      %v1045 = vrot.slane %v1043, 5
      %v1046 = vsel %vm734, %v1041, %v1045
      %v1048 = vshrl.u32 %v723, 16
      %v1050 = vrot.slane %v1048, 4
      %v1051 = vshll.u32 %v723, 16
      %v1053 = vrot.slane %v1051, 5
      %v1054 = vor.u32 %v1050, %v1053
      %v1055 = vrot.slane %v1054, 4
      %v1057 = vshll.u32 %v724, 16
      %v1059 = vrot.slane %v1057, 5
      %v1060 = vsel %vm734, %v1055, %v1059
      %v1061 = vshrl.u32 %v724, 16
      %v1063 = vrot.slane %v1061, 4
      %v1064 = vor.u32 %v1063, %v1059
      %v1065 = vrot.slane %v1064, 4
      %v1067 = vshll.u32 %v725, 16
      %v1069 = vrot.slane %v1067, 5
      %v1070 = vsel %vm734, %v1065, %v1069
      %v1072 = vshrl.u32 %v726, 16
      %v1074 = vrot.slane %v1072, 4
      %v1075 = vshll.u32 %v726, 16
      %v1077 = vrot.slane %v1075, 5
      %v1078 = vor.u32 %v1074, %v1077
      %v1079 = vrot.slane %v1078, 4
      %v1081 = vshll.u32 %v727, 16
      %v1083 = vrot.slane %v1081, 5
      %v1084 = vsel %vm734, %v1079, %v1083
      %v1085 = vshrl.u32 %v727, 16
      %v1087 = vrot.slane %v1085, 4
      %v1088 = vor.u32 %v1087, %v1083
      %v1089 = vrot.slane %v1088, 4
      %v1091 = vshll.u32 %v728, 16
      %v1093 = vrot.slane %v1091, 5
      %v1094 = vsel %vm734, %v1089, %v1093
      %v1096 = vshrl.u32 %v729, 16
      %v1098 = vrot.slane %v1096, 4
      %v1099 = vshll.u32 %v729, 16
      %v1101 = vrot.slane %v1099, 5
      %v1102 = vor.u32 %v1098, %v1101
      %v1103 = vrot.slane %v1102, 4
      %v1105 = vshll.u32 %v730, 16
      %v1107 = vrot.slane %v1105, 5
      %v1108 = vsel %vm734, %v1103, %v1107
      %v1109 = vshrl.u32 %v730, 16
      %v1111 = vrot.slane %v1109, 4
      %v1112 = vor.u32 %v1111, %v1107
      %v1113 = vrot.slane %v1112, 4
      %v1115 = vshll.u32 %v731, 16
      %v1117 = vrot.slane %v1115, 5
      %v1118 = vsel %vm734, %v1113, %v1117
      %s1119 = scalar_lea.vmem %s298, 8
      %v1120 = vld [vmem:[%s1119] sm:$0xf]
      %v1121 = vld [vmem:[%s1119 + $0x4] sm:$0xf]
      %v1122 = vunpack.c.l.b16 %v748
      %v1123 = vunpack.c.l.b16 %v758
      %v1124 = vunpack.c.l.b16 %v772
      %v1125 = vunpack.c.l.b16 %v782
      %v1126 = vunpack.c.l.b16 %v796
      %v1127 = vunpack.c.l.b16 %v806
      %v1128 = vunpack.c.l.b16 %v820
      %v1129 = vunpack.c.l.b16 %v830
      %v1130 = vunpack.c.l.b16 %v844
      %v1131 = vunpack.c.l.b16 %v854
      %v1132 = vunpack.c.l.b16 %v868
      %v1133 = vunpack.c.l.b16 %v878
      %v1134 = vunpack.c.l.b16 %v892
      %v1135 = vunpack.c.l.b16 %v902
      %v1136 = vunpack.c.l.b16 %v916
      %v1137 = vunpack.c.l.b16 %v926
      %v1138 = vunpack.c.l.b16 %v940
      %v1139 = vunpack.c.l.b16 %v950
      %v1140 = vunpack.c.l.b16 %v964
      %v1141 = vunpack.c.l.b16 %v974
      %v1142 = vunpack.c.l.b16 %v988
      %v1143 = vunpack.c.l.b16 %v998
      %v1144 = vunpack.c.l.b16 %v1012
      %v1145 = vunpack.c.l.b16 %v1022
      %v1146 = vunpack.c.l.b16 %v1036
      %v1147 = vunpack.c.l.b16 %v1046
      %v1148 = vunpack.c.l.b16 %v1060
      %v1149 = vunpack.c.l.b16 %v1070
      %v1150 = vunpack.c.l.b16 %v1084
      %v1151 = vunpack.c.l.b16 %v1094
      %v1152 = vunpack.c.l.b16 %v1108
      %v1153 = vunpack.c.l.b16 %v1118
      %v1154 = vpack.c.b16 %v1123, %v1122
      %v1155 = vpack.c.b16 %v1125, %v1124
      %v1156 = vpack.c.b16 %v1127, %v1126
      %v1157 = vpack.c.b16 %v1129, %v1128
      %v1158 = vpack.c.b16 %v1131, %v1130
      %v1159 = vpack.c.b16 %v1133, %v1132
      %v1160 = vpack.c.b16 %v1135, %v1134
      %v1161 = vpack.c.b16 %v1137, %v1136
      %v1162 = vpack.c.b16 %v1139, %v1138
      %v1163 = vpack.c.b16 %v1141, %v1140
      %v1164 = vpack.c.b16 %v1143, %v1142
      %v1165 = vpack.c.b16 %v1145, %v1144
      %v1166 = vpack.c.b16 %v1147, %v1146
      %v1167 = vpack.c.b16 %v1149, %v1148
      %v1168 = vpack.c.b16 %v1151, %v1150
      %v1169 = vpack.c.b16 %v1153, %v1152
      %v1172 = vunpack.c.l.b16 %v1120
      %v1173 = vunpack.c.l.b16 %v1121
      %v1174 = vpack.c.b16 %v1173, %v1172
      %v1177 = vsel %vm442, %v1154, 0
      %v1180 = vsel %vm442, %v1155, 0
      %v1183 = vsel %vm442, %v1156, 0
      %v1186 = vsel %vm442, %v1157, 0
      %v1189 = vsel %vm442, %v1158, 0
      %v1192 = vsel %vm442, %v1159, 0
      %v1195 = vsel %vm442, %v1160, 0
      %v1198 = vsel %vm442, %v1161, 0
      %v1201 = vsel %vm442, %v1162, 0
      %v1204 = vsel %vm442, %v1163, 0
      %v1207 = vsel %vm442, %v1164, 0
      %v1210 = vsel %vm442, %v1165, 0
      %v1213 = vsel %vm442, %v1166, 0
      %v1216 = vsel %vm442, %v1167, 0
      %v1219 = vsel %vm442, %v1168, 0
      %v1222 = vsel %vm442, %v1169, 0
      %1224 = vmatprep.subr.bf16.mxu0 0
      %1225 = vmatpush1.bf16.msra.mxu0 0
      %1226 = vmatprep.subr.bf16.mxu0 0
      %1227 = vmatpush1.bf16.msra.mxu0 0
      %1228 = vmatprep.subr.bf16.mxu0 0
      %1229 = vmatpush1.bf16.msra.mxu0 0
      %1230 = vmatprep.subr.bf16.mxu0 0
      %1231 = vmatpush1.bf16.msra.mxu0 0
      %1232 = vmatprep.subr.bf16.mxu0 0
      %1233 = vmatpush1.bf16.msra.mxu0 0
      %1234 = vmatprep.subr.bf16.mxu0 0
      %1235 = vmatpush1.bf16.msra.mxu0 0
      %1236 = vmatprep.subr.bf16.mxu0 0
      %1237 = vmatpush1.bf16.msra.mxu0 0
      %1238 = vmatprep.subr.bf16.mxu0 0
      %1239 = vmatpush1.bf16.msra.mxu0 %v1174
      %1240 = vmatprep.subr.bf16.mxu0 0
      %1241 = vmatpush2.bf16.msra.mxu0 0
      %1242 = vmatprep.subr.bf16.mxu0 0
      %1243 = vmatpush2.bf16.msra.mxu0 0
      %1244 = vmatprep.subr.bf16.mxu0 0
      %1245 = vmatpush2.bf16.msra.mxu0 0
      %1246 = vmatprep.subr.bf16.mxu0 0
      %1247 = vmatpush2.bf16.msra.mxu0 0
      %1248 = vmatprep.subr.bf16.mxu0 0
      %1249 = vmatpush2.bf16.msra.mxu0 0
      %1250 = vmatprep.subr.bf16.mxu0 0
      %1251 = vmatpush2.bf16.msra.mxu0 0
      %1252 = vmatprep.subr.bf16.mxu0 0
      %1253 = vmatpush2.bf16.msra.mxu0 0
      %1254 = vmatprep.subr.bf16.mxu0 0
      %1255 = vmatpush2.bf16.msra.mxu0 0
      %1256 = vmatprep.mubr.bf16.mxu0 0
      %1257 = vmatmul.mubr.bf16.gmra.mxu0 %v1177
      %v1258 = vpop.f32.mrf.mxu0
      %v1259 = vadd.f32 0.0, %v1258
      %v1260 = vpop.f32.mrf.mxu0
      %v1261 = vpop.f32.mrf.mxu0
      %v1262 = vadd.f32 0.0, %v1261
      %v1263 = vpop.f32.mrf.mxu0
      %1264 = vmatprep.mubr.bf16.mxu0 0
      %1265 = vmatmul.mubr.bf16.gmra.mxu0 %v1180
      %v1266 = vpop.f32.mrf.mxu0
      %v1267 = vadd.f32 0.0, %v1266
      %v1268 = vpop.f32.mrf.mxu0
      %v1269 = vpop.f32.mrf.mxu0
      %v1270 = vadd.f32 0.0, %v1269
      %v1271 = vpop.f32.mrf.mxu0
      %1272 = vmatprep.mubr.bf16.mxu0 0
      %1273 = vmatmul.mubr.bf16.gmra.mxu0 %v1183
      %v1274 = vpop.f32.mrf.mxu0
      %v1275 = vadd.f32 0.0, %v1274
      %v1276 = vpop.f32.mrf.mxu0
      %v1277 = vpop.f32.mrf.mxu0
      %v1278 = vadd.f32 0.0, %v1277
      %v1279 = vpop.f32.mrf.mxu0
      %1280 = vmatprep.mubr.bf16.mxu0 0
      %1281 = vmatmul.mubr.bf16.gmra.mxu0 %v1186
      %v1282 = vpop.f32.mrf.mxu0
      %v1283 = vadd.f32 0.0, %v1282
      %v1284 = vpop.f32.mrf.mxu0
      %v1285 = vpop.f32.mrf.mxu0
      %v1286 = vadd.f32 0.0, %v1285
      %v1287 = vpop.f32.mrf.mxu0
      %1288 = vmatprep.mubr.bf16.mxu0 0
      %1289 = vmatmul.mubr.bf16.gmra.mxu0 %v1189
      %v1290 = vpop.f32.mrf.mxu0
      %v1291 = vadd.f32 0.0, %v1290
      %v1292 = vpop.f32.mrf.mxu0
      %v1293 = vpop.f32.mrf.mxu0
      %v1294 = vadd.f32 0.0, %v1293
      %v1295 = vpop.f32.mrf.mxu0
      %1296 = vmatprep.mubr.bf16.mxu0 0
      %1297 = vmatmul.mubr.bf16.gmra.mxu0 %v1192
      %v1298 = vpop.f32.mrf.mxu0
      %v1299 = vadd.f32 0.0, %v1298
      %v1300 = vpop.f32.mrf.mxu0
      %v1301 = vpop.f32.mrf.mxu0
      %v1302 = vadd.f32 0.0, %v1301
      %v1303 = vpop.f32.mrf.mxu0
      %1304 = vmatprep.mubr.bf16.mxu0 0
      %1305 = vmatmul.mubr.bf16.gmra.mxu0 %v1195
      %v1306 = vpop.f32.mrf.mxu0
      %v1307 = vadd.f32 0.0, %v1306
      %v1308 = vpop.f32.mrf.mxu0
      %v1309 = vpop.f32.mrf.mxu0
      %v1310 = vadd.f32 0.0, %v1309
      %v1311 = vpop.f32.mrf.mxu0
      %1312 = vmatprep.mubr.bf16.mxu0 0
      %1313 = vmatmul.mubr.bf16.gmra.mxu0 %v1198
      %v1314 = vpop.f32.mrf.mxu0
      %v1315 = vadd.f32 0.0, %v1314
      %v1316 = vpop.f32.mrf.mxu0
      %v1317 = vpop.f32.mrf.mxu0
      %v1318 = vadd.f32 0.0, %v1317
      %v1319 = vpop.f32.mrf.mxu0
      %1320 = vmatprep.mubr.bf16.mxu0 0
      %1321 = vmatmul.mubr.bf16.gmra.mxu0 %v1201
      %v1322 = vpop.f32.mrf.mxu0
      %v1323 = vadd.f32 0.0, %v1322
      %v1324 = vpop.f32.mrf.mxu0
      %v1325 = vpop.f32.mrf.mxu0
      %v1326 = vadd.f32 0.0, %v1325
      %v1327 = vpop.f32.mrf.mxu0
      %1328 = vmatprep.mubr.bf16.mxu0 0
      %1329 = vmatmul.mubr.bf16.gmra.mxu0 %v1204
      %v1330 = vpop.f32.mrf.mxu0
      %v1331 = vadd.f32 0.0, %v1330
      %v1332 = vpop.f32.mrf.mxu0
      %v1333 = vpop.f32.mrf.mxu0
      %v1334 = vadd.f32 0.0, %v1333
      %v1335 = vpop.f32.mrf.mxu0
      %1336 = vmatprep.mubr.bf16.mxu0 0
      %1337 = vmatmul.mubr.bf16.gmra.mxu0 %v1207
      %v1338 = vpop.f32.mrf.mxu0
      %v1339 = vadd.f32 0.0, %v1338
      %v1340 = vpop.f32.mrf.mxu0
      %v1341 = vpop.f32.mrf.mxu0
      %v1342 = vadd.f32 0.0, %v1341
      %v1343 = vpop.f32.mrf.mxu0
      %1344 = vmatprep.mubr.bf16.mxu0 0
      %1345 = vmatmul.mubr.bf16.gmra.mxu0 %v1210
      %v1346 = vpop.f32.mrf.mxu0
      %v1347 = vadd.f32 0.0, %v1346
      %v1348 = vpop.f32.mrf.mxu0
      %v1349 = vpop.f32.mrf.mxu0
      %v1350 = vadd.f32 0.0, %v1349
      %v1351 = vpop.f32.mrf.mxu0
      %1352 = vmatprep.mubr.bf16.mxu0 0
      %1353 = vmatmul.mubr.bf16.gmra.mxu0 %v1213
      %v1354 = vpop.f32.mrf.mxu0
      %v1355 = vadd.f32 0.0, %v1354
      %v1356 = vpop.f32.mrf.mxu0
      %v1357 = vpop.f32.mrf.mxu0
      %v1358 = vadd.f32 0.0, %v1357
      %v1359 = vpop.f32.mrf.mxu0
      %1360 = vmatprep.mubr.bf16.mxu0 0
      %1361 = vmatmul.mubr.bf16.gmra.mxu0 %v1216
      %v1362 = vpop.f32.mrf.mxu0
      %v1363 = vadd.f32 0.0, %v1362
      %v1364 = vpop.f32.mrf.mxu0
      %v1365 = vpop.f32.mrf.mxu0
      %v1366 = vadd.f32 0.0, %v1365
      %v1367 = vpop.f32.mrf.mxu0
      %1368 = vmatprep.mubr.bf16.mxu0 0
      %1369 = vmatmul.mubr.bf16.gmra.mxu0 %v1219
      %v1370 = vpop.f32.mrf.mxu0
      %v1371 = vadd.f32 0.0, %v1370
      %v1372 = vpop.f32.mrf.mxu0
      %v1373 = vpop.f32.mrf.mxu0
      %v1374 = vadd.f32 0.0, %v1373
      %v1375 = vpop.f32.mrf.mxu0
      %1376 = vmatprep.mubr.bf16.mxu0 0
      %1377 = vmatmul.mubr.bf16.gmra.mxu0 %v1222
      %v1378 = vpop.f32.mrf.mxu0
      %v1379 = vadd.f32 0.0, %v1378
      %v1380 = vpop.f32.mrf.mxu0
      %v1381 = vpop.f32.mrf.mxu0
      %v1382 = vadd.f32 0.0, %v1381
      %v1383 = vpop.f32.mrf.mxu0
      %1384 = vdwg.mxu0
      %v1385 = vld [vmem:[#allocation2] sm:$0xff]
      %v1386 = vld [vmem:[#allocation2 + $0x8] sm:$0xff]
      %v1387 = vld [vmem:[#allocation2 + $0x10] sm:$0xff]
      %v1388 = vld [vmem:[#allocation2 + $0x18] sm:$0xff]
      %v1389 = vld [vmem:[#allocation2 + $0x20] sm:$0xff]
      %v1390 = vld [vmem:[#allocation2 + $0x28] sm:$0xff]
      %v1391 = vld [vmem:[#allocation2 + $0x30] sm:$0xff]
      %v1392 = vld [vmem:[#allocation2 + $0x38] sm:$0xff]
      %v1393 = vld [vmem:[#allocation2 + $0x40] sm:$0xff]
      %v1394 = vld [vmem:[#allocation2 + $0x48] sm:$0xff]
      %v1395 = vld [vmem:[#allocation2 + $0x50] sm:$0xff]
      %v1396 = vld [vmem:[#allocation2 + $0x58] sm:$0xff]
      %v1397 = vld [vmem:[#allocation2 + $0x60] sm:$0xff]
      %v1398 = vld [vmem:[#allocation2 + $0x68] sm:$0xff]
      %v1399 = vld [vmem:[#allocation2 + $0x70] sm:$0xff]
      %v1400 = vld [vmem:[#allocation2 + $0x78] sm:$0xff]
      %v1401 = vld [vmem:[#allocation2 + $0x80] sm:$0xff]
      %v1402 = vld [vmem:[#allocation2 + $0x88] sm:$0xff]
      %v1403 = vld [vmem:[#allocation2 + $0x90] sm:$0xff]
      %v1404 = vld [vmem:[#allocation2 + $0x98] sm:$0xff]
      %v1405 = vld [vmem:[#allocation2 + $0xa0] sm:$0xff]
      %v1406 = vld [vmem:[#allocation2 + $0xa8] sm:$0xff]
      %v1407 = vld [vmem:[#allocation2 + $0xb0] sm:$0xff]
      %v1408 = vld [vmem:[#allocation2 + $0xb8] sm:$0xff]
      %v1409 = vld [vmem:[#allocation2 + $0xc0] sm:$0xff]
      %v1410 = vld [vmem:[#allocation2 + $0xc8] sm:$0xff]
      %v1411 = vld [vmem:[#allocation2 + $0xd0] sm:$0xff]
      %v1412 = vld [vmem:[#allocation2 + $0xd8] sm:$0xff]
      %v1413 = vld [vmem:[#allocation2 + $0xe0] sm:$0xff]
      %v1414 = vld [vmem:[#allocation2 + $0xe8] sm:$0xff]
      %v1415 = vld [vmem:[#allocation2 + $0xf0] sm:$0xff]
      %v1416 = vld [vmem:[#allocation2 + $0xf8] sm:$0xff]
      %v1417 = vadd.f32 %v1385, %v1259
      %v1418 = vadd.f32 %v1386, %v1262
      %v1419 = vadd.f32 %v1387, %v1267
      %v1420 = vadd.f32 %v1388, %v1270
      %v1421 = vadd.f32 %v1389, %v1275
      %v1422 = vadd.f32 %v1390, %v1278
      %v1423 = vadd.f32 %v1391, %v1283
      %v1424 = vadd.f32 %v1392, %v1286
      %v1425 = vadd.f32 %v1393, %v1291
      %v1426 = vadd.f32 %v1394, %v1294
      %v1427 = vadd.f32 %v1395, %v1299
      %v1428 = vadd.f32 %v1396, %v1302
      %v1429 = vadd.f32 %v1397, %v1307
      %v1430 = vadd.f32 %v1398, %v1310
      %v1431 = vadd.f32 %v1399, %v1315
      %v1432 = vadd.f32 %v1400, %v1318
      %v1433 = vadd.f32 %v1401, %v1323
      %v1434 = vadd.f32 %v1402, %v1326
      %v1435 = vadd.f32 %v1403, %v1331
      %v1436 = vadd.f32 %v1404, %v1334
      %v1437 = vadd.f32 %v1405, %v1339
      %v1438 = vadd.f32 %v1406, %v1342
      %v1439 = vadd.f32 %v1407, %v1347
      %v1440 = vadd.f32 %v1408, %v1350
      %v1441 = vadd.f32 %v1409, %v1355
      %v1442 = vadd.f32 %v1410, %v1358
      %v1443 = vadd.f32 %v1411, %v1363
      %v1444 = vadd.f32 %v1412, %v1366
      %v1445 = vadd.f32 %v1413, %v1371
      %v1446 = vadd.f32 %v1414, %v1374
      %v1447 = vadd.f32 %v1415, %v1379
      %v1448 = vadd.f32 %v1416, %v1382
      %1449 = vst.msk [vmem:[#allocation2] sm:$0xff] %vm442, %v1417
      %1450 = vst.msk [vmem:[#allocation2 + $0x8] sm:$0xff] %vm442, %v1418
      %1451 = vst.msk [vmem:[#allocation2 + $0x10] sm:$0xff] %vm442, %v1419
      %1452 = vst.msk [vmem:[#allocation2 + $0x18] sm:$0xff] %vm442, %v1420
      %1453 = vst.msk [vmem:[#allocation2 + $0x20] sm:$0xff] %vm442, %v1421
      %1454 = vst.msk [vmem:[#allocation2 + $0x28] sm:$0xff] %vm442, %v1422
      %1455 = vst.msk [vmem:[#allocation2 + $0x30] sm:$0xff] %vm442, %v1423
      %1456 = vst.msk [vmem:[#allocation2 + $0x38] sm:$0xff] %vm442, %v1424
      %1457 = vst.msk [vmem:[#allocation2 + $0x40] sm:$0xff] %vm442, %v1425
      %1458 = vst.msk [vmem:[#allocation2 + $0x48] sm:$0xff] %vm442, %v1426
      %1459 = vst.msk [vmem:[#allocation2 + $0x50] sm:$0xff] %vm442, %v1427
      %1460 = vst.msk [vmem:[#allocation2 + $0x58] sm:$0xff] %vm442, %v1428
      %1461 = vst.msk [vmem:[#allocation2 + $0x60] sm:$0xff] %vm442, %v1429
      %1462 = vst.msk [vmem:[#allocation2 + $0x68] sm:$0xff] %vm442, %v1430
      %1463 = vst.msk [vmem:[#allocation2 + $0x70] sm:$0xff] %vm442, %v1431
      %1464 = vst.msk [vmem:[#allocation2 + $0x78] sm:$0xff] %vm442, %v1432
      %1465 = vst.msk [vmem:[#allocation2 + $0x80] sm:$0xff] %vm442, %v1433
      %1466 = vst.msk [vmem:[#allocation2 + $0x88] sm:$0xff] %vm442, %v1434
      %1467 = vst.msk [vmem:[#allocation2 + $0x90] sm:$0xff] %vm442, %v1435
      %1468 = vst.msk [vmem:[#allocation2 + $0x98] sm:$0xff] %vm442, %v1436
      %1469 = vst.msk [vmem:[#allocation2 + $0xa0] sm:$0xff] %vm442, %v1437
      %1470 = vst.msk [vmem:[#allocation2 + $0xa8] sm:$0xff] %vm442, %v1438
      %1471 = vst.msk [vmem:[#allocation2 + $0xb0] sm:$0xff] %vm442, %v1439
      %1472 = vst.msk [vmem:[#allocation2 + $0xb8] sm:$0xff] %vm442, %v1440
      %1473 = vst.msk [vmem:[#allocation2 + $0xc0] sm:$0xff] %vm442, %v1441
      %1474 = vst.msk [vmem:[#allocation2 + $0xc8] sm:$0xff] %vm442, %v1442
      %1475 = vst.msk [vmem:[#allocation2 + $0xd0] sm:$0xff] %vm442, %v1443
      %1476 = vst.msk [vmem:[#allocation2 + $0xd8] sm:$0xff] %vm442, %v1444
      %1477 = vst.msk [vmem:[#allocation2 + $0xe0] sm:$0xff] %vm442, %v1445
      %1478 = vst.msk [vmem:[#allocation2 + $0xe8] sm:$0xff] %vm442, %v1446
      %1479 = vst.msk [vmem:[#allocation2 + $0xf0] sm:$0xff] %vm442, %v1447
      %1480 = vst.msk [vmem:[#allocation2 + $0xf8] sm:$0xff] %vm442, %v1448
      %v1481 = vld [vmem:[%s294] sm:$0xe]
      %v1482 = vld [vmem:[%s294 + $0x4] sm:$0xf]
      %v1483 = vld [vmem:[%s294 + $0x8] sm:$0x1]
      %v1484 = vld [vmem:[%s294 + $0xc] sm:$0xe]
      %v1485 = vld [vmem:[%s294 + $0x10] sm:$0xf]
      %v1486 = vld [vmem:[%s294 + $0x14] sm:$0x1]
      %v1487 = vld [vmem:[%s294 + $0x18] sm:$0xe]
      %v1488 = vld [vmem:[%s294 + $0x1c] sm:$0xf]
      %v1489 = vld [vmem:[%s294 + $0x20] sm:$0x1]
      %v1490 = vld [vmem:[%s294 + $0x24] sm:$0xe]
      %v1491 = vld [vmem:[%s294 + $0x28] sm:$0xf]
      %v1492 = vld [vmem:[%s294 + $0x2c] sm:$0x1]
      %v1493 = vld [vmem:[%s294 + $0x30] sm:$0xe]
      %v1494 = vld [vmem:[%s294 + $0x34] sm:$0xf]
      %v1495 = vld [vmem:[%s294 + $0x38] sm:$0x1]
      %v1496 = vld [vmem:[%s294 + $0x3c] sm:$0xe]
      %v1497 = vld [vmem:[%s294 + $0x40] sm:$0xf]
      %v1498 = vld [vmem:[%s294 + $0x44] sm:$0x1]
      %v1499 = vld [vmem:[%s294 + $0x48] sm:$0xe]
      %v1500 = vld [vmem:[%s294 + $0x4c] sm:$0xf]
      %v1501 = vld [vmem:[%s294 + $0x50] sm:$0x1]
      %v1502 = vld [vmem:[%s294 + $0x54] sm:$0xe]
      %v1503 = vld [vmem:[%s294 + $0x58] sm:$0xf]
      %v1504 = vld [vmem:[%s294 + $0x5c] sm:$0x1]
      %v1505 = vld [vmem:[%s294 + $0x60] sm:$0xe]
      %v1506 = vld [vmem:[%s294 + $0x64] sm:$0xf]
      %v1507 = vld [vmem:[%s294 + $0x68] sm:$0x1]
      %v1508 = vld [vmem:[%s294 + $0x6c] sm:$0xe]
      %v1509 = vld [vmem:[%s294 + $0x70] sm:$0xf]
      %v1510 = vld [vmem:[%s294 + $0x74] sm:$0x1]
      %v1511 = vld [vmem:[%s294 + $0x78] sm:$0xe]
      %v1512 = vld [vmem:[%s294 + $0x7c] sm:$0xf]
      %v1513 = vld [vmem:[%s294 + $0x80] sm:$0x1]
      %v1514 = vld [vmem:[%s294 + $0x84] sm:$0xe]
      %v1515 = vld [vmem:[%s294 + $0x88] sm:$0xf]
      %v1516 = vld [vmem:[%s294 + $0x8c] sm:$0x1]
      %v1517 = vld [vmem:[%s294 + $0x90] sm:$0xe]
      %v1518 = vld [vmem:[%s294 + $0x94] sm:$0xf]
      %v1519 = vld [vmem:[%s294 + $0x98] sm:$0x1]
      %v1520 = vld [vmem:[%s294 + $0x9c] sm:$0xe]
      %v1521 = vld [vmem:[%s294 + $0xa0] sm:$0xf]
      %v1522 = vld [vmem:[%s294 + $0xa4] sm:$0x1]
      %v1523 = vld [vmem:[%s294 + $0xa8] sm:$0xe]
      %v1524 = vld [vmem:[%s294 + $0xac] sm:$0xf]
      %v1525 = vld [vmem:[%s294 + $0xb0] sm:$0x1]
      %v1526 = vld [vmem:[%s294 + $0xb4] sm:$0xe]
      %v1527 = vld [vmem:[%s294 + $0xb8] sm:$0xf]
      %v1528 = vld [vmem:[%s294 + $0xbc] sm:$0x1]
      %vm1577 = vcmask 1042432
      %vm1578 = vcmask 1046532
      %vm1579 = vmor %vm1577, %vm1578
      %v1580 = vrot.slane %v1481, 5
      %v1581 = vrot.slane %v1580, 4
      %v1582 = vrot.slane %v1482, 5
      %v1583 = vsel %vm1579, %v1581, %v1582
      %v1584 = vrot.slane %v1582, 4
      %v1585 = vrot.slane %v1483, 5
      %v1586 = vsel %vm1579, %v1584, %v1585
      %v1587 = vrot.slane %v1484, 5
      %v1588 = vrot.slane %v1587, 4
      %v1589 = vrot.slane %v1485, 5
      %v1590 = vsel %vm1579, %v1588, %v1589
      %v1591 = vrot.slane %v1589, 4
      %v1592 = vrot.slane %v1486, 5
      %v1593 = vsel %vm1579, %v1591, %v1592
      %v1594 = vrot.slane %v1487, 5
      %v1595 = vrot.slane %v1594, 4
      %v1596 = vrot.slane %v1488, 5
      %v1597 = vsel %vm1579, %v1595, %v1596
      %v1598 = vrot.slane %v1596, 4
      %v1599 = vrot.slane %v1489, 5
      %v1600 = vsel %vm1579, %v1598, %v1599
      %v1601 = vrot.slane %v1490, 5
      %v1602 = vrot.slane %v1601, 4
      %v1603 = vrot.slane %v1491, 5
      %v1604 = vsel %vm1579, %v1602, %v1603
      %v1605 = vrot.slane %v1603, 4
      %v1606 = vrot.slane %v1492, 5
      %v1607 = vsel %vm1579, %v1605, %v1606
      %v1608 = vrot.slane %v1493, 5
      %v1609 = vrot.slane %v1608, 4
      %v1610 = vrot.slane %v1494, 5
      %v1611 = vsel %vm1579, %v1609, %v1610
      %v1612 = vrot.slane %v1610, 4
      %v1613 = vrot.slane %v1495, 5
      %v1614 = vsel %vm1579, %v1612, %v1613
      %v1615 = vrot.slane %v1496, 5
      %v1616 = vrot.slane %v1615, 4
      %v1617 = vrot.slane %v1497, 5
      %v1618 = vsel %vm1579, %v1616, %v1617
      %v1619 = vrot.slane %v1617, 4
      %v1620 = vrot.slane %v1498, 5
      %v1621 = vsel %vm1579, %v1619, %v1620
      %v1622 = vrot.slane %v1499, 5
      %v1623 = vrot.slane %v1622, 4
      %v1624 = vrot.slane %v1500, 5
      %v1625 = vsel %vm1579, %v1623, %v1624
      %v1626 = vrot.slane %v1624, 4
      %v1627 = vrot.slane %v1501, 5
      %v1628 = vsel %vm1579, %v1626, %v1627
      %v1629 = vrot.slane %v1502, 5
      %v1630 = vrot.slane %v1629, 4
      %v1631 = vrot.slane %v1503, 5
      %v1632 = vsel %vm1579, %v1630, %v1631
      %v1633 = vrot.slane %v1631, 4
      %v1634 = vrot.slane %v1504, 5
      %v1635 = vsel %vm1579, %v1633, %v1634
      %v1636 = vrot.slane %v1505, 5
      %v1637 = vrot.slane %v1636, 4
      %v1638 = vrot.slane %v1506, 5
      %v1639 = vsel %vm1579, %v1637, %v1638
      %v1640 = vrot.slane %v1638, 4
      %v1641 = vrot.slane %v1507, 5
      %v1642 = vsel %vm1579, %v1640, %v1641
      %v1643 = vrot.slane %v1508, 5
      %v1644 = vrot.slane %v1643, 4
      %v1645 = vrot.slane %v1509, 5
      %v1646 = vsel %vm1579, %v1644, %v1645
      %v1647 = vrot.slane %v1645, 4
      %v1648 = vrot.slane %v1510, 5
      %v1649 = vsel %vm1579, %v1647, %v1648
      %v1650 = vrot.slane %v1511, 5
      %v1651 = vrot.slane %v1650, 4
      %v1652 = vrot.slane %v1512, 5
      %v1653 = vsel %vm1579, %v1651, %v1652
      %v1654 = vrot.slane %v1652, 4
      %v1655 = vrot.slane %v1513, 5
      %v1656 = vsel %vm1579, %v1654, %v1655
      %v1657 = vrot.slane %v1514, 5
      %v1658 = vrot.slane %v1657, 4
      %v1659 = vrot.slane %v1515, 5
      %v1660 = vsel %vm1579, %v1658, %v1659
      %v1661 = vrot.slane %v1659, 4
      %v1662 = vrot.slane %v1516, 5
      %v1663 = vsel %vm1579, %v1661, %v1662
      %v1664 = vrot.slane %v1517, 5
      %v1665 = vrot.slane %v1664, 4
      %v1666 = vrot.slane %v1518, 5
      %v1667 = vsel %vm1579, %v1665, %v1666
      %v1668 = vrot.slane %v1666, 4
      %v1669 = vrot.slane %v1519, 5
      %v1670 = vsel %vm1579, %v1668, %v1669
      %v1671 = vrot.slane %v1520, 5
      %v1672 = vrot.slane %v1671, 4
      %v1673 = vrot.slane %v1521, 5
      %v1674 = vsel %vm1579, %v1672, %v1673
      %v1675 = vrot.slane %v1673, 4
      %v1676 = vrot.slane %v1522, 5
      %v1677 = vsel %vm1579, %v1675, %v1676
      %v1678 = vrot.slane %v1523, 5
      %v1679 = vrot.slane %v1678, 4
      %v1680 = vrot.slane %v1524, 5
      %v1681 = vsel %vm1579, %v1679, %v1680
      %v1682 = vrot.slane %v1680, 4
      %v1683 = vrot.slane %v1525, 5
      %v1684 = vsel %vm1579, %v1682, %v1683
      %v1685 = vrot.slane %v1526, 5
      %v1686 = vrot.slane %v1685, 4
      %v1687 = vrot.slane %v1527, 5
      %v1688 = vsel %vm1579, %v1686, %v1687
      %v1689 = vrot.slane %v1687, 4
      %v1690 = vrot.slane %v1528, 5
      %v1691 = vsel %vm1579, %v1689, %v1690
      %s1692 = scalar_lea.vmem %s298, 16
      %v1693 = vld [vmem:[%s1692] sm:$0xf]
      %v1694 = vld [vmem:[%s1692 + $0x4] sm:$0xf]
      %v1695 = vunpack.c.l.b16 %v1583
      %v1696 = vunpack.c.l.b16 %v1586
      %v1697 = vunpack.c.l.b16 %v1590
      %v1698 = vunpack.c.l.b16 %v1593
      %v1699 = vunpack.c.l.b16 %v1597
      %v1700 = vunpack.c.l.b16 %v1600
      %v1701 = vunpack.c.l.b16 %v1604
      %v1702 = vunpack.c.l.b16 %v1607
      %v1703 = vunpack.c.l.b16 %v1611
      %v1704 = vunpack.c.l.b16 %v1614
      %v1705 = vunpack.c.l.b16 %v1618
      %v1706 = vunpack.c.l.b16 %v1621
      %v1707 = vunpack.c.l.b16 %v1625
      %v1708 = vunpack.c.l.b16 %v1628
      %v1709 = vunpack.c.l.b16 %v1632
      %v1710 = vunpack.c.l.b16 %v1635
      %v1711 = vunpack.c.l.b16 %v1639
      %v1712 = vunpack.c.l.b16 %v1642
      %v1713 = vunpack.c.l.b16 %v1646
      %v1714 = vunpack.c.l.b16 %v1649
      %v1715 = vunpack.c.l.b16 %v1653
      %v1716 = vunpack.c.l.b16 %v1656
      %v1717 = vunpack.c.l.b16 %v1660
      %v1718 = vunpack.c.l.b16 %v1663
      %v1719 = vunpack.c.l.b16 %v1667
      %v1720 = vunpack.c.l.b16 %v1670
      %v1721 = vunpack.c.l.b16 %v1674
      %v1722 = vunpack.c.l.b16 %v1677
      %v1723 = vunpack.c.l.b16 %v1681
      %v1724 = vunpack.c.l.b16 %v1684
      %v1725 = vunpack.c.l.b16 %v1688
      %v1726 = vunpack.c.l.b16 %v1691
      %v1727 = vpack.c.b16 %v1696, %v1695
      %v1728 = vpack.c.b16 %v1698, %v1697
      %v1729 = vpack.c.b16 %v1700, %v1699
      %v1730 = vpack.c.b16 %v1702, %v1701
      %v1731 = vpack.c.b16 %v1704, %v1703
      %v1732 = vpack.c.b16 %v1706, %v1705
      %v1733 = vpack.c.b16 %v1708, %v1707
      %v1734 = vpack.c.b16 %v1710, %v1709
      %v1735 = vpack.c.b16 %v1712, %v1711
      %v1736 = vpack.c.b16 %v1714, %v1713
      %v1737 = vpack.c.b16 %v1716, %v1715
      %v1738 = vpack.c.b16 %v1718, %v1717
      %v1739 = vpack.c.b16 %v1720, %v1719
      %v1740 = vpack.c.b16 %v1722, %v1721
      %v1741 = vpack.c.b16 %v1724, %v1723
      %v1742 = vpack.c.b16 %v1726, %v1725
      %v1745 = vunpack.c.l.b16 %v1693
      %v1746 = vunpack.c.l.b16 %v1694
      %v1747 = vpack.c.b16 %v1746, %v1745
      %v1750 = vsel %vm442, %v1727, 0
      %v1753 = vsel %vm442, %v1728, 0
      %v1756 = vsel %vm442, %v1729, 0
      %v1759 = vsel %vm442, %v1730, 0
      %v1762 = vsel %vm442, %v1731, 0
      %v1765 = vsel %vm442, %v1732, 0
      %v1768 = vsel %vm442, %v1733, 0
      %v1771 = vsel %vm442, %v1734, 0
      %v1774 = vsel %vm442, %v1735, 0
      %v1777 = vsel %vm442, %v1736, 0
      %v1780 = vsel %vm442, %v1737, 0
      %v1783 = vsel %vm442, %v1738, 0
      %v1786 = vsel %vm442, %v1739, 0
      %v1789 = vsel %vm442, %v1740, 0
      %v1792 = vsel %vm442, %v1741, 0
      %v1795 = vsel %vm442, %v1742, 0
      %1797 = vmatprep.subr.bf16.mxu0 0
      %1798 = vmatpush1.bf16.msra.mxu0 0
      %1799 = vmatprep.subr.bf16.mxu0 0
      %1800 = vmatpush1.bf16.msra.mxu0 0
      %1801 = vmatprep.subr.bf16.mxu0 0
      %1802 = vmatpush1.bf16.msra.mxu0 0
      %1803 = vmatprep.subr.bf16.mxu0 0
      %1804 = vmatpush1.bf16.msra.mxu0 0
      %1805 = vmatprep.subr.bf16.mxu0 0
      %1806 = vmatpush1.bf16.msra.mxu0 0
      %1807 = vmatprep.subr.bf16.mxu0 0
      %1808 = vmatpush1.bf16.msra.mxu0 0
      %1809 = vmatprep.subr.bf16.mxu0 0
      %1810 = vmatpush1.bf16.msra.mxu0 0
      %1811 = vmatprep.subr.bf16.mxu0 0
      %1812 = vmatpush1.bf16.msra.mxu0 %v1747
      %1813 = vmatprep.subr.bf16.mxu0 0
      %1814 = vmatpush2.bf16.msra.mxu0 0
      %1815 = vmatprep.subr.bf16.mxu0 0
      %1816 = vmatpush2.bf16.msra.mxu0 0
      %1817 = vmatprep.subr.bf16.mxu0 0
      %1818 = vmatpush2.bf16.msra.mxu0 0
      %1819 = vmatprep.subr.bf16.mxu0 0
      %1820 = vmatpush2.bf16.msra.mxu0 0
      %1821 = vmatprep.subr.bf16.mxu0 0
      %1822 = vmatpush2.bf16.msra.mxu0 0
      %1823 = vmatprep.subr.bf16.mxu0 0
      %1824 = vmatpush2.bf16.msra.mxu0 0
      %1825 = vmatprep.subr.bf16.mxu0 0
      %1826 = vmatpush2.bf16.msra.mxu0 0
      %1827 = vmatprep.subr.bf16.mxu0 0
      %1828 = vmatpush2.bf16.msra.mxu0 0
      %1829 = vmatprep.mubr.bf16.mxu0 0
      %1830 = vmatmul.mubr.bf16.gmra.mxu0 %v1750
      %v1831 = vpop.f32.mrf.mxu0
      %v1832 = vadd.f32 0.0, %v1831
      %v1833 = vpop.f32.mrf.mxu0
      %v1834 = vpop.f32.mrf.mxu0
      %v1835 = vadd.f32 0.0, %v1834
      %v1836 = vpop.f32.mrf.mxu0
      %1837 = vmatprep.mubr.bf16.mxu0 0
      %1838 = vmatmul.mubr.bf16.gmra.mxu0 %v1753
      %v1839 = vpop.f32.mrf.mxu0
      %v1840 = vadd.f32 0.0, %v1839
      %v1841 = vpop.f32.mrf.mxu0
      %v1842 = vpop.f32.mrf.mxu0
      %v1843 = vadd.f32 0.0, %v1842
      %v1844 = vpop.f32.mrf.mxu0
      %1845 = vmatprep.mubr.bf16.mxu0 0
      %1846 = vmatmul.mubr.bf16.gmra.mxu0 %v1756
      %v1847 = vpop.f32.mrf.mxu0
      %v1848 = vadd.f32 0.0, %v1847
      %v1849 = vpop.f32.mrf.mxu0
      %v1850 = vpop.f32.mrf.mxu0
      %v1851 = vadd.f32 0.0, %v1850
      %v1852 = vpop.f32.mrf.mxu0
      %1853 = vmatprep.mubr.bf16.mxu0 0
      %1854 = vmatmul.mubr.bf16.gmra.mxu0 %v1759
      %v1855 = vpop.f32.mrf.mxu0
      %v1856 = vadd.f32 0.0, %v1855
      %v1857 = vpop.f32.mrf.mxu0
      %v1858 = vpop.f32.mrf.mxu0
      %v1859 = vadd.f32 0.0, %v1858
      %v1860 = vpop.f32.mrf.mxu0
      %1861 = vmatprep.mubr.bf16.mxu0 0
      %1862 = vmatmul.mubr.bf16.gmra.mxu0 %v1762
      %v1863 = vpop.f32.mrf.mxu0
      %v1864 = vadd.f32 0.0, %v1863
      %v1865 = vpop.f32.mrf.mxu0
      %v1866 = vpop.f32.mrf.mxu0
      %v1867 = vadd.f32 0.0, %v1866
      %v1868 = vpop.f32.mrf.mxu0
      %1869 = vmatprep.mubr.bf16.mxu0 0
      %1870 = vmatmul.mubr.bf16.gmra.mxu0 %v1765
      %v1871 = vpop.f32.mrf.mxu0
      %v1872 = vadd.f32 0.0, %v1871
      %v1873 = vpop.f32.mrf.mxu0
      %v1874 = vpop.f32.mrf.mxu0
      %v1875 = vadd.f32 0.0, %v1874
      %v1876 = vpop.f32.mrf.mxu0
      %1877 = vmatprep.mubr.bf16.mxu0 0
      %1878 = vmatmul.mubr.bf16.gmra.mxu0 %v1768
      %v1879 = vpop.f32.mrf.mxu0
      %v1880 = vadd.f32 0.0, %v1879
      %v1881 = vpop.f32.mrf.mxu0
      %v1882 = vpop.f32.mrf.mxu0
      %v1883 = vadd.f32 0.0, %v1882
      %v1884 = vpop.f32.mrf.mxu0
      %1885 = vmatprep.mubr.bf16.mxu0 0
      %1886 = vmatmul.mubr.bf16.gmra.mxu0 %v1771
      %v1887 = vpop.f32.mrf.mxu0
      %v1888 = vadd.f32 0.0, %v1887
      %v1889 = vpop.f32.mrf.mxu0
      %v1890 = vpop.f32.mrf.mxu0
      %v1891 = vadd.f32 0.0, %v1890
      %v1892 = vpop.f32.mrf.mxu0
      %1893 = vmatprep.mubr.bf16.mxu0 0
      %1894 = vmatmul.mubr.bf16.gmra.mxu0 %v1774
      %v1895 = vpop.f32.mrf.mxu0
      %v1896 = vadd.f32 0.0, %v1895
      %v1897 = vpop.f32.mrf.mxu0
      %v1898 = vpop.f32.mrf.mxu0
      %v1899 = vadd.f32 0.0, %v1898
      %v1900 = vpop.f32.mrf.mxu0
      %1901 = vmatprep.mubr.bf16.mxu0 0
      %1902 = vmatmul.mubr.bf16.gmra.mxu0 %v1777
      %v1903 = vpop.f32.mrf.mxu0
      %v1904 = vadd.f32 0.0, %v1903
      %v1905 = vpop.f32.mrf.mxu0
      %v1906 = vpop.f32.mrf.mxu0
      %v1907 = vadd.f32 0.0, %v1906
      %v1908 = vpop.f32.mrf.mxu0
      %1909 = vmatprep.mubr.bf16.mxu0 0
      %1910 = vmatmul.mubr.bf16.gmra.mxu0 %v1780
      %v1911 = vpop.f32.mrf.mxu0
      %v1912 = vadd.f32 0.0, %v1911
      %v1913 = vpop.f32.mrf.mxu0
      %v1914 = vpop.f32.mrf.mxu0
      %v1915 = vadd.f32 0.0, %v1914
      %v1916 = vpop.f32.mrf.mxu0
      %1917 = vmatprep.mubr.bf16.mxu0 0
      %1918 = vmatmul.mubr.bf16.gmra.mxu0 %v1783
      %v1919 = vpop.f32.mrf.mxu0
      %v1920 = vadd.f32 0.0, %v1919
      %v1921 = vpop.f32.mrf.mxu0
      %v1922 = vpop.f32.mrf.mxu0
      %v1923 = vadd.f32 0.0, %v1922
      %v1924 = vpop.f32.mrf.mxu0
      %1925 = vmatprep.mubr.bf16.mxu0 0
      %1926 = vmatmul.mubr.bf16.gmra.mxu0 %v1786
      %v1927 = vpop.f32.mrf.mxu0
      %v1928 = vadd.f32 0.0, %v1927
      %v1929 = vpop.f32.mrf.mxu0
      %v1930 = vpop.f32.mrf.mxu0
      %v1931 = vadd.f32 0.0, %v1930
      %v1932 = vpop.f32.mrf.mxu0
      %1933 = vmatprep.mubr.bf16.mxu0 0
      %1934 = vmatmul.mubr.bf16.gmra.mxu0 %v1789
      %v1935 = vpop.f32.mrf.mxu0
      %v1936 = vadd.f32 0.0, %v1935
      %v1937 = vpop.f32.mrf.mxu0
      %v1938 = vpop.f32.mrf.mxu0
      %v1939 = vadd.f32 0.0, %v1938
      %v1940 = vpop.f32.mrf.mxu0
      %1941 = vmatprep.mubr.bf16.mxu0 0
      %1942 = vmatmul.mubr.bf16.gmra.mxu0 %v1792
      %v1943 = vpop.f32.mrf.mxu0
      %v1944 = vadd.f32 0.0, %v1943
      %v1945 = vpop.f32.mrf.mxu0
      %v1946 = vpop.f32.mrf.mxu0
      %v1947 = vadd.f32 0.0, %v1946
      %v1948 = vpop.f32.mrf.mxu0
      %1949 = vmatprep.mubr.bf16.mxu0 0
      %1950 = vmatmul.mubr.bf16.gmra.mxu0 %v1795
      %v1951 = vpop.f32.mrf.mxu0
      %v1952 = vadd.f32 0.0, %v1951
      %v1953 = vpop.f32.mrf.mxu0
      %v1954 = vpop.f32.mrf.mxu0
      %v1955 = vadd.f32 0.0, %v1954
      %v1956 = vpop.f32.mrf.mxu0
      %1957 = vdwg.mxu0
      %v1958 = vld [vmem:[#allocation2] sm:$0xff]
      %v1959 = vld [vmem:[#allocation2 + $0x8] sm:$0xff]
      %v1960 = vld [vmem:[#allocation2 + $0x10] sm:$0xff]
      %v1961 = vld [vmem:[#allocation2 + $0x18] sm:$0xff]
      %v1962 = vld [vmem:[#allocation2 + $0x20] sm:$0xff]
      %v1963 = vld [vmem:[#allocation2 + $0x28] sm:$0xff]
      %v1964 = vld [vmem:[#allocation2 + $0x30] sm:$0xff]
      %v1965 = vld [vmem:[#allocation2 + $0x38] sm:$0xff]
      %v1966 = vld [vmem:[#allocation2 + $0x40] sm:$0xff]
      %v1967 = vld [vmem:[#allocation2 + $0x48] sm:$0xff]
      %v1968 = vld [vmem:[#allocation2 + $0x50] sm:$0xff]
      %v1969 = vld [vmem:[#allocation2 + $0x58] sm:$0xff]
      %v1970 = vld [vmem:[#allocation2 + $0x60] sm:$0xff]
      %v1971 = vld [vmem:[#allocation2 + $0x68] sm:$0xff]
      %v1972 = vld [vmem:[#allocation2 + $0x70] sm:$0xff]
      %v1973 = vld [vmem:[#allocation2 + $0x78] sm:$0xff]
      %v1974 = vld [vmem:[#allocation2 + $0x80] sm:$0xff]
      %v1975 = vld [vmem:[#allocation2 + $0x88] sm:$0xff]
      %v1976 = vld [vmem:[#allocation2 + $0x90] sm:$0xff]
      %v1977 = vld [vmem:[#allocation2 + $0x98] sm:$0xff]
      %v1978 = vld [vmem:[#allocation2 + $0xa0] sm:$0xff]
      %v1979 = vld [vmem:[#allocation2 + $0xa8] sm:$0xff]
      %v1980 = vld [vmem:[#allocation2 + $0xb0] sm:$0xff]
      %v1981 = vld [vmem:[#allocation2 + $0xb8] sm:$0xff]
      %v1982 = vld [vmem:[#allocation2 + $0xc0] sm:$0xff]
      %v1983 = vld [vmem:[#allocation2 + $0xc8] sm:$0xff]
      %v1984 = vld [vmem:[#allocation2 + $0xd0] sm:$0xff]
      %v1985 = vld [vmem:[#allocation2 + $0xd8] sm:$0xff]
      %v1986 = vld [vmem:[#allocation2 + $0xe0] sm:$0xff]
      %v1987 = vld [vmem:[#allocation2 + $0xe8] sm:$0xff]
      %v1988 = vld [vmem:[#allocation2 + $0xf0] sm:$0xff]
      %v1989 = vld [vmem:[#allocation2 + $0xf8] sm:$0xff]
      %v1990 = vadd.f32 %v1958, %v1832
      %v1991 = vadd.f32 %v1959, %v1835
      %v1992 = vadd.f32 %v1960, %v1840
      %v1993 = vadd.f32 %v1961, %v1843
      %v1994 = vadd.f32 %v1962, %v1848
      %v1995 = vadd.f32 %v1963, %v1851
      %v1996 = vadd.f32 %v1964, %v1856
      %v1997 = vadd.f32 %v1965, %v1859
      %v1998 = vadd.f32 %v1966, %v1864
      %v1999 = vadd.f32 %v1967, %v1867
      %v2000 = vadd.f32 %v1968, %v1872
      %v2001 = vadd.f32 %v1969, %v1875
      %v2002 = vadd.f32 %v1970, %v1880
      %v2003 = vadd.f32 %v1971, %v1883
      %v2004 = vadd.f32 %v1972, %v1888
      %v2005 = vadd.f32 %v1973, %v1891
      %v2006 = vadd.f32 %v1974, %v1896
      %v2007 = vadd.f32 %v1975, %v1899
      %v2008 = vadd.f32 %v1976, %v1904
      %v2009 = vadd.f32 %v1977, %v1907
      %v2010 = vadd.f32 %v1978, %v1912
      %v2011 = vadd.f32 %v1979, %v1915
      %v2012 = vadd.f32 %v1980, %v1920
      %v2013 = vadd.f32 %v1981, %v1923
      %v2014 = vadd.f32 %v1982, %v1928
      %v2015 = vadd.f32 %v1983, %v1931
      %v2016 = vadd.f32 %v1984, %v1936
      %v2017 = vadd.f32 %v1985, %v1939
      %v2018 = vadd.f32 %v1986, %v1944
      %v2019 = vadd.f32 %v1987, %v1947
      %v2020 = vadd.f32 %v1988, %v1952
      %v2021 = vadd.f32 %v1989, %v1955
      %2022 = vst.msk [vmem:[#allocation2] sm:$0xff] %vm442, %v1990
      %2023 = vst.msk [vmem:[#allocation2 + $0x8] sm:$0xff] %vm442, %v1991
      %2024 = vst.msk [vmem:[#allocation2 + $0x10] sm:$0xff] %vm442, %v1992
      %2025 = vst.msk [vmem:[#allocation2 + $0x18] sm:$0xff] %vm442, %v1993
      %2026 = vst.msk [vmem:[#allocation2 + $0x20] sm:$0xff] %vm442, %v1994
      %2027 = vst.msk [vmem:[#allocation2 + $0x28] sm:$0xff] %vm442, %v1995
      %2028 = vst.msk [vmem:[#allocation2 + $0x30] sm:$0xff] %vm442, %v1996
      %2029 = vst.msk [vmem:[#allocation2 + $0x38] sm:$0xff] %vm442, %v1997
      %2030 = vst.msk [vmem:[#allocation2 + $0x40] sm:$0xff] %vm442, %v1998
      %2031 = vst.msk [vmem:[#allocation2 + $0x48] sm:$0xff] %vm442, %v1999
      %2032 = vst.msk [vmem:[#allocation2 + $0x50] sm:$0xff] %vm442, %v2000
      %2033 = vst.msk [vmem:[#allocation2 + $0x58] sm:$0xff] %vm442, %v2001
      %2034 = vst.msk [vmem:[#allocation2 + $0x60] sm:$0xff] %vm442, %v2002
      %2035 = vst.msk [vmem:[#allocation2 + $0x68] sm:$0xff] %vm442, %v2003
      %2036 = vst.msk [vmem:[#allocation2 + $0x70] sm:$0xff] %vm442, %v2004
      %2037 = vst.msk [vmem:[#allocation2 + $0x78] sm:$0xff] %vm442, %v2005
      %2038 = vst.msk [vmem:[#allocation2 + $0x80] sm:$0xff] %vm442, %v2006
      %2039 = vst.msk [vmem:[#allocation2 + $0x88] sm:$0xff] %vm442, %v2007
      %2040 = vst.msk [vmem:[#allocation2 + $0x90] sm:$0xff] %vm442, %v2008
      %2041 = vst.msk [vmem:[#allocation2 + $0x98] sm:$0xff] %vm442, %v2009
      %2042 = vst.msk [vmem:[#allocation2 + $0xa0] sm:$0xff] %vm442, %v2010
      %2043 = vst.msk [vmem:[#allocation2 + $0xa8] sm:$0xff] %vm442, %v2011
      %2044 = vst.msk [vmem:[#allocation2 + $0xb0] sm:$0xff] %vm442, %v2012
      %2045 = vst.msk [vmem:[#allocation2 + $0xb8] sm:$0xff] %vm442, %v2013
      %2046 = vst.msk [vmem:[#allocation2 + $0xc0] sm:$0xff] %vm442, %v2014
      %2047 = vst.msk [vmem:[#allocation2 + $0xc8] sm:$0xff] %vm442, %v2015
      %2048 = vst.msk [vmem:[#allocation2 + $0xd0] sm:$0xff] %vm442, %v2016
      %2049 = vst.msk [vmem:[#allocation2 + $0xd8] sm:$0xff] %vm442, %v2017
      %2050 = vst.msk [vmem:[#allocation2 + $0xe0] sm:$0xff] %vm442, %v2018
      %2051 = vst.msk [vmem:[#allocation2 + $0xe8] sm:$0xff] %vm442, %v2019
      %2052 = vst.msk [vmem:[#allocation2 + $0xf0] sm:$0xff] %vm442, %v2020
      %2053 = vst.msk [vmem:[#allocation2 + $0xf8] sm:$0xff] %vm442, %v2021
      %s2054 = scalar_lea.vmem %s294, 12
      %v2055 = vld [vmem:[%s2054] sm:$0xf]
      %v2056 = vld [vmem:[%s2054 + $0x4] sm:$0xf]
      %v2057 = vld [vmem:[%s2054 + $0xc] sm:$0xf]
      %v2058 = vld [vmem:[%s2054 + $0x10] sm:$0xf]
      %v2059 = vld [vmem:[%s2054 + $0x18] sm:$0xf]
      %v2060 = vld [vmem:[%s2054 + $0x1c] sm:$0xf]
      %v2061 = vld [vmem:[%s2054 + $0x24] sm:$0xf]
      %v2062 = vld [vmem:[%s2054 + $0x28] sm:$0xf]
      %v2063 = vld [vmem:[%s2054 + $0x30] sm:$0xf]
      %v2064 = vld [vmem:[%s2054 + $0x34] sm:$0xf]
      %v2065 = vld [vmem:[%s2054 + $0x3c] sm:$0xf]
      %v2066 = vld [vmem:[%s2054 + $0x40] sm:$0xf]
      %v2067 = vld [vmem:[%s2054 + $0x48] sm:$0xf]
      %v2068 = vld [vmem:[%s2054 + $0x4c] sm:$0xf]
      %v2069 = vld [vmem:[%s2054 + $0x54] sm:$0xf]
      %v2070 = vld [vmem:[%s2054 + $0x58] sm:$0xf]
      %v2071 = vld [vmem:[%s2054 + $0x60] sm:$0xf]
      %v2072 = vld [vmem:[%s2054 + $0x64] sm:$0xf]
      %v2073 = vld [vmem:[%s2054 + $0x6c] sm:$0xf]
      %v2074 = vld [vmem:[%s2054 + $0x70] sm:$0xf]
      %v2075 = vld [vmem:[%s2054 + $0x78] sm:$0xf]
      %v2076 = vld [vmem:[%s2054 + $0x7c] sm:$0xf]
      %v2077 = vld [vmem:[%s2054 + $0x84] sm:$0xf]
      %v2078 = vld [vmem:[%s2054 + $0x88] sm:$0xf]
      %v2079 = vld [vmem:[%s2054 + $0x90] sm:$0xf]
      %v2080 = vld [vmem:[%s2054 + $0x94] sm:$0xf]
      %v2081 = vld [vmem:[%s2054 + $0x9c] sm:$0xf]
      %v2082 = vld [vmem:[%s2054 + $0xa0] sm:$0xf]
      %v2083 = vld [vmem:[%s2054 + $0xa8] sm:$0xf]
      %v2084 = vld [vmem:[%s2054 + $0xac] sm:$0xf]
      %v2085 = vld [vmem:[%s2054 + $0xb4] sm:$0xf]
      %v2086 = vld [vmem:[%s2054 + $0xb8] sm:$0xf]
      %s2087 = scalar_lea.vmem %s298, 24
      %v2088 = vld [vmem:[%s2087] sm:$0xf]
      %v2089 = vld [vmem:[%s2087 + $0x4] sm:$0xf]
      %v2122 = vunpack.c.l.b16 %v2055
      %v2123 = vunpack.c.l.b16 %v2056
      %v2124 = vunpack.c.l.b16 %v2057
      %v2125 = vunpack.c.l.b16 %v2058
      %v2126 = vunpack.c.l.b16 %v2059
      %v2127 = vunpack.c.l.b16 %v2060
      %v2128 = vunpack.c.l.b16 %v2061
      %v2129 = vunpack.c.l.b16 %v2062
      %v2130 = vunpack.c.l.b16 %v2063
      %v2131 = vunpack.c.l.b16 %v2064
      %v2132 = vunpack.c.l.b16 %v2065
      %v2133 = vunpack.c.l.b16 %v2066
      %v2134 = vunpack.c.l.b16 %v2067
      %v2135 = vunpack.c.l.b16 %v2068
      %v2136 = vunpack.c.l.b16 %v2069
      %v2137 = vunpack.c.l.b16 %v2070
      %v2138 = vunpack.c.l.b16 %v2071
      %v2139 = vunpack.c.l.b16 %v2072
      %v2140 = vunpack.c.l.b16 %v2073
      %v2141 = vunpack.c.l.b16 %v2074
      %v2142 = vunpack.c.l.b16 %v2075
      %v2143 = vunpack.c.l.b16 %v2076
      %v2144 = vunpack.c.l.b16 %v2077
      %v2145 = vunpack.c.l.b16 %v2078
      %v2146 = vunpack.c.l.b16 %v2079
      %v2147 = vunpack.c.l.b16 %v2080
      %v2148 = vunpack.c.l.b16 %v2081
      %v2149 = vunpack.c.l.b16 %v2082
      %v2150 = vunpack.c.l.b16 %v2083
      %v2151 = vunpack.c.l.b16 %v2084
      %v2152 = vunpack.c.l.b16 %v2085
      %v2153 = vunpack.c.l.b16 %v2086
      %v2154 = vpack.c.b16 %v2123, %v2122
      %v2155 = vpack.c.b16 %v2125, %v2124
      %v2156 = vpack.c.b16 %v2127, %v2126
      %v2157 = vpack.c.b16 %v2129, %v2128
      %v2158 = vpack.c.b16 %v2131, %v2130
      %v2159 = vpack.c.b16 %v2133, %v2132
      %v2160 = vpack.c.b16 %v2135, %v2134
      %v2161 = vpack.c.b16 %v2137, %v2136
      %v2162 = vpack.c.b16 %v2139, %v2138
      %v2163 = vpack.c.b16 %v2141, %v2140
      %v2164 = vpack.c.b16 %v2143, %v2142
      %v2165 = vpack.c.b16 %v2145, %v2144
      %v2166 = vpack.c.b16 %v2147, %v2146
      %v2167 = vpack.c.b16 %v2149, %v2148
      %v2168 = vpack.c.b16 %v2151, %v2150
      %v2169 = vpack.c.b16 %v2153, %v2152
      %v2172 = vunpack.c.l.b16 %v2088
      %v2173 = vunpack.c.l.b16 %v2089
      %v2174 = vpack.c.b16 %v2173, %v2172
      %v2177 = vsel %vm442, %v2154, 0
      %v2180 = vsel %vm442, %v2155, 0
      %v2183 = vsel %vm442, %v2156, 0
      %v2186 = vsel %vm442, %v2157, 0
      %v2189 = vsel %vm442, %v2158, 0
      %v2192 = vsel %vm442, %v2159, 0
      %v2195 = vsel %vm442, %v2160, 0
      %v2198 = vsel %vm442, %v2161, 0
      %v2201 = vsel %vm442, %v2162, 0
      %v2204 = vsel %vm442, %v2163, 0
      %v2207 = vsel %vm442, %v2164, 0
      %v2210 = vsel %vm442, %v2165, 0
      %v2213 = vsel %vm442, %v2166, 0
      %v2216 = vsel %vm442, %v2167, 0
      %v2219 = vsel %vm442, %v2168, 0
      %v2222 = vsel %vm442, %v2169, 0
      %2224 = vmatprep.subr.bf16.mxu0 0
      %2225 = vmatpush1.bf16.msra.mxu0 0
      %2226 = vmatprep.subr.bf16.mxu0 0
      %2227 = vmatpush1.bf16.msra.mxu0 0
      %2228 = vmatprep.subr.bf16.mxu0 0
      %2229 = vmatpush1.bf16.msra.mxu0 0
      %2230 = vmatprep.subr.bf16.mxu0 0
      %2231 = vmatpush1.bf16.msra.mxu0 0
      %2232 = vmatprep.subr.bf16.mxu0 0
      %2233 = vmatpush1.bf16.msra.mxu0 0
      %2234 = vmatprep.subr.bf16.mxu0 0
      %2235 = vmatpush1.bf16.msra.mxu0 0
      %2236 = vmatprep.subr.bf16.mxu0 0
      %2237 = vmatpush1.bf16.msra.mxu0 0
      %2238 = vmatprep.subr.bf16.mxu0 0
      %2239 = vmatpush1.bf16.msra.mxu0 %v2174
      %2240 = vmatprep.subr.bf16.mxu0 0
      %2241 = vmatpush2.bf16.msra.mxu0 0
      %2242 = vmatprep.subr.bf16.mxu0 0
      %2243 = vmatpush2.bf16.msra.mxu0 0
      %2244 = vmatprep.subr.bf16.mxu0 0
      %2245 = vmatpush2.bf16.msra.mxu0 0
      %2246 = vmatprep.subr.bf16.mxu0 0
      %2247 = vmatpush2.bf16.msra.mxu0 0
      %2248 = vmatprep.subr.bf16.mxu0 0
      %2249 = vmatpush2.bf16.msra.mxu0 0
      %2250 = vmatprep.subr.bf16.mxu0 0
      %2251 = vmatpush2.bf16.msra.mxu0 0
      %2252 = vmatprep.subr.bf16.mxu0 0
      %2253 = vmatpush2.bf16.msra.mxu0 0
      %2254 = vmatprep.subr.bf16.mxu0 0
      %2255 = vmatpush2.bf16.msra.mxu0 0
      %2256 = vmatprep.mubr.bf16.mxu0 0
      %2257 = vmatmul.mubr.bf16.gmra.mxu0 %v2177
      %v2258 = vpop.f32.mrf.mxu0
      %v2259 = vadd.f32 0.0, %v2258
      %v2260 = vpop.f32.mrf.mxu0
      %v2261 = vpop.f32.mrf.mxu0
      %v2262 = vadd.f32 0.0, %v2261
      %v2263 = vpop.f32.mrf.mxu0
      %2264 = vmatprep.mubr.bf16.mxu0 0
      %2265 = vmatmul.mubr.bf16.gmra.mxu0 %v2180
      %v2266 = vpop.f32.mrf.mxu0
      %v2267 = vadd.f32 0.0, %v2266
      %v2268 = vpop.f32.mrf.mxu0
      %v2269 = vpop.f32.mrf.mxu0
      %v2270 = vadd.f32 0.0, %v2269
      %v2271 = vpop.f32.mrf.mxu0
      %2272 = vmatprep.mubr.bf16.mxu0 0
      %2273 = vmatmul.mubr.bf16.gmra.mxu0 %v2183
      %v2274 = vpop.f32.mrf.mxu0
      %v2275 = vadd.f32 0.0, %v2274
      %v2276 = vpop.f32.mrf.mxu0
      %v2277 = vpop.f32.mrf.mxu0
      %v2278 = vadd.f32 0.0, %v2277
      %v2279 = vpop.f32.mrf.mxu0
      %2280 = vmatprep.mubr.bf16.mxu0 0
      %2281 = vmatmul.mubr.bf16.gmra.mxu0 %v2186
      %v2282 = vpop.f32.mrf.mxu0
      %v2283 = vadd.f32 0.0, %v2282
      %v2284 = vpop.f32.mrf.mxu0
      %v2285 = vpop.f32.mrf.mxu0
      %v2286 = vadd.f32 0.0, %v2285
      %v2287 = vpop.f32.mrf.mxu0
      %2288 = vmatprep.mubr.bf16.mxu0 0
      %2289 = vmatmul.mubr.bf16.gmra.mxu0 %v2189
      %v2290 = vpop.f32.mrf.mxu0
      %v2291 = vadd.f32 0.0, %v2290
      %v2292 = vpop.f32.mrf.mxu0
      %v2293 = vpop.f32.mrf.mxu0
      %v2294 = vadd.f32 0.0, %v2293
      %v2295 = vpop.f32.mrf.mxu0
      %2296 = vmatprep.mubr.bf16.mxu0 0
      %2297 = vmatmul.mubr.bf16.gmra.mxu0 %v2192
      %v2298 = vpop.f32.mrf.mxu0
      %v2299 = vadd.f32 0.0, %v2298
      %v2300 = vpop.f32.mrf.mxu0
      %v2301 = vpop.f32.mrf.mxu0
      %v2302 = vadd.f32 0.0, %v2301
      %v2303 = vpop.f32.mrf.mxu0
      %2304 = vmatprep.mubr.bf16.mxu0 0
      %2305 = vmatmul.mubr.bf16.gmra.mxu0 %v2195
      %v2306 = vpop.f32.mrf.mxu0
      %v2307 = vadd.f32 0.0, %v2306
      %v2308 = vpop.f32.mrf.mxu0
      %v2309 = vpop.f32.mrf.mxu0
      %v2310 = vadd.f32 0.0, %v2309
      %v2311 = vpop.f32.mrf.mxu0
      %2312 = vmatprep.mubr.bf16.mxu0 0
      %2313 = vmatmul.mubr.bf16.gmra.mxu0 %v2198
      %v2314 = vpop.f32.mrf.mxu0
      %v2315 = vadd.f32 0.0, %v2314
      %v2316 = vpop.f32.mrf.mxu0
      %v2317 = vpop.f32.mrf.mxu0
      %v2318 = vadd.f32 0.0, %v2317
      %v2319 = vpop.f32.mrf.mxu0
      %2320 = vmatprep.mubr.bf16.mxu0 0
      %2321 = vmatmul.mubr.bf16.gmra.mxu0 %v2201
      %v2322 = vpop.f32.mrf.mxu0
      %v2323 = vadd.f32 0.0, %v2322
      %v2324 = vpop.f32.mrf.mxu0
      %v2325 = vpop.f32.mrf.mxu0
      %v2326 = vadd.f32 0.0, %v2325
      %v2327 = vpop.f32.mrf.mxu0
      %2328 = vmatprep.mubr.bf16.mxu0 0
      %2329 = vmatmul.mubr.bf16.gmra.mxu0 %v2204
      %v2330 = vpop.f32.mrf.mxu0
      %v2331 = vadd.f32 0.0, %v2330
      %v2332 = vpop.f32.mrf.mxu0
      %v2333 = vpop.f32.mrf.mxu0
      %v2334 = vadd.f32 0.0, %v2333
      %v2335 = vpop.f32.mrf.mxu0
      %2336 = vmatprep.mubr.bf16.mxu0 0
      %2337 = vmatmul.mubr.bf16.gmra.mxu0 %v2207
      %v2338 = vpop.f32.mrf.mxu0
      %v2339 = vadd.f32 0.0, %v2338
      %v2340 = vpop.f32.mrf.mxu0
      %v2341 = vpop.f32.mrf.mxu0
      %v2342 = vadd.f32 0.0, %v2341
      %v2343 = vpop.f32.mrf.mxu0
      %2344 = vmatprep.mubr.bf16.mxu0 0
      %2345 = vmatmul.mubr.bf16.gmra.mxu0 %v2210
      %v2346 = vpop.f32.mrf.mxu0
      %v2347 = vadd.f32 0.0, %v2346
      %v2348 = vpop.f32.mrf.mxu0
      %v2349 = vpop.f32.mrf.mxu0
      %v2350 = vadd.f32 0.0, %v2349
      %v2351 = vpop.f32.mrf.mxu0
      %2352 = vmatprep.mubr.bf16.mxu0 0
      %2353 = vmatmul.mubr.bf16.gmra.mxu0 %v2213
      %v2354 = vpop.f32.mrf.mxu0
      %v2355 = vadd.f32 0.0, %v2354
      %v2356 = vpop.f32.mrf.mxu0
      %v2357 = vpop.f32.mrf.mxu0
      %v2358 = vadd.f32 0.0, %v2357
      %v2359 = vpop.f32.mrf.mxu0
      %2360 = vmatprep.mubr.bf16.mxu0 0
      %2361 = vmatmul.mubr.bf16.gmra.mxu0 %v2216
      %v2362 = vpop.f32.mrf.mxu0
      %v2363 = vadd.f32 0.0, %v2362
      %v2364 = vpop.f32.mrf.mxu0
      %v2365 = vpop.f32.mrf.mxu0
      %v2366 = vadd.f32 0.0, %v2365
      %v2367 = vpop.f32.mrf.mxu0
      %2368 = vmatprep.mubr.bf16.mxu0 0
      %2369 = vmatmul.mubr.bf16.gmra.mxu0 %v2219
      %v2370 = vpop.f32.mrf.mxu0
      %v2371 = vadd.f32 0.0, %v2370
      %v2372 = vpop.f32.mrf.mxu0
      %v2373 = vpop.f32.mrf.mxu0
      %v2374 = vadd.f32 0.0, %v2373
      %v2375 = vpop.f32.mrf.mxu0
      %2376 = vmatprep.mubr.bf16.mxu0 0
      %2377 = vmatmul.mubr.bf16.gmra.mxu0 %v2222
      %v2378 = vpop.f32.mrf.mxu0
      %v2379 = vadd.f32 0.0, %v2378
      %v2380 = vpop.f32.mrf.mxu0
      %v2381 = vpop.f32.mrf.mxu0
      %v2382 = vadd.f32 0.0, %v2381
      %v2383 = vpop.f32.mrf.mxu0
      %2384 = vdwg.mxu0
      %v2385 = vld [vmem:[#allocation2] sm:$0xff]
      %v2386 = vld [vmem:[#allocation2 + $0x8] sm:$0xff]
      %v2387 = vld [vmem:[#allocation2 + $0x10] sm:$0xff]
      %v2388 = vld [vmem:[#allocation2 + $0x18] sm:$0xff]
      %v2389 = vld [vmem:[#allocation2 + $0x20] sm:$0xff]
      %v2390 = vld [vmem:[#allocation2 + $0x28] sm:$0xff]
      %v2391 = vld [vmem:[#allocation2 + $0x30] sm:$0xff]
      %v2392 = vld [vmem:[#allocation2 + $0x38] sm:$0xff]
      %v2393 = vld [vmem:[#allocation2 + $0x40] sm:$0xff]
      %v2394 = vld [vmem:[#allocation2 + $0x48] sm:$0xff]
      %v2395 = vld [vmem:[#allocation2 + $0x50] sm:$0xff]
      %v2396 = vld [vmem:[#allocation2 + $0x58] sm:$0xff]
      %v2397 = vld [vmem:[#allocation2 + $0x60] sm:$0xff]
      %v2398 = vld [vmem:[#allocation2 + $0x68] sm:$0xff]
      %v2399 = vld [vmem:[#allocation2 + $0x70] sm:$0xff]
      %v2400 = vld [vmem:[#allocation2 + $0x78] sm:$0xff]
      %v2401 = vld [vmem:[#allocation2 + $0x80] sm:$0xff]
      %v2402 = vld [vmem:[#allocation2 + $0x88] sm:$0xff]
      %v2403 = vld [vmem:[#allocation2 + $0x90] sm:$0xff]
      %v2404 = vld [vmem:[#allocation2 + $0x98] sm:$0xff]
      %v2405 = vld [vmem:[#allocation2 + $0xa0] sm:$0xff]
      %v2406 = vld [vmem:[#allocation2 + $0xa8] sm:$0xff]
      %v2407 = vld [vmem:[#allocation2 + $0xb0] sm:$0xff]
      %v2408 = vld [vmem:[#allocation2 + $0xb8] sm:$0xff]
      %v2409 = vld [vmem:[#allocation2 + $0xc0] sm:$0xff]
      %v2410 = vld [vmem:[#allocation2 + $0xc8] sm:$0xff]
      %v2411 = vld [vmem:[#allocation2 + $0xd0] sm:$0xff]
      %v2412 = vld [vmem:[#allocation2 + $0xd8] sm:$0xff]
      %v2413 = vld [vmem:[#allocation2 + $0xe0] sm:$0xff]
      %v2414 = vld [vmem:[#allocation2 + $0xe8] sm:$0xff]
      %v2415 = vld [vmem:[#allocation2 + $0xf0] sm:$0xff]
      %v2416 = vld [vmem:[#allocation2 + $0xf8] sm:$0xff]
      %v2417 = vadd.f32 %v2385, %v2259
      %v2418 = vadd.f32 %v2386, %v2262
      %v2419 = vadd.f32 %v2387, %v2267
      %v2420 = vadd.f32 %v2388, %v2270
      %v2421 = vadd.f32 %v2389, %v2275
      %v2422 = vadd.f32 %v2390, %v2278
      %v2423 = vadd.f32 %v2391, %v2283
      %v2424 = vadd.f32 %v2392, %v2286
      %v2425 = vadd.f32 %v2393, %v2291
      %v2426 = vadd.f32 %v2394, %v2294
      %v2427 = vadd.f32 %v2395, %v2299
      %v2428 = vadd.f32 %v2396, %v2302
      %v2429 = vadd.f32 %v2397, %v2307
      %v2430 = vadd.f32 %v2398, %v2310
      %v2431 = vadd.f32 %v2399, %v2315
      %v2432 = vadd.f32 %v2400, %v2318
      %v2433 = vadd.f32 %v2401, %v2323
      %v2434 = vadd.f32 %v2402, %v2326
      %v2435 = vadd.f32 %v2403, %v2331
      %v2436 = vadd.f32 %v2404, %v2334
      %v2437 = vadd.f32 %v2405, %v2339
      %v2438 = vadd.f32 %v2406, %v2342
      %v2439 = vadd.f32 %v2407, %v2347
      %v2440 = vadd.f32 %v2408, %v2350
      %v2441 = vadd.f32 %v2409, %v2355
      %v2442 = vadd.f32 %v2410, %v2358
      %v2443 = vadd.f32 %v2411, %v2363
      %v2444 = vadd.f32 %v2412, %v2366
      %v2445 = vadd.f32 %v2413, %v2371
      %v2446 = vadd.f32 %v2414, %v2374
      %v2447 = vadd.f32 %v2415, %v2379
      %v2448 = vadd.f32 %v2416, %v2382
      %2449 = vst.msk [vmem:[#allocation2] sm:$0xff] %vm442, %v2417
      %2450 = vst.msk [vmem:[#allocation2 + $0x8] sm:$0xff] %vm442, %v2418
      %2451 = vst.msk [vmem:[#allocation2 + $0x10] sm:$0xff] %vm442, %v2419
      %2452 = vst.msk [vmem:[#allocation2 + $0x18] sm:$0xff] %vm442, %v2420
      %2453 = vst.msk [vmem:[#allocation2 + $0x20] sm:$0xff] %vm442, %v2421
      %2454 = vst.msk [vmem:[#allocation2 + $0x28] sm:$0xff] %vm442, %v2422
      %2455 = vst.msk [vmem:[#allocation2 + $0x30] sm:$0xff] %vm442, %v2423
      %2456 = vst.msk [vmem:[#allocation2 + $0x38] sm:$0xff] %vm442, %v2424
      %2457 = vst.msk [vmem:[#allocation2 + $0x40] sm:$0xff] %vm442, %v2425
      %2458 = vst.msk [vmem:[#allocation2 + $0x48] sm:$0xff] %vm442, %v2426
      %2459 = vst.msk [vmem:[#allocation2 + $0x50] sm:$0xff] %vm442, %v2427
      %2460 = vst.msk [vmem:[#allocation2 + $0x58] sm:$0xff] %vm442, %v2428
      %2461 = vst.msk [vmem:[#allocation2 + $0x60] sm:$0xff] %vm442, %v2429
      %2462 = vst.msk [vmem:[#allocation2 + $0x68] sm:$0xff] %vm442, %v2430
      %2463 = vst.msk [vmem:[#allocation2 + $0x70] sm:$0xff] %vm442, %v2431
      %2464 = vst.msk [vmem:[#allocation2 + $0x78] sm:$0xff] %vm442, %v2432
      %2465 = vst.msk [vmem:[#allocation2 + $0x80] sm:$0xff] %vm442, %v2433
      %2466 = vst.msk [vmem:[#allocation2 + $0x88] sm:$0xff] %vm442, %v2434
      %2467 = vst.msk [vmem:[#allocation2 + $0x90] sm:$0xff] %vm442, %v2435
      %2468 = vst.msk [vmem:[#allocation2 + $0x98] sm:$0xff] %vm442, %v2436
      %2469 = vst.msk [vmem:[#allocation2 + $0xa0] sm:$0xff] %vm442, %v2437
      %2470 = vst.msk [vmem:[#allocation2 + $0xa8] sm:$0xff] %vm442, %v2438
      %2471 = vst.msk [vmem:[#allocation2 + $0xb0] sm:$0xff] %vm442, %v2439
      %2472 = vst.msk [vmem:[#allocation2 + $0xb8] sm:$0xff] %vm442, %v2440
      %2473 = vst.msk [vmem:[#allocation2 + $0xc0] sm:$0xff] %vm442, %v2441
      %2474 = vst.msk [vmem:[#allocation2 + $0xc8] sm:$0xff] %vm442, %v2442
      %2475 = vst.msk [vmem:[#allocation2 + $0xd0] sm:$0xff] %vm442, %v2443
      %2476 = vst.msk [vmem:[#allocation2 + $0xd8] sm:$0xff] %vm442, %v2444
      %2477 = vst.msk [vmem:[#allocation2 + $0xe0] sm:$0xff] %vm442, %v2445
      %2478 = vst.msk [vmem:[#allocation2 + $0xe8] sm:$0xff] %vm442, %v2446
      %2479 = vst.msk [vmem:[#allocation2 + $0xf0] sm:$0xff] %vm442, %v2447
      %2480 = vst.msk [vmem:[#allocation2 + $0xf8] sm:$0xff] %vm442, %v2448
      %v2481 = vld [vmem:[%s2054] sm:$0xf]
      %v2482 = vld [vmem:[%s2054 + $0x4] sm:$0xf]
      %v2483 = vld [vmem:[%s2054 + $0x8] sm:$0x1]
      %v2484 = vld [vmem:[%s2054 + $0xc] sm:$0xf]
      %v2485 = vld [vmem:[%s2054 + $0x10] sm:$0xf]
      %v2486 = vld [vmem:[%s2054 + $0x14] sm:$0x1]
      %v2487 = vld [vmem:[%s2054 + $0x18] sm:$0xf]
      %v2488 = vld [vmem:[%s2054 + $0x1c] sm:$0xf]
      %v2489 = vld [vmem:[%s2054 + $0x20] sm:$0x1]
      %v2490 = vld [vmem:[%s2054 + $0x24] sm:$0xf]
      %v2491 = vld [vmem:[%s2054 + $0x28] sm:$0xf]
      %v2492 = vld [vmem:[%s2054 + $0x2c] sm:$0x1]
      %v2493 = vld [vmem:[%s2054 + $0x30] sm:$0xf]
      %v2494 = vld [vmem:[%s2054 + $0x34] sm:$0xf]
      %v2495 = vld [vmem:[%s2054 + $0x38] sm:$0x1]
      %v2496 = vld [vmem:[%s2054 + $0x3c] sm:$0xf]
      %v2497 = vld [vmem:[%s2054 + $0x40] sm:$0xf]
      %v2498 = vld [vmem:[%s2054 + $0x44] sm:$0x1]
      %v2499 = vld [vmem:[%s2054 + $0x48] sm:$0xf]
      %v2500 = vld [vmem:[%s2054 + $0x4c] sm:$0xf]
      %v2501 = vld [vmem:[%s2054 + $0x50] sm:$0x1]
      %v2502 = vld [vmem:[%s2054 + $0x54] sm:$0xf]
      %v2503 = vld [vmem:[%s2054 + $0x58] sm:$0xf]
      %v2504 = vld [vmem:[%s2054 + $0x5c] sm:$0x1]
      %v2505 = vld [vmem:[%s2054 + $0x60] sm:$0xf]
      %v2506 = vld [vmem:[%s2054 + $0x64] sm:$0xf]
      %v2507 = vld [vmem:[%s2054 + $0x68] sm:$0x1]
      %v2508 = vld [vmem:[%s2054 + $0x6c] sm:$0xf]
      %v2509 = vld [vmem:[%s2054 + $0x70] sm:$0xf]
      %v2510 = vld [vmem:[%s2054 + $0x74] sm:$0x1]
      %v2511 = vld [vmem:[%s2054 + $0x78] sm:$0xf]
      %v2512 = vld [vmem:[%s2054 + $0x7c] sm:$0xf]
      %v2513 = vld [vmem:[%s2054 + $0x80] sm:$0x1]
      %v2514 = vld [vmem:[%s2054 + $0x84] sm:$0xf]
      %v2515 = vld [vmem:[%s2054 + $0x88] sm:$0xf]
      %v2516 = vld [vmem:[%s2054 + $0x8c] sm:$0x1]
      %v2517 = vld [vmem:[%s2054 + $0x90] sm:$0xf]
      %v2518 = vld [vmem:[%s2054 + $0x94] sm:$0xf]
      %v2519 = vld [vmem:[%s2054 + $0x98] sm:$0x1]
      %v2520 = vld [vmem:[%s2054 + $0x9c] sm:$0xf]
      %v2521 = vld [vmem:[%s2054 + $0xa0] sm:$0xf]
      %v2522 = vld [vmem:[%s2054 + $0xa4] sm:$0x1]
      %v2523 = vld [vmem:[%s2054 + $0xa8] sm:$0xf]
      %v2524 = vld [vmem:[%s2054 + $0xac] sm:$0xf]
      %v2525 = vld [vmem:[%s2054 + $0xb0] sm:$0x1]
      %v2526 = vld [vmem:[%s2054 + $0xb4] sm:$0xf]
      %v2527 = vld [vmem:[%s2054 + $0xb8] sm:$0xf]
      %v2528 = vld [vmem:[%s2054 + $0xbc] sm:$0x1]
      %v2530 = vshrl.u32 %v2481, 16
      %v2532 = vrot.slane %v2530, 4
      %v2533 = vshll.u32 %v2481, 16
      %v2535 = vrot.slane %v2533, 5
      %v2536 = vor.u32 %v2532, %v2535
      %v2537 = vrot.slane %v2536, 4
      %v2539 = vshll.u32 %v2482, 16
      %v2541 = vrot.slane %v2539, 5
      %v2542 = vsel %vm734, %v2537, %v2541
      %v2543 = vshrl.u32 %v2482, 16
      %v2545 = vrot.slane %v2543, 4
      %v2546 = vor.u32 %v2545, %v2541
      %v2547 = vrot.slane %v2546, 4
      %v2549 = vshll.u32 %v2483, 16
      %v2551 = vrot.slane %v2549, 5
      %v2552 = vsel %vm734, %v2547, %v2551
      %v2554 = vshrl.u32 %v2484, 16
      %v2556 = vrot.slane %v2554, 4
      %v2557 = vshll.u32 %v2484, 16
      %v2559 = vrot.slane %v2557, 5
      %v2560 = vor.u32 %v2556, %v2559
      %v2561 = vrot.slane %v2560, 4
      %v2563 = vshll.u32 %v2485, 16
      %v2565 = vrot.slane %v2563, 5
      %v2566 = vsel %vm734, %v2561, %v2565
      %v2567 = vshrl.u32 %v2485, 16
      %v2569 = vrot.slane %v2567, 4
      %v2570 = vor.u32 %v2569, %v2565
      %v2571 = vrot.slane %v2570, 4
      %v2573 = vshll.u32 %v2486, 16
      %v2575 = vrot.slane %v2573, 5
      %v2576 = vsel %vm734, %v2571, %v2575
      %v2578 = vshrl.u32 %v2487, 16
      %v2580 = vrot.slane %v2578, 4
      %v2581 = vshll.u32 %v2487, 16
      %v2583 = vrot.slane %v2581, 5
      %v2584 = vor.u32 %v2580, %v2583
      %v2585 = vrot.slane %v2584, 4
      %v2587 = vshll.u32 %v2488, 16
      %v2589 = vrot.slane %v2587, 5
      %v2590 = vsel %vm734, %v2585, %v2589
      %v2591 = vshrl.u32 %v2488, 16
      %v2593 = vrot.slane %v2591, 4
      %v2594 = vor.u32 %v2593, %v2589
      %v2595 = vrot.slane %v2594, 4
      %v2597 = vshll.u32 %v2489, 16
      %v2599 = vrot.slane %v2597, 5
      %v2600 = vsel %vm734, %v2595, %v2599
      %v2602 = vshrl.u32 %v2490, 16
      %v2604 = vrot.slane %v2602, 4
      %v2605 = vshll.u32 %v2490, 16
      %v2607 = vrot.slane %v2605, 5
      %v2608 = vor.u32 %v2604, %v2607
      %v2609 = vrot.slane %v2608, 4
      %v2611 = vshll.u32 %v2491, 16
      %v2613 = vrot.slane %v2611, 5
      %v2614 = vsel %vm734, %v2609, %v2613
      %v2615 = vshrl.u32 %v2491, 16
      %v2617 = vrot.slane %v2615, 4
      %v2618 = vor.u32 %v2617, %v2613
      %v2619 = vrot.slane %v2618, 4
      %v2621 = vshll.u32 %v2492, 16
      %v2623 = vrot.slane %v2621, 5
      %v2624 = vsel %vm734, %v2619, %v2623
      %v2626 = vshrl.u32 %v2493, 16
      %v2628 = vrot.slane %v2626, 4
      %v2629 = vshll.u32 %v2493, 16
      %v2631 = vrot.slane %v2629, 5
      %v2632 = vor.u32 %v2628, %v2631
      %v2633 = vrot.slane %v2632, 4
      %v2635 = vshll.u32 %v2494, 16
      %v2637 = vrot.slane %v2635, 5
      %v2638 = vsel %vm734, %v2633, %v2637
      %v2639 = vshrl.u32 %v2494, 16
      %v2641 = vrot.slane %v2639, 4
      %v2642 = vor.u32 %v2641, %v2637
      %v2643 = vrot.slane %v2642, 4
      %v2645 = vshll.u32 %v2495, 16
      %v2647 = vrot.slane %v2645, 5
      %v2648 = vsel %vm734, %v2643, %v2647
      %v2650 = vshrl.u32 %v2496, 16
      %v2652 = vrot.slane %v2650, 4
      %v2653 = vshll.u32 %v2496, 16
      %v2655 = vrot.slane %v2653, 5
      %v2656 = vor.u32 %v2652, %v2655
      %v2657 = vrot.slane %v2656, 4
      %v2659 = vshll.u32 %v2497, 16
      %v2661 = vrot.slane %v2659, 5
      %v2662 = vsel %vm734, %v2657, %v2661
      %v2663 = vshrl.u32 %v2497, 16
      %v2665 = vrot.slane %v2663, 4
      %v2666 = vor.u32 %v2665, %v2661
      %v2667 = vrot.slane %v2666, 4
      %v2669 = vshll.u32 %v2498, 16
      %v2671 = vrot.slane %v2669, 5
      %v2672 = vsel %vm734, %v2667, %v2671
      %v2674 = vshrl.u32 %v2499, 16
      %v2676 = vrot.slane %v2674, 4
      %v2677 = vshll.u32 %v2499, 16
      %v2679 = vrot.slane %v2677, 5
      %v2680 = vor.u32 %v2676, %v2679
      %v2681 = vrot.slane %v2680, 4
      %v2683 = vshll.u32 %v2500, 16
      %v2685 = vrot.slane %v2683, 5
      %v2686 = vsel %vm734, %v2681, %v2685
      %v2687 = vshrl.u32 %v2500, 16
      %v2689 = vrot.slane %v2687, 4
      %v2690 = vor.u32 %v2689, %v2685
      %v2691 = vrot.slane %v2690, 4
      %v2693 = vshll.u32 %v2501, 16
      %v2695 = vrot.slane %v2693, 5
      %v2696 = vsel %vm734, %v2691, %v2695
      %v2698 = vshrl.u32 %v2502, 16
      %v2700 = vrot.slane %v2698, 4
      %v2701 = vshll.u32 %v2502, 16
      %v2703 = vrot.slane %v2701, 5
      %v2704 = vor.u32 %v2700, %v2703
      %v2705 = vrot.slane %v2704, 4
      %v2707 = vshll.u32 %v2503, 16
      %v2709 = vrot.slane %v2707, 5
      %v2710 = vsel %vm734, %v2705, %v2709
      %v2711 = vshrl.u32 %v2503, 16
      %v2713 = vrot.slane %v2711, 4
      %v2714 = vor.u32 %v2713, %v2709
      %v2715 = vrot.slane %v2714, 4
      %v2717 = vshll.u32 %v2504, 16
      %v2719 = vrot.slane %v2717, 5
      %v2720 = vsel %vm734, %v2715, %v2719
      %v2722 = vshrl.u32 %v2505, 16
      %v2724 = vrot.slane %v2722, 4
      %v2725 = vshll.u32 %v2505, 16
      %v2727 = vrot.slane %v2725, 5
      %v2728 = vor.u32 %v2724, %v2727
      %v2729 = vrot.slane %v2728, 4
      %v2731 = vshll.u32 %v2506, 16
      %v2733 = vrot.slane %v2731, 5
      %v2734 = vsel %vm734, %v2729, %v2733
      %v2735 = vshrl.u32 %v2506, 16
      %v2737 = vrot.slane %v2735, 4
      %v2738 = vor.u32 %v2737, %v2733
      %v2739 = vrot.slane %v2738, 4
      %v2741 = vshll.u32 %v2507, 16
      %v2743 = vrot.slane %v2741, 5
      %v2744 = vsel %vm734, %v2739, %v2743
      %v2746 = vshrl.u32 %v2508, 16
      %v2748 = vrot.slane %v2746, 4
      %v2749 = vshll.u32 %v2508, 16
      %v2751 = vrot.slane %v2749, 5
      %v2752 = vor.u32 %v2748, %v2751
      %v2753 = vrot.slane %v2752, 4
      %v2755 = vshll.u32 %v2509, 16
      %v2757 = vrot.slane %v2755, 5
      %v2758 = vsel %vm734, %v2753, %v2757
      %v2759 = vshrl.u32 %v2509, 16
      %v2761 = vrot.slane %v2759, 4
      %v2762 = vor.u32 %v2761, %v2757
      %v2763 = vrot.slane %v2762, 4
      %v2765 = vshll.u32 %v2510, 16
      %v2767 = vrot.slane %v2765, 5
      %v2768 = vsel %vm734, %v2763, %v2767
      %v2770 = vshrl.u32 %v2511, 16
      %v2772 = vrot.slane %v2770, 4
      %v2773 = vshll.u32 %v2511, 16
      %v2775 = vrot.slane %v2773, 5
      %v2776 = vor.u32 %v2772, %v2775
      %v2777 = vrot.slane %v2776, 4
      %v2779 = vshll.u32 %v2512, 16
      %v2781 = vrot.slane %v2779, 5
      %v2782 = vsel %vm734, %v2777, %v2781
      %v2783 = vshrl.u32 %v2512, 16
      %v2785 = vrot.slane %v2783, 4
      %v2786 = vor.u32 %v2785, %v2781
      %v2787 = vrot.slane %v2786, 4
      %v2789 = vshll.u32 %v2513, 16
      %v2791 = vrot.slane %v2789, 5
      %v2792 = vsel %vm734, %v2787, %v2791
      %v2794 = vshrl.u32 %v2514, 16
      %v2796 = vrot.slane %v2794, 4
      %v2797 = vshll.u32 %v2514, 16
      %v2799 = vrot.slane %v2797, 5
      %v2800 = vor.u32 %v2796, %v2799
      %v2801 = vrot.slane %v2800, 4
      %v2803 = vshll.u32 %v2515, 16
      %v2805 = vrot.slane %v2803, 5
      %v2806 = vsel %vm734, %v2801, %v2805
      %v2807 = vshrl.u32 %v2515, 16
      %v2809 = vrot.slane %v2807, 4
      %v2810 = vor.u32 %v2809, %v2805
      %v2811 = vrot.slane %v2810, 4
      %v2813 = vshll.u32 %v2516, 16
      %v2815 = vrot.slane %v2813, 5
      %v2816 = vsel %vm734, %v2811, %v2815
      %v2818 = vshrl.u32 %v2517, 16
      %v2820 = vrot.slane %v2818, 4
      %v2821 = vshll.u32 %v2517, 16
      %v2823 = vrot.slane %v2821, 5
      %v2824 = vor.u32 %v2820, %v2823
      %v2825 = vrot.slane %v2824, 4
      %v2827 = vshll.u32 %v2518, 16
      %v2829 = vrot.slane %v2827, 5
      %v2830 = vsel %vm734, %v2825, %v2829
      %v2831 = vshrl.u32 %v2518, 16
      %v2833 = vrot.slane %v2831, 4
      %v2834 = vor.u32 %v2833, %v2829
      %v2835 = vrot.slane %v2834, 4
      %v2837 = vshll.u32 %v2519, 16
      %v2839 = vrot.slane %v2837, 5
      %v2840 = vsel %vm734, %v2835, %v2839
      %v2842 = vshrl.u32 %v2520, 16
      %v2844 = vrot.slane %v2842, 4
      %v2845 = vshll.u32 %v2520, 16
      %v2847 = vrot.slane %v2845, 5
      %v2848 = vor.u32 %v2844, %v2847
      %v2849 = vrot.slane %v2848, 4
      %v2851 = vshll.u32 %v2521, 16
      %v2853 = vrot.slane %v2851, 5
      %v2854 = vsel %vm734, %v2849, %v2853
      %v2855 = vshrl.u32 %v2521, 16
      %v2857 = vrot.slane %v2855, 4
      %v2858 = vor.u32 %v2857, %v2853
      %v2859 = vrot.slane %v2858, 4
      %v2861 = vshll.u32 %v2522, 16
      %v2863 = vrot.slane %v2861, 5
      %v2864 = vsel %vm734, %v2859, %v2863
      %v2866 = vshrl.u32 %v2523, 16
      %v2868 = vrot.slane %v2866, 4
      %v2869 = vshll.u32 %v2523, 16
      %v2871 = vrot.slane %v2869, 5
      %v2872 = vor.u32 %v2868, %v2871
      %v2873 = vrot.slane %v2872, 4
      %v2875 = vshll.u32 %v2524, 16
      %v2877 = vrot.slane %v2875, 5
      %v2878 = vsel %vm734, %v2873, %v2877
      %v2879 = vshrl.u32 %v2524, 16
      %v2881 = vrot.slane %v2879, 4
      %v2882 = vor.u32 %v2881, %v2877
      %v2883 = vrot.slane %v2882, 4
      %v2885 = vshll.u32 %v2525, 16
      %v2887 = vrot.slane %v2885, 5
      %v2888 = vsel %vm734, %v2883, %v2887
      %v2890 = vshrl.u32 %v2526, 16
      %v2892 = vrot.slane %v2890, 4
      %v2893 = vshll.u32 %v2526, 16
      %v2895 = vrot.slane %v2893, 5
      %v2896 = vor.u32 %v2892, %v2895
      %v2897 = vrot.slane %v2896, 4
      %v2899 = vshll.u32 %v2527, 16
      %v2901 = vrot.slane %v2899, 5
      %v2902 = vsel %vm734, %v2897, %v2901
      %v2903 = vshrl.u32 %v2527, 16
      %v2905 = vrot.slane %v2903, 4
      %v2906 = vor.u32 %v2905, %v2901
      %v2907 = vrot.slane %v2906, 4
      %v2909 = vshll.u32 %v2528, 16
      %v2911 = vrot.slane %v2909, 5
      %v2912 = vsel %vm734, %v2907, %v2911
      %s2913 = scalar_lea.vmem %s298, 32
      %v2914 = vld [vmem:[%s2913] sm:$0xf]
      %v2915 = vld [vmem:[%s2913 + $0x4] sm:$0xf]
      %v2916 = vunpack.c.l.b16 %v2542
      %v2917 = vunpack.c.l.b16 %v2552
      %v2918 = vunpack.c.l.b16 %v2566
      %v2919 = vunpack.c.l.b16 %v2576
      %v2920 = vunpack.c.l.b16 %v2590
      %v2921 = vunpack.c.l.b16 %v2600
      %v2922 = vunpack.c.l.b16 %v2614
      %v2923 = vunpack.c.l.b16 %v2624
      %v2924 = vunpack.c.l.b16 %v2638
      %v2925 = vunpack.c.l.b16 %v2648
      %v2926 = vunpack.c.l.b16 %v2662
      %v2927 = vunpack.c.l.b16 %v2672
      %v2928 = vunpack.c.l.b16 %v2686
      %v2929 = vunpack.c.l.b16 %v2696
      %v2930 = vunpack.c.l.b16 %v2710
      %v2931 = vunpack.c.l.b16 %v2720
      %v2932 = vunpack.c.l.b16 %v2734
      %v2933 = vunpack.c.l.b16 %v2744
      %v2934 = vunpack.c.l.b16 %v2758
      %v2935 = vunpack.c.l.b16 %v2768
      %v2936 = vunpack.c.l.b16 %v2782
      %v2937 = vunpack.c.l.b16 %v2792
      %v2938 = vunpack.c.l.b16 %v2806
      %v2939 = vunpack.c.l.b16 %v2816
      %v2940 = vunpack.c.l.b16 %v2830
      %v2941 = vunpack.c.l.b16 %v2840
      %v2942 = vunpack.c.l.b16 %v2854
      %v2943 = vunpack.c.l.b16 %v2864
      %v2944 = vunpack.c.l.b16 %v2878
      %v2945 = vunpack.c.l.b16 %v2888
      %v2946 = vunpack.c.l.b16 %v2902
      %v2947 = vunpack.c.l.b16 %v2912
      %v2948 = vpack.c.b16 %v2917, %v2916
      %v2949 = vpack.c.b16 %v2919, %v2918
      %v2950 = vpack.c.b16 %v2921, %v2920
      %v2951 = vpack.c.b16 %v2923, %v2922
      %v2952 = vpack.c.b16 %v2925, %v2924
      %v2953 = vpack.c.b16 %v2927, %v2926
      %v2954 = vpack.c.b16 %v2929, %v2928
      %v2955 = vpack.c.b16 %v2931, %v2930
      %v2956 = vpack.c.b16 %v2933, %v2932
      %v2957 = vpack.c.b16 %v2935, %v2934
      %v2958 = vpack.c.b16 %v2937, %v2936
      %v2959 = vpack.c.b16 %v2939, %v2938
      %v2960 = vpack.c.b16 %v2941, %v2940
      %v2961 = vpack.c.b16 %v2943, %v2942
      %v2962 = vpack.c.b16 %v2945, %v2944
      %v2963 = vpack.c.b16 %v2947, %v2946
      %v2966 = vunpack.c.l.b16 %v2914
      %v2967 = vunpack.c.l.b16 %v2915
      %v2968 = vpack.c.b16 %v2967, %v2966
      %v2971 = vsel %vm442, %v2948, 0
      %v2974 = vsel %vm442, %v2949, 0
      %v2977 = vsel %vm442, %v2950, 0
      %v2980 = vsel %vm442, %v2951, 0
      %v2983 = vsel %vm442, %v2952, 0
      %v2986 = vsel %vm442, %v2953, 0
      %v2989 = vsel %vm442, %v2954, 0
      %v2992 = vsel %vm442, %v2955, 0
      %v2995 = vsel %vm442, %v2956, 0
      %v2998 = vsel %vm442, %v2957, 0
      %v3001 = vsel %vm442, %v2958, 0
      %v3004 = vsel %vm442, %v2959, 0
      %v3007 = vsel %vm442, %v2960, 0
      %v3010 = vsel %vm442, %v2961, 0
      %v3013 = vsel %vm442, %v2962, 0
      %v3016 = vsel %vm442, %v2963, 0
      %3018 = vmatprep.subr.bf16.mxu0 0
      %3019 = vmatpush1.bf16.msra.mxu0 0
      %3020 = vmatprep.subr.bf16.mxu0 0
      %3021 = vmatpush1.bf16.msra.mxu0 0
      %3022 = vmatprep.subr.bf16.mxu0 0
      %3023 = vmatpush1.bf16.msra.mxu0 0
      %3024 = vmatprep.subr.bf16.mxu0 0
      %3025 = vmatpush1.bf16.msra.mxu0 0
      %3026 = vmatprep.subr.bf16.mxu0 0
      %3027 = vmatpush1.bf16.msra.mxu0 0
      %3028 = vmatprep.subr.bf16.mxu0 0
      %3029 = vmatpush1.bf16.msra.mxu0 0
      %3030 = vmatprep.subr.bf16.mxu0 0
      %3031 = vmatpush1.bf16.msra.mxu0 0
      %3032 = vmatprep.subr.bf16.mxu0 0
      %3033 = vmatpush1.bf16.msra.mxu0 %v2968
      %3034 = vmatprep.subr.bf16.mxu0 0
      %3035 = vmatpush2.bf16.msra.mxu0 0
      %3036 = vmatprep.subr.bf16.mxu0 0
      %3037 = vmatpush2.bf16.msra.mxu0 0
      %3038 = vmatprep.subr.bf16.mxu0 0
      %3039 = vmatpush2.bf16.msra.mxu0 0
      %3040 = vmatprep.subr.bf16.mxu0 0
      %3041 = vmatpush2.bf16.msra.mxu0 0
      %3042 = vmatprep.subr.bf16.mxu0 0
      %3043 = vmatpush2.bf16.msra.mxu0 0
      %3044 = vmatprep.subr.bf16.mxu0 0
      %3045 = vmatpush2.bf16.msra.mxu0 0
      %3046 = vmatprep.subr.bf16.mxu0 0
      %3047 = vmatpush2.bf16.msra.mxu0 0
      %3048 = vmatprep.subr.bf16.mxu0 0
      %3049 = vmatpush2.bf16.msra.mxu0 0
      %3050 = vmatprep.mubr.bf16.mxu0 0
      %3051 = vmatmul.mubr.bf16.gmra.mxu0 %v2971
      %v3052 = vpop.f32.mrf.mxu0
      %v3053 = vadd.f32 0.0, %v3052
      %v3054 = vpop.f32.mrf.mxu0
      %v3055 = vpop.f32.mrf.mxu0
      %v3056 = vadd.f32 0.0, %v3055
      %v3057 = vpop.f32.mrf.mxu0
      %3058 = vmatprep.mubr.bf16.mxu0 0
      %3059 = vmatmul.mubr.bf16.gmra.mxu0 %v2974
      %v3060 = vpop.f32.mrf.mxu0
      %v3061 = vadd.f32 0.0, %v3060
      %v3062 = vpop.f32.mrf.mxu0
      %v3063 = vpop.f32.mrf.mxu0
      %v3064 = vadd.f32 0.0, %v3063
      %v3065 = vpop.f32.mrf.mxu0
      %3066 = vmatprep.mubr.bf16.mxu0 0
      %3067 = vmatmul.mubr.bf16.gmra.mxu0 %v2977
      %v3068 = vpop.f32.mrf.mxu0
      %v3069 = vadd.f32 0.0, %v3068
      %v3070 = vpop.f32.mrf.mxu0
      %v3071 = vpop.f32.mrf.mxu0
      %v3072 = vadd.f32 0.0, %v3071
      %v3073 = vpop.f32.mrf.mxu0
      %3074 = vmatprep.mubr.bf16.mxu0 0
      %3075 = vmatmul.mubr.bf16.gmra.mxu0 %v2980
      %v3076 = vpop.f32.mrf.mxu0
      %v3077 = vadd.f32 0.0, %v3076
      %v3078 = vpop.f32.mrf.mxu0
      %v3079 = vpop.f32.mrf.mxu0
      %v3080 = vadd.f32 0.0, %v3079
      %v3081 = vpop.f32.mrf.mxu0
      %3082 = vmatprep.mubr.bf16.mxu0 0
      %3083 = vmatmul.mubr.bf16.gmra.mxu0 %v2983
      %v3084 = vpop.f32.mrf.mxu0
      %v3085 = vadd.f32 0.0, %v3084
      %v3086 = vpop.f32.mrf.mxu0
      %v3087 = vpop.f32.mrf.mxu0
      %v3088 = vadd.f32 0.0, %v3087
      %v3089 = vpop.f32.mrf.mxu0
      %3090 = vmatprep.mubr.bf16.mxu0 0
      %3091 = vmatmul.mubr.bf16.gmra.mxu0 %v2986
      %v3092 = vpop.f32.mrf.mxu0
      %v3093 = vadd.f32 0.0, %v3092
      %v3094 = vpop.f32.mrf.mxu0
      %v3095 = vpop.f32.mrf.mxu0
      %v3096 = vadd.f32 0.0, %v3095
      %v3097 = vpop.f32.mrf.mxu0
      %3098 = vmatprep.mubr.bf16.mxu0 0
      %3099 = vmatmul.mubr.bf16.gmra.mxu0 %v2989
      %v3100 = vpop.f32.mrf.mxu0
      %v3101 = vadd.f32 0.0, %v3100
      %v3102 = vpop.f32.mrf.mxu0
      %v3103 = vpop.f32.mrf.mxu0
      %v3104 = vadd.f32 0.0, %v3103
      %v3105 = vpop.f32.mrf.mxu0
      %3106 = vmatprep.mubr.bf16.mxu0 0
      %3107 = vmatmul.mubr.bf16.gmra.mxu0 %v2992
      %v3108 = vpop.f32.mrf.mxu0
      %v3109 = vadd.f32 0.0, %v3108
      %v3110 = vpop.f32.mrf.mxu0
      %v3111 = vpop.f32.mrf.mxu0
      %v3112 = vadd.f32 0.0, %v3111
      %v3113 = vpop.f32.mrf.mxu0
      %3114 = vmatprep.mubr.bf16.mxu0 0
      %3115 = vmatmul.mubr.bf16.gmra.mxu0 %v2995
      %v3116 = vpop.f32.mrf.mxu0
      %v3117 = vadd.f32 0.0, %v3116
      %v3118 = vpop.f32.mrf.mxu0
      %v3119 = vpop.f32.mrf.mxu0
      %v3120 = vadd.f32 0.0, %v3119
      %v3121 = vpop.f32.mrf.mxu0
      %3122 = vmatprep.mubr.bf16.mxu0 0
      %3123 = vmatmul.mubr.bf16.gmra.mxu0 %v2998
      %v3124 = vpop.f32.mrf.mxu0
      %v3125 = vadd.f32 0.0, %v3124
      %v3126 = vpop.f32.mrf.mxu0
      %v3127 = vpop.f32.mrf.mxu0
      %v3128 = vadd.f32 0.0, %v3127
      %v3129 = vpop.f32.mrf.mxu0
      %3130 = vmatprep.mubr.bf16.mxu0 0
      %3131 = vmatmul.mubr.bf16.gmra.mxu0 %v3001
      %v3132 = vpop.f32.mrf.mxu0
      %v3133 = vadd.f32 0.0, %v3132
      %v3134 = vpop.f32.mrf.mxu0
      %v3135 = vpop.f32.mrf.mxu0
      %v3136 = vadd.f32 0.0, %v3135
      %v3137 = vpop.f32.mrf.mxu0
      %3138 = vmatprep.mubr.bf16.mxu0 0
      %3139 = vmatmul.mubr.bf16.gmra.mxu0 %v3004
      %v3140 = vpop.f32.mrf.mxu0
      %v3141 = vadd.f32 0.0, %v3140
      %v3142 = vpop.f32.mrf.mxu0
      %v3143 = vpop.f32.mrf.mxu0
      %v3144 = vadd.f32 0.0, %v3143
      %v3145 = vpop.f32.mrf.mxu0
      %3146 = vmatprep.mubr.bf16.mxu0 0
      %3147 = vmatmul.mubr.bf16.gmra.mxu0 %v3007
      %v3148 = vpop.f32.mrf.mxu0
      %v3149 = vadd.f32 0.0, %v3148
      %v3150 = vpop.f32.mrf.mxu0
      %v3151 = vpop.f32.mrf.mxu0
      %v3152 = vadd.f32 0.0, %v3151
      %v3153 = vpop.f32.mrf.mxu0
      %3154 = vmatprep.mubr.bf16.mxu0 0
      %3155 = vmatmul.mubr.bf16.gmra.mxu0 %v3010
      %v3156 = vpop.f32.mrf.mxu0
      %v3157 = vadd.f32 0.0, %v3156
      %v3158 = vpop.f32.mrf.mxu0
      %v3159 = vpop.f32.mrf.mxu0
      %v3160 = vadd.f32 0.0, %v3159
      %v3161 = vpop.f32.mrf.mxu0
      %3162 = vmatprep.mubr.bf16.mxu0 0
      %3163 = vmatmul.mubr.bf16.gmra.mxu0 %v3013
      %v3164 = vpop.f32.mrf.mxu0
      %v3165 = vadd.f32 0.0, %v3164
      %v3166 = vpop.f32.mrf.mxu0
      %v3167 = vpop.f32.mrf.mxu0
      %v3168 = vadd.f32 0.0, %v3167
      %v3169 = vpop.f32.mrf.mxu0
      %3170 = vmatprep.mubr.bf16.mxu0 0
      %3171 = vmatmul.mubr.bf16.gmra.mxu0 %v3016
      %v3172 = vpop.f32.mrf.mxu0
      %v3173 = vadd.f32 0.0, %v3172
      %v3174 = vpop.f32.mrf.mxu0
      %v3175 = vpop.f32.mrf.mxu0
      %v3176 = vadd.f32 0.0, %v3175
      %v3177 = vpop.f32.mrf.mxu0
      %3178 = vdwg.mxu0
      %v3179 = vld [vmem:[#allocation2] sm:$0xff]
      %v3180 = vld [vmem:[#allocation2 + $0x8] sm:$0xff]
      %v3181 = vld [vmem:[#allocation2 + $0x10] sm:$0xff]
      %v3182 = vld [vmem:[#allocation2 + $0x18] sm:$0xff]
      %v3183 = vld [vmem:[#allocation2 + $0x20] sm:$0xff]
      %v3184 = vld [vmem:[#allocation2 + $0x28] sm:$0xff]
      %v3185 = vld [vmem:[#allocation2 + $0x30] sm:$0xff]
      %v3186 = vld [vmem:[#allocation2 + $0x38] sm:$0xff]
      %v3187 = vld [vmem:[#allocation2 + $0x40] sm:$0xff]
      %v3188 = vld [vmem:[#allocation2 + $0x48] sm:$0xff]
      %v3189 = vld [vmem:[#allocation2 + $0x50] sm:$0xff]
      %v3190 = vld [vmem:[#allocation2 + $0x58] sm:$0xff]
      %v3191 = vld [vmem:[#allocation2 + $0x60] sm:$0xff]
      %v3192 = vld [vmem:[#allocation2 + $0x68] sm:$0xff]
      %v3193 = vld [vmem:[#allocation2 + $0x70] sm:$0xff]
      %v3194 = vld [vmem:[#allocation2 + $0x78] sm:$0xff]
      %v3195 = vld [vmem:[#allocation2 + $0x80] sm:$0xff]
      %v3196 = vld [vmem:[#allocation2 + $0x88] sm:$0xff]
      %v3197 = vld [vmem:[#allocation2 + $0x90] sm:$0xff]
      %v3198 = vld [vmem:[#allocation2 + $0x98] sm:$0xff]
      %v3199 = vld [vmem:[#allocation2 + $0xa0] sm:$0xff]
      %v3200 = vld [vmem:[#allocation2 + $0xa8] sm:$0xff]
      %v3201 = vld [vmem:[#allocation2 + $0xb0] sm:$0xff]
      %v3202 = vld [vmem:[#allocation2 + $0xb8] sm:$0xff]
      %v3203 = vld [vmem:[#allocation2 + $0xc0] sm:$0xff]
      %v3204 = vld [vmem:[#allocation2 + $0xc8] sm:$0xff]
      %v3205 = vld [vmem:[#allocation2 + $0xd0] sm:$0xff]
      %v3206 = vld [vmem:[#allocation2 + $0xd8] sm:$0xff]
      %v3207 = vld [vmem:[#allocation2 + $0xe0] sm:$0xff]
      %v3208 = vld [vmem:[#allocation2 + $0xe8] sm:$0xff]
      %v3209 = vld [vmem:[#allocation2 + $0xf0] sm:$0xff]
      %v3210 = vld [vmem:[#allocation2 + $0xf8] sm:$0xff]
      %v3211 = vadd.f32 %v3179, %v3053
      %v3212 = vadd.f32 %v3180, %v3056
      %v3213 = vadd.f32 %v3181, %v3061
      %v3214 = vadd.f32 %v3182, %v3064
      %v3215 = vadd.f32 %v3183, %v3069
      %v3216 = vadd.f32 %v3184, %v3072
      %v3217 = vadd.f32 %v3185, %v3077
      %v3218 = vadd.f32 %v3186, %v3080
      %v3219 = vadd.f32 %v3187, %v3085
      %v3220 = vadd.f32 %v3188, %v3088
      %v3221 = vadd.f32 %v3189, %v3093
      %v3222 = vadd.f32 %v3190, %v3096
      %v3223 = vadd.f32 %v3191, %v3101
      %v3224 = vadd.f32 %v3192, %v3104
      %v3225 = vadd.f32 %v3193, %v3109
      %v3226 = vadd.f32 %v3194, %v3112
      %v3227 = vadd.f32 %v3195, %v3117
      %v3228 = vadd.f32 %v3196, %v3120
      %v3229 = vadd.f32 %v3197, %v3125
      %v3230 = vadd.f32 %v3198, %v3128
      %v3231 = vadd.f32 %v3199, %v3133
      %v3232 = vadd.f32 %v3200, %v3136
      %v3233 = vadd.f32 %v3201, %v3141
      %v3234 = vadd.f32 %v3202, %v3144
      %v3235 = vadd.f32 %v3203, %v3149
      %v3236 = vadd.f32 %v3204, %v3152
      %v3237 = vadd.f32 %v3205, %v3157
      %v3238 = vadd.f32 %v3206, %v3160
      %v3239 = vadd.f32 %v3207, %v3165
      %v3240 = vadd.f32 %v3208, %v3168
      %v3241 = vadd.f32 %v3209, %v3173
      %v3242 = vadd.f32 %v3210, %v3176
      %3243 = vst.msk [vmem:[#allocation2] sm:$0xff] %vm442, %v3211
      %3244 = vst.msk [vmem:[#allocation2 + $0x8] sm:$0xff] %vm442, %v3212
      %3245 = vst.msk [vmem:[#allocation2 + $0x10] sm:$0xff] %vm442, %v3213
      %3246 = vst.msk [vmem:[#allocation2 + $0x18] sm:$0xff] %vm442, %v3214
      %3247 = vst.msk [vmem:[#allocation2 + $0x20] sm:$0xff] %vm442, %v3215
      %3248 = vst.msk [vmem:[#allocation2 + $0x28] sm:$0xff] %vm442, %v3216
      %3249 = vst.msk [vmem:[#allocation2 + $0x30] sm:$0xff] %vm442, %v3217
      %3250 = vst.msk [vmem:[#allocation2 + $0x38] sm:$0xff] %vm442, %v3218
      %3251 = vst.msk [vmem:[#allocation2 + $0x40] sm:$0xff] %vm442, %v3219
      %3252 = vst.msk [vmem:[#allocation2 + $0x48] sm:$0xff] %vm442, %v3220
      %3253 = vst.msk [vmem:[#allocation2 + $0x50] sm:$0xff] %vm442, %v3221
      %3254 = vst.msk [vmem:[#allocation2 + $0x58] sm:$0xff] %vm442, %v3222
      %3255 = vst.msk [vmem:[#allocation2 + $0x60] sm:$0xff] %vm442, %v3223
      %3256 = vst.msk [vmem:[#allocation2 + $0x68] sm:$0xff] %vm442, %v3224
      %3257 = vst.msk [vmem:[#allocation2 + $0x70] sm:$0xff] %vm442, %v3225
      %3258 = vst.msk [vmem:[#allocation2 + $0x78] sm:$0xff] %vm442, %v3226
      %3259 = vst.msk [vmem:[#allocation2 + $0x80] sm:$0xff] %vm442, %v3227
      %3260 = vst.msk [vmem:[#allocation2 + $0x88] sm:$0xff] %vm442, %v3228
      %3261 = vst.msk [vmem:[#allocation2 + $0x90] sm:$0xff] %vm442, %v3229
      %3262 = vst.msk [vmem:[#allocation2 + $0x98] sm:$0xff] %vm442, %v3230
      %3263 = vst.msk [vmem:[#allocation2 + $0xa0] sm:$0xff] %vm442, %v3231
      %3264 = vst.msk [vmem:[#allocation2 + $0xa8] sm:$0xff] %vm442, %v3232
      %3265 = vst.msk [vmem:[#allocation2 + $0xb0] sm:$0xff] %vm442, %v3233
      %3266 = vst.msk [vmem:[#allocation2 + $0xb8] sm:$0xff] %vm442, %v3234
      %3267 = vst.msk [vmem:[#allocation2 + $0xc0] sm:$0xff] %vm442, %v3235
      %3268 = vst.msk [vmem:[#allocation2 + $0xc8] sm:$0xff] %vm442, %v3236
      %3269 = vst.msk [vmem:[#allocation2 + $0xd0] sm:$0xff] %vm442, %v3237
      %3270 = vst.msk [vmem:[#allocation2 + $0xd8] sm:$0xff] %vm442, %v3238
      %3271 = vst.msk [vmem:[#allocation2 + $0xe0] sm:$0xff] %vm442, %v3239
      %3272 = vst.msk [vmem:[#allocation2 + $0xe8] sm:$0xff] %vm442, %v3240
      %3273 = vst.msk [vmem:[#allocation2 + $0xf0] sm:$0xff] %vm442, %v3241
      %3274 = vst.msk [vmem:[#allocation2 + $0xf8] sm:$0xff] %vm442, %v3242
      %v3275 = vld [vmem:[%s2054] sm:$0xe]
      %v3276 = vld [vmem:[%s2054 + $0x4] sm:$0xf]
      %v3277 = vld [vmem:[%s2054 + $0x8] sm:$0x1]
      %v3278 = vld [vmem:[%s2054 + $0xc] sm:$0xe]
      %v3279 = vld [vmem:[%s2054 + $0x10] sm:$0xf]
      %v3280 = vld [vmem:[%s2054 + $0x14] sm:$0x1]
      %v3281 = vld [vmem:[%s2054 + $0x18] sm:$0xe]
      %v3282 = vld [vmem:[%s2054 + $0x1c] sm:$0xf]
      %v3283 = vld [vmem:[%s2054 + $0x20] sm:$0x1]
      %v3284 = vld [vmem:[%s2054 + $0x24] sm:$0xe]
      %v3285 = vld [vmem:[%s2054 + $0x28] sm:$0xf]
      %v3286 = vld [vmem:[%s2054 + $0x2c] sm:$0x1]
      %v3287 = vld [vmem:[%s2054 + $0x30] sm:$0xe]
      %v3288 = vld [vmem:[%s2054 + $0x34] sm:$0xf]
      %v3289 = vld [vmem:[%s2054 + $0x38] sm:$0x1]
      %v3290 = vld [vmem:[%s2054 + $0x3c] sm:$0xe]
      %v3291 = vld [vmem:[%s2054 + $0x40] sm:$0xf]
      %v3292 = vld [vmem:[%s2054 + $0x44] sm:$0x1]
      %v3293 = vld [vmem:[%s2054 + $0x48] sm:$0xe]
      %v3294 = vld [vmem:[%s2054 + $0x4c] sm:$0xf]
      %v3295 = vld [vmem:[%s2054 + $0x50] sm:$0x1]
      %v3296 = vld [vmem:[%s2054 + $0x54] sm:$0xe]
      %v3297 = vld [vmem:[%s2054 + $0x58] sm:$0xf]
      %v3298 = vld [vmem:[%s2054 + $0x5c] sm:$0x1]
      %v3299 = vld [vmem:[%s2054 + $0x60] sm:$0xe]
      %v3300 = vld [vmem:[%s2054 + $0x64] sm:$0xf]
      %v3301 = vld [vmem:[%s2054 + $0x68] sm:$0x1]
      %v3302 = vld [vmem:[%s2054 + $0x6c] sm:$0xe]
      %v3303 = vld [vmem:[%s2054 + $0x70] sm:$0xf]
      %v3304 = vld [vmem:[%s2054 + $0x74] sm:$0x1]
      %v3305 = vld [vmem:[%s2054 + $0x78] sm:$0xe]
      %v3306 = vld [vmem:[%s2054 + $0x7c] sm:$0xf]
      %v3307 = vld [vmem:[%s2054 + $0x80] sm:$0x1]
      %v3308 = vld [vmem:[%s2054 + $0x84] sm:$0xe]
      %v3309 = vld [vmem:[%s2054 + $0x88] sm:$0xf]
      %v3310 = vld [vmem:[%s2054 + $0x8c] sm:$0x1]
      %v3311 = vld [vmem:[%s2054 + $0x90] sm:$0xe]
      %v3312 = vld [vmem:[%s2054 + $0x94] sm:$0xf]
      %v3313 = vld [vmem:[%s2054 + $0x98] sm:$0x1]
      %v3314 = vld [vmem:[%s2054 + $0x9c] sm:$0xe]
      %v3315 = vld [vmem:[%s2054 + $0xa0] sm:$0xf]
      %v3316 = vld [vmem:[%s2054 + $0xa4] sm:$0x1]
      %v3317 = vld [vmem:[%s2054 + $0xa8] sm:$0xe]
      %v3318 = vld [vmem:[%s2054 + $0xac] sm:$0xf]
      %v3319 = vld [vmem:[%s2054 + $0xb0] sm:$0x1]
      %v3320 = vld [vmem:[%s2054 + $0xb4] sm:$0xe]
      %v3321 = vld [vmem:[%s2054 + $0xb8] sm:$0xf]
      %v3322 = vld [vmem:[%s2054 + $0xbc] sm:$0x1]
      %v3371 = vrot.slane %v3275, 5
      %v3372 = vrot.slane %v3371, 4
      %v3373 = vrot.slane %v3276, 5
      %v3374 = vsel %vm1579, %v3372, %v3373
      %v3375 = vrot.slane %v3373, 4
      %v3376 = vrot.slane %v3277, 5
      %v3377 = vsel %vm1579, %v3375, %v3376
      %v3378 = vrot.slane %v3278, 5
      %v3379 = vrot.slane %v3378, 4
      %v3380 = vrot.slane %v3279, 5
      %v3381 = vsel %vm1579, %v3379, %v3380
      %v3382 = vrot.slane %v3380, 4
      %v3383 = vrot.slane %v3280, 5
      %v3384 = vsel %vm1579, %v3382, %v3383
      %v3385 = vrot.slane %v3281, 5
      %v3386 = vrot.slane %v3385, 4
      %v3387 = vrot.slane %v3282, 5
      %v3388 = vsel %vm1579, %v3386, %v3387
      %v3389 = vrot.slane %v3387, 4
      %v3390 = vrot.slane %v3283, 5
      %v3391 = vsel %vm1579, %v3389, %v3390
      %v3392 = vrot.slane %v3284, 5
      %v3393 = vrot.slane %v3392, 4
      %v3394 = vrot.slane %v3285, 5
      %v3395 = vsel %vm1579, %v3393, %v3394
      %v3396 = vrot.slane %v3394, 4
      %v3397 = vrot.slane %v3286, 5
      %v3398 = vsel %vm1579, %v3396, %v3397
      %v3399 = vrot.slane %v3287, 5
      %v3400 = vrot.slane %v3399, 4
      %v3401 = vrot.slane %v3288, 5
      %v3402 = vsel %vm1579, %v3400, %v3401
      %v3403 = vrot.slane %v3401, 4
      %v3404 = vrot.slane %v3289, 5
      %v3405 = vsel %vm1579, %v3403, %v3404
      %v3406 = vrot.slane %v3290, 5
      %v3407 = vrot.slane %v3406, 4
      %v3408 = vrot.slane %v3291, 5
      %v3409 = vsel %vm1579, %v3407, %v3408
      %v3410 = vrot.slane %v3408, 4
      %v3411 = vrot.slane %v3292, 5
      %v3412 = vsel %vm1579, %v3410, %v3411
      %v3413 = vrot.slane %v3293, 5
      %v3414 = vrot.slane %v3413, 4
      %v3415 = vrot.slane %v3294, 5
      %v3416 = vsel %vm1579, %v3414, %v3415
      %v3417 = vrot.slane %v3415, 4
      %v3418 = vrot.slane %v3295, 5
      %v3419 = vsel %vm1579, %v3417, %v3418
      %v3420 = vrot.slane %v3296, 5
      %v3421 = vrot.slane %v3420, 4
      %v3422 = vrot.slane %v3297, 5
      %v3423 = vsel %vm1579, %v3421, %v3422
      %v3424 = vrot.slane %v3422, 4
      %v3425 = vrot.slane %v3298, 5
      %v3426 = vsel %vm1579, %v3424, %v3425
      %v3427 = vrot.slane %v3299, 5
      %v3428 = vrot.slane %v3427, 4
      %v3429 = vrot.slane %v3300, 5
      %v3430 = vsel %vm1579, %v3428, %v3429
      %v3431 = vrot.slane %v3429, 4
      %v3432 = vrot.slane %v3301, 5
      %v3433 = vsel %vm1579, %v3431, %v3432
      %v3434 = vrot.slane %v3302, 5
      %v3435 = vrot.slane %v3434, 4
      %v3436 = vrot.slane %v3303, 5
      %v3437 = vsel %vm1579, %v3435, %v3436
      %v3438 = vrot.slane %v3436, 4
      %v3439 = vrot.slane %v3304, 5
      %v3440 = vsel %vm1579, %v3438, %v3439
      %v3441 = vrot.slane %v3305, 5
      %v3442 = vrot.slane %v3441, 4
      %v3443 = vrot.slane %v3306, 5
      %v3444 = vsel %vm1579, %v3442, %v3443
      %v3445 = vrot.slane %v3443, 4
      %v3446 = vrot.slane %v3307, 5
      %v3447 = vsel %vm1579, %v3445, %v3446
      %v3448 = vrot.slane %v3308, 5
      %v3449 = vrot.slane %v3448, 4
      %v3450 = vrot.slane %v3309, 5
      %v3451 = vsel %vm1579, %v3449, %v3450
      %v3452 = vrot.slane %v3450, 4
      %v3453 = vrot.slane %v3310, 5
      %v3454 = vsel %vm1579, %v3452, %v3453
      %v3455 = vrot.slane %v3311, 5
      %v3456 = vrot.slane %v3455, 4
      %v3457 = vrot.slane %v3312, 5
      %v3458 = vsel %vm1579, %v3456, %v3457
      %v3459 = vrot.slane %v3457, 4
      %v3460 = vrot.slane %v3313, 5
      %v3461 = vsel %vm1579, %v3459, %v3460
      %v3462 = vrot.slane %v3314, 5
      %v3463 = vrot.slane %v3462, 4
      %v3464 = vrot.slane %v3315, 5
      %v3465 = vsel %vm1579, %v3463, %v3464
      %v3466 = vrot.slane %v3464, 4
      %v3467 = vrot.slane %v3316, 5
      %v3468 = vsel %vm1579, %v3466, %v3467
      %v3469 = vrot.slane %v3317, 5
      %v3470 = vrot.slane %v3469, 4
      %v3471 = vrot.slane %v3318, 5
      %v3472 = vsel %vm1579, %v3470, %v3471
      %v3473 = vrot.slane %v3471, 4
      %v3474 = vrot.slane %v3319, 5
      %v3475 = vsel %vm1579, %v3473, %v3474
      %v3476 = vrot.slane %v3320, 5
      %v3477 = vrot.slane %v3476, 4
      %v3478 = vrot.slane %v3321, 5
      %v3479 = vsel %vm1579, %v3477, %v3478
      %v3480 = vrot.slane %v3478, 4
      %v3481 = vrot.slane %v3322, 5
      %v3482 = vsel %vm1579, %v3480, %v3481
      %s3483 = scalar_lea.vmem %s298, 40
      %v3484 = vld [vmem:[%s3483] sm:$0xf]
      %v3485 = vld [vmem:[%s3483 + $0x4] sm:$0xf]
      %v3486 = vunpack.c.l.b16 %v3374
      %v3487 = vunpack.c.l.b16 %v3377
      %v3488 = vunpack.c.l.b16 %v3381
      %v3489 = vunpack.c.l.b16 %v3384
      %v3490 = vunpack.c.l.b16 %v3388
      %v3491 = vunpack.c.l.b16 %v3391
      %v3492 = vunpack.c.l.b16 %v3395
      %v3493 = vunpack.c.l.b16 %v3398
      %v3494 = vunpack.c.l.b16 %v3402
      %v3495 = vunpack.c.l.b16 %v3405
      %v3496 = vunpack.c.l.b16 %v3409
      %v3497 = vunpack.c.l.b16 %v3412
      %v3498 = vunpack.c.l.b16 %v3416
      %v3499 = vunpack.c.l.b16 %v3419
      %v3500 = vunpack.c.l.b16 %v3423
      %v3501 = vunpack.c.l.b16 %v3426
      %v3502 = vunpack.c.l.b16 %v3430
      %v3503 = vunpack.c.l.b16 %v3433
      %v3504 = vunpack.c.l.b16 %v3437
      %v3505 = vunpack.c.l.b16 %v3440
      %v3506 = vunpack.c.l.b16 %v3444
      %v3507 = vunpack.c.l.b16 %v3447
      %v3508 = vunpack.c.l.b16 %v3451
      %v3509 = vunpack.c.l.b16 %v3454
      %v3510 = vunpack.c.l.b16 %v3458
      %v3511 = vunpack.c.l.b16 %v3461
      %v3512 = vunpack.c.l.b16 %v3465
      %v3513 = vunpack.c.l.b16 %v3468
      %v3514 = vunpack.c.l.b16 %v3472
      %v3515 = vunpack.c.l.b16 %v3475
      %v3516 = vunpack.c.l.b16 %v3479
      %v3517 = vunpack.c.l.b16 %v3482
      %v3518 = vpack.c.b16 %v3487, %v3486
      %v3519 = vpack.c.b16 %v3489, %v3488
      %v3520 = vpack.c.b16 %v3491, %v3490
      %v3521 = vpack.c.b16 %v3493, %v3492
      %v3522 = vpack.c.b16 %v3495, %v3494
      %v3523 = vpack.c.b16 %v3497, %v3496
      %v3524 = vpack.c.b16 %v3499, %v3498
      %v3525 = vpack.c.b16 %v3501, %v3500
      %v3526 = vpack.c.b16 %v3503, %v3502
      %v3527 = vpack.c.b16 %v3505, %v3504
      %v3528 = vpack.c.b16 %v3507, %v3506
      %v3529 = vpack.c.b16 %v3509, %v3508
      %v3530 = vpack.c.b16 %v3511, %v3510
      %v3531 = vpack.c.b16 %v3513, %v3512
      %v3532 = vpack.c.b16 %v3515, %v3514
      %v3533 = vpack.c.b16 %v3517, %v3516
      %v3536 = vunpack.c.l.b16 %v3484
      %v3537 = vunpack.c.l.b16 %v3485
      %v3538 = vpack.c.b16 %v3537, %v3536
      %v3541 = vsel %vm442, %v3518, 0
      %v3544 = vsel %vm442, %v3519, 0
      %v3547 = vsel %vm442, %v3520, 0
      %v3550 = vsel %vm442, %v3521, 0
      %v3553 = vsel %vm442, %v3522, 0
      %v3556 = vsel %vm442, %v3523, 0
      %v3559 = vsel %vm442, %v3524, 0
      %v3562 = vsel %vm442, %v3525, 0
      %v3565 = vsel %vm442, %v3526, 0
      %v3568 = vsel %vm442, %v3527, 0
      %v3571 = vsel %vm442, %v3528, 0
      %v3574 = vsel %vm442, %v3529, 0
      %v3577 = vsel %vm442, %v3530, 0
      %v3580 = vsel %vm442, %v3531, 0
      %v3583 = vsel %vm442, %v3532, 0
      %v3586 = vsel %vm442, %v3533, 0
      %3588 = vmatprep.subr.bf16.mxu0 0
      %3589 = vmatpush1.bf16.msra.mxu0 0
      %3590 = vmatprep.subr.bf16.mxu0 0
      %3591 = vmatpush1.bf16.msra.mxu0 0
      %3592 = vmatprep.subr.bf16.mxu0 0
      %3593 = vmatpush1.bf16.msra.mxu0 0
      %3594 = vmatprep.subr.bf16.mxu0 0
      %3595 = vmatpush1.bf16.msra.mxu0 0
      %3596 = vmatprep.subr.bf16.mxu0 0
      %3597 = vmatpush1.bf16.msra.mxu0 0
      %3598 = vmatprep.subr.bf16.mxu0 0
      %3599 = vmatpush1.bf16.msra.mxu0 0
      %3600 = vmatprep.subr.bf16.mxu0 0
      %3601 = vmatpush1.bf16.msra.mxu0 0
      %3602 = vmatprep.subr.bf16.mxu0 0
      %3603 = vmatpush1.bf16.msra.mxu0 %v3538
      %3604 = vmatprep.subr.bf16.mxu0 0
      %3605 = vmatpush2.bf16.msra.mxu0 0
      %3606 = vmatprep.subr.bf16.mxu0 0
      %3607 = vmatpush2.bf16.msra.mxu0 0
      %3608 = vmatprep.subr.bf16.mxu0 0
      %3609 = vmatpush2.bf16.msra.mxu0 0
      %3610 = vmatprep.subr.bf16.mxu0 0
      %3611 = vmatpush2.bf16.msra.mxu0 0
      %3612 = vmatprep.subr.bf16.mxu0 0
      %3613 = vmatpush2.bf16.msra.mxu0 0
      %3614 = vmatprep.subr.bf16.mxu0 0
      %3615 = vmatpush2.bf16.msra.mxu0 0
      %3616 = vmatprep.subr.bf16.mxu0 0
      %3617 = vmatpush2.bf16.msra.mxu0 0
      %3618 = vmatprep.subr.bf16.mxu0 0
      %3619 = vmatpush2.bf16.msra.mxu0 0
      %3620 = vmatprep.mubr.bf16.mxu0 0
      %3621 = vmatmul.mubr.bf16.gmra.mxu0 %v3541
      %v3622 = vpop.f32.mrf.mxu0
      %v3623 = vadd.f32 0.0, %v3622
      %v3624 = vpop.f32.mrf.mxu0
      %v3625 = vpop.f32.mrf.mxu0
      %v3626 = vadd.f32 0.0, %v3625
      %v3627 = vpop.f32.mrf.mxu0
      %3628 = vmatprep.mubr.bf16.mxu0 0
      %3629 = vmatmul.mubr.bf16.gmra.mxu0 %v3544
      %v3630 = vpop.f32.mrf.mxu0
      %v3631 = vadd.f32 0.0, %v3630
      %v3632 = vpop.f32.mrf.mxu0
      %v3633 = vpop.f32.mrf.mxu0
      %v3634 = vadd.f32 0.0, %v3633
      %v3635 = vpop.f32.mrf.mxu0
      %3636 = vmatprep.mubr.bf16.mxu0 0
      %3637 = vmatmul.mubr.bf16.gmra.mxu0 %v3547
      %v3638 = vpop.f32.mrf.mxu0
      %v3639 = vadd.f32 0.0, %v3638
      %v3640 = vpop.f32.mrf.mxu0
      %v3641 = vpop.f32.mrf.mxu0
      %v3642 = vadd.f32 0.0, %v3641
      %v3643 = vpop.f32.mrf.mxu0
      %3644 = vmatprep.mubr.bf16.mxu0 0
      %3645 = vmatmul.mubr.bf16.gmra.mxu0 %v3550
      %v3646 = vpop.f32.mrf.mxu0
      %v3647 = vadd.f32 0.0, %v3646
      %v3648 = vpop.f32.mrf.mxu0
      %v3649 = vpop.f32.mrf.mxu0
      %v3650 = vadd.f32 0.0, %v3649
      %v3651 = vpop.f32.mrf.mxu0
      %3652 = vmatprep.mubr.bf16.mxu0 0
      %3653 = vmatmul.mubr.bf16.gmra.mxu0 %v3553
      %v3654 = vpop.f32.mrf.mxu0
      %v3655 = vadd.f32 0.0, %v3654
      %v3656 = vpop.f32.mrf.mxu0
      %v3657 = vpop.f32.mrf.mxu0
      %v3658 = vadd.f32 0.0, %v3657
      %v3659 = vpop.f32.mrf.mxu0
      %3660 = vmatprep.mubr.bf16.mxu0 0
      %3661 = vmatmul.mubr.bf16.gmra.mxu0 %v3556
      %v3662 = vpop.f32.mrf.mxu0
      %v3663 = vadd.f32 0.0, %v3662
      %v3664 = vpop.f32.mrf.mxu0
      %v3665 = vpop.f32.mrf.mxu0
      %v3666 = vadd.f32 0.0, %v3665
      %v3667 = vpop.f32.mrf.mxu0
      %3668 = vmatprep.mubr.bf16.mxu0 0
      %3669 = vmatmul.mubr.bf16.gmra.mxu0 %v3559
      %v3670 = vpop.f32.mrf.mxu0
      %v3671 = vadd.f32 0.0, %v3670
      %v3672 = vpop.f32.mrf.mxu0
      %v3673 = vpop.f32.mrf.mxu0
      %v3674 = vadd.f32 0.0, %v3673
      %v3675 = vpop.f32.mrf.mxu0
      %3676 = vmatprep.mubr.bf16.mxu0 0
      %3677 = vmatmul.mubr.bf16.gmra.mxu0 %v3562
      %v3678 = vpop.f32.mrf.mxu0
      %v3679 = vadd.f32 0.0, %v3678
      %v3680 = vpop.f32.mrf.mxu0
      %v3681 = vpop.f32.mrf.mxu0
      %v3682 = vadd.f32 0.0, %v3681
      %v3683 = vpop.f32.mrf.mxu0
      %3684 = vmatprep.mubr.bf16.mxu0 0
      %3685 = vmatmul.mubr.bf16.gmra.mxu0 %v3565
      %v3686 = vpop.f32.mrf.mxu0
      %v3687 = vadd.f32 0.0, %v3686
      %v3688 = vpop.f32.mrf.mxu0
      %v3689 = vpop.f32.mrf.mxu0
      %v3690 = vadd.f32 0.0, %v3689
      %v3691 = vpop.f32.mrf.mxu0
      %3692 = vmatprep.mubr.bf16.mxu0 0
      %3693 = vmatmul.mubr.bf16.gmra.mxu0 %v3568
      %v3694 = vpop.f32.mrf.mxu0
      %v3695 = vadd.f32 0.0, %v3694
      %v3696 = vpop.f32.mrf.mxu0
      %v3697 = vpop.f32.mrf.mxu0
      %v3698 = vadd.f32 0.0, %v3697
      %v3699 = vpop.f32.mrf.mxu0
      %3700 = vmatprep.mubr.bf16.mxu0 0
      %3701 = vmatmul.mubr.bf16.gmra.mxu0 %v3571
      %v3702 = vpop.f32.mrf.mxu0
      %v3703 = vadd.f32 0.0, %v3702
      %v3704 = vpop.f32.mrf.mxu0
      %v3705 = vpop.f32.mrf.mxu0
      %v3706 = vadd.f32 0.0, %v3705
      %v3707 = vpop.f32.mrf.mxu0
      %3708 = vmatprep.mubr.bf16.mxu0 0
      %3709 = vmatmul.mubr.bf16.gmra.mxu0 %v3574
      %v3710 = vpop.f32.mrf.mxu0
      %v3711 = vadd.f32 0.0, %v3710
      %v3712 = vpop.f32.mrf.mxu0
      %v3713 = vpop.f32.mrf.mxu0
      %v3714 = vadd.f32 0.0, %v3713
      %v3715 = vpop.f32.mrf.mxu0
      %3716 = vmatprep.mubr.bf16.mxu0 0
      %3717 = vmatmul.mubr.bf16.gmra.mxu0 %v3577
      %v3718 = vpop.f32.mrf.mxu0
      %v3719 = vadd.f32 0.0, %v3718
      %v3720 = vpop.f32.mrf.mxu0
      %v3721 = vpop.f32.mrf.mxu0
      %v3722 = vadd.f32 0.0, %v3721
      %v3723 = vpop.f32.mrf.mxu0
      %3724 = vmatprep.mubr.bf16.mxu0 0
      %3725 = vmatmul.mubr.bf16.gmra.mxu0 %v3580
      %v3726 = vpop.f32.mrf.mxu0
      %v3727 = vadd.f32 0.0, %v3726
      %v3728 = vpop.f32.mrf.mxu0
      %v3729 = vpop.f32.mrf.mxu0
      %v3730 = vadd.f32 0.0, %v3729
      %v3731 = vpop.f32.mrf.mxu0
      %3732 = vmatprep.mubr.bf16.mxu0 0
      %3733 = vmatmul.mubr.bf16.gmra.mxu0 %v3583
      %v3734 = vpop.f32.mrf.mxu0
      %v3735 = vadd.f32 0.0, %v3734
      %v3736 = vpop.f32.mrf.mxu0
      %v3737 = vpop.f32.mrf.mxu0
      %v3738 = vadd.f32 0.0, %v3737
      %v3739 = vpop.f32.mrf.mxu0
      %3740 = vmatprep.mubr.bf16.mxu0 0
      %3741 = vmatmul.mubr.bf16.gmra.mxu0 %v3586
      %v3742 = vpop.f32.mrf.mxu0
      %v3743 = vadd.f32 0.0, %v3742
      %v3744 = vpop.f32.mrf.mxu0
      %v3745 = vpop.f32.mrf.mxu0
      %v3746 = vadd.f32 0.0, %v3745
      %v3747 = vpop.f32.mrf.mxu0
      %3748 = vdwg.mxu0
      %v3749 = vld [vmem:[#allocation2] sm:$0xff]
      %v3750 = vld [vmem:[#allocation2 + $0x8] sm:$0xff]
      %v3751 = vld [vmem:[#allocation2 + $0x10] sm:$0xff]
      %v3752 = vld [vmem:[#allocation2 + $0x18] sm:$0xff]
      %v3753 = vld [vmem:[#allocation2 + $0x20] sm:$0xff]
      %v3754 = vld [vmem:[#allocation2 + $0x28] sm:$0xff]
      %v3755 = vld [vmem:[#allocation2 + $0x30] sm:$0xff]
      %v3756 = vld [vmem:[#allocation2 + $0x38] sm:$0xff]
      %v3757 = vld [vmem:[#allocation2 + $0x40] sm:$0xff]
      %v3758 = vld [vmem:[#allocation2 + $0x48] sm:$0xff]
      %v3759 = vld [vmem:[#allocation2 + $0x50] sm:$0xff]
      %v3760 = vld [vmem:[#allocation2 + $0x58] sm:$0xff]
      %v3761 = vld [vmem:[#allocation2 + $0x60] sm:$0xff]
      %v3762 = vld [vmem:[#allocation2 + $0x68] sm:$0xff]
      %v3763 = vld [vmem:[#allocation2 + $0x70] sm:$0xff]
      %v3764 = vld [vmem:[#allocation2 + $0x78] sm:$0xff]
      %v3765 = vld [vmem:[#allocation2 + $0x80] sm:$0xff]
      %v3766 = vld [vmem:[#allocation2 + $0x88] sm:$0xff]
      %v3767 = vld [vmem:[#allocation2 + $0x90] sm:$0xff]
      %v3768 = vld [vmem:[#allocation2 + $0x98] sm:$0xff]
      %v3769 = vld [vmem:[#allocation2 + $0xa0] sm:$0xff]
      %v3770 = vld [vmem:[#allocation2 + $0xa8] sm:$0xff]
      %v3771 = vld [vmem:[#allocation2 + $0xb0] sm:$0xff]
      %v3772 = vld [vmem:[#allocation2 + $0xb8] sm:$0xff]
      %v3773 = vld [vmem:[#allocation2 + $0xc0] sm:$0xff]
      %v3774 = vld [vmem:[#allocation2 + $0xc8] sm:$0xff]
      %v3775 = vld [vmem:[#allocation2 + $0xd0] sm:$0xff]
      %v3776 = vld [vmem:[#allocation2 + $0xd8] sm:$0xff]
      %v3777 = vld [vmem:[#allocation2 + $0xe0] sm:$0xff]
      %v3778 = vld [vmem:[#allocation2 + $0xe8] sm:$0xff]
      %v3779 = vld [vmem:[#allocation2 + $0xf0] sm:$0xff]
      %v3780 = vld [vmem:[#allocation2 + $0xf8] sm:$0xff]
      %v3781 = vadd.f32 %v3749, %v3623
      %v3782 = vadd.f32 %v3750, %v3626
      %v3783 = vadd.f32 %v3751, %v3631
      %v3784 = vadd.f32 %v3752, %v3634
      %v3785 = vadd.f32 %v3753, %v3639
      %v3786 = vadd.f32 %v3754, %v3642
      %v3787 = vadd.f32 %v3755, %v3647
      %v3788 = vadd.f32 %v3756, %v3650
      %v3789 = vadd.f32 %v3757, %v3655
      %v3790 = vadd.f32 %v3758, %v3658
      %v3791 = vadd.f32 %v3759, %v3663
      %v3792 = vadd.f32 %v3760, %v3666
      %v3793 = vadd.f32 %v3761, %v3671
      %v3794 = vadd.f32 %v3762, %v3674
      %v3795 = vadd.f32 %v3763, %v3679
      %v3796 = vadd.f32 %v3764, %v3682
      %v3797 = vadd.f32 %v3765, %v3687
      %v3798 = vadd.f32 %v3766, %v3690
      %v3799 = vadd.f32 %v3767, %v3695
      %v3800 = vadd.f32 %v3768, %v3698
      %v3801 = vadd.f32 %v3769, %v3703
      %v3802 = vadd.f32 %v3770, %v3706
      %v3803 = vadd.f32 %v3771, %v3711
      %v3804 = vadd.f32 %v3772, %v3714
      %v3805 = vadd.f32 %v3773, %v3719
      %v3806 = vadd.f32 %v3774, %v3722
      %v3807 = vadd.f32 %v3775, %v3727
      %v3808 = vadd.f32 %v3776, %v3730
      %v3809 = vadd.f32 %v3777, %v3735
      %v3810 = vadd.f32 %v3778, %v3738
      %v3811 = vadd.f32 %v3779, %v3743
      %v3812 = vadd.f32 %v3780, %v3746
      %3813 = vst.msk [vmem:[#allocation2] sm:$0xff] %vm442, %v3781
      %3814 = vst.msk [vmem:[#allocation2 + $0x8] sm:$0xff] %vm442, %v3782
      %3815 = vst.msk [vmem:[#allocation2 + $0x10] sm:$0xff] %vm442, %v3783
      %3816 = vst.msk [vmem:[#allocation2 + $0x18] sm:$0xff] %vm442, %v3784
      %3817 = vst.msk [vmem:[#allocation2 + $0x20] sm:$0xff] %vm442, %v3785
      %3818 = vst.msk [vmem:[#allocation2 + $0x28] sm:$0xff] %vm442, %v3786
      %3819 = vst.msk [vmem:[#allocation2 + $0x30] sm:$0xff] %vm442, %v3787
      %3820 = vst.msk [vmem:[#allocation2 + $0x38] sm:$0xff] %vm442, %v3788
      %3821 = vst.msk [vmem:[#allocation2 + $0x40] sm:$0xff] %vm442, %v3789
      %3822 = vst.msk [vmem:[#allocation2 + $0x48] sm:$0xff] %vm442, %v3790
      %3823 = vst.msk [vmem:[#allocation2 + $0x50] sm:$0xff] %vm442, %v3791
      %3824 = vst.msk [vmem:[#allocation2 + $0x58] sm:$0xff] %vm442, %v3792
      %3825 = vst.msk [vmem:[#allocation2 + $0x60] sm:$0xff] %vm442, %v3793
      %3826 = vst.msk [vmem:[#allocation2 + $0x68] sm:$0xff] %vm442, %v3794
      %3827 = vst.msk [vmem:[#allocation2 + $0x70] sm:$0xff] %vm442, %v3795
      %3828 = vst.msk [vmem:[#allocation2 + $0x78] sm:$0xff] %vm442, %v3796
      %3829 = vst.msk [vmem:[#allocation2 + $0x80] sm:$0xff] %vm442, %v3797
      %3830 = vst.msk [vmem:[#allocation2 + $0x88] sm:$0xff] %vm442, %v3798
      %3831 = vst.msk [vmem:[#allocation2 + $0x90] sm:$0xff] %vm442, %v3799
      %3832 = vst.msk [vmem:[#allocation2 + $0x98] sm:$0xff] %vm442, %v3800
      %3833 = vst.msk [vmem:[#allocation2 + $0xa0] sm:$0xff] %vm442, %v3801
      %3834 = vst.msk [vmem:[#allocation2 + $0xa8] sm:$0xff] %vm442, %v3802
      %3835 = vst.msk [vmem:[#allocation2 + $0xb0] sm:$0xff] %vm442, %v3803
      %3836 = vst.msk [vmem:[#allocation2 + $0xb8] sm:$0xff] %vm442, %v3804
      %3837 = vst.msk [vmem:[#allocation2 + $0xc0] sm:$0xff] %vm442, %v3805
      %3838 = vst.msk [vmem:[#allocation2 + $0xc8] sm:$0xff] %vm442, %v3806
      %3839 = vst.msk [vmem:[#allocation2 + $0xd0] sm:$0xff] %vm442, %v3807
      %3840 = vst.msk [vmem:[#allocation2 + $0xd8] sm:$0xff] %vm442, %v3808
      %3841 = vst.msk [vmem:[#allocation2 + $0xe0] sm:$0xff] %vm442, %v3809
      %3842 = vst.msk [vmem:[#allocation2 + $0xe8] sm:$0xff] %vm442, %v3810
      %3843 = vst.msk [vmem:[#allocation2 + $0xf0] sm:$0xff] %vm442, %v3811
      %3844 = vst.msk [vmem:[#allocation2 + $0xf8] sm:$0xff] %vm442, %v3812
      %s3845 = scalar_lea.vmem %s294, 24
      %v3846 = vld [vmem:[%s3845] sm:$0xf]
      %v3847 = vld [vmem:[%s3845 + $0x4] sm:$0xf]
      %v3848 = vld [vmem:[%s3845 + $0xc] sm:$0xf]
      %v3849 = vld [vmem:[%s3845 + $0x10] sm:$0xf]
      %v3850 = vld [vmem:[%s3845 + $0x18] sm:$0xf]
      %v3851 = vld [vmem:[%s3845 + $0x1c] sm:$0xf]
      %v3852 = vld [vmem:[%s3845 + $0x24] sm:$0xf]
      %v3853 = vld [vmem:[%s3845 + $0x28] sm:$0xf]
      %v3854 = vld [vmem:[%s3845 + $0x30] sm:$0xf]
      %v3855 = vld [vmem:[%s3845 + $0x34] sm:$0xf]
      %v3856 = vld [vmem:[%s3845 + $0x3c] sm:$0xf]
      %v3857 = vld [vmem:[%s3845 + $0x40] sm:$0xf]
      %v3858 = vld [vmem:[%s3845 + $0x48] sm:$0xf]
      %v3859 = vld [vmem:[%s3845 + $0x4c] sm:$0xf]
      %v3860 = vld [vmem:[%s3845 + $0x54] sm:$0xf]
      %v3861 = vld [vmem:[%s3845 + $0x58] sm:$0xf]
      %v3862 = vld [vmem:[%s3845 + $0x60] sm:$0xf]
      %v3863 = vld [vmem:[%s3845 + $0x64] sm:$0xf]
      %v3864 = vld [vmem:[%s3845 + $0x6c] sm:$0xf]
      %v3865 = vld [vmem:[%s3845 + $0x70] sm:$0xf]
      %v3866 = vld [vmem:[%s3845 + $0x78] sm:$0xf]
      %v3867 = vld [vmem:[%s3845 + $0x7c] sm:$0xf]
      %v3868 = vld [vmem:[%s3845 + $0x84] sm:$0xf]
      %v3869 = vld [vmem:[%s3845 + $0x88] sm:$0xf]
      %v3870 = vld [vmem:[%s3845 + $0x90] sm:$0xf]
      %v3871 = vld [vmem:[%s3845 + $0x94] sm:$0xf]
      %v3872 = vld [vmem:[%s3845 + $0x9c] sm:$0xf]
      %v3873 = vld [vmem:[%s3845 + $0xa0] sm:$0xf]
      %v3874 = vld [vmem:[%s3845 + $0xa8] sm:$0xf]
      %v3875 = vld [vmem:[%s3845 + $0xac] sm:$0xf]
      %v3876 = vld [vmem:[%s3845 + $0xb4] sm:$0xf]
      %v3877 = vld [vmem:[%s3845 + $0xb8] sm:$0xf]
      %s3878 = scalar_lea.vmem %s298, 48
      %v3879 = vld [vmem:[%s3878] sm:$0xf]
      %v3880 = vld [vmem:[%s3878 + $0x4] sm:$0xf]
      %v3913 = vunpack.c.l.b16 %v3846
      %v3914 = vunpack.c.l.b16 %v3847
      %v3915 = vunpack.c.l.b16 %v3848
      %v3916 = vunpack.c.l.b16 %v3849
      %v3917 = vunpack.c.l.b16 %v3850
      %v3918 = vunpack.c.l.b16 %v3851
      %v3919 = vunpack.c.l.b16 %v3852
      %v3920 = vunpack.c.l.b16 %v3853
      %v3921 = vunpack.c.l.b16 %v3854
      %v3922 = vunpack.c.l.b16 %v3855
      %v3923 = vunpack.c.l.b16 %v3856
      %v3924 = vunpack.c.l.b16 %v3857
      %v3925 = vunpack.c.l.b16 %v3858
      %v3926 = vunpack.c.l.b16 %v3859
      %v3927 = vunpack.c.l.b16 %v3860
      %v3928 = vunpack.c.l.b16 %v3861
      %v3929 = vunpack.c.l.b16 %v3862
      %v3930 = vunpack.c.l.b16 %v3863
      %v3931 = vunpack.c.l.b16 %v3864
      %v3932 = vunpack.c.l.b16 %v3865
      %v3933 = vunpack.c.l.b16 %v3866
      %v3934 = vunpack.c.l.b16 %v3867
      %v3935 = vunpack.c.l.b16 %v3868
      %v3936 = vunpack.c.l.b16 %v3869
      %v3937 = vunpack.c.l.b16 %v3870
      %v3938 = vunpack.c.l.b16 %v3871
      %v3939 = vunpack.c.l.b16 %v3872
      %v3940 = vunpack.c.l.b16 %v3873
      %v3941 = vunpack.c.l.b16 %v3874
      %v3942 = vunpack.c.l.b16 %v3875
      %v3943 = vunpack.c.l.b16 %v3876
      %v3944 = vunpack.c.l.b16 %v3877
      %v3945 = vpack.c.b16 %v3914, %v3913
      %v3946 = vpack.c.b16 %v3916, %v3915
      %v3947 = vpack.c.b16 %v3918, %v3917
      %v3948 = vpack.c.b16 %v3920, %v3919
      %v3949 = vpack.c.b16 %v3922, %v3921
      %v3950 = vpack.c.b16 %v3924, %v3923
      %v3951 = vpack.c.b16 %v3926, %v3925
      %v3952 = vpack.c.b16 %v3928, %v3927
      %v3953 = vpack.c.b16 %v3930, %v3929
      %v3954 = vpack.c.b16 %v3932, %v3931
      %v3955 = vpack.c.b16 %v3934, %v3933
      %v3956 = vpack.c.b16 %v3936, %v3935
      %v3957 = vpack.c.b16 %v3938, %v3937
      %v3958 = vpack.c.b16 %v3940, %v3939
      %v3959 = vpack.c.b16 %v3942, %v3941
      %v3960 = vpack.c.b16 %v3944, %v3943
      %v3963 = vunpack.c.l.b16 %v3879
      %v3964 = vunpack.c.l.b16 %v3880
      %v3965 = vpack.c.b16 %v3964, %v3963
      %v3968 = vsel %vm442, %v3945, 0
      %v3971 = vsel %vm442, %v3946, 0
      %v3974 = vsel %vm442, %v3947, 0
      %v3977 = vsel %vm442, %v3948, 0
      %v3980 = vsel %vm442, %v3949, 0
      %v3983 = vsel %vm442, %v3950, 0
      %v3986 = vsel %vm442, %v3951, 0
      %v3989 = vsel %vm442, %v3952, 0
      %v3992 = vsel %vm442, %v3953, 0
      %v3995 = vsel %vm442, %v3954, 0
      %v3998 = vsel %vm442, %v3955, 0
      %v4001 = vsel %vm442, %v3956, 0
      %v4004 = vsel %vm442, %v3957, 0
      %v4007 = vsel %vm442, %v3958, 0
      %v4010 = vsel %vm442, %v3959, 0
      %v4013 = vsel %vm442, %v3960, 0
      %4015 = vmatprep.subr.bf16.mxu0 0
      %4016 = vmatpush1.bf16.msra.mxu0 0
      %4017 = vmatprep.subr.bf16.mxu0 0
      %4018 = vmatpush1.bf16.msra.mxu0 0
      %4019 = vmatprep.subr.bf16.mxu0 0
      %4020 = vmatpush1.bf16.msra.mxu0 0
      %4021 = vmatprep.subr.bf16.mxu0 0
      %4022 = vmatpush1.bf16.msra.mxu0 0
      %4023 = vmatprep.subr.bf16.mxu0 0
      %4024 = vmatpush1.bf16.msra.mxu0 0
      %4025 = vmatprep.subr.bf16.mxu0 0
      %4026 = vmatpush1.bf16.msra.mxu0 0
      %4027 = vmatprep.subr.bf16.mxu0 0
      %4028 = vmatpush1.bf16.msra.mxu0 0
      %4029 = vmatprep.subr.bf16.mxu0 0
      %4030 = vmatpush1.bf16.msra.mxu0 %v3965
      %4031 = vmatprep.subr.bf16.mxu0 0
      %4032 = vmatpush2.bf16.msra.mxu0 0
      %4033 = vmatprep.subr.bf16.mxu0 0
      %4034 = vmatpush2.bf16.msra.mxu0 0
      %4035 = vmatprep.subr.bf16.mxu0 0
      %4036 = vmatpush2.bf16.msra.mxu0 0
      %4037 = vmatprep.subr.bf16.mxu0 0
      %4038 = vmatpush2.bf16.msra.mxu0 0
      %4039 = vmatprep.subr.bf16.mxu0 0
      %4040 = vmatpush2.bf16.msra.mxu0 0
      %4041 = vmatprep.subr.bf16.mxu0 0
      %4042 = vmatpush2.bf16.msra.mxu0 0
      %4043 = vmatprep.subr.bf16.mxu0 0
      %4044 = vmatpush2.bf16.msra.mxu0 0
      %4045 = vmatprep.subr.bf16.mxu0 0
      %4046 = vmatpush2.bf16.msra.mxu0 0
      %4047 = vmatprep.mubr.bf16.mxu0 0
      %4048 = vmatmul.mubr.bf16.gmra.mxu0 %v3968
      %v4049 = vpop.f32.mrf.mxu0
      %v4050 = vadd.f32 0.0, %v4049
      %v4051 = vpop.f32.mrf.mxu0
      %v4052 = vpop.f32.mrf.mxu0
      %v4053 = vadd.f32 0.0, %v4052
      %v4054 = vpop.f32.mrf.mxu0
      %4055 = vmatprep.mubr.bf16.mxu0 0
      %4056 = vmatmul.mubr.bf16.gmra.mxu0 %v3971
      %v4057 = vpop.f32.mrf.mxu0
      %v4058 = vadd.f32 0.0, %v4057
      %v4059 = vpop.f32.mrf.mxu0
      %v4060 = vpop.f32.mrf.mxu0
      %v4061 = vadd.f32 0.0, %v4060
      %v4062 = vpop.f32.mrf.mxu0
      %4063 = vmatprep.mubr.bf16.mxu0 0
      %4064 = vmatmul.mubr.bf16.gmra.mxu0 %v3974
      %v4065 = vpop.f32.mrf.mxu0
      %v4066 = vadd.f32 0.0, %v4065
      %v4067 = vpop.f32.mrf.mxu0
      %v4068 = vpop.f32.mrf.mxu0
      %v4069 = vadd.f32 0.0, %v4068
      %v4070 = vpop.f32.mrf.mxu0
      %4071 = vmatprep.mubr.bf16.mxu0 0
      %4072 = vmatmul.mubr.bf16.gmra.mxu0 %v3977
      %v4073 = vpop.f32.mrf.mxu0
      %v4074 = vadd.f32 0.0, %v4073
      %v4075 = vpop.f32.mrf.mxu0
      %v4076 = vpop.f32.mrf.mxu0
      %v4077 = vadd.f32 0.0, %v4076
      %v4078 = vpop.f32.mrf.mxu0
      %4079 = vmatprep.mubr.bf16.mxu0 0
      %4080 = vmatmul.mubr.bf16.gmra.mxu0 %v3980
      %v4081 = vpop.f32.mrf.mxu0
      %v4082 = vadd.f32 0.0, %v4081
      %v4083 = vpop.f32.mrf.mxu0
      %v4084 = vpop.f32.mrf.mxu0
      %v4085 = vadd.f32 0.0, %v4084
      %v4086 = vpop.f32.mrf.mxu0
      %4087 = vmatprep.mubr.bf16.mxu0 0
      %4088 = vmatmul.mubr.bf16.gmra.mxu0 %v3983
      %v4089 = vpop.f32.mrf.mxu0
      %v4090 = vadd.f32 0.0, %v4089
      %v4091 = vpop.f32.mrf.mxu0
      %v4092 = vpop.f32.mrf.mxu0
      %v4093 = vadd.f32 0.0, %v4092
      %v4094 = vpop.f32.mrf.mxu0
      %4095 = vmatprep.mubr.bf16.mxu0 0
      %4096 = vmatmul.mubr.bf16.gmra.mxu0 %v3986
      %v4097 = vpop.f32.mrf.mxu0
      %v4098 = vadd.f32 0.0, %v4097
      %v4099 = vpop.f32.mrf.mxu0
      %v4100 = vpop.f32.mrf.mxu0
      %v4101 = vadd.f32 0.0, %v4100
      %v4102 = vpop.f32.mrf.mxu0
      %4103 = vmatprep.mubr.bf16.mxu0 0
      %4104 = vmatmul.mubr.bf16.gmra.mxu0 %v3989
      %v4105 = vpop.f32.mrf.mxu0
      %v4106 = vadd.f32 0.0, %v4105
      %v4107 = vpop.f32.mrf.mxu0
      %v4108 = vpop.f32.mrf.mxu0
      %v4109 = vadd.f32 0.0, %v4108
      %v4110 = vpop.f32.mrf.mxu0
      %4111 = vmatprep.mubr.bf16.mxu0 0
      %4112 = vmatmul.mubr.bf16.gmra.mxu0 %v3992
      %v4113 = vpop.f32.mrf.mxu0
      %v4114 = vadd.f32 0.0, %v4113
      %v4115 = vpop.f32.mrf.mxu0
      %v4116 = vpop.f32.mrf.mxu0
      %v4117 = vadd.f32 0.0, %v4116
      %v4118 = vpop.f32.mrf.mxu0
      %4119 = vmatprep.mubr.bf16.mxu0 0
      %4120 = vmatmul.mubr.bf16.gmra.mxu0 %v3995
      %v4121 = vpop.f32.mrf.mxu0
      %v4122 = vadd.f32 0.0, %v4121
      %v4123 = vpop.f32.mrf.mxu0
      %v4124 = vpop.f32.mrf.mxu0
      %v4125 = vadd.f32 0.0, %v4124
      %v4126 = vpop.f32.mrf.mxu0
      %4127 = vmatprep.mubr.bf16.mxu0 0
      %4128 = vmatmul.mubr.bf16.gmra.mxu0 %v3998
      %v4129 = vpop.f32.mrf.mxu0
      %v4130 = vadd.f32 0.0, %v4129
      %v4131 = vpop.f32.mrf.mxu0
      %v4132 = vpop.f32.mrf.mxu0
      %v4133 = vadd.f32 0.0, %v4132
      %v4134 = vpop.f32.mrf.mxu0
      %4135 = vmatprep.mubr.bf16.mxu0 0
      %4136 = vmatmul.mubr.bf16.gmra.mxu0 %v4001
      %v4137 = vpop.f32.mrf.mxu0
      %v4138 = vadd.f32 0.0, %v4137
      %v4139 = vpop.f32.mrf.mxu0
      %v4140 = vpop.f32.mrf.mxu0
      %v4141 = vadd.f32 0.0, %v4140
      %v4142 = vpop.f32.mrf.mxu0
      %4143 = vmatprep.mubr.bf16.mxu0 0
      %4144 = vmatmul.mubr.bf16.gmra.mxu0 %v4004
      %v4145 = vpop.f32.mrf.mxu0
      %v4146 = vadd.f32 0.0, %v4145
      %v4147 = vpop.f32.mrf.mxu0
      %v4148 = vpop.f32.mrf.mxu0
      %v4149 = vadd.f32 0.0, %v4148
      %v4150 = vpop.f32.mrf.mxu0
      %4151 = vmatprep.mubr.bf16.mxu0 0
      %4152 = vmatmul.mubr.bf16.gmra.mxu0 %v4007
      %v4153 = vpop.f32.mrf.mxu0
      %v4154 = vadd.f32 0.0, %v4153
      %v4155 = vpop.f32.mrf.mxu0
      %v4156 = vpop.f32.mrf.mxu0
      %v4157 = vadd.f32 0.0, %v4156
      %v4158 = vpop.f32.mrf.mxu0
      %4159 = vmatprep.mubr.bf16.mxu0 0
      %4160 = vmatmul.mubr.bf16.gmra.mxu0 %v4010
      %v4161 = vpop.f32.mrf.mxu0
      %v4162 = vadd.f32 0.0, %v4161
      %v4163 = vpop.f32.mrf.mxu0
      %v4164 = vpop.f32.mrf.mxu0
      %v4165 = vadd.f32 0.0, %v4164
      %v4166 = vpop.f32.mrf.mxu0
      %4167 = vmatprep.mubr.bf16.mxu0 0
      %4168 = vmatmul.mubr.bf16.gmra.mxu0 %v4013
      %v4169 = vpop.f32.mrf.mxu0
      %v4170 = vadd.f32 0.0, %v4169
      %v4171 = vpop.f32.mrf.mxu0
      %v4172 = vpop.f32.mrf.mxu0
      %v4173 = vadd.f32 0.0, %v4172
      %v4174 = vpop.f32.mrf.mxu0
      %4175 = vdwg.mxu0
      %v4176 = vld [vmem:[#allocation2] sm:$0xff]
      %v4177 = vld [vmem:[#allocation2 + $0x8] sm:$0xff]
      %v4178 = vld [vmem:[#allocation2 + $0x10] sm:$0xff]
      %v4179 = vld [vmem:[#allocation2 + $0x18] sm:$0xff]
      %v4180 = vld [vmem:[#allocation2 + $0x20] sm:$0xff]
      %v4181 = vld [vmem:[#allocation2 + $0x28] sm:$0xff]
      %v4182 = vld [vmem:[#allocation2 + $0x30] sm:$0xff]
      %v4183 = vld [vmem:[#allocation2 + $0x38] sm:$0xff]
      %v4184 = vld [vmem:[#allocation2 + $0x40] sm:$0xff]
      %v4185 = vld [vmem:[#allocation2 + $0x48] sm:$0xff]
      %v4186 = vld [vmem:[#allocation2 + $0x50] sm:$0xff]
      %v4187 = vld [vmem:[#allocation2 + $0x58] sm:$0xff]
      %v4188 = vld [vmem:[#allocation2 + $0x60] sm:$0xff]
      %v4189 = vld [vmem:[#allocation2 + $0x68] sm:$0xff]
      %v4190 = vld [vmem:[#allocation2 + $0x70] sm:$0xff]
      %v4191 = vld [vmem:[#allocation2 + $0x78] sm:$0xff]
      %v4192 = vld [vmem:[#allocation2 + $0x80] sm:$0xff]
      %v4193 = vld [vmem:[#allocation2 + $0x88] sm:$0xff]
      %v4194 = vld [vmem:[#allocation2 + $0x90] sm:$0xff]
      %v4195 = vld [vmem:[#allocation2 + $0x98] sm:$0xff]
      %v4196 = vld [vmem:[#allocation2 + $0xa0] sm:$0xff]
      %v4197 = vld [vmem:[#allocation2 + $0xa8] sm:$0xff]
      %v4198 = vld [vmem:[#allocation2 + $0xb0] sm:$0xff]
      %v4199 = vld [vmem:[#allocation2 + $0xb8] sm:$0xff]
      %v4200 = vld [vmem:[#allocation2 + $0xc0] sm:$0xff]
      %v4201 = vld [vmem:[#allocation2 + $0xc8] sm:$0xff]
      %v4202 = vld [vmem:[#allocation2 + $0xd0] sm:$0xff]
      %v4203 = vld [vmem:[#allocation2 + $0xd8] sm:$0xff]
      %v4204 = vld [vmem:[#allocation2 + $0xe0] sm:$0xff]
      %v4205 = vld [vmem:[#allocation2 + $0xe8] sm:$0xff]
      %v4206 = vld [vmem:[#allocation2 + $0xf0] sm:$0xff]
      %v4207 = vld [vmem:[#allocation2 + $0xf8] sm:$0xff]
      %v4208 = vadd.f32 %v4176, %v4050
      %v4209 = vadd.f32 %v4177, %v4053
      %v4210 = vadd.f32 %v4178, %v4058
      %v4211 = vadd.f32 %v4179, %v4061
      %v4212 = vadd.f32 %v4180, %v4066
      %v4213 = vadd.f32 %v4181, %v4069
      %v4214 = vadd.f32 %v4182, %v4074
      %v4215 = vadd.f32 %v4183, %v4077
      %v4216 = vadd.f32 %v4184, %v4082
      %v4217 = vadd.f32 %v4185, %v4085
      %v4218 = vadd.f32 %v4186, %v4090
      %v4219 = vadd.f32 %v4187, %v4093
      %v4220 = vadd.f32 %v4188, %v4098
      %v4221 = vadd.f32 %v4189, %v4101
      %v4222 = vadd.f32 %v4190, %v4106
      %v4223 = vadd.f32 %v4191, %v4109
      %v4224 = vadd.f32 %v4192, %v4114
      %v4225 = vadd.f32 %v4193, %v4117
      %v4226 = vadd.f32 %v4194, %v4122
      %v4227 = vadd.f32 %v4195, %v4125
      %v4228 = vadd.f32 %v4196, %v4130
      %v4229 = vadd.f32 %v4197, %v4133
      %v4230 = vadd.f32 %v4198, %v4138
      %v4231 = vadd.f32 %v4199, %v4141
      %v4232 = vadd.f32 %v4200, %v4146
      %v4233 = vadd.f32 %v4201, %v4149
      %v4234 = vadd.f32 %v4202, %v4154
      %v4235 = vadd.f32 %v4203, %v4157
      %v4236 = vadd.f32 %v4204, %v4162
      %v4237 = vadd.f32 %v4205, %v4165
      %v4238 = vadd.f32 %v4206, %v4170
      %v4239 = vadd.f32 %v4207, %v4173
      %4240 = vst.msk [vmem:[#allocation2] sm:$0xff] %vm442, %v4208
      %4241 = vst.msk [vmem:[#allocation2 + $0x8] sm:$0xff] %vm442, %v4209
      %4242 = vst.msk [vmem:[#allocation2 + $0x10] sm:$0xff] %vm442, %v4210
      %4243 = vst.msk [vmem:[#allocation2 + $0x18] sm:$0xff] %vm442, %v4211
      %4244 = vst.msk [vmem:[#allocation2 + $0x20] sm:$0xff] %vm442, %v4212
      %4245 = vst.msk [vmem:[#allocation2 + $0x28] sm:$0xff] %vm442, %v4213
      %4246 = vst.msk [vmem:[#allocation2 + $0x30] sm:$0xff] %vm442, %v4214
      %4247 = vst.msk [vmem:[#allocation2 + $0x38] sm:$0xff] %vm442, %v4215
      %4248 = vst.msk [vmem:[#allocation2 + $0x40] sm:$0xff] %vm442, %v4216
      %4249 = vst.msk [vmem:[#allocation2 + $0x48] sm:$0xff] %vm442, %v4217
      %4250 = vst.msk [vmem:[#allocation2 + $0x50] sm:$0xff] %vm442, %v4218
      %4251 = vst.msk [vmem:[#allocation2 + $0x58] sm:$0xff] %vm442, %v4219
      %4252 = vst.msk [vmem:[#allocation2 + $0x60] sm:$0xff] %vm442, %v4220
      %4253 = vst.msk [vmem:[#allocation2 + $0x68] sm:$0xff] %vm442, %v4221
      %4254 = vst.msk [vmem:[#allocation2 + $0x70] sm:$0xff] %vm442, %v4222
      %4255 = vst.msk [vmem:[#allocation2 + $0x78] sm:$0xff] %vm442, %v4223
      %4256 = vst.msk [vmem:[#allocation2 + $0x80] sm:$0xff] %vm442, %v4224
      %4257 = vst.msk [vmem:[#allocation2 + $0x88] sm:$0xff] %vm442, %v4225
      %4258 = vst.msk [vmem:[#allocation2 + $0x90] sm:$0xff] %vm442, %v4226
      %4259 = vst.msk [vmem:[#allocation2 + $0x98] sm:$0xff] %vm442, %v4227
      %4260 = vst.msk [vmem:[#allocation2 + $0xa0] sm:$0xff] %vm442, %v4228
      %4261 = vst.msk [vmem:[#allocation2 + $0xa8] sm:$0xff] %vm442, %v4229
      %4262 = vst.msk [vmem:[#allocation2 + $0xb0] sm:$0xff] %vm442, %v4230
      %4263 = vst.msk [vmem:[#allocation2 + $0xb8] sm:$0xff] %vm442, %v4231
      %4264 = vst.msk [vmem:[#allocation2 + $0xc0] sm:$0xff] %vm442, %v4232
      %4265 = vst.msk [vmem:[#allocation2 + $0xc8] sm:$0xff] %vm442, %v4233
      %4266 = vst.msk [vmem:[#allocation2 + $0xd0] sm:$0xff] %vm442, %v4234
      %4267 = vst.msk [vmem:[#allocation2 + $0xd8] sm:$0xff] %vm442, %v4235
      %4268 = vst.msk [vmem:[#allocation2 + $0xe0] sm:$0xff] %vm442, %v4236
      %4269 = vst.msk [vmem:[#allocation2 + $0xe8] sm:$0xff] %vm442, %v4237
      %4270 = vst.msk [vmem:[#allocation2 + $0xf0] sm:$0xff] %vm442, %v4238
      %4271 = vst.msk [vmem:[#allocation2 + $0xf8] sm:$0xff] %vm442, %v4239
      %v4272 = vld [vmem:[%s3845] sm:$0xf]
      %v4273 = vld [vmem:[%s3845 + $0x4] sm:$0xf]
      %v4274 = vld [vmem:[%s3845 + $0x8] sm:$0x1]
      %v4275 = vld [vmem:[%s3845 + $0xc] sm:$0xf]
      %v4276 = vld [vmem:[%s3845 + $0x10] sm:$0xf]
      %v4277 = vld [vmem:[%s3845 + $0x14] sm:$0x1]
      %v4278 = vld [vmem:[%s3845 + $0x18] sm:$0xf]
      %v4279 = vld [vmem:[%s3845 + $0x1c] sm:$0xf]
      %v4280 = vld [vmem:[%s3845 + $0x20] sm:$0x1]
      %v4281 = vld [vmem:[%s3845 + $0x24] sm:$0xf]
      %v4282 = vld [vmem:[%s3845 + $0x28] sm:$0xf]
      %v4283 = vld [vmem:[%s3845 + $0x2c] sm:$0x1]
      %v4284 = vld [vmem:[%s3845 + $0x30] sm:$0xf]
      %v4285 = vld [vmem:[%s3845 + $0x34] sm:$0xf]
      %v4286 = vld [vmem:[%s3845 + $0x38] sm:$0x1]
      %v4287 = vld [vmem:[%s3845 + $0x3c] sm:$0xf]
      %v4288 = vld [vmem:[%s3845 + $0x40] sm:$0xf]
      %v4289 = vld [vmem:[%s3845 + $0x44] sm:$0x1]
      %v4290 = vld [vmem:[%s3845 + $0x48] sm:$0xf]
      %v4291 = vld [vmem:[%s3845 + $0x4c] sm:$0xf]
      %v4292 = vld [vmem:[%s3845 + $0x50] sm:$0x1]
      %v4293 = vld [vmem:[%s3845 + $0x54] sm:$0xf]
      %v4294 = vld [vmem:[%s3845 + $0x58] sm:$0xf]
      %v4295 = vld [vmem:[%s3845 + $0x5c] sm:$0x1]
      %v4296 = vld [vmem:[%s3845 + $0x60] sm:$0xf]
      %v4297 = vld [vmem:[%s3845 + $0x64] sm:$0xf]
      %v4298 = vld [vmem:[%s3845 + $0x68] sm:$0x1]
      %v4299 = vld [vmem:[%s3845 + $0x6c] sm:$0xf]
      %v4300 = vld [vmem:[%s3845 + $0x70] sm:$0xf]
      %v4301 = vld [vmem:[%s3845 + $0x74] sm:$0x1]
      %v4302 = vld [vmem:[%s3845 + $0x78] sm:$0xf]
      %v4303 = vld [vmem:[%s3845 + $0x7c] sm:$0xf]
      %v4304 = vld [vmem:[%s3845 + $0x80] sm:$0x1]
      %v4305 = vld [vmem:[%s3845 + $0x84] sm:$0xf]
      %v4306 = vld [vmem:[%s3845 + $0x88] sm:$0xf]
      %v4307 = vld [vmem:[%s3845 + $0x8c] sm:$0x1]
      %v4308 = vld [vmem:[%s3845 + $0x90] sm:$0xf]
      %v4309 = vld [vmem:[%s3845 + $0x94] sm:$0xf]
      %v4310 = vld [vmem:[%s3845 + $0x98] sm:$0x1]
      %v4311 = vld [vmem:[%s3845 + $0x9c] sm:$0xf]
      %v4312 = vld [vmem:[%s3845 + $0xa0] sm:$0xf]
      %v4313 = vld [vmem:[%s3845 + $0xa4] sm:$0x1]
      %v4314 = vld [vmem:[%s3845 + $0xa8] sm:$0xf]
      %v4315 = vld [vmem:[%s3845 + $0xac] sm:$0xf]
      %v4316 = vld [vmem:[%s3845 + $0xb0] sm:$0x1]
      %v4317 = vld [vmem:[%s3845 + $0xb4] sm:$0xf]
      %v4318 = vld [vmem:[%s3845 + $0xb8] sm:$0xf]
      %v4319 = vld [vmem:[%s3845 + $0xbc] sm:$0x1]
      %v4321 = vshrl.u32 %v4272, 16
      %v4323 = vrot.slane %v4321, 4
      %v4324 = vshll.u32 %v4272, 16
      %v4326 = vrot.slane %v4324, 5
      %v4327 = vor.u32 %v4323, %v4326
      %v4328 = vrot.slane %v4327, 4
      %v4330 = vshll.u32 %v4273, 16
      %v4332 = vrot.slane %v4330, 5
      %v4333 = vsel %vm734, %v4328, %v4332
      %v4334 = vshrl.u32 %v4273, 16
      %v4336 = vrot.slane %v4334, 4
      %v4337 = vor.u32 %v4336, %v4332
      %v4338 = vrot.slane %v4337, 4
      %v4340 = vshll.u32 %v4274, 16
      %v4342 = vrot.slane %v4340, 5
      %v4343 = vsel %vm734, %v4338, %v4342
      %v4345 = vshrl.u32 %v4275, 16
      %v4347 = vrot.slane %v4345, 4
      %v4348 = vshll.u32 %v4275, 16
      %v4350 = vrot.slane %v4348, 5
      %v4351 = vor.u32 %v4347, %v4350
      %v4352 = vrot.slane %v4351, 4
      %v4354 = vshll.u32 %v4276, 16
      %v4356 = vrot.slane %v4354, 5
      %v4357 = vsel %vm734, %v4352, %v4356
      %v4358 = vshrl.u32 %v4276, 16
      %v4360 = vrot.slane %v4358, 4
      %v4361 = vor.u32 %v4360, %v4356
      %v4362 = vrot.slane %v4361, 4
      %v4364 = vshll.u32 %v4277, 16
      %v4366 = vrot.slane %v4364, 5
      %v4367 = vsel %vm734, %v4362, %v4366
      %v4369 = vshrl.u32 %v4278, 16
      %v4371 = vrot.slane %v4369, 4
      %v4372 = vshll.u32 %v4278, 16
      %v4374 = vrot.slane %v4372, 5
      %v4375 = vor.u32 %v4371, %v4374
      %v4376 = vrot.slane %v4375, 4
      %v4378 = vshll.u32 %v4279, 16
      %v4380 = vrot.slane %v4378, 5
      %v4381 = vsel %vm734, %v4376, %v4380
      %v4382 = vshrl.u32 %v4279, 16
      %v4384 = vrot.slane %v4382, 4
      %v4385 = vor.u32 %v4384, %v4380
      %v4386 = vrot.slane %v4385, 4
      %v4388 = vshll.u32 %v4280, 16
      %v4390 = vrot.slane %v4388, 5
      %v4391 = vsel %vm734, %v4386, %v4390
      %v4393 = vshrl.u32 %v4281, 16
      %v4395 = vrot.slane %v4393, 4
      %v4396 = vshll.u32 %v4281, 16
      %v4398 = vrot.slane %v4396, 5
      %v4399 = vor.u32 %v4395, %v4398
      %v4400 = vrot.slane %v4399, 4
      %v4402 = vshll.u32 %v4282, 16
      %v4404 = vrot.slane %v4402, 5
      %v4405 = vsel %vm734, %v4400, %v4404
      %v4406 = vshrl.u32 %v4282, 16
      %v4408 = vrot.slane %v4406, 4
      %v4409 = vor.u32 %v4408, %v4404
      %v4410 = vrot.slane %v4409, 4
      %v4412 = vshll.u32 %v4283, 16
      %v4414 = vrot.slane %v4412, 5
      %v4415 = vsel %vm734, %v4410, %v4414
      %v4417 = vshrl.u32 %v4284, 16
      %v4419 = vrot.slane %v4417, 4
      %v4420 = vshll.u32 %v4284, 16
      %v4422 = vrot.slane %v4420, 5
      %v4423 = vor.u32 %v4419, %v4422
      %v4424 = vrot.slane %v4423, 4
      %v4426 = vshll.u32 %v4285, 16
      %v4428 = vrot.slane %v4426, 5
      %v4429 = vsel %vm734, %v4424, %v4428
      %v4430 = vshrl.u32 %v4285, 16
      %v4432 = vrot.slane %v4430, 4
      %v4433 = vor.u32 %v4432, %v4428
      %v4434 = vrot.slane %v4433, 4
      %v4436 = vshll.u32 %v4286, 16
      %v4438 = vrot.slane %v4436, 5
      %v4439 = vsel %vm734, %v4434, %v4438
      %v4441 = vshrl.u32 %v4287, 16
      %v4443 = vrot.slane %v4441, 4
      %v4444 = vshll.u32 %v4287, 16
      %v4446 = vrot.slane %v4444, 5
      %v4447 = vor.u32 %v4443, %v4446
      %v4448 = vrot.slane %v4447, 4
      %v4450 = vshll.u32 %v4288, 16
      %v4452 = vrot.slane %v4450, 5
      %v4453 = vsel %vm734, %v4448, %v4452
      %v4454 = vshrl.u32 %v4288, 16
      %v4456 = vrot.slane %v4454, 4
      %v4457 = vor.u32 %v4456, %v4452
      %v4458 = vrot.slane %v4457, 4
      %v4460 = vshll.u32 %v4289, 16
      %v4462 = vrot.slane %v4460, 5
      %v4463 = vsel %vm734, %v4458, %v4462
      %v4465 = vshrl.u32 %v4290, 16
      %v4467 = vrot.slane %v4465, 4
      %v4468 = vshll.u32 %v4290, 16
      %v4470 = vrot.slane %v4468, 5
      %v4471 = vor.u32 %v4467, %v4470
      %v4472 = vrot.slane %v4471, 4
      %v4474 = vshll.u32 %v4291, 16
      %v4476 = vrot.slane %v4474, 5
      %v4477 = vsel %vm734, %v4472, %v4476
      %v4478 = vshrl.u32 %v4291, 16
      %v4480 = vrot.slane %v4478, 4
      %v4481 = vor.u32 %v4480, %v4476
      %v4482 = vrot.slane %v4481, 4
      %v4484 = vshll.u32 %v4292, 16
      %v4486 = vrot.slane %v4484, 5
      %v4487 = vsel %vm734, %v4482, %v4486
      %v4489 = vshrl.u32 %v4293, 16
      %v4491 = vrot.slane %v4489, 4
      %v4492 = vshll.u32 %v4293, 16
      %v4494 = vrot.slane %v4492, 5
      %v4495 = vor.u32 %v4491, %v4494
      %v4496 = vrot.slane %v4495, 4
      %v4498 = vshll.u32 %v4294, 16
      %v4500 = vrot.slane %v4498, 5
      %v4501 = vsel %vm734, %v4496, %v4500
      %v4502 = vshrl.u32 %v4294, 16
      %v4504 = vrot.slane %v4502, 4
      %v4505 = vor.u32 %v4504, %v4500
      %v4506 = vrot.slane %v4505, 4
      %v4508 = vshll.u32 %v4295, 16
      %v4510 = vrot.slane %v4508, 5
      %v4511 = vsel %vm734, %v4506, %v4510
      %v4513 = vshrl.u32 %v4296, 16
      %v4515 = vrot.slane %v4513, 4
      %v4516 = vshll.u32 %v4296, 16
      %v4518 = vrot.slane %v4516, 5
      %v4519 = vor.u32 %v4515, %v4518
      %v4520 = vrot.slane %v4519, 4
      %v4522 = vshll.u32 %v4297, 16
      %v4524 = vrot.slane %v4522, 5
      %v4525 = vsel %vm734, %v4520, %v4524
      %v4526 = vshrl.u32 %v4297, 16
      %v4528 = vrot.slane %v4526, 4
      %v4529 = vor.u32 %v4528, %v4524
      %v4530 = vrot.slane %v4529, 4
      %v4532 = vshll.u32 %v4298, 16
      %v4534 = vrot.slane %v4532, 5
      %v4535 = vsel %vm734, %v4530, %v4534
      %v4537 = vshrl.u32 %v4299, 16
      %v4539 = vrot.slane %v4537, 4
      %v4540 = vshll.u32 %v4299, 16
      %v4542 = vrot.slane %v4540, 5
      %v4543 = vor.u32 %v4539, %v4542
      %v4544 = vrot.slane %v4543, 4
      %v4546 = vshll.u32 %v4300, 16
      %v4548 = vrot.slane %v4546, 5
      %v4549 = vsel %vm734, %v4544, %v4548
      %v4550 = vshrl.u32 %v4300, 16
      %v4552 = vrot.slane %v4550, 4
      %v4553 = vor.u32 %v4552, %v4548
      %v4554 = vrot.slane %v4553, 4
      %v4556 = vshll.u32 %v4301, 16
      %v4558 = vrot.slane %v4556, 5
      %v4559 = vsel %vm734, %v4554, %v4558
      %v4561 = vshrl.u32 %v4302, 16
      %v4563 = vrot.slane %v4561, 4
      %v4564 = vshll.u32 %v4302, 16
      %v4566 = vrot.slane %v4564, 5
      %v4567 = vor.u32 %v4563, %v4566
      %v4568 = vrot.slane %v4567, 4
      %v4570 = vshll.u32 %v4303, 16
      %v4572 = vrot.slane %v4570, 5
      %v4573 = vsel %vm734, %v4568, %v4572
      %v4574 = vshrl.u32 %v4303, 16
      %v4576 = vrot.slane %v4574, 4
      %v4577 = vor.u32 %v4576, %v4572
      %v4578 = vrot.slane %v4577, 4
      %v4580 = vshll.u32 %v4304, 16
      %v4582 = vrot.slane %v4580, 5
      %v4583 = vsel %vm734, %v4578, %v4582
      %v4585 = vshrl.u32 %v4305, 16
      %v4587 = vrot.slane %v4585, 4
      %v4588 = vshll.u32 %v4305, 16
      %v4590 = vrot.slane %v4588, 5
      %v4591 = vor.u32 %v4587, %v4590
      %v4592 = vrot.slane %v4591, 4
      %v4594 = vshll.u32 %v4306, 16
      %v4596 = vrot.slane %v4594, 5
      %v4597 = vsel %vm734, %v4592, %v4596
      %v4598 = vshrl.u32 %v4306, 16
      %v4600 = vrot.slane %v4598, 4
      %v4601 = vor.u32 %v4600, %v4596
      %v4602 = vrot.slane %v4601, 4
      %v4604 = vshll.u32 %v4307, 16
      %v4606 = vrot.slane %v4604, 5
      %v4607 = vsel %vm734, %v4602, %v4606
      %v4609 = vshrl.u32 %v4308, 16
      %v4611 = vrot.slane %v4609, 4
      %v4612 = vshll.u32 %v4308, 16
      %v4614 = vrot.slane %v4612, 5
      %v4615 = vor.u32 %v4611, %v4614
      %v4616 = vrot.slane %v4615, 4
      %v4618 = vshll.u32 %v4309, 16
      %v4620 = vrot.slane %v4618, 5
      %v4621 = vsel %vm734, %v4616, %v4620
      %v4622 = vshrl.u32 %v4309, 16
      %v4624 = vrot.slane %v4622, 4
      %v4625 = vor.u32 %v4624, %v4620
      %v4626 = vrot.slane %v4625, 4
      %v4628 = vshll.u32 %v4310, 16
      %v4630 = vrot.slane %v4628, 5
      %v4631 = vsel %vm734, %v4626, %v4630
      %v4633 = vshrl.u32 %v4311, 16
      %v4635 = vrot.slane %v4633, 4
      %v4636 = vshll.u32 %v4311, 16
      %v4638 = vrot.slane %v4636, 5
      %v4639 = vor.u32 %v4635, %v4638
      %v4640 = vrot.slane %v4639, 4
      %v4642 = vshll.u32 %v4312, 16
      %v4644 = vrot.slane %v4642, 5
      %v4645 = vsel %vm734, %v4640, %v4644
      %v4646 = vshrl.u32 %v4312, 16
      %v4648 = vrot.slane %v4646, 4
      %v4649 = vor.u32 %v4648, %v4644
      %v4650 = vrot.slane %v4649, 4
      %v4652 = vshll.u32 %v4313, 16
      %v4654 = vrot.slane %v4652, 5
      %v4655 = vsel %vm734, %v4650, %v4654
      %v4657 = vshrl.u32 %v4314, 16
      %v4659 = vrot.slane %v4657, 4
      %v4660 = vshll.u32 %v4314, 16
      %v4662 = vrot.slane %v4660, 5
      %v4663 = vor.u32 %v4659, %v4662
      %v4664 = vrot.slane %v4663, 4
      %v4666 = vshll.u32 %v4315, 16
      %v4668 = vrot.slane %v4666, 5
      %v4669 = vsel %vm734, %v4664, %v4668
      %v4670 = vshrl.u32 %v4315, 16
      %v4672 = vrot.slane %v4670, 4
      %v4673 = vor.u32 %v4672, %v4668
      %v4674 = vrot.slane %v4673, 4
      %v4676 = vshll.u32 %v4316, 16
      %v4678 = vrot.slane %v4676, 5
      %v4679 = vsel %vm734, %v4674, %v4678
      %v4681 = vshrl.u32 %v4317, 16
      %v4683 = vrot.slane %v4681, 4
      %v4684 = vshll.u32 %v4317, 16
      %v4686 = vrot.slane %v4684, 5
      %v4687 = vor.u32 %v4683, %v4686
      %v4688 = vrot.slane %v4687, 4
      %v4690 = vshll.u32 %v4318, 16
      %v4692 = vrot.slane %v4690, 5
      %v4693 = vsel %vm734, %v4688, %v4692
      %v4694 = vshrl.u32 %v4318, 16
      %v4696 = vrot.slane %v4694, 4
      %v4697 = vor.u32 %v4696, %v4692
      %v4698 = vrot.slane %v4697, 4
      %v4700 = vshll.u32 %v4319, 16
      %v4702 = vrot.slane %v4700, 5
      %v4703 = vsel %vm734, %v4698, %v4702
      %s4704 = scalar_lea.vmem %s298, 56
      %v4705 = vld [vmem:[%s4704] sm:$0xf]
      %v4706 = vld [vmem:[%s4704 + $0x4] sm:$0xf]
      %v4707 = vunpack.c.l.b16 %v4333
      %v4708 = vunpack.c.l.b16 %v4343
      %v4709 = vunpack.c.l.b16 %v4357
      %v4710 = vunpack.c.l.b16 %v4367
      %v4711 = vunpack.c.l.b16 %v4381
      %v4712 = vunpack.c.l.b16 %v4391
      %v4713 = vunpack.c.l.b16 %v4405
      %v4714 = vunpack.c.l.b16 %v4415
      %v4715 = vunpack.c.l.b16 %v4429
      %v4716 = vunpack.c.l.b16 %v4439
      %v4717 = vunpack.c.l.b16 %v4453
      %v4718 = vunpack.c.l.b16 %v4463
      %v4719 = vunpack.c.l.b16 %v4477
      %v4720 = vunpack.c.l.b16 %v4487
      %v4721 = vunpack.c.l.b16 %v4501
      %v4722 = vunpack.c.l.b16 %v4511
      %v4723 = vunpack.c.l.b16 %v4525
      %v4724 = vunpack.c.l.b16 %v4535
      %v4725 = vunpack.c.l.b16 %v4549
      %v4726 = vunpack.c.l.b16 %v4559
      %v4727 = vunpack.c.l.b16 %v4573
      %v4728 = vunpack.c.l.b16 %v4583
      %v4729 = vunpack.c.l.b16 %v4597
      %v4730 = vunpack.c.l.b16 %v4607
      %v4731 = vunpack.c.l.b16 %v4621
      %v4732 = vunpack.c.l.b16 %v4631
      %v4733 = vunpack.c.l.b16 %v4645
      %v4734 = vunpack.c.l.b16 %v4655
      %v4735 = vunpack.c.l.b16 %v4669
      %v4736 = vunpack.c.l.b16 %v4679
      %v4737 = vunpack.c.l.b16 %v4693
      %v4738 = vunpack.c.l.b16 %v4703
      %v4739 = vpack.c.b16 %v4708, %v4707
      %v4740 = vpack.c.b16 %v4710, %v4709
      %v4741 = vpack.c.b16 %v4712, %v4711
      %v4742 = vpack.c.b16 %v4714, %v4713
      %v4743 = vpack.c.b16 %v4716, %v4715
      %v4744 = vpack.c.b16 %v4718, %v4717
      %v4745 = vpack.c.b16 %v4720, %v4719
      %v4746 = vpack.c.b16 %v4722, %v4721
      %v4747 = vpack.c.b16 %v4724, %v4723
      %v4748 = vpack.c.b16 %v4726, %v4725
      %v4749 = vpack.c.b16 %v4728, %v4727
      %v4750 = vpack.c.b16 %v4730, %v4729
      %v4751 = vpack.c.b16 %v4732, %v4731
      %v4752 = vpack.c.b16 %v4734, %v4733
      %v4753 = vpack.c.b16 %v4736, %v4735
      %v4754 = vpack.c.b16 %v4738, %v4737
      %v4757 = vunpack.c.l.b16 %v4705
      %v4758 = vunpack.c.l.b16 %v4706
      %v4759 = vpack.c.b16 %v4758, %v4757
      %v4762 = vsel %vm442, %v4739, 0
      %v4765 = vsel %vm442, %v4740, 0
      %v4768 = vsel %vm442, %v4741, 0
      %v4771 = vsel %vm442, %v4742, 0
      %v4774 = vsel %vm442, %v4743, 0
      %v4777 = vsel %vm442, %v4744, 0
      %v4780 = vsel %vm442, %v4745, 0
      %v4783 = vsel %vm442, %v4746, 0
      %v4786 = vsel %vm442, %v4747, 0
      %v4789 = vsel %vm442, %v4748, 0
      %v4792 = vsel %vm442, %v4749, 0
      %v4795 = vsel %vm442, %v4750, 0
      %v4798 = vsel %vm442, %v4751, 0
      %v4801 = vsel %vm442, %v4752, 0
      %v4804 = vsel %vm442, %v4753, 0
      %v4807 = vsel %vm442, %v4754, 0
      %4809 = vmatprep.subr.bf16.mxu0 0
      %4810 = vmatpush1.bf16.msra.mxu0 0
      %4811 = vmatprep.subr.bf16.mxu0 0
      %4812 = vmatpush1.bf16.msra.mxu0 0
      %4813 = vmatprep.subr.bf16.mxu0 0
      %4814 = vmatpush1.bf16.msra.mxu0 0
      %4815 = vmatprep.subr.bf16.mxu0 0
      %4816 = vmatpush1.bf16.msra.mxu0 0
      %4817 = vmatprep.subr.bf16.mxu0 0
      %4818 = vmatpush1.bf16.msra.mxu0 0
      %4819 = vmatprep.subr.bf16.mxu0 0
      %4820 = vmatpush1.bf16.msra.mxu0 0
      %4821 = vmatprep.subr.bf16.mxu0 0
      %4822 = vmatpush1.bf16.msra.mxu0 0
      %4823 = vmatprep.subr.bf16.mxu0 0
      %4824 = vmatpush1.bf16.msra.mxu0 %v4759
      %4825 = vmatprep.subr.bf16.mxu0 0
      %4826 = vmatpush2.bf16.msra.mxu0 0
      %4827 = vmatprep.subr.bf16.mxu0 0
      %4828 = vmatpush2.bf16.msra.mxu0 0
      %4829 = vmatprep.subr.bf16.mxu0 0
      %4830 = vmatpush2.bf16.msra.mxu0 0
      %4831 = vmatprep.subr.bf16.mxu0 0
      %4832 = vmatpush2.bf16.msra.mxu0 0
      %4833 = vmatprep.subr.bf16.mxu0 0
      %4834 = vmatpush2.bf16.msra.mxu0 0
      %4835 = vmatprep.subr.bf16.mxu0 0
      %4836 = vmatpush2.bf16.msra.mxu0 0
      %4837 = vmatprep.subr.bf16.mxu0 0
      %4838 = vmatpush2.bf16.msra.mxu0 0
      %4839 = vmatprep.subr.bf16.mxu0 0
      %4840 = vmatpush2.bf16.msra.mxu0 0
      %4841 = vmatprep.mubr.bf16.mxu0 0
      %4842 = vmatmul.mubr.bf16.gmra.mxu0 %v4762
      %v4843 = vpop.f32.mrf.mxu0
      %v4844 = vadd.f32 0.0, %v4843
      %v4845 = vpop.f32.mrf.mxu0
      %v4846 = vpop.f32.mrf.mxu0
      %v4847 = vadd.f32 0.0, %v4846
      %v4848 = vpop.f32.mrf.mxu0
      %4849 = vmatprep.mubr.bf16.mxu0 0
      %4850 = vmatmul.mubr.bf16.gmra.mxu0 %v4765
      %v4851 = vpop.f32.mrf.mxu0
      %v4852 = vadd.f32 0.0, %v4851
      %v4853 = vpop.f32.mrf.mxu0
      %v4854 = vpop.f32.mrf.mxu0
      %v4855 = vadd.f32 0.0, %v4854
      %v4856 = vpop.f32.mrf.mxu0
      %4857 = vmatprep.mubr.bf16.mxu0 0
      %4858 = vmatmul.mubr.bf16.gmra.mxu0 %v4768
      %v4859 = vpop.f32.mrf.mxu0
      %v4860 = vadd.f32 0.0, %v4859
      %v4861 = vpop.f32.mrf.mxu0
      %v4862 = vpop.f32.mrf.mxu0
      %v4863 = vadd.f32 0.0, %v4862
      %v4864 = vpop.f32.mrf.mxu0
      %4865 = vmatprep.mubr.bf16.mxu0 0
      %4866 = vmatmul.mubr.bf16.gmra.mxu0 %v4771
      %v4867 = vpop.f32.mrf.mxu0
      %v4868 = vadd.f32 0.0, %v4867
      %v4869 = vpop.f32.mrf.mxu0
      %v4870 = vpop.f32.mrf.mxu0
      %v4871 = vadd.f32 0.0, %v4870
      %v4872 = vpop.f32.mrf.mxu0
      %4873 = vmatprep.mubr.bf16.mxu0 0
      %4874 = vmatmul.mubr.bf16.gmra.mxu0 %v4774
      %v4875 = vpop.f32.mrf.mxu0
      %v4876 = vadd.f32 0.0, %v4875
      %v4877 = vpop.f32.mrf.mxu0
      %v4878 = vpop.f32.mrf.mxu0
      %v4879 = vadd.f32 0.0, %v4878
      %v4880 = vpop.f32.mrf.mxu0
      %4881 = vmatprep.mubr.bf16.mxu0 0
      %4882 = vmatmul.mubr.bf16.gmra.mxu0 %v4777
      %v4883 = vpop.f32.mrf.mxu0
      %v4884 = vadd.f32 0.0, %v4883
      %v4885 = vpop.f32.mrf.mxu0
      %v4886 = vpop.f32.mrf.mxu0
      %v4887 = vadd.f32 0.0, %v4886
      %v4888 = vpop.f32.mrf.mxu0
      %4889 = vmatprep.mubr.bf16.mxu0 0
      %4890 = vmatmul.mubr.bf16.gmra.mxu0 %v4780
      %v4891 = vpop.f32.mrf.mxu0
      %v4892 = vadd.f32 0.0, %v4891
      %v4893 = vpop.f32.mrf.mxu0
      %v4894 = vpop.f32.mrf.mxu0
      %v4895 = vadd.f32 0.0, %v4894
      %v4896 = vpop.f32.mrf.mxu0
      %4897 = vmatprep.mubr.bf16.mxu0 0
      %4898 = vmatmul.mubr.bf16.gmra.mxu0 %v4783
      %v4899 = vpop.f32.mrf.mxu0
      %v4900 = vadd.f32 0.0, %v4899
      %v4901 = vpop.f32.mrf.mxu0
      %v4902 = vpop.f32.mrf.mxu0
      %v4903 = vadd.f32 0.0, %v4902
      %v4904 = vpop.f32.mrf.mxu0
      %4905 = vmatprep.mubr.bf16.mxu0 0
      %4906 = vmatmul.mubr.bf16.gmra.mxu0 %v4786
      %v4907 = vpop.f32.mrf.mxu0
      %v4908 = vadd.f32 0.0, %v4907
      %v4909 = vpop.f32.mrf.mxu0
      %v4910 = vpop.f32.mrf.mxu0
      %v4911 = vadd.f32 0.0, %v4910
      %v4912 = vpop.f32.mrf.mxu0
      %4913 = vmatprep.mubr.bf16.mxu0 0
      %4914 = vmatmul.mubr.bf16.gmra.mxu0 %v4789
      %v4915 = vpop.f32.mrf.mxu0
      %v4916 = vadd.f32 0.0, %v4915
      %v4917 = vpop.f32.mrf.mxu0
      %v4918 = vpop.f32.mrf.mxu0
      %v4919 = vadd.f32 0.0, %v4918
      %v4920 = vpop.f32.mrf.mxu0
      %4921 = vmatprep.mubr.bf16.mxu0 0
      %4922 = vmatmul.mubr.bf16.gmra.mxu0 %v4792
      %v4923 = vpop.f32.mrf.mxu0
      %v4924 = vadd.f32 0.0, %v4923
      %v4925 = vpop.f32.mrf.mxu0
      %v4926 = vpop.f32.mrf.mxu0
      %v4927 = vadd.f32 0.0, %v4926
      %v4928 = vpop.f32.mrf.mxu0
      %4929 = vmatprep.mubr.bf16.mxu0 0
      %4930 = vmatmul.mubr.bf16.gmra.mxu0 %v4795
      %v4931 = vpop.f32.mrf.mxu0
      %v4932 = vadd.f32 0.0, %v4931
      %v4933 = vpop.f32.mrf.mxu0
      %v4934 = vpop.f32.mrf.mxu0
      %v4935 = vadd.f32 0.0, %v4934
      %v4936 = vpop.f32.mrf.mxu0
      %4937 = vmatprep.mubr.bf16.mxu0 0
      %4938 = vmatmul.mubr.bf16.gmra.mxu0 %v4798
      %v4939 = vpop.f32.mrf.mxu0
      %v4940 = vadd.f32 0.0, %v4939
      %v4941 = vpop.f32.mrf.mxu0
      %v4942 = vpop.f32.mrf.mxu0
      %v4943 = vadd.f32 0.0, %v4942
      %v4944 = vpop.f32.mrf.mxu0
      %4945 = vmatprep.mubr.bf16.mxu0 0
      %4946 = vmatmul.mubr.bf16.gmra.mxu0 %v4801
      %v4947 = vpop.f32.mrf.mxu0
      %v4948 = vadd.f32 0.0, %v4947
      %v4949 = vpop.f32.mrf.mxu0
      %v4950 = vpop.f32.mrf.mxu0
      %v4951 = vadd.f32 0.0, %v4950
      %v4952 = vpop.f32.mrf.mxu0
      %4953 = vmatprep.mubr.bf16.mxu0 0
      %4954 = vmatmul.mubr.bf16.gmra.mxu0 %v4804
      %v4955 = vpop.f32.mrf.mxu0
      %v4956 = vadd.f32 0.0, %v4955
      %v4957 = vpop.f32.mrf.mxu0
      %v4958 = vpop.f32.mrf.mxu0
      %v4959 = vadd.f32 0.0, %v4958
      %v4960 = vpop.f32.mrf.mxu0
      %4961 = vmatprep.mubr.bf16.mxu0 0
      %4962 = vmatmul.mubr.bf16.gmra.mxu0 %v4807
      %v4963 = vpop.f32.mrf.mxu0
      %v4964 = vadd.f32 0.0, %v4963
      %v4965 = vpop.f32.mrf.mxu0
      %v4966 = vpop.f32.mrf.mxu0
      %v4967 = vadd.f32 0.0, %v4966
      %v4968 = vpop.f32.mrf.mxu0
      %4969 = vdwg.mxu0
      %v4970 = vld [vmem:[#allocation2] sm:$0xff]
      %v4971 = vld [vmem:[#allocation2 + $0x8] sm:$0xff]
      %v4972 = vld [vmem:[#allocation2 + $0x10] sm:$0xff]
      %v4973 = vld [vmem:[#allocation2 + $0x18] sm:$0xff]
      %v4974 = vld [vmem:[#allocation2 + $0x20] sm:$0xff]
      %v4975 = vld [vmem:[#allocation2 + $0x28] sm:$0xff]
      %v4976 = vld [vmem:[#allocation2 + $0x30] sm:$0xff]
      %v4977 = vld [vmem:[#allocation2 + $0x38] sm:$0xff]
      %v4978 = vld [vmem:[#allocation2 + $0x40] sm:$0xff]
      %v4979 = vld [vmem:[#allocation2 + $0x48] sm:$0xff]
      %v4980 = vld [vmem:[#allocation2 + $0x50] sm:$0xff]
      %v4981 = vld [vmem:[#allocation2 + $0x58] sm:$0xff]
      %v4982 = vld [vmem:[#allocation2 + $0x60] sm:$0xff]
      %v4983 = vld [vmem:[#allocation2 + $0x68] sm:$0xff]
      %v4984 = vld [vmem:[#allocation2 + $0x70] sm:$0xff]
      %v4985 = vld [vmem:[#allocation2 + $0x78] sm:$0xff]
      %v4986 = vld [vmem:[#allocation2 + $0x80] sm:$0xff]
      %v4987 = vld [vmem:[#allocation2 + $0x88] sm:$0xff]
      %v4988 = vld [vmem:[#allocation2 + $0x90] sm:$0xff]
      %v4989 = vld [vmem:[#allocation2 + $0x98] sm:$0xff]
      %v4990 = vld [vmem:[#allocation2 + $0xa0] sm:$0xff]
      %v4991 = vld [vmem:[#allocation2 + $0xa8] sm:$0xff]
      %v4992 = vld [vmem:[#allocation2 + $0xb0] sm:$0xff]
      %v4993 = vld [vmem:[#allocation2 + $0xb8] sm:$0xff]
      %v4994 = vld [vmem:[#allocation2 + $0xc0] sm:$0xff]
      %v4995 = vld [vmem:[#allocation2 + $0xc8] sm:$0xff]
      %v4996 = vld [vmem:[#allocation2 + $0xd0] sm:$0xff]
      %v4997 = vld [vmem:[#allocation2 + $0xd8] sm:$0xff]
      %v4998 = vld [vmem:[#allocation2 + $0xe0] sm:$0xff]
      %v4999 = vld [vmem:[#allocation2 + $0xe8] sm:$0xff]
      %v5000 = vld [vmem:[#allocation2 + $0xf0] sm:$0xff]
      %v5001 = vld [vmem:[#allocation2 + $0xf8] sm:$0xff]
      %v5002 = vadd.f32 %v4970, %v4844
      %v5003 = vadd.f32 %v4971, %v4847
      %v5004 = vadd.f32 %v4972, %v4852
      %v5005 = vadd.f32 %v4973, %v4855
      %v5006 = vadd.f32 %v4974, %v4860
      %v5007 = vadd.f32 %v4975, %v4863
      %v5008 = vadd.f32 %v4976, %v4868
      %v5009 = vadd.f32 %v4977, %v4871
      %v5010 = vadd.f32 %v4978, %v4876
      %v5011 = vadd.f32 %v4979, %v4879
      %v5012 = vadd.f32 %v4980, %v4884
      %v5013 = vadd.f32 %v4981, %v4887
      %v5014 = vadd.f32 %v4982, %v4892
      %v5015 = vadd.f32 %v4983, %v4895
      %v5016 = vadd.f32 %v4984, %v4900
      %v5017 = vadd.f32 %v4985, %v4903
      %v5018 = vadd.f32 %v4986, %v4908
      %v5019 = vadd.f32 %v4987, %v4911
      %v5020 = vadd.f32 %v4988, %v4916
      %v5021 = vadd.f32 %v4989, %v4919
      %v5022 = vadd.f32 %v4990, %v4924
      %v5023 = vadd.f32 %v4991, %v4927
      %v5024 = vadd.f32 %v4992, %v4932
      %v5025 = vadd.f32 %v4993, %v4935
      %v5026 = vadd.f32 %v4994, %v4940
      %v5027 = vadd.f32 %v4995, %v4943
      %v5028 = vadd.f32 %v4996, %v4948
      %v5029 = vadd.f32 %v4997, %v4951
      %v5030 = vadd.f32 %v4998, %v4956
      %v5031 = vadd.f32 %v4999, %v4959
      %v5032 = vadd.f32 %v5000, %v4964
      %v5033 = vadd.f32 %v5001, %v4967
      %5034 = vst.msk [vmem:[#allocation2] sm:$0xff] %vm442, %v5002
      %5035 = vst.msk [vmem:[#allocation2 + $0x8] sm:$0xff] %vm442, %v5003
      %5036 = vst.msk [vmem:[#allocation2 + $0x10] sm:$0xff] %vm442, %v5004
      %5037 = vst.msk [vmem:[#allocation2 + $0x18] sm:$0xff] %vm442, %v5005
      %5038 = vst.msk [vmem:[#allocation2 + $0x20] sm:$0xff] %vm442, %v5006
      %5039 = vst.msk [vmem:[#allocation2 + $0x28] sm:$0xff] %vm442, %v5007
      %5040 = vst.msk [vmem:[#allocation2 + $0x30] sm:$0xff] %vm442, %v5008
      %5041 = vst.msk [vmem:[#allocation2 + $0x38] sm:$0xff] %vm442, %v5009
      %5042 = vst.msk [vmem:[#allocation2 + $0x40] sm:$0xff] %vm442, %v5010
      %5043 = vst.msk [vmem:[#allocation2 + $0x48] sm:$0xff] %vm442, %v5011
      %5044 = vst.msk [vmem:[#allocation2 + $0x50] sm:$0xff] %vm442, %v5012
      %5045 = vst.msk [vmem:[#allocation2 + $0x58] sm:$0xff] %vm442, %v5013
      %5046 = vst.msk [vmem:[#allocation2 + $0x60] sm:$0xff] %vm442, %v5014
      %5047 = vst.msk [vmem:[#allocation2 + $0x68] sm:$0xff] %vm442, %v5015
      %5048 = vst.msk [vmem:[#allocation2 + $0x70] sm:$0xff] %vm442, %v5016
      %5049 = vst.msk [vmem:[#allocation2 + $0x78] sm:$0xff] %vm442, %v5017
      %5050 = vst.msk [vmem:[#allocation2 + $0x80] sm:$0xff] %vm442, %v5018
      %5051 = vst.msk [vmem:[#allocation2 + $0x88] sm:$0xff] %vm442, %v5019
      %5052 = vst.msk [vmem:[#allocation2 + $0x90] sm:$0xff] %vm442, %v5020
      %5053 = vst.msk [vmem:[#allocation2 + $0x98] sm:$0xff] %vm442, %v5021
      %5054 = vst.msk [vmem:[#allocation2 + $0xa0] sm:$0xff] %vm442, %v5022
      %5055 = vst.msk [vmem:[#allocation2 + $0xa8] sm:$0xff] %vm442, %v5023
      %5056 = vst.msk [vmem:[#allocation2 + $0xb0] sm:$0xff] %vm442, %v5024
      %5057 = vst.msk [vmem:[#allocation2 + $0xb8] sm:$0xff] %vm442, %v5025
      %5058 = vst.msk [vmem:[#allocation2 + $0xc0] sm:$0xff] %vm442, %v5026
      %5059 = vst.msk [vmem:[#allocation2 + $0xc8] sm:$0xff] %vm442, %v5027
      %5060 = vst.msk [vmem:[#allocation2 + $0xd0] sm:$0xff] %vm442, %v5028
      %5061 = vst.msk [vmem:[#allocation2 + $0xd8] sm:$0xff] %vm442, %v5029
      %5062 = vst.msk [vmem:[#allocation2 + $0xe0] sm:$0xff] %vm442, %v5030
      %5063 = vst.msk [vmem:[#allocation2 + $0xe8] sm:$0xff] %vm442, %v5031
      %5064 = vst.msk [vmem:[#allocation2 + $0xf0] sm:$0xff] %vm442, %v5032
      %5065 = vst.msk [vmem:[#allocation2 + $0xf8] sm:$0xff] %vm442, %v5033
      %v5066 = vld [vmem:[%s3845] sm:$0xe]
      %v5067 = vld [vmem:[%s3845 + $0x4] sm:$0xf]
      %v5068 = vld [vmem:[%s3845 + $0x8] sm:$0x1]
      %v5069 = vld [vmem:[%s3845 + $0xc] sm:$0xe]
      %v5070 = vld [vmem:[%s3845 + $0x10] sm:$0xf]
      %v5071 = vld [vmem:[%s3845 + $0x14] sm:$0x1]
      %v5072 = vld [vmem:[%s3845 + $0x18] sm:$0xe]
      %v5073 = vld [vmem:[%s3845 + $0x1c] sm:$0xf]
      %v5074 = vld [vmem:[%s3845 + $0x20] sm:$0x1]
      %v5075 = vld [vmem:[%s3845 + $0x24] sm:$0xe]
      %v5076 = vld [vmem:[%s3845 + $0x28] sm:$0xf]
      %v5077 = vld [vmem:[%s3845 + $0x2c] sm:$0x1]
      %v5078 = vld [vmem:[%s3845 + $0x30] sm:$0xe]
      %v5079 = vld [vmem:[%s3845 + $0x34] sm:$0xf]
      %v5080 = vld [vmem:[%s3845 + $0x38] sm:$0x1]
      %v5081 = vld [vmem:[%s3845 + $0x3c] sm:$0xe]
      %v5082 = vld [vmem:[%s3845 + $0x40] sm:$0xf]
      %v5083 = vld [vmem:[%s3845 + $0x44] sm:$0x1]
      %v5084 = vld [vmem:[%s3845 + $0x48] sm:$0xe]
      %v5085 = vld [vmem:[%s3845 + $0x4c] sm:$0xf]
      %v5086 = vld [vmem:[%s3845 + $0x50] sm:$0x1]
      %v5087 = vld [vmem:[%s3845 + $0x54] sm:$0xe]
      %v5088 = vld [vmem:[%s3845 + $0x58] sm:$0xf]
      %v5089 = vld [vmem:[%s3845 + $0x5c] sm:$0x1]
      %v5090 = vld [vmem:[%s3845 + $0x60] sm:$0xe]
      %v5091 = vld [vmem:[%s3845 + $0x64] sm:$0xf]
      %v5092 = vld [vmem:[%s3845 + $0x68] sm:$0x1]
      %v5093 = vld [vmem:[%s3845 + $0x6c] sm:$0xe]
      %v5094 = vld [vmem:[%s3845 + $0x70] sm:$0xf]
      %v5095 = vld [vmem:[%s3845 + $0x74] sm:$0x1]
      %v5096 = vld [vmem:[%s3845 + $0x78] sm:$0xe]
      %v5097 = vld [vmem:[%s3845 + $0x7c] sm:$0xf]
      %v5098 = vld [vmem:[%s3845 + $0x80] sm:$0x1]
      %v5099 = vld [vmem:[%s3845 + $0x84] sm:$0xe]
      %v5100 = vld [vmem:[%s3845 + $0x88] sm:$0xf]
      %v5101 = vld [vmem:[%s3845 + $0x8c] sm:$0x1]
      %v5102 = vld [vmem:[%s3845 + $0x90] sm:$0xe]
      %v5103 = vld [vmem:[%s3845 + $0x94] sm:$0xf]
      %v5104 = vld [vmem:[%s3845 + $0x98] sm:$0x1]
      %v5105 = vld [vmem:[%s3845 + $0x9c] sm:$0xe]
      %v5106 = vld [vmem:[%s3845 + $0xa0] sm:$0xf]
      %v5107 = vld [vmem:[%s3845 + $0xa4] sm:$0x1]
      %v5108 = vld [vmem:[%s3845 + $0xa8] sm:$0xe]
      %v5109 = vld [vmem:[%s3845 + $0xac] sm:$0xf]
      %v5110 = vld [vmem:[%s3845 + $0xb0] sm:$0x1]
      %v5111 = vld [vmem:[%s3845 + $0xb4] sm:$0xe]
      %v5112 = vld [vmem:[%s3845 + $0xb8] sm:$0xf]
      %v5113 = vld [vmem:[%s3845 + $0xbc] sm:$0x1]
      %v5162 = vrot.slane %v5066, 5
      %v5163 = vrot.slane %v5162, 4
      %v5164 = vrot.slane %v5067, 5
      %v5165 = vsel %vm1579, %v5163, %v5164
      %v5166 = vrot.slane %v5164, 4
      %v5167 = vrot.slane %v5068, 5
      %v5168 = vsel %vm1579, %v5166, %v5167
      %v5169 = vrot.slane %v5069, 5
      %v5170 = vrot.slane %v5169, 4
      %v5171 = vrot.slane %v5070, 5
      %v5172 = vsel %vm1579, %v5170, %v5171
      %v5173 = vrot.slane %v5171, 4
      %v5174 = vrot.slane %v5071, 5
      %v5175 = vsel %vm1579, %v5173, %v5174
      %v5176 = vrot.slane %v5072, 5
      %v5177 = vrot.slane %v5176, 4
      %v5178 = vrot.slane %v5073, 5
      %v5179 = vsel %vm1579, %v5177, %v5178
      %v5180 = vrot.slane %v5178, 4
      %v5181 = vrot.slane %v5074, 5
      %v5182 = vsel %vm1579, %v5180, %v5181
      %v5183 = vrot.slane %v5075, 5
      %v5184 = vrot.slane %v5183, 4
      %v5185 = vrot.slane %v5076, 5
      %v5186 = vsel %vm1579, %v5184, %v5185
      %v5187 = vrot.slane %v5185, 4
      %v5188 = vrot.slane %v5077, 5
      %v5189 = vsel %vm1579, %v5187, %v5188
      %v5190 = vrot.slane %v5078, 5
      %v5191 = vrot.slane %v5190, 4
      %v5192 = vrot.slane %v5079, 5
      %v5193 = vsel %vm1579, %v5191, %v5192
      %v5194 = vrot.slane %v5192, 4
      %v5195 = vrot.slane %v5080, 5
      %v5196 = vsel %vm1579, %v5194, %v5195
      %v5197 = vrot.slane %v5081, 5
      %v5198 = vrot.slane %v5197, 4
      %v5199 = vrot.slane %v5082, 5
      %v5200 = vsel %vm1579, %v5198, %v5199
      %v5201 = vrot.slane %v5199, 4
      %v5202 = vrot.slane %v5083, 5
      %v5203 = vsel %vm1579, %v5201, %v5202
      %v5204 = vrot.slane %v5084, 5
      %v5205 = vrot.slane %v5204, 4
      %v5206 = vrot.slane %v5085, 5
      %v5207 = vsel %vm1579, %v5205, %v5206
      %v5208 = vrot.slane %v5206, 4
      %v5209 = vrot.slane %v5086, 5
      %v5210 = vsel %vm1579, %v5208, %v5209
      %v5211 = vrot.slane %v5087, 5
      %v5212 = vrot.slane %v5211, 4
      %v5213 = vrot.slane %v5088, 5
      %v5214 = vsel %vm1579, %v5212, %v5213
      %v5215 = vrot.slane %v5213, 4
      %v5216 = vrot.slane %v5089, 5
      %v5217 = vsel %vm1579, %v5215, %v5216
      %v5218 = vrot.slane %v5090, 5
      %v5219 = vrot.slane %v5218, 4
      %v5220 = vrot.slane %v5091, 5
      %v5221 = vsel %vm1579, %v5219, %v5220
      %v5222 = vrot.slane %v5220, 4
      %v5223 = vrot.slane %v5092, 5
      %v5224 = vsel %vm1579, %v5222, %v5223
      %v5225 = vrot.slane %v5093, 5
      %v5226 = vrot.slane %v5225, 4
      %v5227 = vrot.slane %v5094, 5
      %v5228 = vsel %vm1579, %v5226, %v5227
      %v5229 = vrot.slane %v5227, 4
      %v5230 = vrot.slane %v5095, 5
      %v5231 = vsel %vm1579, %v5229, %v5230
      %v5232 = vrot.slane %v5096, 5
      %v5233 = vrot.slane %v5232, 4
      %v5234 = vrot.slane %v5097, 5
      %v5235 = vsel %vm1579, %v5233, %v5234
      %v5236 = vrot.slane %v5234, 4
      %v5237 = vrot.slane %v5098, 5
      %v5238 = vsel %vm1579, %v5236, %v5237
      %v5239 = vrot.slane %v5099, 5
      %v5240 = vrot.slane %v5239, 4
      %v5241 = vrot.slane %v5100, 5
      %v5242 = vsel %vm1579, %v5240, %v5241
      %v5243 = vrot.slane %v5241, 4
      %v5244 = vrot.slane %v5101, 5
      %v5245 = vsel %vm1579, %v5243, %v5244
      %v5246 = vrot.slane %v5102, 5
      %v5247 = vrot.slane %v5246, 4
      %v5248 = vrot.slane %v5103, 5
      %v5249 = vsel %vm1579, %v5247, %v5248
      %v5250 = vrot.slane %v5248, 4
      %v5251 = vrot.slane %v5104, 5
      %v5252 = vsel %vm1579, %v5250, %v5251
      %v5253 = vrot.slane %v5105, 5
      %v5254 = vrot.slane %v5253, 4
      %v5255 = vrot.slane %v5106, 5
      %v5256 = vsel %vm1579, %v5254, %v5255
      %v5257 = vrot.slane %v5255, 4
      %v5258 = vrot.slane %v5107, 5
      %v5259 = vsel %vm1579, %v5257, %v5258
      %v5260 = vrot.slane %v5108, 5
      %v5261 = vrot.slane %v5260, 4
      %v5262 = vrot.slane %v5109, 5
      %v5263 = vsel %vm1579, %v5261, %v5262
      %v5264 = vrot.slane %v5262, 4
      %v5265 = vrot.slane %v5110, 5
      %v5266 = vsel %vm1579, %v5264, %v5265
      %v5267 = vrot.slane %v5111, 5
      %v5268 = vrot.slane %v5267, 4
      %v5269 = vrot.slane %v5112, 5
      %v5270 = vsel %vm1579, %v5268, %v5269
      %v5271 = vrot.slane %v5269, 4
      %v5272 = vrot.slane %v5113, 5
      %v5273 = vsel %vm1579, %v5271, %v5272
      %s5274 = scalar_lea.vmem %s298, 64
      %v5275 = vld [vmem:[%s5274] sm:$0xf]
      %v5276 = vld [vmem:[%s5274 + $0x4] sm:$0xf]
      %v5277 = vunpack.c.l.b16 %v5165
      %v5278 = vunpack.c.l.b16 %v5168
      %v5279 = vunpack.c.l.b16 %v5172
      %v5280 = vunpack.c.l.b16 %v5175
      %v5281 = vunpack.c.l.b16 %v5179
      %v5282 = vunpack.c.l.b16 %v5182
      %v5283 = vunpack.c.l.b16 %v5186
      %v5284 = vunpack.c.l.b16 %v5189
      %v5285 = vunpack.c.l.b16 %v5193
      %v5286 = vunpack.c.l.b16 %v5196
      %v5287 = vunpack.c.l.b16 %v5200
      %v5288 = vunpack.c.l.b16 %v5203
      %v5289 = vunpack.c.l.b16 %v5207
      %v5290 = vunpack.c.l.b16 %v5210
      %v5291 = vunpack.c.l.b16 %v5214
      %v5292 = vunpack.c.l.b16 %v5217
      %v5293 = vunpack.c.l.b16 %v5221
      %v5294 = vunpack.c.l.b16 %v5224
      %v5295 = vunpack.c.l.b16 %v5228
      %v5296 = vunpack.c.l.b16 %v5231
      %v5297 = vunpack.c.l.b16 %v5235
      %v5298 = vunpack.c.l.b16 %v5238
      %v5299 = vunpack.c.l.b16 %v5242
      %v5300 = vunpack.c.l.b16 %v5245
      %v5301 = vunpack.c.l.b16 %v5249
      %v5302 = vunpack.c.l.b16 %v5252
      %v5303 = vunpack.c.l.b16 %v5256
      %v5304 = vunpack.c.l.b16 %v5259
      %v5305 = vunpack.c.l.b16 %v5263
      %v5306 = vunpack.c.l.b16 %v5266
      %v5307 = vunpack.c.l.b16 %v5270
      %v5308 = vunpack.c.l.b16 %v5273
      %v5309 = vpack.c.b16 %v5278, %v5277
      %v5310 = vpack.c.b16 %v5280, %v5279
      %v5311 = vpack.c.b16 %v5282, %v5281
      %v5312 = vpack.c.b16 %v5284, %v5283
      %v5313 = vpack.c.b16 %v5286, %v5285
      %v5314 = vpack.c.b16 %v5288, %v5287
      %v5315 = vpack.c.b16 %v5290, %v5289
      %v5316 = vpack.c.b16 %v5292, %v5291
      %v5317 = vpack.c.b16 %v5294, %v5293
      %v5318 = vpack.c.b16 %v5296, %v5295
      %v5319 = vpack.c.b16 %v5298, %v5297
      %v5320 = vpack.c.b16 %v5300, %v5299
      %v5321 = vpack.c.b16 %v5302, %v5301
      %v5322 = vpack.c.b16 %v5304, %v5303
      %v5323 = vpack.c.b16 %v5306, %v5305
      %v5324 = vpack.c.b16 %v5308, %v5307
      %v5327 = vunpack.c.l.b16 %v5275
      %v5328 = vunpack.c.l.b16 %v5276
      %v5329 = vpack.c.b16 %v5328, %v5327
      %v5332 = vsel %vm442, %v5309, 0
      %v5335 = vsel %vm442, %v5310, 0
      %v5338 = vsel %vm442, %v5311, 0
      %v5341 = vsel %vm442, %v5312, 0
      %v5344 = vsel %vm442, %v5313, 0
      %v5347 = vsel %vm442, %v5314, 0
      %v5350 = vsel %vm442, %v5315, 0
      %v5353 = vsel %vm442, %v5316, 0
      %v5356 = vsel %vm442, %v5317, 0
      %v5359 = vsel %vm442, %v5318, 0
      %v5362 = vsel %vm442, %v5319, 0
      %v5365 = vsel %vm442, %v5320, 0
      %v5368 = vsel %vm442, %v5321, 0
      %v5371 = vsel %vm442, %v5322, 0
      %v5374 = vsel %vm442, %v5323, 0
      %v5377 = vsel %vm442, %v5324, 0
      %5379 = vmatprep.subr.bf16.mxu0 0
      %5380 = vmatpush1.bf16.msra.mxu0 0
      %5381 = vmatprep.subr.bf16.mxu0 0
      %5382 = vmatpush1.bf16.msra.mxu0 0
      %5383 = vmatprep.subr.bf16.mxu0 0
      %5384 = vmatpush1.bf16.msra.mxu0 0
      %5385 = vmatprep.subr.bf16.mxu0 0
      %5386 = vmatpush1.bf16.msra.mxu0 0
      %5387 = vmatprep.subr.bf16.mxu0 0
      %5388 = vmatpush1.bf16.msra.mxu0 0
      %5389 = vmatprep.subr.bf16.mxu0 0
      %5390 = vmatpush1.bf16.msra.mxu0 0
      %5391 = vmatprep.subr.bf16.mxu0 0
      %5392 = vmatpush1.bf16.msra.mxu0 0
      %5393 = vmatprep.subr.bf16.mxu0 0
      %5394 = vmatpush1.bf16.msra.mxu0 %v5329
      %5395 = vmatprep.subr.bf16.mxu0 0
      %5396 = vmatpush2.bf16.msra.mxu0 0
      %5397 = vmatprep.subr.bf16.mxu0 0
      %5398 = vmatpush2.bf16.msra.mxu0 0
      %5399 = vmatprep.subr.bf16.mxu0 0
      %5400 = vmatpush2.bf16.msra.mxu0 0
      %5401 = vmatprep.subr.bf16.mxu0 0
      %5402 = vmatpush2.bf16.msra.mxu0 0
      %5403 = vmatprep.subr.bf16.mxu0 0
      %5404 = vmatpush2.bf16.msra.mxu0 0
      %5405 = vmatprep.subr.bf16.mxu0 0
      %5406 = vmatpush2.bf16.msra.mxu0 0
      %5407 = vmatprep.subr.bf16.mxu0 0
      %5408 = vmatpush2.bf16.msra.mxu0 0
      %5409 = vmatprep.subr.bf16.mxu0 0
      %5410 = vmatpush2.bf16.msra.mxu0 0
      %5411 = vmatprep.mubr.bf16.mxu0 0
      %5412 = vmatmul.mubr.bf16.gmra.mxu0 %v5332
      %v5413 = vpop.f32.mrf.mxu0
      %v5414 = vadd.f32 0.0, %v5413
      %v5415 = vpop.f32.mrf.mxu0
      %v5416 = vpop.f32.mrf.mxu0
      %v5417 = vadd.f32 0.0, %v5416
      %v5418 = vpop.f32.mrf.mxu0
      %5419 = vmatprep.mubr.bf16.mxu0 0
      %5420 = vmatmul.mubr.bf16.gmra.mxu0 %v5335
      %v5421 = vpop.f32.mrf.mxu0
      %v5422 = vadd.f32 0.0, %v5421
      %v5423 = vpop.f32.mrf.mxu0
      %v5424 = vpop.f32.mrf.mxu0
      %v5425 = vadd.f32 0.0, %v5424
      %v5426 = vpop.f32.mrf.mxu0
      %5427 = vmatprep.mubr.bf16.mxu0 0
      %5428 = vmatmul.mubr.bf16.gmra.mxu0 %v5338
      %v5429 = vpop.f32.mrf.mxu0
      %v5430 = vadd.f32 0.0, %v5429
      %v5431 = vpop.f32.mrf.mxu0
      %v5432 = vpop.f32.mrf.mxu0
      %v5433 = vadd.f32 0.0, %v5432
      %v5434 = vpop.f32.mrf.mxu0
      %5435 = vmatprep.mubr.bf16.mxu0 0
      %5436 = vmatmul.mubr.bf16.gmra.mxu0 %v5341
      %v5437 = vpop.f32.mrf.mxu0
      %v5438 = vadd.f32 0.0, %v5437
      %v5439 = vpop.f32.mrf.mxu0
      %v5440 = vpop.f32.mrf.mxu0
      %v5441 = vadd.f32 0.0, %v5440
      %v5442 = vpop.f32.mrf.mxu0
      %5443 = vmatprep.mubr.bf16.mxu0 0
      %5444 = vmatmul.mubr.bf16.gmra.mxu0 %v5344
      %v5445 = vpop.f32.mrf.mxu0
      %v5446 = vadd.f32 0.0, %v5445
      %v5447 = vpop.f32.mrf.mxu0
      %v5448 = vpop.f32.mrf.mxu0
      %v5449 = vadd.f32 0.0, %v5448
      %v5450 = vpop.f32.mrf.mxu0
      %5451 = vmatprep.mubr.bf16.mxu0 0
      %5452 = vmatmul.mubr.bf16.gmra.mxu0 %v5347
      %v5453 = vpop.f32.mrf.mxu0
      %v5454 = vadd.f32 0.0, %v5453
      %v5455 = vpop.f32.mrf.mxu0
      %v5456 = vpop.f32.mrf.mxu0
      %v5457 = vadd.f32 0.0, %v5456
      %v5458 = vpop.f32.mrf.mxu0
      %5459 = vmatprep.mubr.bf16.mxu0 0
      %5460 = vmatmul.mubr.bf16.gmra.mxu0 %v5350
      %v5461 = vpop.f32.mrf.mxu0
      %v5462 = vadd.f32 0.0, %v5461
      %v5463 = vpop.f32.mrf.mxu0
      %v5464 = vpop.f32.mrf.mxu0
      %v5465 = vadd.f32 0.0, %v5464
      %v5466 = vpop.f32.mrf.mxu0
      %5467 = vmatprep.mubr.bf16.mxu0 0
      %5468 = vmatmul.mubr.bf16.gmra.mxu0 %v5353
      %v5469 = vpop.f32.mrf.mxu0
      %v5470 = vadd.f32 0.0, %v5469
      %v5471 = vpop.f32.mrf.mxu0
      %v5472 = vpop.f32.mrf.mxu0
      %v5473 = vadd.f32 0.0, %v5472
      %v5474 = vpop.f32.mrf.mxu0
      %5475 = vmatprep.mubr.bf16.mxu0 0
      %5476 = vmatmul.mubr.bf16.gmra.mxu0 %v5356
      %v5477 = vpop.f32.mrf.mxu0
      %v5478 = vadd.f32 0.0, %v5477
      %v5479 = vpop.f32.mrf.mxu0
      %v5480 = vpop.f32.mrf.mxu0
      %v5481 = vadd.f32 0.0, %v5480
      %v5482 = vpop.f32.mrf.mxu0
      %5483 = vmatprep.mubr.bf16.mxu0 0
      %5484 = vmatmul.mubr.bf16.gmra.mxu0 %v5359
      %v5485 = vpop.f32.mrf.mxu0
      %v5486 = vadd.f32 0.0, %v5485
      %v5487 = vpop.f32.mrf.mxu0
      %v5488 = vpop.f32.mrf.mxu0
      %v5489 = vadd.f32 0.0, %v5488
      %v5490 = vpop.f32.mrf.mxu0
      %5491 = vmatprep.mubr.bf16.mxu0 0
      %5492 = vmatmul.mubr.bf16.gmra.mxu0 %v5362
      %v5493 = vpop.f32.mrf.mxu0
      %v5494 = vadd.f32 0.0, %v5493
      %v5495 = vpop.f32.mrf.mxu0
      %v5496 = vpop.f32.mrf.mxu0
      %v5497 = vadd.f32 0.0, %v5496
      %v5498 = vpop.f32.mrf.mxu0
      %5499 = vmatprep.mubr.bf16.mxu0 0
      %5500 = vmatmul.mubr.bf16.gmra.mxu0 %v5365
      %v5501 = vpop.f32.mrf.mxu0
      %v5502 = vadd.f32 0.0, %v5501
      %v5503 = vpop.f32.mrf.mxu0
      %v5504 = vpop.f32.mrf.mxu0
      %v5505 = vadd.f32 0.0, %v5504
      %v5506 = vpop.f32.mrf.mxu0
      %5507 = vmatprep.mubr.bf16.mxu0 0
      %5508 = vmatmul.mubr.bf16.gmra.mxu0 %v5368
      %v5509 = vpop.f32.mrf.mxu0
      %v5510 = vadd.f32 0.0, %v5509
      %v5511 = vpop.f32.mrf.mxu0
      %v5512 = vpop.f32.mrf.mxu0
      %v5513 = vadd.f32 0.0, %v5512
      %v5514 = vpop.f32.mrf.mxu0
      %5515 = vmatprep.mubr.bf16.mxu0 0
      %5516 = vmatmul.mubr.bf16.gmra.mxu0 %v5371
      %v5517 = vpop.f32.mrf.mxu0
      %v5518 = vadd.f32 0.0, %v5517
      %v5519 = vpop.f32.mrf.mxu0
      %v5520 = vpop.f32.mrf.mxu0
      %v5521 = vadd.f32 0.0, %v5520
      %v5522 = vpop.f32.mrf.mxu0
      %5523 = vmatprep.mubr.bf16.mxu0 0
      %5524 = vmatmul.mubr.bf16.gmra.mxu0 %v5374
      %v5525 = vpop.f32.mrf.mxu0
      %v5526 = vadd.f32 0.0, %v5525
      %v5527 = vpop.f32.mrf.mxu0
      %v5528 = vpop.f32.mrf.mxu0
      %v5529 = vadd.f32 0.0, %v5528
      %v5530 = vpop.f32.mrf.mxu0
      %5531 = vmatprep.mubr.bf16.mxu0 0
      %5532 = vmatmul.mubr.bf16.gmra.mxu0 %v5377
      %v5533 = vpop.f32.mrf.mxu0
      %v5534 = vadd.f32 0.0, %v5533
      %v5535 = vpop.f32.mrf.mxu0
      %v5536 = vpop.f32.mrf.mxu0
      %v5537 = vadd.f32 0.0, %v5536
      %v5538 = vpop.f32.mrf.mxu0
      %5539 = vdwg.mxu0
      %v5540 = vld [vmem:[#allocation2] sm:$0xff]
      %v5541 = vld [vmem:[#allocation2 + $0x8] sm:$0xff]
      %v5542 = vld [vmem:[#allocation2 + $0x10] sm:$0xff]
      %v5543 = vld [vmem:[#allocation2 + $0x18] sm:$0xff]
      %v5544 = vld [vmem:[#allocation2 + $0x20] sm:$0xff]
      %v5545 = vld [vmem:[#allocation2 + $0x28] sm:$0xff]
      %v5546 = vld [vmem:[#allocation2 + $0x30] sm:$0xff]
      %v5547 = vld [vmem:[#allocation2 + $0x38] sm:$0xff]
      %v5548 = vld [vmem:[#allocation2 + $0x40] sm:$0xff]
      %v5549 = vld [vmem:[#allocation2 + $0x48] sm:$0xff]
      %v5550 = vld [vmem:[#allocation2 + $0x50] sm:$0xff]
      %v5551 = vld [vmem:[#allocation2 + $0x58] sm:$0xff]
      %v5552 = vld [vmem:[#allocation2 + $0x60] sm:$0xff]
      %v5553 = vld [vmem:[#allocation2 + $0x68] sm:$0xff]
      %v5554 = vld [vmem:[#allocation2 + $0x70] sm:$0xff]
      %v5555 = vld [vmem:[#allocation2 + $0x78] sm:$0xff]
      %v5556 = vld [vmem:[#allocation2 + $0x80] sm:$0xff]
      %v5557 = vld [vmem:[#allocation2 + $0x88] sm:$0xff]
      %v5558 = vld [vmem:[#allocation2 + $0x90] sm:$0xff]
      %v5559 = vld [vmem:[#allocation2 + $0x98] sm:$0xff]
      %v5560 = vld [vmem:[#allocation2 + $0xa0] sm:$0xff]
      %v5561 = vld [vmem:[#allocation2 + $0xa8] sm:$0xff]
      %v5562 = vld [vmem:[#allocation2 + $0xb0] sm:$0xff]
      %v5563 = vld [vmem:[#allocation2 + $0xb8] sm:$0xff]
      %v5564 = vld [vmem:[#allocation2 + $0xc0] sm:$0xff]
      %v5565 = vld [vmem:[#allocation2 + $0xc8] sm:$0xff]
      %v5566 = vld [vmem:[#allocation2 + $0xd0] sm:$0xff]
      %v5567 = vld [vmem:[#allocation2 + $0xd8] sm:$0xff]
      %v5568 = vld [vmem:[#allocation2 + $0xe0] sm:$0xff]
      %v5569 = vld [vmem:[#allocation2 + $0xe8] sm:$0xff]
      %v5570 = vld [vmem:[#allocation2 + $0xf0] sm:$0xff]
      %v5571 = vld [vmem:[#allocation2 + $0xf8] sm:$0xff]
      %v5572 = vadd.f32 %v5540, %v5414
      %v5573 = vadd.f32 %v5541, %v5417
      %v5574 = vadd.f32 %v5542, %v5422
      %v5575 = vadd.f32 %v5543, %v5425
      %v5576 = vadd.f32 %v5544, %v5430
      %v5577 = vadd.f32 %v5545, %v5433
      %v5578 = vadd.f32 %v5546, %v5438
      %v5579 = vadd.f32 %v5547, %v5441
      %v5580 = vadd.f32 %v5548, %v5446
      %v5581 = vadd.f32 %v5549, %v5449
      %v5582 = vadd.f32 %v5550, %v5454
      %v5583 = vadd.f32 %v5551, %v5457
      %v5584 = vadd.f32 %v5552, %v5462
      %v5585 = vadd.f32 %v5553, %v5465
      %v5586 = vadd.f32 %v5554, %v5470
      %v5587 = vadd.f32 %v5555, %v5473
      %v5588 = vadd.f32 %v5556, %v5478
      %v5589 = vadd.f32 %v5557, %v5481
      %v5590 = vadd.f32 %v5558, %v5486
      %v5591 = vadd.f32 %v5559, %v5489
      %v5592 = vadd.f32 %v5560, %v5494
      %v5593 = vadd.f32 %v5561, %v5497
      %v5594 = vadd.f32 %v5562, %v5502
      %v5595 = vadd.f32 %v5563, %v5505
      %v5596 = vadd.f32 %v5564, %v5510
      %v5597 = vadd.f32 %v5565, %v5513
      %v5598 = vadd.f32 %v5566, %v5518
      %v5599 = vadd.f32 %v5567, %v5521
      %v5600 = vadd.f32 %v5568, %v5526
      %v5601 = vadd.f32 %v5569, %v5529
      %v5602 = vadd.f32 %v5570, %v5534
      %v5603 = vadd.f32 %v5571, %v5537
      %5604 = vst.msk [vmem:[#allocation2] sm:$0xff] %vm442, %v5572
      %5605 = vst.msk [vmem:[#allocation2 + $0x8] sm:$0xff] %vm442, %v5573
      %5606 = vst.msk [vmem:[#allocation2 + $0x10] sm:$0xff] %vm442, %v5574
      %5607 = vst.msk [vmem:[#allocation2 + $0x18] sm:$0xff] %vm442, %v5575
      %5608 = vst.msk [vmem:[#allocation2 + $0x20] sm:$0xff] %vm442, %v5576
      %5609 = vst.msk [vmem:[#allocation2 + $0x28] sm:$0xff] %vm442, %v5577
      %5610 = vst.msk [vmem:[#allocation2 + $0x30] sm:$0xff] %vm442, %v5578
      %5611 = vst.msk [vmem:[#allocation2 + $0x38] sm:$0xff] %vm442, %v5579
      %5612 = vst.msk [vmem:[#allocation2 + $0x40] sm:$0xff] %vm442, %v5580
      %5613 = vst.msk [vmem:[#allocation2 + $0x48] sm:$0xff] %vm442, %v5581
      %5614 = vst.msk [vmem:[#allocation2 + $0x50] sm:$0xff] %vm442, %v5582
      %5615 = vst.msk [vmem:[#allocation2 + $0x58] sm:$0xff] %vm442, %v5583
      %5616 = vst.msk [vmem:[#allocation2 + $0x60] sm:$0xff] %vm442, %v5584
      %5617 = vst.msk [vmem:[#allocation2 + $0x68] sm:$0xff] %vm442, %v5585
      %5618 = vst.msk [vmem:[#allocation2 + $0x70] sm:$0xff] %vm442, %v5586
      %5619 = vst.msk [vmem:[#allocation2 + $0x78] sm:$0xff] %vm442, %v5587
      %5620 = vst.msk [vmem:[#allocation2 + $0x80] sm:$0xff] %vm442, %v5588
      %5621 = vst.msk [vmem:[#allocation2 + $0x88] sm:$0xff] %vm442, %v5589
      %5622 = vst.msk [vmem:[#allocation2 + $0x90] sm:$0xff] %vm442, %v5590
      %5623 = vst.msk [vmem:[#allocation2 + $0x98] sm:$0xff] %vm442, %v5591
      %5624 = vst.msk [vmem:[#allocation2 + $0xa0] sm:$0xff] %vm442, %v5592
      %5625 = vst.msk [vmem:[#allocation2 + $0xa8] sm:$0xff] %vm442, %v5593
      %5626 = vst.msk [vmem:[#allocation2 + $0xb0] sm:$0xff] %vm442, %v5594
      %5627 = vst.msk [vmem:[#allocation2 + $0xb8] sm:$0xff] %vm442, %v5595
      %5628 = vst.msk [vmem:[#allocation2 + $0xc0] sm:$0xff] %vm442, %v5596
      %5629 = vst.msk [vmem:[#allocation2 + $0xc8] sm:$0xff] %vm442, %v5597
      %5630 = vst.msk [vmem:[#allocation2 + $0xd0] sm:$0xff] %vm442, %v5598
      %5631 = vst.msk [vmem:[#allocation2 + $0xd8] sm:$0xff] %vm442, %v5599
      %5632 = vst.msk [vmem:[#allocation2 + $0xe0] sm:$0xff] %vm442, %v5600
      %5633 = vst.msk [vmem:[#allocation2 + $0xe8] sm:$0xff] %vm442, %v5601
      %5634 = vst.msk [vmem:[#allocation2 + $0xf0] sm:$0xff] %vm442, %v5602
      %5635 = vst.msk [vmem:[#allocation2 + $0xf8] sm:$0xff] %vm442, %v5603
      %v5636 = vld [vmem:[#allocation2] sm:$0xff]
      %v5637 = vld [vmem:[#allocation2 + $0x8] sm:$0xff]
      %v5638 = vld [vmem:[#allocation2 + $0x10] sm:$0xff]
      %v5639 = vld [vmem:[#allocation2 + $0x18] sm:$0xff]
      %v5640 = vld [vmem:[#allocation2 + $0x20] sm:$0xff]
      %v5641 = vld [vmem:[#allocation2 + $0x28] sm:$0xff]
      %v5642 = vld [vmem:[#allocation2 + $0x30] sm:$0xff]
      %v5643 = vld [vmem:[#allocation2 + $0x38] sm:$0xff]
      %v5644 = vld [vmem:[#allocation2 + $0x40] sm:$0xff]
      %v5645 = vld [vmem:[#allocation2 + $0x48] sm:$0xff]
      %v5646 = vld [vmem:[#allocation2 + $0x50] sm:$0xff]
      %v5647 = vld [vmem:[#allocation2 + $0x58] sm:$0xff]
      %v5648 = vld [vmem:[#allocation2 + $0x60] sm:$0xff]
      %v5649 = vld [vmem:[#allocation2 + $0x68] sm:$0xff]
      %v5650 = vld [vmem:[#allocation2 + $0x70] sm:$0xff]
      %v5651 = vld [vmem:[#allocation2 + $0x78] sm:$0xff]
      %v5652 = vld [vmem:[#allocation2 + $0x80] sm:$0xff]
      %v5653 = vld [vmem:[#allocation2 + $0x88] sm:$0xff]
      %v5654 = vld [vmem:[#allocation2 + $0x90] sm:$0xff]
      %v5655 = vld [vmem:[#allocation2 + $0x98] sm:$0xff]
      %v5656 = vld [vmem:[#allocation2 + $0xa0] sm:$0xff]
      %v5657 = vld [vmem:[#allocation2 + $0xa8] sm:$0xff]
      %v5658 = vld [vmem:[#allocation2 + $0xb0] sm:$0xff]
      %v5659 = vld [vmem:[#allocation2 + $0xb8] sm:$0xff]
      %v5660 = vld [vmem:[#allocation2 + $0xc0] sm:$0xff]
      %v5661 = vld [vmem:[#allocation2 + $0xc8] sm:$0xff]
      %v5662 = vld [vmem:[#allocation2 + $0xd0] sm:$0xff]
      %v5663 = vld [vmem:[#allocation2 + $0xd8] sm:$0xff]
      %v5664 = vld [vmem:[#allocation2 + $0xe0] sm:$0xff]
      %v5665 = vld [vmem:[#allocation2 + $0xe8] sm:$0xff]
      %v5666 = vld [vmem:[#allocation2 + $0xf0] sm:$0xff]
      %v5667 = vld [vmem:[#allocation2 + $0xf8] sm:$0xff]
      %v5668 = vld [vmem:[%s301] sm:$0x1]
      %v5670 = vlaneseq
      %v5671 = vshrl.u32 %v5670, 7
      %v5672 = vsub.s32 0, %v5671
      %v5673 = vrot.slane %v5668, %v5672
      %v5675 = vmul.f32 %v5636, %v5673
      %v5676 = vmul.f32 %v5637, %v5673
      %v5677 = vmul.f32 %v5638, %v5673
      %v5678 = vmul.f32 %v5639, %v5673
      %v5679 = vmul.f32 %v5640, %v5673
      %v5680 = vmul.f32 %v5641, %v5673
      %v5681 = vmul.f32 %v5642, %v5673
      %v5682 = vmul.f32 %v5643, %v5673
      %v5683 = vmul.f32 %v5644, %v5673
      %v5684 = vmul.f32 %v5645, %v5673
      %v5685 = vmul.f32 %v5646, %v5673
      %v5686 = vmul.f32 %v5647, %v5673
      %v5687 = vmul.f32 %v5648, %v5673
      %v5688 = vmul.f32 %v5649, %v5673
      %v5689 = vmul.f32 %v5650, %v5673
      %v5690 = vmul.f32 %v5651, %v5673
      %v5691 = vmul.f32 %v5652, %v5673
      %v5692 = vmul.f32 %v5653, %v5673
      %v5693 = vmul.f32 %v5654, %v5673
      %v5694 = vmul.f32 %v5655, %v5673
      %v5695 = vmul.f32 %v5656, %v5673
      %v5696 = vmul.f32 %v5657, %v5673
      %v5697 = vmul.f32 %v5658, %v5673
      %v5698 = vmul.f32 %v5659, %v5673
      %v5699 = vmul.f32 %v5660, %v5673
      %v5700 = vmul.f32 %v5661, %v5673
      %v5701 = vmul.f32 %v5662, %v5673
      %v5702 = vmul.f32 %v5663, %v5673
      %v5703 = vmul.f32 %v5664, %v5673
      %v5704 = vmul.f32 %v5665, %v5673
      %v5705 = vmul.f32 %v5666, %v5673
      %v5706 = vmul.f32 %v5667, %v5673
      %v5707 = vld [vmem:[%s304] sm:$0x1]
      %v5709 = vlaneseq
      %v5710 = vshrl.u32 %v5709, 7
      %v5711 = vsub.s32 0, %v5710
      %v5712 = vrot.slane %v5707, %v5711
      %v5714 = vadd.f32 %v5675, %v5712
      %v5715 = vadd.f32 %v5676, %v5712
      %v5716 = vadd.f32 %v5677, %v5712
      %v5717 = vadd.f32 %v5678, %v5712
      %v5718 = vadd.f32 %v5679, %v5712
      %v5719 = vadd.f32 %v5680, %v5712
      %v5720 = vadd.f32 %v5681, %v5712
      %v5721 = vadd.f32 %v5682, %v5712
      %v5722 = vadd.f32 %v5683, %v5712
      %v5723 = vadd.f32 %v5684, %v5712
      %v5724 = vadd.f32 %v5685, %v5712
      %v5725 = vadd.f32 %v5686, %v5712
      %v5726 = vadd.f32 %v5687, %v5712
      %v5727 = vadd.f32 %v5688, %v5712
      %v5728 = vadd.f32 %v5689, %v5712
      %v5729 = vadd.f32 %v5690, %v5712
      %v5730 = vadd.f32 %v5691, %v5712
      %v5731 = vadd.f32 %v5692, %v5712
      %v5732 = vadd.f32 %v5693, %v5712
      %v5733 = vadd.f32 %v5694, %v5712
      %v5734 = vadd.f32 %v5695, %v5712
      %v5735 = vadd.f32 %v5696, %v5712
      %v5736 = vadd.f32 %v5697, %v5712
      %v5737 = vadd.f32 %v5698, %v5712
      %v5738 = vadd.f32 %v5699, %v5712
      %v5739 = vadd.f32 %v5700, %v5712
      %v5740 = vadd.f32 %v5701, %v5712
      %v5741 = vadd.f32 %v5702, %v5712
      %v5742 = vadd.f32 %v5703, %v5712
      %v5743 = vadd.f32 %v5704, %v5712
      %v5744 = vadd.f32 %v5705, %v5712
      %v5745 = vadd.f32 %v5706, %v5712
      %v5746 = vld [vmem:[%s312] sm:$0xff]
      %v5747 = vld [vmem:[%s312 + $0x8] sm:$0xff]
      %v5748 = vld [vmem:[%s312 + $0x10] sm:$0xff]
      %v5749 = vld [vmem:[%s312 + $0x18] sm:$0xff]
      %v5750 = vld [vmem:[%s312 + $0x20] sm:$0xff]
      %v5751 = vld [vmem:[%s312 + $0x28] sm:$0xff]
      %v5752 = vld [vmem:[%s312 + $0x30] sm:$0xff]
      %v5753 = vld [vmem:[%s312 + $0x38] sm:$0xff]
      %v5754 = vld [vmem:[%s312 + $0x40] sm:$0xff]
      %v5755 = vld [vmem:[%s312 + $0x48] sm:$0xff]
      %v5756 = vld [vmem:[%s312 + $0x50] sm:$0xff]
      %v5757 = vld [vmem:[%s312 + $0x58] sm:$0xff]
      %v5758 = vld [vmem:[%s312 + $0x60] sm:$0xff]
      %v5759 = vld [vmem:[%s312 + $0x68] sm:$0xff]
      %v5760 = vld [vmem:[%s312 + $0x70] sm:$0xff]
      %v5761 = vld [vmem:[%s312 + $0x78] sm:$0xff]
      %v5762 = vld [vmem:[%s312 + $0x80] sm:$0xff]
      %v5763 = vld [vmem:[%s312 + $0x88] sm:$0xff]
      %v5764 = vld [vmem:[%s312 + $0x90] sm:$0xff]
      %v5765 = vld [vmem:[%s312 + $0x98] sm:$0xff]
      %v5766 = vld [vmem:[%s312 + $0xa0] sm:$0xff]
      %v5767 = vld [vmem:[%s312 + $0xa8] sm:$0xff]
      %v5768 = vld [vmem:[%s312 + $0xb0] sm:$0xff]
      %v5769 = vld [vmem:[%s312 + $0xb8] sm:$0xff]
      %v5770 = vld [vmem:[%s312 + $0xc0] sm:$0xff]
      %v5771 = vld [vmem:[%s312 + $0xc8] sm:$0xff]
      %v5772 = vld [vmem:[%s312 + $0xd0] sm:$0xff]
      %v5773 = vld [vmem:[%s312 + $0xd8] sm:$0xff]
      %v5774 = vld [vmem:[%s312 + $0xe0] sm:$0xff]
      %v5775 = vld [vmem:[%s312 + $0xe8] sm:$0xff]
      %v5776 = vld [vmem:[%s312 + $0xf0] sm:$0xff]
      %v5777 = vld [vmem:[%s312 + $0xf8] sm:$0xff]
      %v5778 = vadd.f32 %v5714, %v5746
      %v5779 = vadd.f32 %v5715, %v5747
      %v5780 = vadd.f32 %v5716, %v5748
      %v5781 = vadd.f32 %v5717, %v5749
      %v5782 = vadd.f32 %v5718, %v5750
      %v5783 = vadd.f32 %v5719, %v5751
      %v5784 = vadd.f32 %v5720, %v5752
      %v5785 = vadd.f32 %v5721, %v5753
      %v5786 = vadd.f32 %v5722, %v5754
      %v5787 = vadd.f32 %v5723, %v5755
      %v5788 = vadd.f32 %v5724, %v5756
      %v5789 = vadd.f32 %v5725, %v5757
      %v5790 = vadd.f32 %v5726, %v5758
      %v5791 = vadd.f32 %v5727, %v5759
      %v5792 = vadd.f32 %v5728, %v5760
      %v5793 = vadd.f32 %v5729, %v5761
      %v5794 = vadd.f32 %v5730, %v5762
      %v5795 = vadd.f32 %v5731, %v5763
      %v5796 = vadd.f32 %v5732, %v5764
      %v5797 = vadd.f32 %v5733, %v5765
      %v5798 = vadd.f32 %v5734, %v5766
      %v5799 = vadd.f32 %v5735, %v5767
      %v5800 = vadd.f32 %v5736, %v5768
      %v5801 = vadd.f32 %v5737, %v5769
      %v5802 = vadd.f32 %v5738, %v5770
      %v5803 = vadd.f32 %v5739, %v5771
      %v5804 = vadd.f32 %v5740, %v5772
      %v5805 = vadd.f32 %v5741, %v5773
      %v5806 = vadd.f32 %v5742, %v5774
      %v5807 = vadd.f32 %v5743, %v5775
      %v5808 = vadd.f32 %v5744, %v5776
      %v5809 = vadd.f32 %v5745, %v5777
      %v5810 = vmax.f32 %v5778, 0.0
      %v5811 = vmax.f32 %v5779, 0.0
      %v5812 = vmax.f32 %v5780, 0.0
      %v5813 = vmax.f32 %v5781, 0.0
      %v5814 = vmax.f32 %v5782, 0.0
      %v5815 = vmax.f32 %v5783, 0.0
      %v5816 = vmax.f32 %v5784, 0.0
      %v5817 = vmax.f32 %v5785, 0.0
      %v5818 = vmax.f32 %v5786, 0.0
      %v5819 = vmax.f32 %v5787, 0.0
      %v5820 = vmax.f32 %v5788, 0.0
      %v5821 = vmax.f32 %v5789, 0.0
      %v5822 = vmax.f32 %v5790, 0.0
      %v5823 = vmax.f32 %v5791, 0.0
      %v5824 = vmax.f32 %v5792, 0.0
      %v5825 = vmax.f32 %v5793, 0.0
      %v5826 = vmax.f32 %v5794, 0.0
      %v5827 = vmax.f32 %v5795, 0.0
      %v5828 = vmax.f32 %v5796, 0.0
      %v5829 = vmax.f32 %v5797, 0.0
      %v5830 = vmax.f32 %v5798, 0.0
      %v5831 = vmax.f32 %v5799, 0.0
      %v5832 = vmax.f32 %v5800, 0.0
      %v5833 = vmax.f32 %v5801, 0.0
      %v5834 = vmax.f32 %v5802, 0.0
      %v5835 = vmax.f32 %v5803, 0.0
      %v5836 = vmax.f32 %v5804, 0.0
      %v5837 = vmax.f32 %v5805, 0.0
      %v5838 = vmax.f32 %v5806, 0.0
      %v5839 = vmax.f32 %v5807, 0.0
      %v5840 = vmax.f32 %v5808, 0.0
      %v5841 = vmax.f32 %v5809, 0.0
      %5842 = vst.msk [vmem:[%s320] sm:$0xff] %vm442, %v5810
      %5843 = vst.msk [vmem:[%s320 + $0x8] sm:$0xff] %vm442, %v5811
      %5844 = vst.msk [vmem:[%s320 + $0x10] sm:$0xff] %vm442, %v5812
      %5845 = vst.msk [vmem:[%s320 + $0x18] sm:$0xff] %vm442, %v5813
      %5846 = vst.msk [vmem:[%s320 + $0x20] sm:$0xff] %vm442, %v5814
      %5847 = vst.msk [vmem:[%s320 + $0x28] sm:$0xff] %vm442, %v5815
      %5848 = vst.msk [vmem:[%s320 + $0x30] sm:$0xff] %vm442, %v5816
      %5849 = vst.msk [vmem:[%s320 + $0x38] sm:$0xff] %vm442, %v5817
      %5850 = vst.msk [vmem:[%s320 + $0x40] sm:$0xff] %vm442, %v5818
      %5851 = vst.msk [vmem:[%s320 + $0x48] sm:$0xff] %vm442, %v5819
      %5852 = vst.msk [vmem:[%s320 + $0x50] sm:$0xff] %vm442, %v5820
      %5853 = vst.msk [vmem:[%s320 + $0x58] sm:$0xff] %vm442, %v5821
      %5854 = vst.msk [vmem:[%s320 + $0x60] sm:$0xff] %vm442, %v5822
      %5855 = vst.msk [vmem:[%s320 + $0x68] sm:$0xff] %vm442, %v5823
      %5856 = vst.msk [vmem:[%s320 + $0x70] sm:$0xff] %vm442, %v5824
      %5857 = vst.msk [vmem:[%s320 + $0x78] sm:$0xff] %vm442, %v5825
      %5858 = vst.msk [vmem:[%s320 + $0x80] sm:$0xff] %vm442, %v5826
      %5859 = vst.msk [vmem:[%s320 + $0x88] sm:$0xff] %vm442, %v5827
      %5860 = vst.msk [vmem:[%s320 + $0x90] sm:$0xff] %vm442, %v5828
      %5861 = vst.msk [vmem:[%s320 + $0x98] sm:$0xff] %vm442, %v5829
      %5862 = vst.msk [vmem:[%s320 + $0xa0] sm:$0xff] %vm442, %v5830
      %5863 = vst.msk [vmem:[%s320 + $0xa8] sm:$0xff] %vm442, %v5831
      %5864 = vst.msk [vmem:[%s320 + $0xb0] sm:$0xff] %vm442, %v5832
      %5865 = vst.msk [vmem:[%s320 + $0xb8] sm:$0xff] %vm442, %v5833
      %5866 = vst.msk [vmem:[%s320 + $0xc0] sm:$0xff] %vm442, %v5834
      %5867 = vst.msk [vmem:[%s320 + $0xc8] sm:$0xff] %vm442, %v5835
      %5868 = vst.msk [vmem:[%s320 + $0xd0] sm:$0xff] %vm442, %v5836
      %5869 = vst.msk [vmem:[%s320 + $0xd8] sm:$0xff] %vm442, %v5837
      %5870 = vst.msk [vmem:[%s320 + $0xe0] sm:$0xff] %vm442, %v5838
      %5871 = vst.msk [vmem:[%s320 + $0xe8] sm:$0xff] %vm442, %v5839
      %5872 = vst.msk [vmem:[%s320 + $0xf0] sm:$0xff] %vm442, %v5840
      %5873 = vst.msk [vmem:[%s320 + $0xf8] sm:$0xff] %vm442, %v5841
      %p5874 = scmp.lt.s32.totalorder %s20, 1
      %s5875 = scalar_select %p5874, %s20, 1
      %p5876 = scmp.lt.s32.totalorder %s21, 0
      %s5877 = scalar_select %p5876, %s21, 0
      %s5878 = smul.addr %s5875, 32
      %s5879 = sadd.s32 %s5877, %s5878
      %s5880 = smul.addr %s5879, 8
      %s5881 = scalar_lea.vmem %s5, %s5880
      // Predicated region
      $region41: #{basic_block_forward.3} parent=39 // pred_check
        %p5882 = pneg %p180
      $region42: #{basic_block_forward.3} parent=39 // pred_check_branch
        %5884 = sbr.rel (%p5882) target = $region44
      $region43: #{basic_block_forward.3} parent=39 // pred_region
        _
      $region44: #{basic_block_forward.3} parent=39 // pred_fallthru
        _
    $region40: #{basic_block_forward.3} parent=5 // pred_fallthru
      _
    %p5885 = scmp.le.s32.totalorder 2, %s11
    // Predicated region
    $region45: #{basic_block_forward.3} parent=5 // pred_check
      %p5886 = pneg %p5885
    $region46: #{basic_block_forward.3} parent=5 // pred_check_branch
      %5888 = sbr.rel (%p5886) target = $region48
    $region47: #{basic_block_forward.3} parent=5 // pred_region
      %s5889 = ssub.s32 %s11, 2
      // Predicated region
      $region49: #{basic_block_forward.3} parent=47 // pred_check
        %p5890 = pneg %p186
      $region50: #{basic_block_forward.3} parent=47 // pred_check_branch
        %5892 = sbr.rel (%p5890) target = $region52
      $region51: #{basic_block_forward.3} parent=47 // pred_region
        %p5893 = scmp.lt.s32.totalorder %s22, 1
        %s5894 = scalar_select %p5893, %s22, 1
        %p5895 = scmp.lt.s32.totalorder %s23, 0
        %s5896 = scalar_select %p5895, %s23, 0
        %s5897 = smul.addr %s5894, 32
        %s5898 = sadd.s32 %s5896, %s5897
        %s5899 = smul.addr %s5898, 8
        %s5900 = scalar_lea.vmem %s5, %s5899
      $region52: #{basic_block_forward.3} parent=47 // pred_fallthru
        _
    $region48: #{basic_block_forward.3} parent=5 // pred_fallthru
      _
  $region6: #{basic_block_forward.3} parent=0 // loop_footer
    %s15 = sadd.s32 1, %s11
  $region7: #{basic_block_forward.3} parent=0 // loop_footer_branch
    %10 = sbr.rel target = $region3
  $region8: #{basic_block_forward.3} parent=0 // loop_exit
    _

</llo_original>
